<compile_context>
chip_gen: v7x
topology: tpu7x:2x2x1
jax: 0.10.0
libtpu: 0.0.40
codegen_flags: <defaults>
</compile_context>

<pallas_src>
import functools

import jax
import jax.numpy as jnp
from jax.experimental import pallas as pl
from jax.experimental.pallas import tpu as pltpu

_EPS = 1e-6  # SAM uses partial(nn.LayerNorm, eps=1e-6)


# --------------------------- small helpers ----------------------------------
def _gelu_tanh(x):
    # TODO(synk): PyTorch nn.GELU defaults to exact erf; tanh approximation
    # is used here (EUP-friendly).
    c = 0.7978845608028654  # sqrt(2/pi)
    return 0.5 * x * (1.0 + jnp.tanh(c * (x + 0.044715 * x * x * x)))


def _layernorm(x, g, b, eps=_EPS):
    mu = jnp.mean(x, axis=-1, keepdims=True)
    var = jnp.mean(jnp.square(x - mu), axis=-1, keepdims=True)
    return (x - mu) * jax.lax.rsqrt(var + eps) * g + b


def _nbytes(*specs):
    tot = 0
    for shape, dtype in specs:
        n = 1
        for d in shape:
            n *= int(d)
        tot += n * jnp.dtype(dtype).itemsize
    return tot


def _cparams(semantics, block_bytes):
    # Inputs/outputs are double-buffered by the pipeline; add margin and clamp
    # so we leave headroom under v7x's 64 MiB physical VMEM.
    limit = int(min(max(2 * block_bytes + (4 << 20), 16 << 20), 56 << 20))
    return pltpu.CompilerParams(dimension_semantics=semantics,
                                vmem_limit_bytes=limit)


def _pick_tile(n, target=128):
    return target if n % target == 0 else n


# --------------------------- MonaOp kernel ----------------------------------
def mona_kernel(x_ref, wdw_ref, bdw_ref, wproj_ref, bproj_ref, out_ref,
                xpad_ref, *, H, W, C, K):
    pad = K // 2
    # Zero-padded staging in VMEM: removes the separate jnp.pad HBM pass.
    xpad_ref[...] = jnp.zeros_like(xpad_ref)
    xpad_ref[pad:pad + H, pad:pad + W, :] = x_ref[0]

    wdw = wdw_ref[...]                                        # (K, K, C)
    acc = jnp.broadcast_to(bdw_ref[0, 0, :], (H, W, C))
    for dy in range(K):
        band = xpad_ref[dy:dy + H, :, :]                      # one load per dy
        for dx in range(K):
            tap = band[:, dx:dx + W, :]                       # value slice
            acc = acc + tap * wdw[dy, dx, :]
    y = acc + x_ref[0]                                        # conv avg + x

    # 1x1 projector conv == channel matmul on the MXU (bf16 in, f32 acc),
    # plus the second residual.
    y2d = y.reshape(H * W, C)
    proj = jnp.dot(y2d.astype(jnp.bfloat16), wproj_ref[...],
                   preferred_element_type=jnp.float32) + bproj_ref[0, :]
    out_ref[0] = (y2d + proj).reshape(H, W, C)


def mona_op(x_nhwc, params):
    B, H, W, C = x_nhwc.shape
    K = 7
    pad = K // 2
    Hp, Wp = H + 2 * pad, W + 2 * pad
    kern = functools.partial(mona_kernel, H=H, W=W, C=C, K=K)
    block_bytes = _nbytes(((1, H, W, C), jnp.float32),
                          ((K, K, C), jnp.float32),
                          ((1, 1, C), jnp.float32),
                          ((C, C), jnp.bfloat16),
                          ((1, C), jnp.float32),
                          ((1, H, W, C), jnp.float32),
                          ((Hp, Wp, C), jnp.float32))
    return pl.pallas_call(
        kern,
        out_shape=jax.ShapeDtypeStruct((B, H, W, C), jnp.float32),
        grid=(B,),
        in_specs=[
            pl.BlockSpec((1, H, W, C), lambda b: (b, 0, 0, 0)),
            pl.BlockSpec((K, K, C), lambda b: (0, 0, 0)),
            pl.BlockSpec((1, 1, C), lambda b: (0, 0, 0)),
            pl.BlockSpec((C, C), lambda b: (0, 0)),
            pl.BlockSpec((1, C), lambda b: (0, 0)),
        ],
        out_specs=pl.BlockSpec((1, H, W, C), lambda b: (b, 0, 0, 0)),
        scratch_shapes=[pltpu.VMEM((Hp, Wp, C), jnp.float32)],
        compiler_params=_cparams(("parallel",), block_bytes),
    )(x_nhwc, params["w_dw"], params["b_dw"], params["w_proj"],
      params["b_proj"])


# --------------------------- LN1 + QKV kernel --------------------------------
def ln_qkv_kernel(x_ref, g_ref, b_ref, w_ref, bias_ref, out_ref):
    xn = _layernorm(x_ref[0], g_ref[0, :], b_ref[0, :])
    qkv = jnp.dot(xn.astype(jnp.bfloat16), w_ref[...],
                  preferred_element_type=jnp.float32) + bias_ref[0, :]
    out_ref[0] = qkv.astype(out_ref.dtype)


def ln_qkv(x0, params, tq):
    B, N, C = x0.shape
    C3 = 3 * C
    block_bytes = _nbytes(((1, tq, C), jnp.float32), ((1, C), jnp.float32),
                          ((1, C), jnp.float32), ((C, C3), jnp.bfloat16),
                          ((1, C3), jnp.float32), ((1, tq, C3), jnp.bfloat16))
    return pl.pallas_call(
        ln_qkv_kernel,
        out_shape=jax.ShapeDtypeStruct((B, N, C3), jnp.bfloat16),
        grid=(B, N // tq),
        in_specs=[
            pl.BlockSpec((1, tq, C), lambda b, i: (b, i, 0)),
            pl.BlockSpec((1, C), lambda b, i: (0, 0)),
            pl.BlockSpec((1, C), lambda b, i: (0, 0)),
            pl.BlockSpec((C, C3), lambda b, i: (0, 0)),
            pl.BlockSpec((1, C3), lambda b, i: (0, 0)),
        ],
        out_specs=pl.BlockSpec((1, tq, C3), lambda b, i: (b, i, 0)),
        compiler_params=_cparams(("parallel", "parallel"), block_bytes),
    )(x0, params["g1"], params["b1"], params["wqkv"], params["bqkv"])


# --------------------------- flash attention kernel --------------------------
def flash_kernel(q_ref, k_ref, v_ref, o_ref, m_sc, l_sc, acc_sc, *, scale):
    ki = pl.program_id(2)

    @pl.when(ki == 0)
    def _():
        m_sc[...] = jnp.full_like(m_sc, -jnp.inf)
        l_sc[...] = jnp.zeros_like(l_sc)
        acc_sc[...] = jnp.zeros_like(acc_sc)

    q = q_ref[0]                                              # (nh, tq, hd) bf16
    k = k_ref[0]                                              # (nh, tk, hd) bf16
    v = v_ref[0]
    # Heads batched into one einsum (no per-head Python loop, no masked
    # sub-lane scratch stores); f32 accumulation on the MXU.
    s = jnp.einsum("hqd,hkd->hqk", q, k,
                   preferred_element_type=jnp.float32) * scale
    m_prev = m_sc[...]
    m_new = jnp.maximum(m_prev, jnp.max(s, axis=-1, keepdims=True))
    alpha = jnp.exp(m_prev - m_new)
    p = jnp.exp(s - m_new)
    l_sc[...] = alpha * l_sc[...] + jnp.sum(p, axis=-1, keepdims=True)
    acc_sc[...] = alpha * acc_sc[...] + jnp.einsum(
        "hqk,hkd->hqd", p.astype(jnp.bfloat16), v,
        preferred_element_type=jnp.float32)
    m_sc[...] = m_new

    @pl.when(ki == pl.num_programs(2) - 1)
    def _():
        o_ref[0] = (acc_sc[...] * pl.reciprocal(l_sc[...], approx=True)
                    ).astype(o_ref.dtype)


def flash_attention(q, k, v, tq, tk):
    B, nh, N, hd = q.shape
    scale = float(hd) ** -0.5
    block_bytes = _nbytes(((1, nh, tq, hd), jnp.bfloat16),
                          ((1, nh, tk, hd), jnp.bfloat16),
                          ((1, nh, tk, hd), jnp.bfloat16),
                          ((1, nh, tq, hd), jnp.bfloat16),
                          ((nh, tq, 1), jnp.float32),
                          ((nh, tq, 1), jnp.float32),
                          ((nh, tq, hd), jnp.float32),
                          ((nh, tq, tk), jnp.float32))
    return pl.pallas_call(
        functools.partial(flash_kernel, scale=scale),
        out_shape=jax.ShapeDtypeStruct((B, nh, N, hd), jnp.bfloat16),
        grid=(B, N // tq, N // tk),
        in_specs=[
            pl.BlockSpec((1, nh, tq, hd), lambda b, qi, ki: (b, 0, qi, 0)),
            pl.BlockSpec((1, nh, tk, hd), lambda b, qi, ki: (b, 0, ki, 0)),
            pl.BlockSpec((1, nh, tk, hd), lambda b, qi, ki: (b, 0, ki, 0)),
        ],
        out_specs=pl.BlockSpec((1, nh, tq, hd),
                               lambda b, qi, ki: (b, 0, qi, 0)),
        scratch_shapes=[
            pltpu.VMEM((nh, tq, 1), jnp.float32),
            pltpu.VMEM((nh, tq, 1), jnp.float32),
            pltpu.VMEM((nh, tq, hd), jnp.float32),
        ],
        compiler_params=_cparams(("parallel", "parallel", "arbitrary"),
                                 block_bytes),
    )(q, k, v)


# --------------------------- out-proj + MLP kernel ---------------------------
def proj_mlp_kernel(x0_ref, attn_ref, wp_ref, bp_ref, g2_ref, b2_ref,
                    w1_ref, bm1_ref, w2_ref, bm2_ref, out_ref):
    x0 = x0_ref[0]
    proj = jnp.dot(attn_ref[0], wp_ref[...],
                   preferred_element_type=jnp.float32) + bp_ref[0, :]
    x = x0 + proj                                             # attn residual
    xn = _layernorm(x, g2_ref[0, :], b2_ref[0, :])
    h = jnp.dot(xn.astype(jnp.bfloat16), w1_ref[...],
                preferred_element_type=jnp.float32) + bm1_ref[0, :]
    h = _gelu_tanh(h)
    mlp = jnp.dot(h.astype(jnp.bfloat16), w2_ref[...],
                  preferred_element_type=jnp.float32) + bm2_ref[0, :]
    out_ref[0] = x + mlp                                      # MLP residual


def proj_mlp(x0, attn, params, tq):
    B, N, C = x0.shape
    hidden = params["w1"].shape[1]
    block_bytes = _nbytes(((1, tq, C), jnp.float32), ((1, tq, C), jnp.bfloat16),
                          ((C, C), jnp.bfloat16), ((1, C), jnp.float32),
                          ((1, C), jnp.float32), ((1, C), jnp.float32),
                          ((C, hidden), jnp.bfloat16),
                          ((1, hidden), jnp.float32),
                          ((hidden, C), jnp.bfloat16), ((1, C), jnp.float32),
                          ((1, tq, C), jnp.float32),
                          ((1, tq, hidden), jnp.float32))
    return pl.pallas_call(
        proj_mlp_kernel,
        out_shape=jax.ShapeDtypeStruct((B, N, C), jnp.float32),
        grid=(B, N // tq),
        in_specs=[
            pl.BlockSpec((1, tq, C), lambda b, i: (b, i, 0)),
            pl.BlockSpec((1, tq, C), lambda b, i: (b, i, 0)),
            pl.BlockSpec((C, C), lambda b, i: (0, 0)),
            pl.BlockSpec((1, C), lambda b, i: (0, 0)),
            pl.BlockSpec((1, C), lambda b, i: (0, 0)),
            pl.BlockSpec((1, C), lambda b, i: (0, 0)),
            pl.BlockSpec((C, hidden), lambda b, i: (0, 0)),
            pl.BlockSpec((1, hidden), lambda b, i: (0, 0)),
            pl.BlockSpec((hidden, C), lambda b, i: (0, 0)),
            pl.BlockSpec((1, C), lambda b, i: (0, 0)),
        ],
        out_specs=pl.BlockSpec((1, tq, C), lambda b, i: (b, i, 0)),
        compiler_params=_cparams(("parallel", "parallel"), block_bytes),
    )(x0, attn, params["wproj_blk"], params["bproj_blk"], params["g2"],
      params["b2"], params["w1"], params["bm1"], params["w2"], params["bm2"])


# --------------------------- Adapter forward ---------------------------------
def adapter_forward(x_nchw, params, num_heads):
    B, C, H, W = x_nchw.shape
    N = H * W
    hd = C // num_heads
    tq = _pick_tile(N)
    tk = _pick_tile(N)

    x = jnp.transpose(x_nchw, (0, 2, 3, 1))                   # NHWC
    # MonaOp, emitted directly in the token layout the block consumes.
    x0 = mona_op(x, params).reshape(B, N, C)                  # (B, N, C) f32

    qkv = ln_qkv(x0, params, tq)                              # (B, N, 3C) bf16
    # Head split done once in XLA (layout plumbing, outside the hot kernels).
    qkv = jnp.transpose(qkv.reshape(B, N, 3, num_heads, hd), (2, 0, 3, 1, 4))
    q, k, v = qkv[0], qkv[1], qkv[2]                          # (B, nh, N, hd)

    attn = flash_attention(q, k, v, tq, tk)                   # (B, nh, N, hd)
    attn = jnp.transpose(attn, (0, 2, 1, 3)).reshape(B, N, C)  # lane-dense C

    out = proj_mlp(x0, attn, params, tq)                      # (B, N, C) f32
    return jnp.transpose(out.reshape(B, H, W, C), (0, 3, 1, 2))  # NCHW


# --------------------------- deterministic params ----------------------------
def init_params(key, C, mlp_ratio=4):
    ks = jax.random.split(key, 16)
    s = 0.02
    bf = jnp.bfloat16

    def nrm(k, shp):
        return jax.random.normal(k, shp, jnp.float32) * s

    # MonaOp depthwise weights, pre-combined (3x3/5x5/7x7 zero-padded + avg).
    w3, w5, w7 = nrm(ks[0], (3, 3, C)), nrm(ks[1], (5, 5, C)), nrm(ks[2], (7, 7, C))
    b3, b5, b7 = nrm(ks[3], (C,)), nrm(ks[4], (C,)), nrm(ks[5], (C,))
    w_dw = (jnp.pad(w3, ((2, 2), (2, 2), (0, 0)))
            + jnp.pad(w5, ((1, 1), (1, 1), (0, 0))) + w7) / 3.0
    b_dw = ((b3 + b5 + b7) / 3.0).reshape(1, 1, C)
    hidden = mlp_ratio * C
    return {
        "w_dw": w_dw,
        "b_dw": b_dw,
        "w_proj": nrm(ks[6], (C, C)).astype(bf),
        "b_proj": nrm(ks[7], (1, C)),
        "g1": jnp.ones((1, C), jnp.float32),
        "b1": jnp.zeros((1, C), jnp.float32),
        "wqkv": nrm(ks[8], (C, 3 * C)).astype(bf),
        "bqkv": nrm(ks[9], (1, 3 * C)),
        "wproj_blk": nrm(ks[10], (C, C)).astype(bf),
        "bproj_blk": nrm(ks[11], (1, C)),
        "g2": jnp.ones((1, C), jnp.float32),
        "b2": jnp.zeros((1, C), jnp.float32),
        "w1": nrm(ks[12], (C, hidden)).astype(bf),
        "bm1": nrm(ks[13], (1, hidden)),
        "w2": nrm(ks[14], (hidden, C)).astype(bf),
        "bm2": nrm(ks[15], (1, C)),
    }


# --------------------------- pure-JAX reference ------------------------------
def adapter_reference(x_nchw, params, num_heads):
    B, C, H, W = x_nchw.shape
    N, hd = H * W, C // num_heads
    bf, f32 = jnp.bfloat16, jnp.float32
    x = jnp.transpose(x_nchw, (0, 2, 3, 1))
    pad = 3
    xpad = jnp.pad(x, ((0, 0), (pad, pad), (pad, pad), (0, 0)))
    acc = jnp.zeros_like(x) + params["b_dw"][0, 0]
    for dy in range(7):
        for dx in range(7):
            acc = acc + xpad[:, dy:dy + H, dx:dx + W, :] * params["w_dw"][dy, dx]
    y = (acc + x).reshape(B, N, C)
    proj = jnp.dot(y.astype(bf), params["w_proj"],
                   preferred_element_type=f32) + params["b_proj"][0]
    x0 = y + proj

    xn = _layernorm(x0, params["g1"][0], params["b1"][0])
    qkv = (jnp.dot(xn.astype(bf), params["wqkv"], preferred_element_type=f32)
           + params["bqkv"][0]).astype(bf)
    qkv = qkv.reshape(B, N, 3, num_heads, hd)
    q = jnp.transpose(qkv[:, :, 0], (0, 2, 1, 3))
    k = jnp.transpose(qkv[:, :, 1], (0, 2, 1, 3))
    v = jnp.transpose(qkv[:, :, 2], (0, 2, 1, 3))
    s = jnp.einsum("bhqd,bhkd->bhqk", q, k,
                   preferred_element_type=f32) * (float(hd) ** -0.5)
    p = jax.nn.softmax(s, axis=-1)
    attn = jnp.einsum("bhqk,bhkd->bhqd", p.astype(bf), v,
                      preferred_element_type=f32).astype(bf)
    attn = jnp.transpose(attn, (0, 2, 1, 3)).reshape(B, N, C)
    x1 = x0 + jnp.dot(attn, params["wproj_blk"],
                      preferred_element_type=f32) + params["bproj_blk"][0]
    xn2 = _layernorm(x1, params["g2"][0], params["b2"][0])
    h = jnp.dot(xn2.astype(bf), params["w1"],
                preferred_element_type=f32) + params["bm1"][0]
    h = _gelu_tanh(h)
    out = x1 + jnp.dot(h.astype(bf), params["w2"],
                       preferred_element_type=f32) + params["bm2"][0]
    return jnp.transpose(out.reshape(B, H, W, C), (0, 3, 1, 2))


if __name__ == "__main__":
    key = jax.random.PRNGKey(0)
    B, C, H, W = 2, 32, 16, 16          # dim = blk.attn.qkv.in_features = 32
    num_heads = 2
    kx, kp = jax.random.split(key)
    x = jax.random.normal(kx, (B, C, H, W), jnp.float32)
    params = init_params(kp, C)

    y = jax.block_until_ready(adapter_forward(x, params, num_heads))
    assert y.shape == (B, C, H, W), y.shape
    assert bool(jnp.all(jnp.isfinite(y)))

    ref = jax.block_until_ready(adapter_reference(x, params, num_heads))
    err = float(jnp.max(jnp.abs(y - ref)))
    assert err < 3e-2, f"max abs err vs reference: {err}"
    print("KERNEL_OK")
</pallas_src>

<mosaic_0001>
module attributes {stable_mosaic.version = 11 : i64} {
  func.func @mona_kernel(%arg0: i32, %arg1: memref<1x16x16x32xf32, #tpu.memory_space<vmem>>, %arg2: memref<7x7x32xf32, #tpu.memory_space<vmem>>, %arg3: memref<1x1x32xf32, #tpu.memory_space<vmem>>, %arg4: memref<32x32xbf16, #tpu.memory_space<vmem>>, %arg5: memref<1x32xf32, #tpu.memory_space<vmem>>, %arg6: memref<1x16x16x32xf32, #tpu.memory_space<vmem>>, %arg7: memref<22x22x32xf32, #tpu.memory_space<vmem>>) attributes {dimension_semantics = [#tpu.dimension_semantics<parallel>], iteration_bounds = array<i64: 2>, scalar_prefetch = 0 : i64, scratch_operands = 1 : i64, tpu.core_type = #tpu.core_type<tc>, window_params = [{transform_indices = @transform_0, window_bounds = array<i64: 1, 16, 16, 32>}, {pipeline_mode = #tpu.pipeline_mode<synchronous>, transform_indices = @transform_1, window_bounds = array<i64: 7, 7, 32>}, {pipeline_mode = #tpu.pipeline_mode<synchronous>, transform_indices = @transform_2, window_bounds = array<i64: 1, 1, 32>}, {pipeline_mode = #tpu.pipeline_mode<synchronous>, transform_indices = @transform_3, window_bounds = array<i64: 32, 32>}, {pipeline_mode = #tpu.pipeline_mode<synchronous>, transform_indices = @transform_4, window_bounds = array<i64: 1, 32>}, {transform_indices = @transform_5, window_bounds = array<i64: 1, 16, 16, 32>}]} {
    %cst = arith.constant 0.000000e+00 : f32
    %0 = vector.broadcast %cst : f32 to vector<22x22x32xf32>
    %c0 = arith.constant 0 : index
    %c0_0 = arith.constant 0 : index
    %c0_1 = arith.constant 0 : index
    %1 = vector.load %arg7[%c0, %c0_0, %c0_1] : memref<22x22x32xf32, #tpu.memory_space<vmem>>, vector<22x22x32xf32>
    tpu.vector_store %arg7[%c0, %c0_0, %c0_1], %0 {strides = array<i32>} : memref<22x22x32xf32, #tpu.memory_space<vmem>>, vector<22x22x32xf32>,
    %c0_2 = arith.constant 0 : index
    %c0_3 = arith.constant 0 : index
    %c0_4 = arith.constant 0 : index
    %c0_5 = arith.constant 0 : index
    %2 = vector.load %arg1[%c0_2, %c0_3, %c0_4, %c0_5] : memref<1x16x16x32xf32, #tpu.memory_space<vmem>>, vector<1x16x16x32xf32>
    %3 = vector.shape_cast %2 : vector<1x16x16x32xf32> to vector<16x16x32xf32>
    %c3 = arith.constant 3 : index
    %c3_6 = arith.constant 3 : index
    %c0_7 = arith.constant 0 : index
    %4 = vector.load %arg7[%c3, %c3_6, %c0_7] : memref<22x22x32xf32, #tpu.memory_space<vmem>>, vector<16x16x32xf32>
    tpu.vector_store %arg7[%c3, %c3_6, %c0_7], %3 {strides = array<i32>} : memref<22x22x32xf32, #tpu.memory_space<vmem>>, vector<16x16x32xf32>,
    %c0_8 = arith.constant 0 : index
    %c0_9 = arith.constant 0 : index
    %c0_10 = arith.constant 0 : index
    %5 = vector.load %arg2[%c0_8, %c0_9, %c0_10] : memref<7x7x32xf32, #tpu.memory_space<vmem>>, vector<7x7x32xf32>
    %c0_11 = arith.constant 0 : index
    %c0_12 = arith.constant 0 : index
    %c0_13 = arith.constant 0 : index
    %6 = vector.load %arg3[%c0_11, %c0_12, %c0_13] : memref<1x1x32xf32, #tpu.memory_space<vmem>>, vector<1x1x32xf32>
    %7 = vector.shape_cast %6 : vector<1x1x32xf32> to vector<32xf32>
    %8 = vector.shape_cast %7 : vector<32xf32> to vector<1x1x32xf32>
    %9 = vector.broadcast %8 : vector<1x1x32xf32> to vector<16x16x32xf32>
    %c0_14 = arith.constant 0 : index
    %c0_15 = arith.constant 0 : index
    %c0_16 = arith.constant 0 : index
    %10 = vector.load %arg7[%c0_14, %c0_15, %c0_16] : memref<22x22x32xf32, #tpu.memory_space<vmem>>, vector<16x22x32xf32>
    %11 = vector.extract_strided_slice %10 {offsets = [0, 0, 0], sizes = [16, 16, 32], strides = [1, 1, 1]} : vector<16x22x32xf32> to vector<16x16x32xf32>
    %12 = vector.extract_strided_slice %5 {offsets = [0, 0, 0], sizes = [1, 1, 32], strides = [1, 1, 1]} : vector<7x7x32xf32> to vector<1x1x32xf32>
    %13 = vector.shape_cast %12 : vector<1x1x32xf32> to vector<32xf32>
    %14 = vector.shape_cast %13 : vector<32xf32> to vector<1x1x32xf32>
    %15 = vector.broadcast %14 : vector<1x1x32xf32> to vector<16x16x32xf32>
    %16 = arith.mulf %11, %15 : vector<16x16x32xf32>
    %17 = arith.addf %9, %16 : vector<16x16x32xf32>
    %18 = vector.extract_strided_slice %10 {offsets = [0, 1, 0], sizes = [16, 16, 32], strides = [1, 1, 1]} : vector<16x22x32xf32> to vector<16x16x32xf32>
    %19 = vector.extract_strided_slice %5 {offsets = [0, 1, 0], sizes = [1, 1, 32], strides = [1, 1, 1]} : vector<7x7x32xf32> to vector<1x1x32xf32>
    %20 = vector.shape_cast %19 : vector<1x1x32xf32> to vector<32xf32>
    %21 = vector.shape_cast %20 : vector<32xf32> to vector<1x1x32xf32>
    %22 = vector.broadcast %21 : vector<1x1x32xf32> to vector<16x16x32xf32>
    %23 = arith.mulf %18, %22 : vector<16x16x32xf32>
    %24 = arith.addf %17, %23 : vector<16x16x32xf32>
    %25 = vector.extract_strided_slice %10 {offsets = [0, 2, 0], sizes = [16, 16, 32], strides = [1, 1, 1]} : vector<16x22x32xf32> to vector<16x16x32xf32>
    %26 = vector.extract_strided_slice %5 {offsets = [0, 2, 0], sizes = [1, 1, 32], strides = [1, 1, 1]} : vector<7x7x32xf32> to vector<1x1x32xf32>
    %27 = vector.shape_cast %26 : vector<1x1x32xf32> to vector<32xf32>
    %28 = vector.shape_cast %27 : vector<32xf32> to vector<1x1x32xf32>
    %29 = vector.broadcast %28 : vector<1x1x32xf32> to vector<16x16x32xf32>
    %30 = arith.mulf %25, %29 : vector<16x16x32xf32>
    %31 = arith.addf %24, %30 : vector<16x16x32xf32>
    %32 = vector.extract_strided_slice %10 {offsets = [0, 3, 0], sizes = [16, 16, 32], strides = [1, 1, 1]} : vector<16x22x32xf32> to vector<16x16x32xf32>
    %33 = vector.extract_strided_slice %5 {offsets = [0, 3, 0], sizes = [1, 1, 32], strides = [1, 1, 1]} : vector<7x7x32xf32> to vector<1x1x32xf32>
    %34 = vector.shape_cast %33 : vector<1x1x32xf32> to vector<32xf32>
    %35 = vector.shape_cast %34 : vector<32xf32> to vector<1x1x32xf32>
    %36 = vector.broadcast %35 : vector<1x1x32xf32> to vector<16x16x32xf32>
    %37 = arith.mulf %32, %36 : vector<16x16x32xf32>
    %38 = arith.addf %31, %37 : vector<16x16x32xf32>
    %39 = vector.extract_strided_slice %10 {offsets = [0, 4, 0], sizes = [16, 16, 32], strides = [1, 1, 1]} : vector<16x22x32xf32> to vector<16x16x32xf32>
    %40 = vector.extract_strided_slice %5 {offsets = [0, 4, 0], sizes = [1, 1, 32], strides = [1, 1, 1]} : vector<7x7x32xf32> to vector<1x1x32xf32>
    %41 = vector.shape_cast %40 : vector<1x1x32xf32> to vector<32xf32>
    %42 = vector.shape_cast %41 : vector<32xf32> to vector<1x1x32xf32>
    %43 = vector.broadcast %42 : vector<1x1x32xf32> to vector<16x16x32xf32>
    %44 = arith.mulf %39, %43 : vector<16x16x32xf32>
    %45 = arith.addf %38, %44 : vector<16x16x32xf32>
    %46 = vector.extract_strided_slice %10 {offsets = [0, 5, 0], sizes = [16, 16, 32], strides = [1, 1, 1]} : vector<16x22x32xf32> to vector<16x16x32xf32>
    %47 = vector.extract_strided_slice %5 {offsets = [0, 5, 0], sizes = [1, 1, 32], strides = [1, 1, 1]} : vector<7x7x32xf32> to vector<1x1x32xf32>
    %48 = vector.shape_cast %47 : vector<1x1x32xf32> to vector<32xf32>
    %49 = vector.shape_cast %48 : vector<32xf32> to vector<1x1x32xf32>
    %50 = vector.broadcast %49 : vector<1x1x32xf32> to vector<16x16x32xf32>
    %51 = arith.mulf %46, %50 : vector<16x16x32xf32>
    %52 = arith.addf %45, %51 : vector<16x16x32xf32>
    %53 = vector.extract_strided_slice %10 {offsets = [0, 6, 0], sizes = [16, 16, 32], strides = [1, 1, 1]} : vector<16x22x32xf32> to vector<16x16x32xf32>
    %54 = vector.extract_strided_slice %5 {offsets = [0, 6, 0], sizes = [1, 1, 32], strides = [1, 1, 1]} : vector<7x7x32xf32> to vector<1x1x32xf32>
    %55 = vector.shape_cast %54 : vector<1x1x32xf32> to vector<32xf32>
    %56 = vector.shape_cast %55 : vector<32xf32> to vector<1x1x32xf32>
    %57 = vector.broadcast %56 : vector<1x1x32xf32> to vector<16x16x32xf32>
    %58 = arith.mulf %53, %57 : vector<16x16x32xf32>
    %59 = arith.addf %52, %58 : vector<16x16x32xf32>
    %c1 = arith.constant 1 : index
    %c0_17 = arith.constant 0 : index
    %c0_18 = arith.constant 0 : index
    %60 = vector.load %arg7[%c1, %c0_17, %c0_18] : memref<22x22x32xf32, #tpu.memory_space<vmem>>, vector<16x22x32xf32>
    %61 = vector.extract_strided_slice %60 {offsets = [0, 0, 0], sizes = [16, 16, 32], strides = [1, 1, 1]} : vector<16x22x32xf32> to vector<16x16x32xf32>
    %62 = vector.extract_strided_slice %5 {offsets = [1, 0, 0], sizes = [1, 1, 32], strides = [1, 1, 1]} : vector<7x7x32xf32> to vector<1x1x32xf32>
    %63 = vector.shape_cast %62 : vector<1x1x32xf32> to vector<32xf32>
    %64 = vector.shape_cast %63 : vector<32xf32> to vector<1x1x32xf32>
    %65 = vector.broadcast %64 : vector<1x1x32xf32> to vector<16x16x32xf32>
    %66 = arith.mulf %61, %65 : vector<16x16x32xf32>
    %67 = arith.addf %59, %66 : vector<16x16x32xf32>
    %68 = vector.extract_strided_slice %60 {offsets = [0, 1, 0], sizes = [16, 16, 32], strides = [1, 1, 1]} : vector<16x22x32xf32> to vector<16x16x32xf32>
    %69 = vector.extract_strided_slice %5 {offsets = [1, 1, 0], sizes = [1, 1, 32], strides = [1, 1, 1]} : vector<7x7x32xf32> to vector<1x1x32xf32>
    %70 = vector.shape_cast %69 : vector<1x1x32xf32> to vector<32xf32>
    %71 = vector.shape_cast %70 : vector<32xf32> to vector<1x1x32xf32>
    %72 = vector.broadcast %71 : vector<1x1x32xf32> to vector<16x16x32xf32>
    %73 = arith.mulf %68, %72 : vector<16x16x32xf32>
    %74 = arith.addf %67, %73 : vector<16x16x32xf32>
    %75 = vector.extract_strided_slice %60 {offsets = [0, 2, 0], sizes = [16, 16, 32], strides = [1, 1, 1]} : vector<16x22x32xf32> to vector<16x16x32xf32>
    %76 = vector.extract_strided_slice %5 {offsets = [1, 2, 0], sizes = [1, 1, 32], strides = [1, 1, 1]} : vector<7x7x32xf32> to vector<1x1x32xf32>
    %77 = vector.shape_cast %76 : vector<1x1x32xf32> to vector<32xf32>
    %78 = vector.shape_cast %77 : vector<32xf32> to vector<1x1x32xf32>
    %79 = vector.broadcast %78 : vector<1x1x32xf32> to vector<16x16x32xf32>
    %80 = arith.mulf %75, %79 : vector<16x16x32xf32>
    %81 = arith.addf %74, %80 : vector<16x16x32xf32>
    %82 = vector.extract_strided_slice %60 {offsets = [0, 3, 0], sizes = [16, 16, 32], strides = [1, 1, 1]} : vector<16x22x32xf32> to vector<16x16x32xf32>
    %83 = vector.extract_strided_slice %5 {offsets = [1, 3, 0], sizes = [1, 1, 32], strides = [1, 1, 1]} : vector<7x7x32xf32> to vector<1x1x32xf32>
    %84 = vector.shape_cast %83 : vector<1x1x32xf32> to vector<32xf32>
    %85 = vector.shape_cast %84 : vector<32xf32> to vector<1x1x32xf32>
    %86 = vector.broadcast %85 : vector<1x1x32xf32> to vector<16x16x32xf32>
    %87 = arith.mulf %82, %86 : vector<16x16x32xf32>
    %88 = arith.addf %81, %87 : vector<16x16x32xf32>
    %89 = vector.extract_strided_slice %60 {offsets = [0, 4, 0], sizes = [16, 16, 32], strides = [1, 1, 1]} : vector<16x22x32xf32> to vector<16x16x32xf32>
    %90 = vector.extract_strided_slice %5 {offsets = [1, 4, 0], sizes = [1, 1, 32], strides = [1, 1, 1]} : vector<7x7x32xf32> to vector<1x1x32xf32>
    %91 = vector.shape_cast %90 : vector<1x1x32xf32> to vector<32xf32>
    %92 = vector.shape_cast %91 : vector<32xf32> to vector<1x1x32xf32>
    %93 = vector.broadcast %92 : vector<1x1x32xf32> to vector<16x16x32xf32>
    %94 = arith.mulf %89, %93 : vector<16x16x32xf32>
    %95 = arith.addf %88, %94 : vector<16x16x32xf32>
    %96 = vector.extract_strided_slice %60 {offsets = [0, 5, 0], sizes = [16, 16, 32], strides = [1, 1, 1]} : vector<16x22x32xf32> to vector<16x16x32xf32>
    %97 = vector.extract_strided_slice %5 {offsets = [1, 5, 0], sizes = [1, 1, 32], strides = [1, 1, 1]} : vector<7x7x32xf32> to vector<1x1x32xf32>
    %98 = vector.shape_cast %97 : vector<1x1x32xf32> to vector<32xf32>
    %99 = vector.shape_cast %98 : vector<32xf32> to vector<1x1x32xf32>
    %100 = vector.broadcast %99 : vector<1x1x32xf32> to vector<16x16x32xf32>
    %101 = arith.mulf %96, %100 : vector<16x16x32xf32>
    %102 = arith.addf %95, %101 : vector<16x16x32xf32>
    %103 = vector.extract_strided_slice %60 {offsets = [0, 6, 0], sizes = [16, 16, 32], strides = [1, 1, 1]} : vector<16x22x32xf32> to vector<16x16x32xf32>
    %104 = vector.extract_strided_slice %5 {offsets = [1, 6, 0], sizes = [1, 1, 32], strides = [1, 1, 1]} : vector<7x7x32xf32> to vector<1x1x32xf32>
    %105 = vector.shape_cast %104 : vector<1x1x32xf32> to vector<32xf32>
    %106 = vector.shape_cast %105 : vector<32xf32> to vector<1x1x32xf32>
    %107 = vector.broadcast %106 : vector<1x1x32xf32> to vector<16x16x32xf32>
    %108 = arith.mulf %103, %107 : vector<16x16x32xf32>
    %109 = arith.addf %102, %108 : vector<16x16x32xf32>
    %c2 = arith.constant 2 : index
    %c0_19 = arith.constant 0 : index
    %c0_20 = arith.constant 0 : index
    %110 = vector.load %arg7[%c2, %c0_19, %c0_20] : memref<22x22x32xf32, #tpu.memory_space<vmem>>, vector<16x22x32xf32>
    %111 = vector.extract_strided_slice %110 {offsets = [0, 0, 0], sizes = [16, 16, 32], strides = [1, 1, 1]} : vector<16x22x32xf32> to vector<16x16x32xf32>
    %112 = vector.extract_strided_slice %5 {offsets = [2, 0, 0], sizes = [1, 1, 32], strides = [1, 1, 1]} : vector<7x7x32xf32> to vector<1x1x32xf32>
    %113 = vector.shape_cast %112 : vector<1x1x32xf32> to vector<32xf32>
    %114 = vector.shape_cast %113 : vector<32xf32> to vector<1x1x32xf32>
    %115 = vector.broadcast %114 : vector<1x1x32xf32> to vector<16x16x32xf32>
    %116 = arith.mulf %111, %115 : vector<16x16x32xf32>
    %117 = arith.addf %109, %116 : vector<16x16x32xf32>
    %118 = vector.extract_strided_slice %110 {offsets = [0, 1, 0], sizes = [16, 16, 32], strides = [1, 1, 1]} : vector<16x22x32xf32> to vector<16x16x32xf32>
    %119 = vector.extract_strided_slice %5 {offsets = [2, 1, 0], sizes = [1, 1, 32], strides = [1, 1, 1]} : vector<7x7x32xf32> to vector<1x1x32xf32>
    %120 = vector.shape_cast %119 : vector<1x1x32xf32> to vector<32xf32>
    %121 = vector.shape_cast %120 : vector<32xf32> to vector<1x1x32xf32>
    %122 = vector.broadcast %121 : vector<1x1x32xf32> to vector<16x16x32xf32>
    %123 = arith.mulf %118, %122 : vector<16x16x32xf32>
    %124 = arith.addf %117, %123 : vector<16x16x32xf32>
    %125 = vector.extract_strided_slice %110 {offsets = [0, 2, 0], sizes = [16, 16, 32], strides = [1, 1, 1]} : vector<16x22x32xf32> to vector<16x16x32xf32>
    %126 = vector.extract_strided_slice %5 {offsets = [2, 2, 0], sizes = [1, 1, 32], strides = [1, 1, 1]} : vector<7x7x32xf32> to vector<1x1x32xf32>
    %127 = vector.shape_cast %126 : vector<1x1x32xf32> to vector<32xf32>
    %128 = vector.shape_cast %127 : vector<32xf32> to vector<1x1x32xf32>
    %129 = vector.broadcast %128 : vector<1x1x32xf32> to vector<16x16x32xf32>
    %130 = arith.mulf %125, %129 : vector<16x16x32xf32>
    %131 = arith.addf %124, %130 : vector<16x16x32xf32>
    %132 = vector.extract_strided_slice %110 {offsets = [0, 3, 0], sizes = [16, 16, 32], strides = [1, 1, 1]} : vector<16x22x32xf32> to vector<16x16x32xf32>
    %133 = vector.extract_strided_slice %5 {offsets = [2, 3, 0], sizes = [1, 1, 32], strides = [1, 1, 1]} : vector<7x7x32xf32> to vector<1x1x32xf32>
    %134 = vector.shape_cast %133 : vector<1x1x32xf32> to vector<32xf32>
    %135 = vector.shape_cast %134 : vector<32xf32> to vector<1x1x32xf32>
    %136 = vector.broadcast %135 : vector<1x1x32xf32> to vector<16x16x32xf32>
    %137 = arith.mulf %132, %136 : vector<16x16x32xf32>
    %138 = arith.addf %131, %137 : vector<16x16x32xf32>
    %139 = vector.extract_strided_slice %110 {offsets = [0, 4, 0], sizes = [16, 16, 32], strides = [1, 1, 1]} : vector<16x22x32xf32> to vector<16x16x32xf32>
    %140 = vector.extract_strided_slice %5 {offsets = [2, 4, 0], sizes = [1, 1, 32], strides = [1, 1, 1]} : vector<7x7x32xf32> to vector<1x1x32xf32>
    %141 = vector.shape_cast %140 : vector<1x1x32xf32> to vector<32xf32>
    %142 = vector.shape_cast %141 : vector<32xf32> to vector<1x1x32xf32>
    %143 = vector.broadcast %142 : vector<1x1x32xf32> to vector<16x16x32xf32>
    %144 = arith.mulf %139, %143 : vector<16x16x32xf32>
    %145 = arith.addf %138, %144 : vector<16x16x32xf32>
    %146 = vector.extract_strided_slice %110 {offsets = [0, 5, 0], sizes = [16, 16, 32], strides = [1, 1, 1]} : vector<16x22x32xf32> to vector<16x16x32xf32>
    %147 = vector.extract_strided_slice %5 {offsets = [2, 5, 0], sizes = [1, 1, 32], strides = [1, 1, 1]} : vector<7x7x32xf32> to vector<1x1x32xf32>
    %148 = vector.shape_cast %147 : vector<1x1x32xf32> to vector<32xf32>
    %149 = vector.shape_cast %148 : vector<32xf32> to vector<1x1x32xf32>
    %150 = vector.broadcast %149 : vector<1x1x32xf32> to vector<16x16x32xf32>
    %151 = arith.mulf %146, %150 : vector<16x16x32xf32>
    %152 = arith.addf %145, %151 : vector<16x16x32xf32>
    %153 = vector.extract_strided_slice %110 {offsets = [0, 6, 0], sizes = [16, 16, 32], strides = [1, 1, 1]} : vector<16x22x32xf32> to vector<16x16x32xf32>
    %154 = vector.extract_strided_slice %5 {offsets = [2, 6, 0], sizes = [1, 1, 32], strides = [1, 1, 1]} : vector<7x7x32xf32> to vector<1x1x32xf32>
    %155 = vector.shape_cast %154 : vector<1x1x32xf32> to vector<32xf32>
    %156 = vector.shape_cast %155 : vector<32xf32> to vector<1x1x32xf32>
    %157 = vector.broadcast %156 : vector<1x1x32xf32> to vector<16x16x32xf32>
    %158 = arith.mulf %153, %157 : vector<16x16x32xf32>
    %159 = arith.addf %152, %158 : vector<16x16x32xf32>
    %c3_21 = arith.constant 3 : index
    %c0_22 = arith.constant 0 : index
    %c0_23 = arith.constant 0 : index
    %160 = vector.load %arg7[%c3_21, %c0_22, %c0_23] : memref<22x22x32xf32, #tpu.memory_space<vmem>>, vector<16x22x32xf32>
    %161 = vector.extract_strided_slice %160 {offsets = [0, 0, 0], sizes = [16, 16, 32], strides = [1, 1, 1]} : vector<16x22x32xf32> to vector<16x16x32xf32>
    %162 = vector.extract_strided_slice %5 {offsets = [3, 0, 0], sizes = [1, 1, 32], strides = [1, 1, 1]} : vector<7x7x32xf32> to vector<1x1x32xf32>
    %163 = vector.shape_cast %162 : vector<1x1x32xf32> to vector<32xf32>
    %164 = vector.shape_cast %163 : vector<32xf32> to vector<1x1x32xf32>
    %165 = vector.broadcast %164 : vector<1x1x32xf32> to vector<16x16x32xf32>
    %166 = arith.mulf %161, %165 : vector<16x16x32xf32>
    %167 = arith.addf %159, %166 : vector<16x16x32xf32>
    %168 = vector.extract_strided_slice %160 {offsets = [0, 1, 0], sizes = [16, 16, 32], strides = [1, 1, 1]} : vector<16x22x32xf32> to vector<16x16x32xf32>
    %169 = vector.extract_strided_slice %5 {offsets = [3, 1, 0], sizes = [1, 1, 32], strides = [1, 1, 1]} : vector<7x7x32xf32> to vector<1x1x32xf32>
    %170 = vector.shape_cast %169 : vector<1x1x32xf32> to vector<32xf32>
    %171 = vector.shape_cast %170 : vector<32xf32> to vector<1x1x32xf32>
    %172 = vector.broadcast %171 : vector<1x1x32xf32> to vector<16x16x32xf32>
    %173 = arith.mulf %168, %172 : vector<16x16x32xf32>
    %174 = arith.addf %167, %173 : vector<16x16x32xf32>
    %175 = vector.extract_strided_slice %160 {offsets = [0, 2, 0], sizes = [16, 16, 32], strides = [1, 1, 1]} : vector<16x22x32xf32> to vector<16x16x32xf32>
    %176 = vector.extract_strided_slice %5 {offsets = [3, 2, 0], sizes = [1, 1, 32], strides = [1, 1, 1]} : vector<7x7x32xf32> to vector<1x1x32xf32>
    %177 = vector.shape_cast %176 : vector<1x1x32xf32> to vector<32xf32>
    %178 = vector.shape_cast %177 : vector<32xf32> to vector<1x1x32xf32>
    %179 = vector.broadcast %178 : vector<1x1x32xf32> to vector<16x16x32xf32>
    %180 = arith.mulf %175, %179 : vector<16x16x32xf32>
    %181 = arith.addf %174, %180 : vector<16x16x32xf32>
    %182 = vector.extract_strided_slice %160 {offsets = [0, 3, 0], sizes = [16, 16, 32], strides = [1, 1, 1]} : vector<16x22x32xf32> to vector<16x16x32xf32>
    %183 = vector.extract_strided_slice %5 {offsets = [3, 3, 0], sizes = [1, 1, 32], strides = [1, 1, 1]} : vector<7x7x32xf32> to vector<1x1x32xf32>
    %184 = vector.shape_cast %183 : vector<1x1x32xf32> to vector<32xf32>
    %185 = vector.shape_cast %184 : vector<32xf32> to vector<1x1x32xf32>
    %186 = vector.broadcast %185 : vector<1x1x32xf32> to vector<16x16x32xf32>
    %187 = arith.mulf %182, %186 : vector<16x16x32xf32>
    %188 = arith.addf %181, %187 : vector<16x16x32xf32>
    %189 = vector.extract_strided_slice %160 {offsets = [0, 4, 0], sizes = [16, 16, 32], strides = [1, 1, 1]} : vector<16x22x32xf32> to vector<16x16x32xf32>
    %190 = vector.extract_strided_slice %5 {offsets = [3, 4, 0], sizes = [1, 1, 32], strides = [1, 1, 1]} : vector<7x7x32xf32> to vector<1x1x32xf32>
    %191 = vector.shape_cast %190 : vector<1x1x32xf32> to vector<32xf32>
    %192 = vector.shape_cast %191 : vector<32xf32> to vector<1x1x32xf32>
    %193 = vector.broadcast %192 : vector<1x1x32xf32> to vector<16x16x32xf32>
    %194 = arith.mulf %189, %193 : vector<16x16x32xf32>
    %195 = arith.addf %188, %194 : vector<16x16x32xf32>
    %196 = vector.extract_strided_slice %160 {offsets = [0, 5, 0], sizes = [16, 16, 32], strides = [1, 1, 1]} : vector<16x22x32xf32> to vector<16x16x32xf32>
    %197 = vector.extract_strided_slice %5 {offsets = [3, 5, 0], sizes = [1, 1, 32], strides = [1, 1, 1]} : vector<7x7x32xf32> to vector<1x1x32xf32>
    %198 = vector.shape_cast %197 : vector<1x1x32xf32> to vector<32xf32>
    %199 = vector.shape_cast %198 : vector<32xf32> to vector<1x1x32xf32>
    %200 = vector.broadcast %199 : vector<1x1x32xf32> to vector<16x16x32xf32>
    %201 = arith.mulf %196, %200 : vector<16x16x32xf32>
    %202 = arith.addf %195, %201 : vector<16x16x32xf32>
    %203 = vector.extract_strided_slice %160 {offsets = [0, 6, 0], sizes = [16, 16, 32], strides = [1, 1, 1]} : vector<16x22x32xf32> to vector<16x16x32xf32>
    %204 = vector.extract_strided_slice %5 {offsets = [3, 6, 0], sizes = [1, 1, 32], strides = [1, 1, 1]} : vector<7x7x32xf32> to vector<1x1x32xf32>
    %205 = vector.shape_cast %204 : vector<1x1x32xf32> to vector<32xf32>
    %206 = vector.shape_cast %205 : vector<32xf32> to vector<1x1x32xf32>
    %207 = vector.broadcast %206 : vector<1x1x32xf32> to vector<16x16x32xf32>
    %208 = arith.mulf %203, %207 : vector<16x16x32xf32>
    %209 = arith.addf %202, %208 : vector<16x16x32xf32>
    %c4 = arith.constant 4 : index
    %c0_24 = arith.constant 0 : index
    %c0_25 = arith.constant 0 : index
    %210 = vector.load %arg7[%c4, %c0_24, %c0_25] : memref<22x22x32xf32, #tpu.memory_space<vmem>>, vector<16x22x32xf32>
    %211 = vector.extract_strided_slice %210 {offsets = [0, 0, 0], sizes = [16, 16, 32], strides = [1, 1, 1]} : vector<16x22x32xf32> to vector<16x16x32xf32>
    %212 = vector.extract_strided_slice %5 {offsets = [4, 0, 0], sizes = [1, 1, 32], strides = [1, 1, 1]} : vector<7x7x32xf32> to vector<1x1x32xf32>
    %213 = vector.shape_cast %212 : vector<1x1x32xf32> to vector<32xf32>
    %214 = vector.shape_cast %213 : vector<32xf32> to vector<1x1x32xf32>
    %215 = vector.broadcast %214 : vector<1x1x32xf32> to vector<16x16x32xf32>
    %216 = arith.mulf %211, %215 : vector<16x16x32xf32>
    %217 = arith.addf %209, %216 : vector<16x16x32xf32>
    %218 = vector.extract_strided_slice %210 {offsets = [0, 1, 0], sizes = [16, 16, 32], strides = [1, 1, 1]} : vector<16x22x32xf32> to vector<16x16x32xf32>
    %219 = vector.extract_strided_slice %5 {offsets = [4, 1, 0], sizes = [1, 1, 32], strides = [1, 1, 1]} : vector<7x7x32xf32> to vector<1x1x32xf32>
    %220 = vector.shape_cast %219 : vector<1x1x32xf32> to vector<32xf32>
    %221 = vector.shape_cast %220 : vector<32xf32> to vector<1x1x32xf32>
    %222 = vector.broadcast %221 : vector<1x1x32xf32> to vector<16x16x32xf32>
    %223 = arith.mulf %218, %222 : vector<16x16x32xf32>
    %224 = arith.addf %217, %223 : vector<16x16x32xf32>
    %225 = vector.extract_strided_slice %210 {offsets = [0, 2, 0], sizes = [16, 16, 32], strides = [1, 1, 1]} : vector<16x22x32xf32> to vector<16x16x32xf32>
    %226 = vector.extract_strided_slice %5 {offsets = [4, 2, 0], sizes = [1, 1, 32], strides = [1, 1, 1]} : vector<7x7x32xf32> to vector<1x1x32xf32>
    %227 = vector.shape_cast %226 : vector<1x1x32xf32> to vector<32xf32>
    %228 = vector.shape_cast %227 : vector<32xf32> to vector<1x1x32xf32>
    %229 = vector.broadcast %228 : vector<1x1x32xf32> to vector<16x16x32xf32>
    %230 = arith.mulf %225, %229 : vector<16x16x32xf32>
    %231 = arith.addf %224, %230 : vector<16x16x32xf32>
    %232 = vector.extract_strided_slice %210 {offsets = [0, 3, 0], sizes = [16, 16, 32], strides = [1, 1, 1]} : vector<16x22x32xf32> to vector<16x16x32xf32>
    %233 = vector.extract_strided_slice %5 {offsets = [4, 3, 0], sizes = [1, 1, 32], strides = [1, 1, 1]} : vector<7x7x32xf32> to vector<1x1x32xf32>
    %234 = vector.shape_cast %233 : vector<1x1x32xf32> to vector<32xf32>
    %235 = vector.shape_cast %234 : vector<32xf32> to vector<1x1x32xf32>
    %236 = vector.broadcast %235 : vector<1x1x32xf32> to vector<16x16x32xf32>
    %237 = arith.mulf %232, %236 : vector<16x16x32xf32>
    %238 = arith.addf %231, %237 : vector<16x16x32xf32>
    %239 = vector.extract_strided_slice %210 {offsets = [0, 4, 0], sizes = [16, 16, 32], strides = [1, 1, 1]} : vector<16x22x32xf32> to vector<16x16x32xf32>
    %240 = vector.extract_strided_slice %5 {offsets = [4, 4, 0], sizes = [1, 1, 32], strides = [1, 1, 1]} : vector<7x7x32xf32> to vector<1x1x32xf32>
    %241 = vector.shape_cast %240 : vector<1x1x32xf32> to vector<32xf32>
    %242 = vector.shape_cast %241 : vector<32xf32> to vector<1x1x32xf32>
    %243 = vector.broadcast %242 : vector<1x1x32xf32> to vector<16x16x32xf32>
    %244 = arith.mulf %239, %243 : vector<16x16x32xf32>
    %245 = arith.addf %238, %244 : vector<16x16x32xf32>
    %246 = vector.extract_strided_slice %210 {offsets = [0, 5, 0], sizes = [16, 16, 32], strides = [1, 1, 1]} : vector<16x22x32xf32> to vector<16x16x32xf32>
    %247 = vector.extract_strided_slice %5 {offsets = [4, 5, 0], sizes = [1, 1, 32], strides = [1, 1, 1]} : vector<7x7x32xf32> to vector<1x1x32xf32>
    %248 = vector.shape_cast %247 : vector<1x1x32xf32> to vector<32xf32>
    %249 = vector.shape_cast %248 : vector<32xf32> to vector<1x1x32xf32>
    %250 = vector.broadcast %249 : vector<1x1x32xf32> to vector<16x16x32xf32>
    %251 = arith.mulf %246, %250 : vector<16x16x32xf32>
    %252 = arith.addf %245, %251 : vector<16x16x32xf32>
    %253 = vector.extract_strided_slice %210 {offsets = [0, 6, 0], sizes = [16, 16, 32], strides = [1, 1, 1]} : vector<16x22x32xf32> to vector<16x16x32xf32>
    %254 = vector.extract_strided_slice %5 {offsets = [4, 6, 0], sizes = [1, 1, 32], strides = [1, 1, 1]} : vector<7x7x32xf32> to vector<1x1x32xf32>
    %255 = vector.shape_cast %254 : vector<1x1x32xf32> to vector<32xf32>
    %256 = vector.shape_cast %255 : vector<32xf32> to vector<1x1x32xf32>
    %257 = vector.broadcast %256 : vector<1x1x32xf32> to vector<16x16x32xf32>
    %258 = arith.mulf %253, %257 : vector<16x16x32xf32>
    %259 = arith.addf %252, %258 : vector<16x16x32xf32>
    %c5 = arith.constant 5 : index
    %c0_26 = arith.constant 0 : index
    %c0_27 = arith.constant 0 : index
    %260 = vector.load %arg7[%c5, %c0_26, %c0_27] : memref<22x22x32xf32, #tpu.memory_space<vmem>>, vector<16x22x32xf32>
    %261 = vector.extract_strided_slice %260 {offsets = [0, 0, 0], sizes = [16, 16, 32], strides = [1, 1, 1]} : vector<16x22x32xf32> to vector<16x16x32xf32>
    %262 = vector.extract_strided_slice %5 {offsets = [5, 0, 0], sizes = [1, 1, 32], strides = [1, 1, 1]} : vector<7x7x32xf32> to vector<1x1x32xf32>
    %263 = vector.shape_cast %262 : vector<1x1x32xf32> to vector<32xf32>
    %264 = vector.shape_cast %263 : vector<32xf32> to vector<1x1x32xf32>
    %265 = vector.broadcast %264 : vector<1x1x32xf32> to vector<16x16x32xf32>
    %266 = arith.mulf %261, %265 : vector<16x16x32xf32>
    %267 = arith.addf %259, %266 : vector<16x16x32xf32>
    %268 = vector.extract_strided_slice %260 {offsets = [0, 1, 0], sizes = [16, 16, 32], strides = [1, 1, 1]} : vector<16x22x32xf32> to vector<16x16x32xf32>
    %269 = vector.extract_strided_slice %5 {offsets = [5, 1, 0], sizes = [1, 1, 32], strides = [1, 1, 1]} : vector<7x7x32xf32> to vector<1x1x32xf32>
    %270 = vector.shape_cast %269 : vector<1x1x32xf32> to vector<32xf32>
    %271 = vector.shape_cast %270 : vector<32xf32> to vector<1x1x32xf32>
    %272 = vector.broadcast %271 : vector<1x1x32xf32> to vector<16x16x32xf32>
    %273 = arith.mulf %268, %272 : vector<16x16x32xf32>
    %274 = arith.addf %267, %273 : vector<16x16x32xf32>
    %275 = vector.extract_strided_slice %260 {offsets = [0, 2, 0], sizes = [16, 16, 32], strides = [1, 1, 1]} : vector<16x22x32xf32> to vector<16x16x32xf32>
    %276 = vector.extract_strided_slice %5 {offsets = [5, 2, 0], sizes = [1, 1, 32], strides = [1, 1, 1]} : vector<7x7x32xf32> to vector<1x1x32xf32>
    %277 = vector.shape_cast %276 : vector<1x1x32xf32> to vector<32xf32>
    %278 = vector.shape_cast %277 : vector<32xf32> to vector<1x1x32xf32>
    %279 = vector.broadcast %278 : vector<1x1x32xf32> to vector<16x16x32xf32>
    %280 = arith.mulf %275, %279 : vector<16x16x32xf32>
    %281 = arith.addf %274, %280 : vector<16x16x32xf32>
    %282 = vector.extract_strided_slice %260 {offsets = [0, 3, 0], sizes = [16, 16, 32], strides = [1, 1, 1]} : vector<16x22x32xf32> to vector<16x16x32xf32>
    %283 = vector.extract_strided_slice %5 {offsets = [5, 3, 0], sizes = [1, 1, 32], strides = [1, 1, 1]} : vector<7x7x32xf32> to vector<1x1x32xf32>
    %284 = vector.shape_cast %283 : vector<1x1x32xf32> to vector<32xf32>
    %285 = vector.shape_cast %284 : vector<32xf32> to vector<1x1x32xf32>
    %286 = vector.broadcast %285 : vector<1x1x32xf32> to vector<16x16x32xf32>
    %287 = arith.mulf %282, %286 : vector<16x16x32xf32>
    %288 = arith.addf %281, %287 : vector<16x16x32xf32>
    %289 = vector.extract_strided_slice %260 {offsets = [0, 4, 0], sizes = [16, 16, 32], strides = [1, 1, 1]} : vector<16x22x32xf32> to vector<16x16x32xf32>
    %290 = vector.extract_strided_slice %5 {offsets = [5, 4, 0], sizes = [1, 1, 32], strides = [1, 1, 1]} : vector<7x7x32xf32> to vector<1x1x32xf32>
    %291 = vector.shape_cast %290 : vector<1x1x32xf32> to vector<32xf32>
    %292 = vector.shape_cast %291 : vector<32xf32> to vector<1x1x32xf32>
    %293 = vector.broadcast %292 : vector<1x1x32xf32> to vector<16x16x32xf32>
    %294 = arith.mulf %289, %293 : vector<16x16x32xf32>
    %295 = arith.addf %288, %294 : vector<16x16x32xf32>
    %296 = vector.extract_strided_slice %260 {offsets = [0, 5, 0], sizes = [16, 16, 32], strides = [1, 1, 1]} : vector<16x22x32xf32> to vector<16x16x32xf32>
    %297 = vector.extract_strided_slice %5 {offsets = [5, 5, 0], sizes = [1, 1, 32], strides = [1, 1, 1]} : vector<7x7x32xf32> to vector<1x1x32xf32>
    %298 = vector.shape_cast %297 : vector<1x1x32xf32> to vector<32xf32>
    %299 = vector.shape_cast %298 : vector<32xf32> to vector<1x1x32xf32>
    %300 = vector.broadcast %299 : vector<1x1x32xf32> to vector<16x16x32xf32>
    %301 = arith.mulf %296, %300 : vector<16x16x32xf32>
    %302 = arith.addf %295, %301 : vector<16x16x32xf32>
    %303 = vector.extract_strided_slice %260 {offsets = [0, 6, 0], sizes = [16, 16, 32], strides = [1, 1, 1]} : vector<16x22x32xf32> to vector<16x16x32xf32>
    %304 = vector.extract_strided_slice %5 {offsets = [5, 6, 0], sizes = [1, 1, 32], strides = [1, 1, 1]} : vector<7x7x32xf32> to vector<1x1x32xf32>
    %305 = vector.shape_cast %304 : vector<1x1x32xf32> to vector<32xf32>
    %306 = vector.shape_cast %305 : vector<32xf32> to vector<1x1x32xf32>
    %307 = vector.broadcast %306 : vector<1x1x32xf32> to vector<16x16x32xf32>
    %308 = arith.mulf %303, %307 : vector<16x16x32xf32>
    %309 = arith.addf %302, %308 : vector<16x16x32xf32>
    %c6 = arith.constant 6 : index
    %c0_28 = arith.constant 0 : index
    %c0_29 = arith.constant 0 : index
    %310 = vector.load %arg7[%c6, %c0_28, %c0_29] : memref<22x22x32xf32, #tpu.memory_space<vmem>>, vector<16x22x32xf32>
    %311 = vector.extract_strided_slice %310 {offsets = [0, 0, 0], sizes = [16, 16, 32], strides = [1, 1, 1]} : vector<16x22x32xf32> to vector<16x16x32xf32>
    %312 = vector.extract_strided_slice %5 {offsets = [6, 0, 0], sizes = [1, 1, 32], strides = [1, 1, 1]} : vector<7x7x32xf32> to vector<1x1x32xf32>
    %313 = vector.shape_cast %312 : vector<1x1x32xf32> to vector<32xf32>
    %314 = vector.shape_cast %313 : vector<32xf32> to vector<1x1x32xf32>
    %315 = vector.broadcast %314 : vector<1x1x32xf32> to vector<16x16x32xf32>
    %316 = arith.mulf %311, %315 : vector<16x16x32xf32>
    %317 = arith.addf %309, %316 : vector<16x16x32xf32>
    %318 = vector.extract_strided_slice %310 {offsets = [0, 1, 0], sizes = [16, 16, 32], strides = [1, 1, 1]} : vector<16x22x32xf32> to vector<16x16x32xf32>
    %319 = vector.extract_strided_slice %5 {offsets = [6, 1, 0], sizes = [1, 1, 32], strides = [1, 1, 1]} : vector<7x7x32xf32> to vector<1x1x32xf32>
    %320 = vector.shape_cast %319 : vector<1x1x32xf32> to vector<32xf32>
    %321 = vector.shape_cast %320 : vector<32xf32> to vector<1x1x32xf32>
    %322 = vector.broadcast %321 : vector<1x1x32xf32> to vector<16x16x32xf32>
    %323 = arith.mulf %318, %322 : vector<16x16x32xf32>
    %324 = arith.addf %317, %323 : vector<16x16x32xf32>
    %325 = vector.extract_strided_slice %310 {offsets = [0, 2, 0], sizes = [16, 16, 32], strides = [1, 1, 1]} : vector<16x22x32xf32> to vector<16x16x32xf32>
    %326 = vector.extract_strided_slice %5 {offsets = [6, 2, 0], sizes = [1, 1, 32], strides = [1, 1, 1]} : vector<7x7x32xf32> to vector<1x1x32xf32>
    %327 = vector.shape_cast %326 : vector<1x1x32xf32> to vector<32xf32>
    %328 = vector.shape_cast %327 : vector<32xf32> to vector<1x1x32xf32>
    %329 = vector.broadcast %328 : vector<1x1x32xf32> to vector<16x16x32xf32>
    %330 = arith.mulf %325, %329 : vector<16x16x32xf32>
    %331 = arith.addf %324, %330 : vector<16x16x32xf32>
    %332 = vector.extract_strided_slice %310 {offsets = [0, 3, 0], sizes = [16, 16, 32], strides = [1, 1, 1]} : vector<16x22x32xf32> to vector<16x16x32xf32>
    %333 = vector.extract_strided_slice %5 {offsets = [6, 3, 0], sizes = [1, 1, 32], strides = [1, 1, 1]} : vector<7x7x32xf32> to vector<1x1x32xf32>
    %334 = vector.shape_cast %333 : vector<1x1x32xf32> to vector<32xf32>
    %335 = vector.shape_cast %334 : vector<32xf32> to vector<1x1x32xf32>
    %336 = vector.broadcast %335 : vector<1x1x32xf32> to vector<16x16x32xf32>
    %337 = arith.mulf %332, %336 : vector<16x16x32xf32>
    %338 = arith.addf %331, %337 : vector<16x16x32xf32>
    %339 = vector.extract_strided_slice %310 {offsets = [0, 4, 0], sizes = [16, 16, 32], strides = [1, 1, 1]} : vector<16x22x32xf32> to vector<16x16x32xf32>
    %340 = vector.extract_strided_slice %5 {offsets = [6, 4, 0], sizes = [1, 1, 32], strides = [1, 1, 1]} : vector<7x7x32xf32> to vector<1x1x32xf32>
    %341 = vector.shape_cast %340 : vector<1x1x32xf32> to vector<32xf32>
    %342 = vector.shape_cast %341 : vector<32xf32> to vector<1x1x32xf32>
    %343 = vector.broadcast %342 : vector<1x1x32xf32> to vector<16x16x32xf32>
    %344 = arith.mulf %339, %343 : vector<16x16x32xf32>
    %345 = arith.addf %338, %344 : vector<16x16x32xf32>
    %346 = vector.extract_strided_slice %310 {offsets = [0, 5, 0], sizes = [16, 16, 32], strides = [1, 1, 1]} : vector<16x22x32xf32> to vector<16x16x32xf32>
    %347 = vector.extract_strided_slice %5 {offsets = [6, 5, 0], sizes = [1, 1, 32], strides = [1, 1, 1]} : vector<7x7x32xf32> to vector<1x1x32xf32>
    %348 = vector.shape_cast %347 : vector<1x1x32xf32> to vector<32xf32>
    %349 = vector.shape_cast %348 : vector<32xf32> to vector<1x1x32xf32>
    %350 = vector.broadcast %349 : vector<1x1x32xf32> to vector<16x16x32xf32>
    %351 = arith.mulf %346, %350 : vector<16x16x32xf32>
    %352 = arith.addf %345, %351 : vector<16x16x32xf32>
    %353 = vector.extract_strided_slice %310 {offsets = [0, 6, 0], sizes = [16, 16, 32], strides = [1, 1, 1]} : vector<16x22x32xf32> to vector<16x16x32xf32>
    %354 = vector.extract_strided_slice %5 {offsets = [6, 6, 0], sizes = [1, 1, 32], strides = [1, 1, 1]} : vector<7x7x32xf32> to vector<1x1x32xf32>
    %355 = vector.shape_cast %354 : vector<1x1x32xf32> to vector<32xf32>
    %356 = vector.shape_cast %355 : vector<32xf32> to vector<1x1x32xf32>
    %357 = vector.broadcast %356 : vector<1x1x32xf32> to vector<16x16x32xf32>
    %358 = arith.mulf %353, %357 : vector<16x16x32xf32>
    %359 = arith.addf %352, %358 : vector<16x16x32xf32>
    %c0_30 = arith.constant 0 : index
    %c0_31 = arith.constant 0 : index
    %c0_32 = arith.constant 0 : index
    %c0_33 = arith.constant 0 : index
    %360 = vector.load %arg1[%c0_30, %c0_31, %c0_32, %c0_33] : memref<1x16x16x32xf32, #tpu.memory_space<vmem>>, vector<1x16x16x32xf32>
    %361 = vector.shape_cast %360 : vector<1x16x16x32xf32> to vector<16x16x32xf32>
    %362 = arith.addf %359, %361 : vector<16x16x32xf32>
    %363 = vector.shape_cast %362 : vector<16x16x32xf32> to vector<256x32xf32>
    %364 = arith.truncf %363 : vector<256x32xf32> to vector<256x32xbf16>
    %c0_34 = arith.constant 0 : index
    %c0_35 = arith.constant 0 : index
    %365 = vector.load %arg4[%c0_34, %c0_35] : memref<32x32xbf16, #tpu.memory_space<vmem>>, vector<32x32xbf16>
    %cst_36 = arith.constant dense<0.000000e+00> : vector<256x32xf32>
    %366 = tpu.matmul %364, %365, %cst_36 {dimension_numbers = #tpu.dot_dimension_numbers<[1], [0], [0], [1], [0, 0, 1, 1], [], []>} : vector<256x32xbf16>, vector<32x32xbf16>, vector<256x32xf32> -> vector<256x32xf32>
    %c0_37 = arith.constant 0 : index
    %c0_38 = arith.constant 0 : index
    %367 = vector.load %arg5[%c0_37, %c0_38] : memref<1x32xf32, #tpu.memory_space<vmem>>, vector<1x32xf32>
    %368 = vector.shape_cast %367 : vector<1x32xf32> to vector<32xf32>
    %369 = vector.shape_cast %368 : vector<32xf32> to vector<1x32xf32>
    %370 = vector.broadcast %369 : vector<1x32xf32> to vector<256x32xf32>
    %371 = arith.addf %366, %370 : vector<256x32xf32>
    %372 = arith.addf %363, %371 : vector<256x32xf32>
    %373 = vector.shape_cast %372 : vector<256x32xf32> to vector<16x16x32xf32>
    %c0_39 = arith.constant 0 : index
    %c0_40 = arith.constant 0 : index
    %c0_41 = arith.constant 0 : index
    %c0_42 = arith.constant 0 : index
    %374 = vector.load %arg6[%c0_39, %c0_40, %c0_41, %c0_42] : memref<1x16x16x32xf32, #tpu.memory_space<vmem>>, vector<1x16x16x32xf32>
    %375 = vector.shape_cast %374 : vector<1x16x16x32xf32> to vector<16x16x32xf32>
    %376 = vector.shape_cast %373 : vector<16x16x32xf32> to vector<1x16x16x32xf32>
    tpu.vector_store %arg6[%c0_39, %c0_40, %c0_41, %c0_42], %376 {strides = array<i32>} : memref<1x16x16x32xf32, #tpu.memory_space<vmem>>, vector<1x16x16x32xf32>,
    return
  }
  func.func @transform_0(%arg0: i32) -> (i32, i32, i32, i32) {
    %c0_i32 = arith.constant 0 : i32
    %c0_i32_0 = arith.constant 0 : i32
    %c0_i32_1 = arith.constant 0 : i32
    %c0_i32_2 = arith.constant 0 : i32
    return %arg0, %c0_i32, %c0_i32_0, %c0_i32_1 : i32, i32, i32, i32
  }
  func.func @transform_1(%arg0: i32) -> (i32, i32, i32) {
    %c0_i32 = arith.constant 0 : i32
    %c0_i32_0 = arith.constant 0 : i32
    %c0_i32_1 = arith.constant 0 : i32
    %c0_i32_2 = arith.constant 0 : i32
    return %c0_i32, %c0_i32_0, %c0_i32_1 : i32, i32, i32
  }
  func.func @transform_2(%arg0: i32) -> (i32, i32, i32) {
    %c0_i32 = arith.constant 0 : i32
    %c0_i32_0 = arith.constant 0 : i32
    %c0_i32_1 = arith.constant 0 : i32
    %c0_i32_2 = arith.constant 0 : i32
    return %c0_i32, %c0_i32_0, %c0_i32_1 : i32, i32, i32
  }
  func.func @transform_3(%arg0: i32) -> (i32, i32) {
    %c0_i32 = arith.constant 0 : i32
    %c0_i32_0 = arith.constant 0 : i32
    %c0_i32_1 = arith.constant 0 : i32
    return %c0_i32, %c0_i32_0 : i32, i32
  }
  func.func @transform_4(%arg0: i32) -> (i32, i32) {
    %c0_i32 = arith.constant 0 : i32
    %c0_i32_0 = arith.constant 0 : i32
    %c0_i32_1 = arith.constant 0 : i32
    return %c0_i32, %c0_i32_0 : i32, i32
  }
  func.func @transform_5(%arg0: i32) -> (i32, i32, i32, i32) {
    %c0_i32 = arith.constant 0 : i32
    %c0_i32_0 = arith.constant 0 : i32
    %c0_i32_1 = arith.constant 0 : i32
    %c0_i32_2 = arith.constant 0 : i32
    return %arg0, %c0_i32, %c0_i32_0, %c0_i32_1 : i32, i32, i32, i32
  }
}

</mosaic_0001>

<llo_original>
// kernel: tpu_custom_call.1
$region0: #{tpu_custom_call.1}
  #allocation0 [shape = 'u32[]', space=smem, size = 0x4, offset = 0x4, fixed_abs, tag = 'smem constant byte address 0x4 - core index']
  #allocation1 [shape = 'u32[144,128]{1,0:T(1,128)}', space=vmem, size = 0x12000, scoped, tag = 'internal scratch']
  #allocation2 [shape = 'f32[22,22,32]{2,1,0:T(8,128)}', space=vmem, size = 0x42000, scoped, tag = 'scratch operand']
  %s0 = inlined_call_operand.hbm [shape: f32[2,16,16,32], index: 0, kind: input, shape index: {}]
  %s1 = inlined_call_operand.hbm [shape: f32[7,7,32], index: 1, kind: input, shape index: {}]
  %s2 = inlined_call_operand.vmem [shape: f32[1,1,32], index: 2, kind: input, shape index: {}]
  %s3 = inlined_call_operand.hbm [shape: bf16[32,32], index: 3, kind: input, shape index: {}]
  %s4 = inlined_call_operand.vmem [shape: f32[1,32], index: 4, kind: input, shape index: {}]
  %s5 = inlined_call_operand.hbm [shape: f32[2,16,16,32], index: 5, kind: output, shape index: {}]
  %s6 = sld [smem:[#allocation0]]
  $region65: #{tpu_custom_call.1} parent=0
    _
  %s8 = ssub.s32 1, %s6
  %s9 = scalar_select 0, %s8, %s6
  $region1: #{tpu_custom_call.1} parent=0
    #allocation3 [shape = 'u8[262144]{0}', space=vmem, size = 0x40000, scoped, tag = 'input window, operand 0']
    #allocation4 [shape = 's32[2]{0}', space=sflag, size = 0x8, scoped, tag = 'scoped memory for tpu_custom_call.1']
    #allocation5 [shape = 's32[2]{0}', space=sflag, size = 0x8, scoped, tag = 'scoped memory for tpu_custom_call.1']
    #allocation6 [shape = 'u8[28672]{0}', space=vmem, size = 0x7000, scoped, tag = 'input window, operand 1, single buffered']
    #allocation7 [shape = 's32[1]{0}', space=sflag, size = 0x4, scoped, tag = 'scoped memory for tpu_custom_call.1']
    #allocation8 [shape = 'u8[8192]{0}', space=vmem, size = 0x2000, scoped, tag = 'input window, operand 3, single buffered']
    #allocation9 [shape = 'u8[262144]{0}', space=vmem, size = 0x40000, scoped, tag = 'output window, operand 0']
    %10 = vsyncpa [#allocation4], 0
    %s11 = scalar_lea.sflag [#allocation4], 1
    %12 = vsyncpa %s11, 0
    %13 = vsyncpa [#allocation7], 0
    %14 = vsyncpa [#allocation5], 0
    %s15 = scalar_lea.sflag [#allocation5], 1
    %16 = vsyncpa %s15, 0
    loop: start=0, step=1, limit=4
    $region2: #{tpu_custom_call.1} parent=1 // loop_pre_header
      _
    $region3: #{tpu_custom_call.1} parent=1 // loop_header
      %s18 = sphi 0, %s22
      %p19 = scmp.ge.s32.totalorder %s18, 4
      %s28 = sphi 0, %s30
      %s31 = sphi 0, %s28
      %s32 = sphi 0, %s31
      %s48 = sphi 0, %s32
      %s52 = sphi 0, %s52
      %s54 = sphi 0, %s52
      %s55 = sphi 0, %s54
      %s69 = sphi 0, %s55
      %s73 = sphi 0, %s73
      %s75 = sphi 0, %s73
      %s76 = sphi 0, %s75
      %s90 = sphi 0, %s76
      %s94 = sphi 0, %s94
      %s96 = sphi 0, %s94
      %s97 = sphi 0, %s96
      %s111 = sphi 0, %s97
      %s115 = sphi 0, %s115
      %s117 = sphi 0, %s115
      %s118 = sphi 0, %s117
      %s132 = sphi 0, %s118
      %s138 = sphi 0, %s140
      %s141 = sphi 0, %s138
      %s142 = sphi 0, %s141
      %s158 = sphi 0, %s142
    $region4: #{tpu_custom_call.1} parent=1 // loop_header_branch
      %21 = sbr.rel (%p19) target = $region8
    $region5: #{tpu_custom_call.1} parent=1 // loop_body
      %s23 = ssub.s32 %s18, 1
      %s24 = ssub.s32 %s18, 2
      %s25 = sadd.s32 %s18, 1
      %s26 = ssub.s32 %s18, %s25
      %p27 = scmp.eq.s32.totalorder %s26, 0
      %s29 = sadd.s32 %s28, 1
      %s30 = scalar_select %p27, %s28, %s29
      %p33 = pneg %p27
      %p34 = scmp.eq.s32.totalorder %s18, 1
      %p35 = por %p33, %p34
      %p36 = scmp.ne.s32.totalorder %s28, %s31
      %p37 = scmp.eq.s32.totalorder %s18, 0
      %p38 = por %p36, %p37
      %p39 = scmp.ne.s32.totalorder %s28, %s31
      %p40 = scmp.eq.s32.totalorder %s23, 1
      %p41 = por %p39, %p40
      %p42 = scmp.ne.s32.totalorder %s31, %s32
      %p43 = scmp.eq.s32.totalorder %s23, 0
      %p44 = por %p42, %p43
      %p45 = scmp.ne.s32.totalorder %s31, %s32
      %p46 = scmp.eq.s32.totalorder %s24, 1
      %p47 = por %p45, %p46
      %p49 = scmp.ne.s32.totalorder %s32, %s48
      %p50 = scmp.eq.s32.totalorder %s24, 0
      %p51 = por %p49, %p50
      %s53 = sadd.s32 %s52, 1
      %p56 = scmp.eq.s32.totalorder %s18, 1
      %p57 = scmp.ne.s32.totalorder %s52, %s54
      %p58 = scmp.eq.s32.totalorder %s18, 0
      %p59 = por %p57, %p58
      %p60 = scmp.ne.s32.totalorder %s52, %s54
      %p61 = scmp.eq.s32.totalorder %s23, 1
      %p62 = por %p60, %p61
      %p63 = scmp.ne.s32.totalorder %s54, %s55
      %p64 = scmp.eq.s32.totalorder %s23, 0
      %p65 = por %p63, %p64
      %p66 = scmp.ne.s32.totalorder %s54, %s55
      %p67 = scmp.eq.s32.totalorder %s24, 1
      %p68 = por %p66, %p67
      %p70 = scmp.ne.s32.totalorder %s55, %s69
      %p71 = scmp.eq.s32.totalorder %s24, 0
      %p72 = por %p70, %p71
      %s74 = sadd.s32 %s73, 1
      %p77 = scmp.eq.s32.totalorder %s18, 1
      %p78 = scmp.ne.s32.totalorder %s73, %s75
      %p79 = scmp.eq.s32.totalorder %s18, 0
      %p80 = por %p78, %p79
      %p81 = scmp.ne.s32.totalorder %s73, %s75
      %p82 = scmp.eq.s32.totalorder %s23, 1
      %p83 = por %p81, %p82
      %p84 = scmp.ne.s32.totalorder %s75, %s76
      %p85 = scmp.eq.s32.totalorder %s23, 0
      %p86 = por %p84, %p85
      %p87 = scmp.ne.s32.totalorder %s75, %s76
      %p88 = scmp.eq.s32.totalorder %s24, 1
      %p89 = por %p87, %p88
      %p91 = scmp.ne.s32.totalorder %s76, %s90
      %p92 = scmp.eq.s32.totalorder %s24, 0
      %p93 = por %p91, %p92
      %s95 = sadd.s32 %s94, 1
      %p98 = scmp.eq.s32.totalorder %s18, 1
      %p99 = scmp.ne.s32.totalorder %s94, %s96
      %p100 = scmp.eq.s32.totalorder %s18, 0
      %p101 = por %p99, %p100
      %p102 = scmp.ne.s32.totalorder %s94, %s96
      %p103 = scmp.eq.s32.totalorder %s23, 1
      %p104 = por %p102, %p103
      %p105 = scmp.ne.s32.totalorder %s96, %s97
      %p106 = scmp.eq.s32.totalorder %s23, 0
      %p107 = por %p105, %p106
      %p108 = scmp.ne.s32.totalorder %s96, %s97
      %p109 = scmp.eq.s32.totalorder %s24, 1
      %p110 = por %p108, %p109
      %p112 = scmp.ne.s32.totalorder %s97, %s111
      %p113 = scmp.eq.s32.totalorder %s24, 0
      %p114 = por %p112, %p113
      %s116 = sadd.s32 %s115, 1
      %p119 = scmp.eq.s32.totalorder %s18, 1
      %p120 = scmp.ne.s32.totalorder %s115, %s117
      %p121 = scmp.eq.s32.totalorder %s18, 0
      %p122 = por %p120, %p121
      %p123 = scmp.ne.s32.totalorder %s115, %s117
      %p124 = scmp.eq.s32.totalorder %s23, 1
      %p125 = por %p123, %p124
      %p126 = scmp.ne.s32.totalorder %s117, %s118
      %p127 = scmp.eq.s32.totalorder %s23, 0
      %p128 = por %p126, %p127
      %p129 = scmp.ne.s32.totalorder %s117, %s118
      %p130 = scmp.eq.s32.totalorder %s24, 1
      %p131 = por %p129, %p130
      %p133 = scmp.ne.s32.totalorder %s118, %s132
      %p134 = scmp.eq.s32.totalorder %s24, 0
      %p135 = por %p133, %p134
      %s136 = ssub.s32 %s18, %s25
      %p137 = scmp.eq.s32.totalorder %s136, 0
      %s139 = sadd.s32 %s138, 1
      %s140 = scalar_select %p137, %s138, %s139
      %p143 = pneg %p137
      %p144 = scmp.eq.s32.totalorder %s18, 1
      %p145 = por %p143, %p144
      %p146 = scmp.ne.s32.totalorder %s138, %s141
      %p147 = scmp.eq.s32.totalorder %s18, 0
      %p148 = por %p146, %p147
      %p149 = scmp.ne.s32.totalorder %s138, %s141
      %p150 = scmp.eq.s32.totalorder %s23, 1
      %p151 = por %p149, %p150
      %p152 = scmp.ne.s32.totalorder %s141, %s142
      %p153 = scmp.eq.s32.totalorder %s23, 0
      %p154 = por %p152, %p153
      %p155 = scmp.ne.s32.totalorder %s141, %s142
      %p156 = scmp.eq.s32.totalorder %s24, 1
      %p157 = por %p155, %p156
      %p159 = scmp.ne.s32.totalorder %s142, %s158
      %p160 = scmp.eq.s32.totalorder %s24, 0
      %p161 = por %p159, %p160
      %p162 = scmp.le.s32.totalorder 1, %s18
      %p163 = scmp.lt.s32.totalorder %s18, 3
      %p164 = pnand %p162, %p163
      %p165 = pneg %p164
      // Predicated region
      $region9: #{tpu_custom_call.1} parent=5 // pred_check
        _
      $region10: #{tpu_custom_call.1} parent=5 // pred_check_branch
        %167 = sbr.rel (%p164) target = $region12
      $region11: #{tpu_custom_call.1} parent=5 // pred_region
        %s168 = ssub.s32 %s18, 1
        // Predicated region
        $region13: #{tpu_custom_call.1} parent=11 // pred_check
          %p169 = pneg %p65
        $region14: #{tpu_custom_call.1} parent=11 // pred_check_branch
          %171 = sbr.rel (%p169) target = $region16
        $region15: #{tpu_custom_call.1} parent=11 // pred_region
          %s173 = ssub.s32 896, 896
          %174 = vsyncadd [#allocation7], %s173
          %s175 = sshll.u32 [#allocation6], 4
          %s176 = int_to_ptr.vmem [resolvable:$true] %s175
          %181 = dma.hbm_to_vmem [thread:$0]  %s1, 896, %s176, [#allocation7], 128, 128, 8
        $region16: #{tpu_custom_call.1} parent=11 // pred_fallthru
          _
        // Predicated region
        $region17: #{tpu_custom_call.1} parent=11 // pred_check
          %p182 = pneg %p86
        $region18: #{tpu_custom_call.1} parent=11 // pred_check_branch
          %184 = sbr.rel (%p182) target = $region20
        $region19: #{tpu_custom_call.1} parent=11 // pred_region
          _
        $region20: #{tpu_custom_call.1} parent=11 // pred_fallthru
          _
        // Predicated region
        $region21: #{tpu_custom_call.1} parent=11 // pred_check
          %p185 = pneg %p107
        $region22: #{tpu_custom_call.1} parent=11 // pred_check_branch
          %187 = sbr.rel (%p185) target = $region24
        $region23: #{tpu_custom_call.1} parent=11 // pred_region
          %s189 = ssub.s32 256, 256
          %190 = vsyncadd [#allocation7], %s189
          %s191 = sshll.u32 [#allocation8], 4
          %s192 = int_to_ptr.vmem [resolvable:$true] %s191
          %197 = dma.hbm_to_vmem [thread:$0]  %s3, 256, %s192, [#allocation7], 64, 64, 4
        $region24: #{tpu_custom_call.1} parent=11 // pred_fallthru
          _
        // Predicated region
        $region25: #{tpu_custom_call.1} parent=11 // pred_check
          %p198 = pneg %p128
        $region26: #{tpu_custom_call.1} parent=11 // pred_check_branch
          %200 = sbr.rel (%p198) target = $region28
        $region27: #{tpu_custom_call.1} parent=11 // pred_region
          _
        $region28: #{tpu_custom_call.1} parent=11 // pred_fallthru
          _
      $region12: #{tpu_custom_call.1} parent=5 // pred_fallthru
        _
      %p201 = scmp.lt.s32.totalorder %s18, 2
      // Predicated region
      $region29: #{tpu_custom_call.1} parent=5 // pred_check
        %p202 = pneg %p201
      $region30: #{tpu_custom_call.1} parent=5 // pred_check_branch
        %204 = sbr.rel (%p202) target = $region32
      $region31: #{tpu_custom_call.1} parent=5 // pred_region
        // Predicated region
        $region33: #{tpu_custom_call.1} parent=31 // pred_check
          %p205 = pneg %p38
        $region34: #{tpu_custom_call.1} parent=31 // pred_check_branch
          %207 = sbr.rel (%p205) target = $region36
        $region35: #{tpu_custom_call.1} parent=31 // pred_region
          %s208 = sand.u32 %s28, 1
          %s209 = scalar_lea.sflag [#allocation4], %s208
          %s210 = sand.u32 %s28, 1
          %s211 = smul.addr %s210, 256
          %s212 = scalar_lea.vmem [#allocation3], %s211
          %s214 = ssub.s32 4096, 4096
          %215 = vsyncadd %s209, %s214
          %s216 = smul.addr %s18, 32
          %s217 = smul.addr %s216, 128
          %s218 = scalar_lea.hbm %s0, %s217
          %s219 = sshll.u32 %s212, 4
          %s220 = int_to_ptr.vmem [resolvable:$true] %s219
          %225 = dma.hbm_to_vmem [thread:$0]  %s218, 4096, %s220, %s209, 128, 128, 8
        $region36: #{tpu_custom_call.1} parent=31 // pred_fallthru
          _
      $region32: #{tpu_custom_call.1} parent=5 // pred_fallthru
        _
      %p226 = scmp.le.s32.totalorder 1, %s18
      %p227 = scmp.lt.s32.totalorder %s18, 3
      %p228 = pnand %p226, %p227
      %p229 = pneg %p228
      // Predicated region
      $region37: #{tpu_custom_call.1} parent=5 // pred_check
        _
      $region38: #{tpu_custom_call.1} parent=5 // pred_check_branch
        %231 = sbr.rel (%p228) target = $region40
      $region39: #{tpu_custom_call.1} parent=5 // pred_region
        %s232 = ssub.s32 %s18, 1
        %s233 = sand.u32 %s31, 1
        %s234 = scalar_lea.sflag [#allocation4], %s233
        %s235 = sand.u32 %s31, 1
        %s236 = smul.addr %s235, 256
        %s237 = scalar_lea.vmem [#allocation3], %s236
        // Predicated region
        $region41: #{tpu_custom_call.1} parent=39 // pred_check
          %p238 = pneg %p44
        $region42: #{tpu_custom_call.1} parent=39 // pred_check_branch
          %240 = sbr.rel (%p238) target = $region44
        $region43: #{tpu_custom_call.1} parent=39 // pred_region
          %241 = dma.done %s234, 4096
        $region44: #{tpu_custom_call.1} parent=39 // pred_fallthru
          _
        // Predicated region
        $region45: #{tpu_custom_call.1} parent=39 // pred_check
          %p242 = pneg %p65
        $region46: #{tpu_custom_call.1} parent=39 // pred_check_branch
          %244 = sbr.rel (%p242) target = $region48
        $region47: #{tpu_custom_call.1} parent=39 // pred_region
          %245 = dma.done [#allocation7], 896
        $region48: #{tpu_custom_call.1} parent=39 // pred_fallthru
          _
        // Predicated region
        $region49: #{tpu_custom_call.1} parent=39 // pred_check
          %p246 = pneg %p107
        $region50: #{tpu_custom_call.1} parent=39 // pred_check_branch
          %248 = sbr.rel (%p246) target = $region52
        $region51: #{tpu_custom_call.1} parent=39 // pred_region
          %249 = dma.done [#allocation7], 256
        $region52: #{tpu_custom_call.1} parent=39 // pred_fallthru
          _
        %s250 = sand.u32 %s31, 1
        %s251 = scalar_lea.sflag [#allocation4], %s250
        %s252 = sand.u32 %s31, 1
        %s253 = smul.addr %s252, 256
        %s254 = scalar_lea.vmem [#allocation3], %s253
        %p255 = pneg %p44
        %p256 = pneg %p41
        %p257 = pneg %p65
        %p258 = pneg %p62
        %p259 = pneg %p86
        %p260 = pneg %p83
        %p261 = pneg %p107
        %p262 = pneg %p104
        %p263 = pneg %p128
        %p264 = pneg %p125
        %p265 = pneg %p154
        %p266 = pneg %p151
        %s267 = sand.u32 %s141, 1
        %s268 = scalar_lea.sflag [#allocation5], %s267
        %s269 = sand.u32 %s141, 1
        %s270 = smul.addr %s269, 256
        %s271 = scalar_lea.vmem [#allocation9], %s270
        %vm273 = vcmask 261120
        %274 = vst.msk [vmem:[#allocation2] sm:$0xff] %vm273, 0.0
        %275 = vst.msk [vmem:[#allocation2 + $0x8] sm:$0xff] %vm273, 0.0
        %vm276 = vcmask 259072
        %277 = vst.msk [vmem:[#allocation2 + $0x10] sm:$0x3f] %vm276, 0.0
        %278 = vst.msk [vmem:[#allocation2 + $0x18] sm:$0xff] %vm273, 0.0
        %279 = vst.msk [vmem:[#allocation2 + $0x20] sm:$0xff] %vm273, 0.0
        %280 = vst.msk [vmem:[#allocation2 + $0x28] sm:$0x3f] %vm276, 0.0
        %281 = vst.msk [vmem:[#allocation2 + $0x30] sm:$0xff] %vm273, 0.0
        %282 = vst.msk [vmem:[#allocation2 + $0x38] sm:$0xff] %vm273, 0.0
        %283 = vst.msk [vmem:[#allocation2 + $0x40] sm:$0x3f] %vm276, 0.0
        %284 = vst.msk [vmem:[#allocation2 + $0x48] sm:$0xff] %vm273, 0.0
        %285 = vst.msk [vmem:[#allocation2 + $0x50] sm:$0xff] %vm273, 0.0
        %286 = vst.msk [vmem:[#allocation2 + $0x58] sm:$0x3f] %vm276, 0.0
        %287 = vst.msk [vmem:[#allocation2 + $0x60] sm:$0xff] %vm273, 0.0
        %288 = vst.msk [vmem:[#allocation2 + $0x68] sm:$0xff] %vm273, 0.0
        %289 = vst.msk [vmem:[#allocation2 + $0x70] sm:$0x3f] %vm276, 0.0
        %290 = vst.msk [vmem:[#allocation2 + $0x78] sm:$0xff] %vm273, 0.0
        %291 = vst.msk [vmem:[#allocation2 + $0x80] sm:$0xff] %vm273, 0.0
        %292 = vst.msk [vmem:[#allocation2 + $0x88] sm:$0x3f] %vm276, 0.0
        %293 = vst.msk [vmem:[#allocation2 + $0x90] sm:$0xff] %vm273, 0.0
        %294 = vst.msk [vmem:[#allocation2 + $0x98] sm:$0xff] %vm273, 0.0
        %295 = vst.msk [vmem:[#allocation2 + $0xa0] sm:$0x3f] %vm276, 0.0
        %296 = vst.msk [vmem:[#allocation2 + $0xa8] sm:$0xff] %vm273, 0.0
        %297 = vst.msk [vmem:[#allocation2 + $0xb0] sm:$0xff] %vm273, 0.0
        %298 = vst.msk [vmem:[#allocation2 + $0xb8] sm:$0x3f] %vm276, 0.0
        %299 = vst.msk [vmem:[#allocation2 + $0xc0] sm:$0xff] %vm273, 0.0
        %300 = vst.msk [vmem:[#allocation2 + $0xc8] sm:$0xff] %vm273, 0.0
        %301 = vst.msk [vmem:[#allocation2 + $0xd0] sm:$0x3f] %vm276, 0.0
        %302 = vst.msk [vmem:[#allocation2 + $0xd8] sm:$0xff] %vm273, 0.0
        %303 = vst.msk [vmem:[#allocation2 + $0xe0] sm:$0xff] %vm273, 0.0
        %304 = vst.msk [vmem:[#allocation2 + $0xe8] sm:$0x3f] %vm276, 0.0
        %305 = vst.msk [vmem:[#allocation2 + $0xf0] sm:$0xff] %vm273, 0.0
        %306 = vst.msk [vmem:[#allocation2 + $0xf8] sm:$0xff] %vm273, 0.0
        %307 = vst.msk [vmem:[#allocation2 + $0x100] sm:$0x3f] %vm276, 0.0
        %308 = vst.msk [vmem:[#allocation2 + $0x108] sm:$0xff] %vm273, 0.0
        %309 = vst.msk [vmem:[#allocation2 + $0x110] sm:$0xff] %vm273, 0.0
        %310 = vst.msk [vmem:[#allocation2 + $0x118] sm:$0x3f] %vm276, 0.0
        %311 = vst.msk [vmem:[#allocation2 + $0x120] sm:$0xff] %vm273, 0.0
        %312 = vst.msk [vmem:[#allocation2 + $0x128] sm:$0xff] %vm273, 0.0
        %313 = vst.msk [vmem:[#allocation2 + $0x130] sm:$0x3f] %vm276, 0.0
        %314 = vst.msk [vmem:[#allocation2 + $0x138] sm:$0xff] %vm273, 0.0
        %315 = vst.msk [vmem:[#allocation2 + $0x140] sm:$0xff] %vm273, 0.0
        %316 = vst.msk [vmem:[#allocation2 + $0x148] sm:$0x3f] %vm276, 0.0
        %317 = vst.msk [vmem:[#allocation2 + $0x150] sm:$0xff] %vm273, 0.0
        %318 = vst.msk [vmem:[#allocation2 + $0x158] sm:$0xff] %vm273, 0.0
        %319 = vst.msk [vmem:[#allocation2 + $0x160] sm:$0x3f] %vm276, 0.0
        %320 = vst.msk [vmem:[#allocation2 + $0x168] sm:$0xff] %vm273, 0.0
        %321 = vst.msk [vmem:[#allocation2 + $0x170] sm:$0xff] %vm273, 0.0
        %322 = vst.msk [vmem:[#allocation2 + $0x178] sm:$0x3f] %vm276, 0.0
        %323 = vst.msk [vmem:[#allocation2 + $0x180] sm:$0xff] %vm273, 0.0
        %324 = vst.msk [vmem:[#allocation2 + $0x188] sm:$0xff] %vm273, 0.0
        %325 = vst.msk [vmem:[#allocation2 + $0x190] sm:$0x3f] %vm276, 0.0
        %326 = vst.msk [vmem:[#allocation2 + $0x198] sm:$0xff] %vm273, 0.0
        %327 = vst.msk [vmem:[#allocation2 + $0x1a0] sm:$0xff] %vm273, 0.0
        %328 = vst.msk [vmem:[#allocation2 + $0x1a8] sm:$0x3f] %vm276, 0.0
        %329 = vst.msk [vmem:[#allocation2 + $0x1b0] sm:$0xff] %vm273, 0.0
        %330 = vst.msk [vmem:[#allocation2 + $0x1b8] sm:$0xff] %vm273, 0.0
        %331 = vst.msk [vmem:[#allocation2 + $0x1c0] sm:$0x3f] %vm276, 0.0
        %332 = vst.msk [vmem:[#allocation2 + $0x1c8] sm:$0xff] %vm273, 0.0
        %333 = vst.msk [vmem:[#allocation2 + $0x1d0] sm:$0xff] %vm273, 0.0
        %334 = vst.msk [vmem:[#allocation2 + $0x1d8] sm:$0x3f] %vm276, 0.0
        %335 = vst.msk [vmem:[#allocation2 + $0x1e0] sm:$0xff] %vm273, 0.0
        %336 = vst.msk [vmem:[#allocation2 + $0x1e8] sm:$0xff] %vm273, 0.0
        %337 = vst.msk [vmem:[#allocation2 + $0x1f0] sm:$0x3f] %vm276, 0.0
        %338 = vst.msk [vmem:[#allocation2 + $0x1f8] sm:$0xff] %vm273, 0.0
        %339 = vst.msk [vmem:[#allocation2 + $0x200] sm:$0xff] %vm273, 0.0
        %340 = vst.msk [vmem:[#allocation2 + $0x208] sm:$0x3f] %vm276, 0.0
        %v341 = vld [vmem:[%s237] sm:$0xff]
        %v342 = vld [vmem:[%s237 + $0x8] sm:$0xff]
        %v343 = vld [vmem:[%s237 + $0x10] sm:$0xff]
        %v344 = vld [vmem:[%s237 + $0x18] sm:$0xff]
        %v345 = vld [vmem:[%s237 + $0x20] sm:$0xff]
        %v346 = vld [vmem:[%s237 + $0x28] sm:$0xff]
        %v347 = vld [vmem:[%s237 + $0x30] sm:$0xff]
        %v348 = vld [vmem:[%s237 + $0x38] sm:$0xff]
        %v349 = vld [vmem:[%s237 + $0x40] sm:$0xff]
        %v350 = vld [vmem:[%s237 + $0x48] sm:$0xff]
        %v351 = vld [vmem:[%s237 + $0x50] sm:$0xff]
        %v352 = vld [vmem:[%s237 + $0x58] sm:$0xff]
        %v353 = vld [vmem:[%s237 + $0x60] sm:$0xff]
        %v354 = vld [vmem:[%s237 + $0x68] sm:$0xff]
        %v355 = vld [vmem:[%s237 + $0x70] sm:$0xff]
        %v356 = vld [vmem:[%s237 + $0x78] sm:$0xff]
        %v357 = vld [vmem:[%s237 + $0x80] sm:$0xff]
        %v358 = vld [vmem:[%s237 + $0x88] sm:$0xff]
        %v359 = vld [vmem:[%s237 + $0x90] sm:$0xff]
        %v360 = vld [vmem:[%s237 + $0x98] sm:$0xff]
        %v361 = vld [vmem:[%s237 + $0xa0] sm:$0xff]
        %v362 = vld [vmem:[%s237 + $0xa8] sm:$0xff]
        %v363 = vld [vmem:[%s237 + $0xb0] sm:$0xff]
        %v364 = vld [vmem:[%s237 + $0xb8] sm:$0xff]
        %v365 = vld [vmem:[%s237 + $0xc0] sm:$0xff]
        %v366 = vld [vmem:[%s237 + $0xc8] sm:$0xff]
        %v367 = vld [vmem:[%s237 + $0xd0] sm:$0xff]
        %v368 = vld [vmem:[%s237 + $0xd8] sm:$0xff]
        %v369 = vld [vmem:[%s237 + $0xe0] sm:$0xff]
        %v370 = vld [vmem:[%s237 + $0xe8] sm:$0xff]
        %v371 = vld [vmem:[%s237 + $0xf0] sm:$0xff]
        %v372 = vld [vmem:[%s237 + $0xf8] sm:$0xff]
        %s373 = scalar_lea.vmem [#allocation2], 72
        %374 = vst.msk [vmem:[%s373 + $0x3] sm:$0xff] %vm273, %v341
        %375 = vst.msk [vmem:[%s373 + $0xb] sm:$0xff] %vm273, %v342
        %376 = vst.msk [vmem:[%s373 + $0x1b] sm:$0xff] %vm273, %v343
        %377 = vst.msk [vmem:[%s373 + $0x23] sm:$0xff] %vm273, %v344
        %378 = vst.msk [vmem:[%s373 + $0x33] sm:$0xff] %vm273, %v345
        %379 = vst.msk [vmem:[%s373 + $0x3b] sm:$0xff] %vm273, %v346
        %380 = vst.msk [vmem:[%s373 + $0x4b] sm:$0xff] %vm273, %v347
        %381 = vst.msk [vmem:[%s373 + $0x53] sm:$0xff] %vm273, %v348
        %382 = vst.msk [vmem:[%s373 + $0x63] sm:$0xff] %vm273, %v349
        %383 = vst.msk [vmem:[%s373 + $0x6b] sm:$0xff] %vm273, %v350
        %384 = vst.msk [vmem:[%s373 + $0x7b] sm:$0xff] %vm273, %v351
        %385 = vst.msk [vmem:[%s373 + $0x83] sm:$0xff] %vm273, %v352
        %386 = vst.msk [vmem:[%s373 + $0x93] sm:$0xff] %vm273, %v353
        %387 = vst.msk [vmem:[%s373 + $0x9b] sm:$0xff] %vm273, %v354
        %388 = vst.msk [vmem:[%s373 + $0xab] sm:$0xff] %vm273, %v355
        %389 = vst.msk [vmem:[%s373 + $0xb3] sm:$0xff] %vm273, %v356
        %390 = vst.msk [vmem:[%s373 + $0xc3] sm:$0xff] %vm273, %v357
        %391 = vst.msk [vmem:[%s373 + $0xcb] sm:$0xff] %vm273, %v358
        %392 = vst.msk [vmem:[%s373 + $0xdb] sm:$0xff] %vm273, %v359
        %393 = vst.msk [vmem:[%s373 + $0xe3] sm:$0xff] %vm273, %v360
        %394 = vst.msk [vmem:[%s373 + $0xf3] sm:$0xff] %vm273, %v361
        %395 = vst.msk [vmem:[%s373 + $0xfb] sm:$0xff] %vm273, %v362
        %396 = vst.msk [vmem:[%s373 + $0x10b] sm:$0xff] %vm273, %v363
        %397 = vst.msk [vmem:[%s373 + $0x113] sm:$0xff] %vm273, %v364
        %398 = vst.msk [vmem:[%s373 + $0x123] sm:$0xff] %vm273, %v365
        %399 = vst.msk [vmem:[%s373 + $0x12b] sm:$0xff] %vm273, %v366
        %400 = vst.msk [vmem:[%s373 + $0x13b] sm:$0xff] %vm273, %v367
        %401 = vst.msk [vmem:[%s373 + $0x143] sm:$0xff] %vm273, %v368
        %402 = vst.msk [vmem:[%s373 + $0x153] sm:$0xff] %vm273, %v369
        %403 = vst.msk [vmem:[%s373 + $0x15b] sm:$0xff] %vm273, %v370
        %404 = vst.msk [vmem:[%s373 + $0x16b] sm:$0xff] %vm273, %v371
        %405 = vst.msk [vmem:[%s373 + $0x173] sm:$0xff] %vm273, %v372
        %v406 = vld [vmem:[#allocation6] sm:$0x7f]
        %v407 = vld [vmem:[#allocation6 + $0x8] sm:$0x7f]
        %v408 = vld [vmem:[#allocation6 + $0x10] sm:$0x7f]
        %v409 = vld [vmem:[#allocation6 + $0x18] sm:$0x7f]
        %v410 = vld [vmem:[#allocation6 + $0x20] sm:$0x7f]
        %v411 = vld [vmem:[#allocation6 + $0x28] sm:$0x7f]
        %v412 = vld [vmem:[#allocation6 + $0x30] sm:$0x7f]
        %v413 = vld [vmem:[%s2] sm:$0x1]
        %v415 = vlaneseq
        %v416 = vshrl.u32 %v415, 7
        %v417 = vsub.s32 0, %v416
        %v418 = vrot.slane %v413, %v417
        %v420 = vld [vmem:[#allocation2] sm:$0xff]
        %v421 = vld [vmem:[#allocation2 + $0x8] sm:$0xff]
        %v422 = vld [vmem:[#allocation2 + $0x10] sm:$0x3f]
        %v423 = vld [vmem:[#allocation2 + $0x18] sm:$0xff]
        %v424 = vld [vmem:[#allocation2 + $0x20] sm:$0xff]
        %v425 = vld [vmem:[#allocation2 + $0x28] sm:$0x3f]
        %v426 = vld [vmem:[#allocation2 + $0x30] sm:$0xff]
        %v427 = vld [vmem:[#allocation2 + $0x38] sm:$0xff]
        %v428 = vld [vmem:[#allocation2 + $0x40] sm:$0x3f]
        %v429 = vld [vmem:[#allocation2 + $0x48] sm:$0xff]
        %v430 = vld [vmem:[#allocation2 + $0x50] sm:$0xff]
        %v431 = vld [vmem:[#allocation2 + $0x58] sm:$0x3f]
        %v432 = vld [vmem:[#allocation2 + $0x60] sm:$0xff]
        %v433 = vld [vmem:[#allocation2 + $0x68] sm:$0xff]
        %v434 = vld [vmem:[#allocation2 + $0x70] sm:$0x3f]
        %v435 = vld [vmem:[#allocation2 + $0x78] sm:$0xff]
        %v436 = vld [vmem:[#allocation2 + $0x80] sm:$0xff]
        %v437 = vld [vmem:[#allocation2 + $0x88] sm:$0x3f]
        %v438 = vld [vmem:[#allocation2 + $0x90] sm:$0xff]
        %v439 = vld [vmem:[#allocation2 + $0x98] sm:$0xff]
        %v440 = vld [vmem:[#allocation2 + $0xa0] sm:$0x3f]
        %v441 = vld [vmem:[#allocation2 + $0xa8] sm:$0xff]
        %v442 = vld [vmem:[#allocation2 + $0xb0] sm:$0xff]
        %v443 = vld [vmem:[#allocation2 + $0xb8] sm:$0x3f]
        %v444 = vld [vmem:[#allocation2 + $0xc0] sm:$0xff]
        %v445 = vld [vmem:[#allocation2 + $0xc8] sm:$0xff]
        %v446 = vld [vmem:[#allocation2 + $0xd0] sm:$0x3f]
        %v447 = vld [vmem:[#allocation2 + $0xd8] sm:$0xff]
        %v448 = vld [vmem:[#allocation2 + $0xe0] sm:$0xff]
        %v449 = vld [vmem:[#allocation2 + $0xe8] sm:$0x3f]
        %v450 = vld [vmem:[#allocation2 + $0xf0] sm:$0xff]
        %v451 = vld [vmem:[#allocation2 + $0xf8] sm:$0xff]
        %v452 = vld [vmem:[#allocation2 + $0x100] sm:$0x3f]
        %v453 = vld [vmem:[#allocation2 + $0x108] sm:$0xff]
        %v454 = vld [vmem:[#allocation2 + $0x110] sm:$0xff]
        %v455 = vld [vmem:[#allocation2 + $0x118] sm:$0x3f]
        %v456 = vld [vmem:[#allocation2 + $0x120] sm:$0xff]
        %v457 = vld [vmem:[#allocation2 + $0x128] sm:$0xff]
        %v458 = vld [vmem:[#allocation2 + $0x130] sm:$0x3f]
        %v459 = vld [vmem:[#allocation2 + $0x138] sm:$0xff]
        %v460 = vld [vmem:[#allocation2 + $0x140] sm:$0xff]
        %v461 = vld [vmem:[#allocation2 + $0x148] sm:$0x3f]
        %v462 = vld [vmem:[#allocation2 + $0x150] sm:$0xff]
        %v463 = vld [vmem:[#allocation2 + $0x158] sm:$0xff]
        %v464 = vld [vmem:[#allocation2 + $0x160] sm:$0x3f]
        %v465 = vld [vmem:[#allocation2 + $0x168] sm:$0xff]
        %v466 = vld [vmem:[#allocation2 + $0x170] sm:$0xff]
        %v467 = vld [vmem:[#allocation2 + $0x178] sm:$0x3f]
        %v468 = vlaneseq
        %v469 = vshrl.u32 %v468, 7
        %v470 = vsub.s32 0, %v469
        %v471 = vrot.slane %v406, %v470
        %v472 = vmul.f32 %v420, %v471
        %v473 = vmul.f32 %v421, %v471
        %v474 = vmul.f32 %v423, %v471
        %v475 = vmul.f32 %v424, %v471
        %v476 = vmul.f32 %v426, %v471
        %v477 = vmul.f32 %v427, %v471
        %v478 = vmul.f32 %v429, %v471
        %v479 = vmul.f32 %v430, %v471
        %v480 = vmul.f32 %v432, %v471
        %v481 = vmul.f32 %v433, %v471
        %v482 = vmul.f32 %v435, %v471
        %v483 = vmul.f32 %v436, %v471
        %v484 = vmul.f32 %v438, %v471
        %v485 = vmul.f32 %v439, %v471
        %v486 = vmul.f32 %v441, %v471
        %v487 = vmul.f32 %v442, %v471
        %v488 = vmul.f32 %v444, %v471
        %v489 = vmul.f32 %v445, %v471
        %v490 = vmul.f32 %v447, %v471
        %v491 = vmul.f32 %v448, %v471
        %v492 = vmul.f32 %v450, %v471
        %v493 = vmul.f32 %v451, %v471
        %v494 = vmul.f32 %v453, %v471
        %v495 = vmul.f32 %v454, %v471
        %v496 = vmul.f32 %v456, %v471
        %v497 = vmul.f32 %v457, %v471
        %v498 = vmul.f32 %v459, %v471
        %v499 = vmul.f32 %v460, %v471
        %v500 = vmul.f32 %v462, %v471
        %v501 = vmul.f32 %v463, %v471
        %v502 = vmul.f32 %v465, %v471
        %v503 = vmul.f32 %v466, %v471
        %v504 = vadd.f32 %v418, %v472
        %v505 = vadd.f32 %v418, %v473
        %v506 = vadd.f32 %v418, %v474
        %v507 = vadd.f32 %v418, %v475
        %v508 = vadd.f32 %v418, %v476
        %v509 = vadd.f32 %v418, %v477
        %v510 = vadd.f32 %v418, %v478
        %v511 = vadd.f32 %v418, %v479
        %v512 = vadd.f32 %v418, %v480
        %v513 = vadd.f32 %v418, %v481
        %v514 = vadd.f32 %v418, %v482
        %v515 = vadd.f32 %v418, %v483
        %v516 = vadd.f32 %v418, %v484
        %v517 = vadd.f32 %v418, %v485
        %v518 = vadd.f32 %v418, %v486
        %v519 = vadd.f32 %v418, %v487
        %v520 = vadd.f32 %v418, %v488
        %v521 = vadd.f32 %v418, %v489
        %v522 = vadd.f32 %v418, %v490
        %v523 = vadd.f32 %v418, %v491
        %v524 = vadd.f32 %v418, %v492
        %v525 = vadd.f32 %v418, %v493
        %v526 = vadd.f32 %v418, %v494
        %v527 = vadd.f32 %v418, %v495
        %v528 = vadd.f32 %v418, %v496
        %v529 = vadd.f32 %v418, %v497
        %v530 = vadd.f32 %v418, %v498
        %v531 = vadd.f32 %v418, %v499
        %v532 = vadd.f32 %v418, %v500
        %v533 = vadd.f32 %v418, %v501
        %v534 = vadd.f32 %v418, %v502
        %v535 = vadd.f32 %v418, %v503
        %v536 = vlaneseq
        %v537 = vshrl.u32 %v536, 7
        %v538 = vsub.s32 1, %v537
        %v539 = vrot.slane %v406, %v538
        %v540 = vmul.f32 %v420, %v539
        %v541 = vmul.f32 %v421, %v539
        %v542 = vmul.f32 %v422, %v539
        %v543 = vmul.f32 %v423, %v539
        %v544 = vmul.f32 %v424, %v539
        %v545 = vmul.f32 %v425, %v539
        %v546 = vmul.f32 %v426, %v539
        %v547 = vmul.f32 %v427, %v539
        %v548 = vmul.f32 %v428, %v539
        %v549 = vmul.f32 %v429, %v539
        %v550 = vmul.f32 %v430, %v539
        %v551 = vmul.f32 %v431, %v539
        %v552 = vmul.f32 %v432, %v539
        %v553 = vmul.f32 %v433, %v539
        %v554 = vmul.f32 %v434, %v539
        %v555 = vmul.f32 %v435, %v539
        %v556 = vmul.f32 %v436, %v539
        %v557 = vmul.f32 %v437, %v539
        %v558 = vmul.f32 %v438, %v539
        %v559 = vmul.f32 %v439, %v539
        %v560 = vmul.f32 %v440, %v539
        %v561 = vmul.f32 %v441, %v539
        %v562 = vmul.f32 %v442, %v539
        %v563 = vmul.f32 %v443, %v539
        %v564 = vmul.f32 %v444, %v539
        %v565 = vmul.f32 %v445, %v539
        %v566 = vmul.f32 %v446, %v539
        %v567 = vmul.f32 %v447, %v539
        %v568 = vmul.f32 %v448, %v539
        %v569 = vmul.f32 %v449, %v539
        %v570 = vmul.f32 %v450, %v539
        %v571 = vmul.f32 %v451, %v539
        %v572 = vmul.f32 %v452, %v539
        %v573 = vmul.f32 %v453, %v539
        %v574 = vmul.f32 %v454, %v539
        %v575 = vmul.f32 %v455, %v539
        %v576 = vmul.f32 %v456, %v539
        %v577 = vmul.f32 %v457, %v539
        %v578 = vmul.f32 %v458, %v539
        %v579 = vmul.f32 %v459, %v539
        %v580 = vmul.f32 %v460, %v539
        %v581 = vmul.f32 %v461, %v539
        %v582 = vmul.f32 %v462, %v539
        %v583 = vmul.f32 %v463, %v539
        %v584 = vmul.f32 %v464, %v539
        %v585 = vmul.f32 %v465, %v539
        %v586 = vmul.f32 %v466, %v539
        %v587 = vmul.f32 %v467, %v539
        %vm636 = vcmask 1046528
        %v637 = vrot.slane %v540, 1
        %v638 = vrot.slane %v541, 1
        %v639 = vsel %vm636, %v637, %v638
        %v640 = vrot.slane %v542, 1
        %v641 = vsel %vm636, %v638, %v640
        %v642 = vrot.slane %v543, 1
        %v643 = vrot.slane %v544, 1
        %v644 = vsel %vm636, %v642, %v643
        %v645 = vrot.slane %v545, 1
        %v646 = vsel %vm636, %v643, %v645
        %v647 = vrot.slane %v546, 1
        %v648 = vrot.slane %v547, 1
        %v649 = vsel %vm636, %v647, %v648
        %v650 = vrot.slane %v548, 1
        %v651 = vsel %vm636, %v648, %v650
        %v652 = vrot.slane %v549, 1
        %v653 = vrot.slane %v550, 1
        %v654 = vsel %vm636, %v652, %v653
        %v655 = vrot.slane %v551, 1
        %v656 = vsel %vm636, %v653, %v655
        %v657 = vrot.slane %v552, 1
        %v658 = vrot.slane %v553, 1
        %v659 = vsel %vm636, %v657, %v658
        %v660 = vrot.slane %v554, 1
        %v661 = vsel %vm636, %v658, %v660
        %v662 = vrot.slane %v555, 1
        %v663 = vrot.slane %v556, 1
        %v664 = vsel %vm636, %v662, %v663
        %v665 = vrot.slane %v557, 1
        %v666 = vsel %vm636, %v663, %v665
        %v667 = vrot.slane %v558, 1
        %v668 = vrot.slane %v559, 1
        %v669 = vsel %vm636, %v667, %v668
        %v670 = vrot.slane %v560, 1
        %v671 = vsel %vm636, %v668, %v670
        %v672 = vrot.slane %v561, 1
        %v673 = vrot.slane %v562, 1
        %v674 = vsel %vm636, %v672, %v673
        %v675 = vrot.slane %v563, 1
        %v676 = vsel %vm636, %v673, %v675
        %v677 = vrot.slane %v564, 1
        %v678 = vrot.slane %v565, 1
        %v679 = vsel %vm636, %v677, %v678
        %v680 = vrot.slane %v566, 1
        %v681 = vsel %vm636, %v678, %v680
        %v682 = vrot.slane %v567, 1
        %v683 = vrot.slane %v568, 1
        %v684 = vsel %vm636, %v682, %v683
        %v685 = vrot.slane %v569, 1
        %v686 = vsel %vm636, %v683, %v685
        %v687 = vrot.slane %v570, 1
        %v688 = vrot.slane %v571, 1
        %v689 = vsel %vm636, %v687, %v688
        %v690 = vrot.slane %v572, 1
        %v691 = vsel %vm636, %v688, %v690
        %v692 = vrot.slane %v573, 1
        %v693 = vrot.slane %v574, 1
        %v694 = vsel %vm636, %v692, %v693
        %v695 = vrot.slane %v575, 1
        %v696 = vsel %vm636, %v693, %v695
        %v697 = vrot.slane %v576, 1
        %v698 = vrot.slane %v577, 1
        %v699 = vsel %vm636, %v697, %v698
        %v700 = vrot.slane %v578, 1
        %v701 = vsel %vm636, %v698, %v700
        %v702 = vrot.slane %v579, 1
        %v703 = vrot.slane %v580, 1
        %v704 = vsel %vm636, %v702, %v703
        %v705 = vrot.slane %v581, 1
        %v706 = vsel %vm636, %v703, %v705
        %v707 = vrot.slane %v582, 1
        %v708 = vrot.slane %v583, 1
        %v709 = vsel %vm636, %v707, %v708
        %v710 = vrot.slane %v584, 1
        %v711 = vsel %vm636, %v708, %v710
        %v712 = vrot.slane %v585, 1
        %v713 = vrot.slane %v586, 1
        %v714 = vsel %vm636, %v712, %v713
        %v715 = vrot.slane %v587, 1
        %v716 = vsel %vm636, %v713, %v715
        %v749 = vadd.f32 %v504, %v639
        %v750 = vadd.f32 %v505, %v641
        %v751 = vadd.f32 %v506, %v644
        %v752 = vadd.f32 %v507, %v646
        %v753 = vadd.f32 %v508, %v649
        %v754 = vadd.f32 %v509, %v651
        %v755 = vadd.f32 %v510, %v654
        %v756 = vadd.f32 %v511, %v656
        %v757 = vadd.f32 %v512, %v659
        %v758 = vadd.f32 %v513, %v661
        %v759 = vadd.f32 %v514, %v664
        %v760 = vadd.f32 %v515, %v666
        %v761 = vadd.f32 %v516, %v669
        %v762 = vadd.f32 %v517, %v671
        %v763 = vadd.f32 %v518, %v674
        %v764 = vadd.f32 %v519, %v676
        %v765 = vadd.f32 %v520, %v679
        %v766 = vadd.f32 %v521, %v681
        %v767 = vadd.f32 %v522, %v684
        %v768 = vadd.f32 %v523, %v686
        %v769 = vadd.f32 %v524, %v689
        %v770 = vadd.f32 %v525, %v691
        %v771 = vadd.f32 %v526, %v694
        %v772 = vadd.f32 %v527, %v696
        %v773 = vadd.f32 %v528, %v699
        %v774 = vadd.f32 %v529, %v701
        %v775 = vadd.f32 %v530, %v704
        %v776 = vadd.f32 %v531, %v706
        %v777 = vadd.f32 %v532, %v709
        %v778 = vadd.f32 %v533, %v711
        %v779 = vadd.f32 %v534, %v714
        %v780 = vadd.f32 %v535, %v716
        %v781 = vlaneseq
        %v782 = vshrl.u32 %v781, 7
        %v783 = vsub.s32 2, %v782
        %v784 = vrot.slane %v406, %v783
        %v785 = vmul.f32 %v420, %v784
        %v786 = vmul.f32 %v421, %v784
        %v787 = vmul.f32 %v422, %v784
        %v788 = vmul.f32 %v423, %v784
        %v789 = vmul.f32 %v424, %v784
        %v790 = vmul.f32 %v425, %v784
        %v791 = vmul.f32 %v426, %v784
        %v792 = vmul.f32 %v427, %v784
        %v793 = vmul.f32 %v428, %v784
        %v794 = vmul.f32 %v429, %v784
        %v795 = vmul.f32 %v430, %v784
        %v796 = vmul.f32 %v431, %v784
        %v797 = vmul.f32 %v432, %v784
        %v798 = vmul.f32 %v433, %v784
        %v799 = vmul.f32 %v434, %v784
        %v800 = vmul.f32 %v435, %v784
        %v801 = vmul.f32 %v436, %v784
        %v802 = vmul.f32 %v437, %v784
        %v803 = vmul.f32 %v438, %v784
        %v804 = vmul.f32 %v439, %v784
        %v805 = vmul.f32 %v440, %v784
        %v806 = vmul.f32 %v441, %v784
        %v807 = vmul.f32 %v442, %v784
        %v808 = vmul.f32 %v443, %v784
        %v809 = vmul.f32 %v444, %v784
        %v810 = vmul.f32 %v445, %v784
        %v811 = vmul.f32 %v446, %v784
        %v812 = vmul.f32 %v447, %v784
        %v813 = vmul.f32 %v448, %v784
        %v814 = vmul.f32 %v449, %v784
        %v815 = vmul.f32 %v450, %v784
        %v816 = vmul.f32 %v451, %v784
        %v817 = vmul.f32 %v452, %v784
        %v818 = vmul.f32 %v453, %v784
        %v819 = vmul.f32 %v454, %v784
        %v820 = vmul.f32 %v455, %v784
        %v821 = vmul.f32 %v456, %v784
        %v822 = vmul.f32 %v457, %v784
        %v823 = vmul.f32 %v458, %v784
        %v824 = vmul.f32 %v459, %v784
        %v825 = vmul.f32 %v460, %v784
        %v826 = vmul.f32 %v461, %v784
        %v827 = vmul.f32 %v462, %v784
        %v828 = vmul.f32 %v463, %v784
        %v829 = vmul.f32 %v464, %v784
        %v830 = vmul.f32 %v465, %v784
        %v831 = vmul.f32 %v466, %v784
        %v832 = vmul.f32 %v467, %v784
        %vm881 = vcmask 1045504
        %v882 = vrot.slane %v785, 2
        %v883 = vrot.slane %v786, 2
        %v884 = vsel %vm881, %v882, %v883
        %v885 = vrot.slane %v787, 2
        %v886 = vsel %vm881, %v883, %v885
        %v887 = vrot.slane %v788, 2
        %v888 = vrot.slane %v789, 2
        %v889 = vsel %vm881, %v887, %v888
        %v890 = vrot.slane %v790, 2
        %v891 = vsel %vm881, %v888, %v890
        %v892 = vrot.slane %v791, 2
        %v893 = vrot.slane %v792, 2
        %v894 = vsel %vm881, %v892, %v893
        %v895 = vrot.slane %v793, 2
        %v896 = vsel %vm881, %v893, %v895
        %v897 = vrot.slane %v794, 2
        %v898 = vrot.slane %v795, 2
        %v899 = vsel %vm881, %v897, %v898
        %v900 = vrot.slane %v796, 2
        %v901 = vsel %vm881, %v898, %v900
        %v902 = vrot.slane %v797, 2
        %v903 = vrot.slane %v798, 2
        %v904 = vsel %vm881, %v902, %v903
        %v905 = vrot.slane %v799, 2
        %v906 = vsel %vm881, %v903, %v905
        %v907 = vrot.slane %v800, 2
        %v908 = vrot.slane %v801, 2
        %v909 = vsel %vm881, %v907, %v908
        %v910 = vrot.slane %v802, 2
        %v911 = vsel %vm881, %v908, %v910
        %v912 = vrot.slane %v803, 2
        %v913 = vrot.slane %v804, 2
        %v914 = vsel %vm881, %v912, %v913
        %v915 = vrot.slane %v805, 2
        %v916 = vsel %vm881, %v913, %v915
        %v917 = vrot.slane %v806, 2
        %v918 = vrot.slane %v807, 2
        %v919 = vsel %vm881, %v917, %v918
        %v920 = vrot.slane %v808, 2
        %v921 = vsel %vm881, %v918, %v920
        %v922 = vrot.slane %v809, 2
        %v923 = vrot.slane %v810, 2
        %v924 = vsel %vm881, %v922, %v923
        %v925 = vrot.slane %v811, 2
        %v926 = vsel %vm881, %v923, %v925
        %v927 = vrot.slane %v812, 2
        %v928 = vrot.slane %v813, 2
        %v929 = vsel %vm881, %v927, %v928
        %v930 = vrot.slane %v814, 2
        %v931 = vsel %vm881, %v928, %v930
        %v932 = vrot.slane %v815, 2
        %v933 = vrot.slane %v816, 2
        %v934 = vsel %vm881, %v932, %v933
        %v935 = vrot.slane %v817, 2
        %v936 = vsel %vm881, %v933, %v935
        %v937 = vrot.slane %v818, 2
        %v938 = vrot.slane %v819, 2
        %v939 = vsel %vm881, %v937, %v938
        %v940 = vrot.slane %v820, 2
        %v941 = vsel %vm881, %v938, %v940
        %v942 = vrot.slane %v821, 2
        %v943 = vrot.slane %v822, 2
        %v944 = vsel %vm881, %v942, %v943
        %v945 = vrot.slane %v823, 2
        %v946 = vsel %vm881, %v943, %v945
        %v947 = vrot.slane %v824, 2
        %v948 = vrot.slane %v825, 2
        %v949 = vsel %vm881, %v947, %v948
        %v950 = vrot.slane %v826, 2
        %v951 = vsel %vm881, %v948, %v950
        %v952 = vrot.slane %v827, 2
        %v953 = vrot.slane %v828, 2
        %v954 = vsel %vm881, %v952, %v953
        %v955 = vrot.slane %v829, 2
        %v956 = vsel %vm881, %v953, %v955
        %v957 = vrot.slane %v830, 2
        %v958 = vrot.slane %v831, 2
        %v959 = vsel %vm881, %v957, %v958
        %v960 = vrot.slane %v832, 2
        %v961 = vsel %vm881, %v958, %v960
        %v994 = vadd.f32 %v749, %v884
        %v995 = vadd.f32 %v750, %v886
        %v996 = vadd.f32 %v751, %v889
        %v997 = vadd.f32 %v752, %v891
        %v998 = vadd.f32 %v753, %v894
        %v999 = vadd.f32 %v754, %v896
        %v1000 = vadd.f32 %v755, %v899
        %v1001 = vadd.f32 %v756, %v901
        %v1002 = vadd.f32 %v757, %v904
        %v1003 = vadd.f32 %v758, %v906
        %v1004 = vadd.f32 %v759, %v909
        %v1005 = vadd.f32 %v760, %v911
        %v1006 = vadd.f32 %v761, %v914
        %v1007 = vadd.f32 %v762, %v916
        %v1008 = vadd.f32 %v763, %v919
        %v1009 = vadd.f32 %v764, %v921
        %v1010 = vadd.f32 %v765, %v924
        %v1011 = vadd.f32 %v766, %v926
        %v1012 = vadd.f32 %v767, %v929
        %v1013 = vadd.f32 %v768, %v931
        %v1014 = vadd.f32 %v769, %v934
        %v1015 = vadd.f32 %v770, %v936
        %v1016 = vadd.f32 %v771, %v939
        %v1017 = vadd.f32 %v772, %v941
        %v1018 = vadd.f32 %v773, %v944
        %v1019 = vadd.f32 %v774, %v946
        %v1020 = vadd.f32 %v775, %v949
        %v1021 = vadd.f32 %v776, %v951
        %v1022 = vadd.f32 %v777, %v954
        %v1023 = vadd.f32 %v778, %v956
        %v1024 = vadd.f32 %v779, %v959
        %v1025 = vadd.f32 %v780, %v961
        %v1026 = vlaneseq
        %v1027 = vshrl.u32 %v1026, 7
        %v1028 = vsub.s32 3, %v1027
        %v1029 = vrot.slane %v406, %v1028
        %v1030 = vmul.f32 %v420, %v1029
        %v1031 = vmul.f32 %v421, %v1029
        %v1032 = vmul.f32 %v422, %v1029
        %v1033 = vmul.f32 %v423, %v1029
        %v1034 = vmul.f32 %v424, %v1029
        %v1035 = vmul.f32 %v425, %v1029
        %v1036 = vmul.f32 %v426, %v1029
        %v1037 = vmul.f32 %v427, %v1029
        %v1038 = vmul.f32 %v428, %v1029
        %v1039 = vmul.f32 %v429, %v1029
        %v1040 = vmul.f32 %v430, %v1029
        %v1041 = vmul.f32 %v431, %v1029
        %v1042 = vmul.f32 %v432, %v1029
        %v1043 = vmul.f32 %v433, %v1029
        %v1044 = vmul.f32 %v434, %v1029
        %v1045 = vmul.f32 %v435, %v1029
        %v1046 = vmul.f32 %v436, %v1029
        %v1047 = vmul.f32 %v437, %v1029
        %v1048 = vmul.f32 %v438, %v1029
        %v1049 = vmul.f32 %v439, %v1029
        %v1050 = vmul.f32 %v440, %v1029
        %v1051 = vmul.f32 %v441, %v1029
        %v1052 = vmul.f32 %v442, %v1029
        %v1053 = vmul.f32 %v443, %v1029
        %v1054 = vmul.f32 %v444, %v1029
        %v1055 = vmul.f32 %v445, %v1029
        %v1056 = vmul.f32 %v446, %v1029
        %v1057 = vmul.f32 %v447, %v1029
        %v1058 = vmul.f32 %v448, %v1029
        %v1059 = vmul.f32 %v449, %v1029
        %v1060 = vmul.f32 %v450, %v1029
        %v1061 = vmul.f32 %v451, %v1029
        %v1062 = vmul.f32 %v452, %v1029
        %v1063 = vmul.f32 %v453, %v1029
        %v1064 = vmul.f32 %v454, %v1029
        %v1065 = vmul.f32 %v455, %v1029
        %v1066 = vmul.f32 %v456, %v1029
        %v1067 = vmul.f32 %v457, %v1029
        %v1068 = vmul.f32 %v458, %v1029
        %v1069 = vmul.f32 %v459, %v1029
        %v1070 = vmul.f32 %v460, %v1029
        %v1071 = vmul.f32 %v461, %v1029
        %v1072 = vmul.f32 %v462, %v1029
        %v1073 = vmul.f32 %v463, %v1029
        %v1074 = vmul.f32 %v464, %v1029
        %v1075 = vmul.f32 %v465, %v1029
        %v1076 = vmul.f32 %v466, %v1029
        %v1077 = vmul.f32 %v467, %v1029
        %vm1126 = vcmask 1044480
        %v1127 = vrot.slane %v1030, 3
        %v1128 = vrot.slane %v1031, 3
        %v1129 = vsel %vm1126, %v1127, %v1128
        %v1130 = vrot.slane %v1032, 3
        %v1131 = vsel %vm1126, %v1128, %v1130
        %v1132 = vrot.slane %v1033, 3
        %v1133 = vrot.slane %v1034, 3
        %v1134 = vsel %vm1126, %v1132, %v1133
        %v1135 = vrot.slane %v1035, 3
        %v1136 = vsel %vm1126, %v1133, %v1135
        %v1137 = vrot.slane %v1036, 3
        %v1138 = vrot.slane %v1037, 3
        %v1139 = vsel %vm1126, %v1137, %v1138
        %v1140 = vrot.slane %v1038, 3
        %v1141 = vsel %vm1126, %v1138, %v1140
        %v1142 = vrot.slane %v1039, 3
        %v1143 = vrot.slane %v1040, 3
        %v1144 = vsel %vm1126, %v1142, %v1143
        %v1145 = vrot.slane %v1041, 3
        %v1146 = vsel %vm1126, %v1143, %v1145
        %v1147 = vrot.slane %v1042, 3
        %v1148 = vrot.slane %v1043, 3
        %v1149 = vsel %vm1126, %v1147, %v1148
        %v1150 = vrot.slane %v1044, 3
        %v1151 = vsel %vm1126, %v1148, %v1150
        %v1152 = vrot.slane %v1045, 3
        %v1153 = vrot.slane %v1046, 3
        %v1154 = vsel %vm1126, %v1152, %v1153
        %v1155 = vrot.slane %v1047, 3
        %v1156 = vsel %vm1126, %v1153, %v1155
        %v1157 = vrot.slane %v1048, 3
        %v1158 = vrot.slane %v1049, 3
        %v1159 = vsel %vm1126, %v1157, %v1158
        %v1160 = vrot.slane %v1050, 3
        %v1161 = vsel %vm1126, %v1158, %v1160
        %v1162 = vrot.slane %v1051, 3
        %v1163 = vrot.slane %v1052, 3
        %v1164 = vsel %vm1126, %v1162, %v1163
        %v1165 = vrot.slane %v1053, 3
        %v1166 = vsel %vm1126, %v1163, %v1165
        %v1167 = vrot.slane %v1054, 3
        %v1168 = vrot.slane %v1055, 3
        %v1169 = vsel %vm1126, %v1167, %v1168
        %v1170 = vrot.slane %v1056, 3
        %v1171 = vsel %vm1126, %v1168, %v1170
        %v1172 = vrot.slane %v1057, 3
        %v1173 = vrot.slane %v1058, 3
        %v1174 = vsel %vm1126, %v1172, %v1173
        %v1175 = vrot.slane %v1059, 3
        %v1176 = vsel %vm1126, %v1173, %v1175
        %v1177 = vrot.slane %v1060, 3
        %v1178 = vrot.slane %v1061, 3
        %v1179 = vsel %vm1126, %v1177, %v1178
        %v1180 = vrot.slane %v1062, 3
        %v1181 = vsel %vm1126, %v1178, %v1180
        %v1182 = vrot.slane %v1063, 3
        %v1183 = vrot.slane %v1064, 3
        %v1184 = vsel %vm1126, %v1182, %v1183
        %v1185 = vrot.slane %v1065, 3
        %v1186 = vsel %vm1126, %v1183, %v1185
        %v1187 = vrot.slane %v1066, 3
        %v1188 = vrot.slane %v1067, 3
        %v1189 = vsel %vm1126, %v1187, %v1188
        %v1190 = vrot.slane %v1068, 3
        %v1191 = vsel %vm1126, %v1188, %v1190
        %v1192 = vrot.slane %v1069, 3
        %v1193 = vrot.slane %v1070, 3
        %v1194 = vsel %vm1126, %v1192, %v1193
        %v1195 = vrot.slane %v1071, 3
        %v1196 = vsel %vm1126, %v1193, %v1195
        %v1197 = vrot.slane %v1072, 3
        %v1198 = vrot.slane %v1073, 3
        %v1199 = vsel %vm1126, %v1197, %v1198
        %v1200 = vrot.slane %v1074, 3
        %v1201 = vsel %vm1126, %v1198, %v1200
        %v1202 = vrot.slane %v1075, 3
        %v1203 = vrot.slane %v1076, 3
        %v1204 = vsel %vm1126, %v1202, %v1203
        %v1205 = vrot.slane %v1077, 3
        %v1206 = vsel %vm1126, %v1203, %v1205
        %v1239 = vadd.f32 %v994, %v1129
        %v1240 = vadd.f32 %v995, %v1131
        %v1241 = vadd.f32 %v996, %v1134
        %v1242 = vadd.f32 %v997, %v1136
        %v1243 = vadd.f32 %v998, %v1139
        %v1244 = vadd.f32 %v999, %v1141
        %v1245 = vadd.f32 %v1000, %v1144
        %v1246 = vadd.f32 %v1001, %v1146
        %v1247 = vadd.f32 %v1002, %v1149
        %v1248 = vadd.f32 %v1003, %v1151
        %v1249 = vadd.f32 %v1004, %v1154
        %v1250 = vadd.f32 %v1005, %v1156
        %v1251 = vadd.f32 %v1006, %v1159
        %v1252 = vadd.f32 %v1007, %v1161
        %v1253 = vadd.f32 %v1008, %v1164
        %v1254 = vadd.f32 %v1009, %v1166
        %v1255 = vadd.f32 %v1010, %v1169
        %v1256 = vadd.f32 %v1011, %v1171
        %v1257 = vadd.f32 %v1012, %v1174
        %v1258 = vadd.f32 %v1013, %v1176
        %v1259 = vadd.f32 %v1014, %v1179
        %v1260 = vadd.f32 %v1015, %v1181
        %v1261 = vadd.f32 %v1016, %v1184
        %v1262 = vadd.f32 %v1017, %v1186
        %v1263 = vadd.f32 %v1018, %v1189
        %v1264 = vadd.f32 %v1019, %v1191
        %v1265 = vadd.f32 %v1020, %v1194
        %v1266 = vadd.f32 %v1021, %v1196
        %v1267 = vadd.f32 %v1022, %v1199
        %v1268 = vadd.f32 %v1023, %v1201
        %v1269 = vadd.f32 %v1024, %v1204
        %v1270 = vadd.f32 %v1025, %v1206
        %v1271 = vlaneseq
        %v1272 = vshrl.u32 %v1271, 7
        %v1273 = vsub.s32 4, %v1272
        %v1274 = vrot.slane %v406, %v1273
        %v1275 = vmul.f32 %v420, %v1274
        %v1276 = vmul.f32 %v421, %v1274
        %v1277 = vmul.f32 %v422, %v1274
        %v1278 = vmul.f32 %v423, %v1274
        %v1279 = vmul.f32 %v424, %v1274
        %v1280 = vmul.f32 %v425, %v1274
        %v1281 = vmul.f32 %v426, %v1274
        %v1282 = vmul.f32 %v427, %v1274
        %v1283 = vmul.f32 %v428, %v1274
        %v1284 = vmul.f32 %v429, %v1274
        %v1285 = vmul.f32 %v430, %v1274
        %v1286 = vmul.f32 %v431, %v1274
        %v1287 = vmul.f32 %v432, %v1274
        %v1288 = vmul.f32 %v433, %v1274
        %v1289 = vmul.f32 %v434, %v1274
        %v1290 = vmul.f32 %v435, %v1274
        %v1291 = vmul.f32 %v436, %v1274
        %v1292 = vmul.f32 %v437, %v1274
        %v1293 = vmul.f32 %v438, %v1274
        %v1294 = vmul.f32 %v439, %v1274
        %v1295 = vmul.f32 %v440, %v1274
        %v1296 = vmul.f32 %v441, %v1274
        %v1297 = vmul.f32 %v442, %v1274
        %v1298 = vmul.f32 %v443, %v1274
        %v1299 = vmul.f32 %v444, %v1274
        %v1300 = vmul.f32 %v445, %v1274
        %v1301 = vmul.f32 %v446, %v1274
        %v1302 = vmul.f32 %v447, %v1274
        %v1303 = vmul.f32 %v448, %v1274
        %v1304 = vmul.f32 %v449, %v1274
        %v1305 = vmul.f32 %v450, %v1274
        %v1306 = vmul.f32 %v451, %v1274
        %v1307 = vmul.f32 %v452, %v1274
        %v1308 = vmul.f32 %v453, %v1274
        %v1309 = vmul.f32 %v454, %v1274
        %v1310 = vmul.f32 %v455, %v1274
        %v1311 = vmul.f32 %v456, %v1274
        %v1312 = vmul.f32 %v457, %v1274
        %v1313 = vmul.f32 %v458, %v1274
        %v1314 = vmul.f32 %v459, %v1274
        %v1315 = vmul.f32 %v460, %v1274
        %v1316 = vmul.f32 %v461, %v1274
        %v1317 = vmul.f32 %v462, %v1274
        %v1318 = vmul.f32 %v463, %v1274
        %v1319 = vmul.f32 %v464, %v1274
        %v1320 = vmul.f32 %v465, %v1274
        %v1321 = vmul.f32 %v466, %v1274
        %v1322 = vmul.f32 %v467, %v1274
        %vm1371 = vcmask 1043456
        %v1372 = vrot.slane %v1275, 4
        %v1373 = vrot.slane %v1276, 4
        %v1374 = vsel %vm1371, %v1372, %v1373
        %v1375 = vrot.slane %v1277, 4
        %v1376 = vsel %vm1371, %v1373, %v1375
        %v1377 = vrot.slane %v1278, 4
        %v1378 = vrot.slane %v1279, 4
        %v1379 = vsel %vm1371, %v1377, %v1378
        %v1380 = vrot.slane %v1280, 4
        %v1381 = vsel %vm1371, %v1378, %v1380
        %v1382 = vrot.slane %v1281, 4
        %v1383 = vrot.slane %v1282, 4
        %v1384 = vsel %vm1371, %v1382, %v1383
        %v1385 = vrot.slane %v1283, 4
        %v1386 = vsel %vm1371, %v1383, %v1385
        %v1387 = vrot.slane %v1284, 4
        %v1388 = vrot.slane %v1285, 4
        %v1389 = vsel %vm1371, %v1387, %v1388
        %v1390 = vrot.slane %v1286, 4
        %v1391 = vsel %vm1371, %v1388, %v1390
        %v1392 = vrot.slane %v1287, 4
        %v1393 = vrot.slane %v1288, 4
        %v1394 = vsel %vm1371, %v1392, %v1393
        %v1395 = vrot.slane %v1289, 4
        %v1396 = vsel %vm1371, %v1393, %v1395
        %v1397 = vrot.slane %v1290, 4
        %v1398 = vrot.slane %v1291, 4
        %v1399 = vsel %vm1371, %v1397, %v1398
        %v1400 = vrot.slane %v1292, 4
        %v1401 = vsel %vm1371, %v1398, %v1400
        %v1402 = vrot.slane %v1293, 4
        %v1403 = vrot.slane %v1294, 4
        %v1404 = vsel %vm1371, %v1402, %v1403
        %v1405 = vrot.slane %v1295, 4
        %v1406 = vsel %vm1371, %v1403, %v1405
        %v1407 = vrot.slane %v1296, 4
        %v1408 = vrot.slane %v1297, 4
        %v1409 = vsel %vm1371, %v1407, %v1408
        %v1410 = vrot.slane %v1298, 4
        %v1411 = vsel %vm1371, %v1408, %v1410
        %v1412 = vrot.slane %v1299, 4
        %v1413 = vrot.slane %v1300, 4
        %v1414 = vsel %vm1371, %v1412, %v1413
        %v1415 = vrot.slane %v1301, 4
        %v1416 = vsel %vm1371, %v1413, %v1415
        %v1417 = vrot.slane %v1302, 4
        %v1418 = vrot.slane %v1303, 4
        %v1419 = vsel %vm1371, %v1417, %v1418
        %v1420 = vrot.slane %v1304, 4
        %v1421 = vsel %vm1371, %v1418, %v1420
        %v1422 = vrot.slane %v1305, 4
        %v1423 = vrot.slane %v1306, 4
        %v1424 = vsel %vm1371, %v1422, %v1423
        %v1425 = vrot.slane %v1307, 4
        %v1426 = vsel %vm1371, %v1423, %v1425
        %v1427 = vrot.slane %v1308, 4
        %v1428 = vrot.slane %v1309, 4
        %v1429 = vsel %vm1371, %v1427, %v1428
        %v1430 = vrot.slane %v1310, 4
        %v1431 = vsel %vm1371, %v1428, %v1430
        %v1432 = vrot.slane %v1311, 4
        %v1433 = vrot.slane %v1312, 4
        %v1434 = vsel %vm1371, %v1432, %v1433
        %v1435 = vrot.slane %v1313, 4
        %v1436 = vsel %vm1371, %v1433, %v1435
        %v1437 = vrot.slane %v1314, 4
        %v1438 = vrot.slane %v1315, 4
        %v1439 = vsel %vm1371, %v1437, %v1438
        %v1440 = vrot.slane %v1316, 4
        %v1441 = vsel %vm1371, %v1438, %v1440
        %v1442 = vrot.slane %v1317, 4
        %v1443 = vrot.slane %v1318, 4
        %v1444 = vsel %vm1371, %v1442, %v1443
        %v1445 = vrot.slane %v1319, 4
        %v1446 = vsel %vm1371, %v1443, %v1445
        %v1447 = vrot.slane %v1320, 4
        %v1448 = vrot.slane %v1321, 4
        %v1449 = vsel %vm1371, %v1447, %v1448
        %v1450 = vrot.slane %v1322, 4
        %v1451 = vsel %vm1371, %v1448, %v1450
        %v1484 = vadd.f32 %v1239, %v1374
        %v1485 = vadd.f32 %v1240, %v1376
        %v1486 = vadd.f32 %v1241, %v1379
        %v1487 = vadd.f32 %v1242, %v1381
        %v1488 = vadd.f32 %v1243, %v1384
        %v1489 = vadd.f32 %v1244, %v1386
        %v1490 = vadd.f32 %v1245, %v1389
        %v1491 = vadd.f32 %v1246, %v1391
        %v1492 = vadd.f32 %v1247, %v1394
        %v1493 = vadd.f32 %v1248, %v1396
        %v1494 = vadd.f32 %v1249, %v1399
        %v1495 = vadd.f32 %v1250, %v1401
        %v1496 = vadd.f32 %v1251, %v1404
        %v1497 = vadd.f32 %v1252, %v1406
        %v1498 = vadd.f32 %v1253, %v1409
        %v1499 = vadd.f32 %v1254, %v1411
        %v1500 = vadd.f32 %v1255, %v1414
        %v1501 = vadd.f32 %v1256, %v1416
        %v1502 = vadd.f32 %v1257, %v1419
        %v1503 = vadd.f32 %v1258, %v1421
        %v1504 = vadd.f32 %v1259, %v1424
        %v1505 = vadd.f32 %v1260, %v1426
        %v1506 = vadd.f32 %v1261, %v1429
        %v1507 = vadd.f32 %v1262, %v1431
        %v1508 = vadd.f32 %v1263, %v1434
        %v1509 = vadd.f32 %v1264, %v1436
        %v1510 = vadd.f32 %v1265, %v1439
        %v1511 = vadd.f32 %v1266, %v1441
        %v1512 = vadd.f32 %v1267, %v1444
        %v1513 = vadd.f32 %v1268, %v1446
        %v1514 = vadd.f32 %v1269, %v1449
        %v1515 = vadd.f32 %v1270, %v1451
        %v1516 = vlaneseq
        %v1517 = vshrl.u32 %v1516, 7
        %v1518 = vsub.s32 5, %v1517
        %v1519 = vrot.slane %v406, %v1518
        %v1520 = vmul.f32 %v420, %v1519
        %v1521 = vmul.f32 %v421, %v1519
        %v1522 = vmul.f32 %v422, %v1519
        %v1523 = vmul.f32 %v423, %v1519
        %v1524 = vmul.f32 %v424, %v1519
        %v1525 = vmul.f32 %v425, %v1519
        %v1526 = vmul.f32 %v426, %v1519
        %v1527 = vmul.f32 %v427, %v1519
        %v1528 = vmul.f32 %v428, %v1519
        %v1529 = vmul.f32 %v429, %v1519
        %v1530 = vmul.f32 %v430, %v1519
        %v1531 = vmul.f32 %v431, %v1519
        %v1532 = vmul.f32 %v432, %v1519
        %v1533 = vmul.f32 %v433, %v1519
        %v1534 = vmul.f32 %v434, %v1519
        %v1535 = vmul.f32 %v435, %v1519
        %v1536 = vmul.f32 %v436, %v1519
        %v1537 = vmul.f32 %v437, %v1519
        %v1538 = vmul.f32 %v438, %v1519
        %v1539 = vmul.f32 %v439, %v1519
        %v1540 = vmul.f32 %v440, %v1519
        %v1541 = vmul.f32 %v441, %v1519
        %v1542 = vmul.f32 %v442, %v1519
        %v1543 = vmul.f32 %v443, %v1519
        %v1544 = vmul.f32 %v444, %v1519
        %v1545 = vmul.f32 %v445, %v1519
        %v1546 = vmul.f32 %v446, %v1519
        %v1547 = vmul.f32 %v447, %v1519
        %v1548 = vmul.f32 %v448, %v1519
        %v1549 = vmul.f32 %v449, %v1519
        %v1550 = vmul.f32 %v450, %v1519
        %v1551 = vmul.f32 %v451, %v1519
        %v1552 = vmul.f32 %v452, %v1519
        %v1553 = vmul.f32 %v453, %v1519
        %v1554 = vmul.f32 %v454, %v1519
        %v1555 = vmul.f32 %v455, %v1519
        %v1556 = vmul.f32 %v456, %v1519
        %v1557 = vmul.f32 %v457, %v1519
        %v1558 = vmul.f32 %v458, %v1519
        %v1559 = vmul.f32 %v459, %v1519
        %v1560 = vmul.f32 %v460, %v1519
        %v1561 = vmul.f32 %v461, %v1519
        %v1562 = vmul.f32 %v462, %v1519
        %v1563 = vmul.f32 %v463, %v1519
        %v1564 = vmul.f32 %v464, %v1519
        %v1565 = vmul.f32 %v465, %v1519
        %v1566 = vmul.f32 %v466, %v1519
        %v1567 = vmul.f32 %v467, %v1519
        %vm1616 = vcmask 1042432
        %v1617 = vrot.slane %v1520, 5
        %v1618 = vrot.slane %v1521, 5
        %v1619 = vsel %vm1616, %v1617, %v1618
        %v1620 = vrot.slane %v1522, 5
        %v1621 = vsel %vm1616, %v1618, %v1620
        %v1622 = vrot.slane %v1523, 5
        %v1623 = vrot.slane %v1524, 5
        %v1624 = vsel %vm1616, %v1622, %v1623
        %v1625 = vrot.slane %v1525, 5
        %v1626 = vsel %vm1616, %v1623, %v1625
        %v1627 = vrot.slane %v1526, 5
        %v1628 = vrot.slane %v1527, 5
        %v1629 = vsel %vm1616, %v1627, %v1628
        %v1630 = vrot.slane %v1528, 5
        %v1631 = vsel %vm1616, %v1628, %v1630
        %v1632 = vrot.slane %v1529, 5
        %v1633 = vrot.slane %v1530, 5
        %v1634 = vsel %vm1616, %v1632, %v1633
        %v1635 = vrot.slane %v1531, 5
        %v1636 = vsel %vm1616, %v1633, %v1635
        %v1637 = vrot.slane %v1532, 5
        %v1638 = vrot.slane %v1533, 5
        %v1639 = vsel %vm1616, %v1637, %v1638
        %v1640 = vrot.slane %v1534, 5
        %v1641 = vsel %vm1616, %v1638, %v1640
        %v1642 = vrot.slane %v1535, 5
        %v1643 = vrot.slane %v1536, 5
        %v1644 = vsel %vm1616, %v1642, %v1643
        %v1645 = vrot.slane %v1537, 5
        %v1646 = vsel %vm1616, %v1643, %v1645
        %v1647 = vrot.slane %v1538, 5
        %v1648 = vrot.slane %v1539, 5
        %v1649 = vsel %vm1616, %v1647, %v1648
        %v1650 = vrot.slane %v1540, 5
        %v1651 = vsel %vm1616, %v1648, %v1650
        %v1652 = vrot.slane %v1541, 5
        %v1653 = vrot.slane %v1542, 5
        %v1654 = vsel %vm1616, %v1652, %v1653
        %v1655 = vrot.slane %v1543, 5
        %v1656 = vsel %vm1616, %v1653, %v1655
        %v1657 = vrot.slane %v1544, 5
        %v1658 = vrot.slane %v1545, 5
        %v1659 = vsel %vm1616, %v1657, %v1658
        %v1660 = vrot.slane %v1546, 5
        %v1661 = vsel %vm1616, %v1658, %v1660
        %v1662 = vrot.slane %v1547, 5
        %v1663 = vrot.slane %v1548, 5
        %v1664 = vsel %vm1616, %v1662, %v1663
        %v1665 = vrot.slane %v1549, 5
        %v1666 = vsel %vm1616, %v1663, %v1665
        %v1667 = vrot.slane %v1550, 5
        %v1668 = vrot.slane %v1551, 5
        %v1669 = vsel %vm1616, %v1667, %v1668
        %v1670 = vrot.slane %v1552, 5
        %v1671 = vsel %vm1616, %v1668, %v1670
        %v1672 = vrot.slane %v1553, 5
        %v1673 = vrot.slane %v1554, 5
        %v1674 = vsel %vm1616, %v1672, %v1673
        %v1675 = vrot.slane %v1555, 5
        %v1676 = vsel %vm1616, %v1673, %v1675
        %v1677 = vrot.slane %v1556, 5
        %v1678 = vrot.slane %v1557, 5
        %v1679 = vsel %vm1616, %v1677, %v1678
        %v1680 = vrot.slane %v1558, 5
        %v1681 = vsel %vm1616, %v1678, %v1680
        %v1682 = vrot.slane %v1559, 5
        %v1683 = vrot.slane %v1560, 5
        %v1684 = vsel %vm1616, %v1682, %v1683
        %v1685 = vrot.slane %v1561, 5
        %v1686 = vsel %vm1616, %v1683, %v1685
        %v1687 = vrot.slane %v1562, 5
        %v1688 = vrot.slane %v1563, 5
        %v1689 = vsel %vm1616, %v1687, %v1688
        %v1690 = vrot.slane %v1564, 5
        %v1691 = vsel %vm1616, %v1688, %v1690
        %v1692 = vrot.slane %v1565, 5
        %v1693 = vrot.slane %v1566, 5
        %v1694 = vsel %vm1616, %v1692, %v1693
        %v1695 = vrot.slane %v1567, 5
        %v1696 = vsel %vm1616, %v1693, %v1695
        %v1729 = vadd.f32 %v1484, %v1619
        %v1730 = vadd.f32 %v1485, %v1621
        %v1731 = vadd.f32 %v1486, %v1624
        %v1732 = vadd.f32 %v1487, %v1626
        %v1733 = vadd.f32 %v1488, %v1629
        %v1734 = vadd.f32 %v1489, %v1631
        %v1735 = vadd.f32 %v1490, %v1634
        %v1736 = vadd.f32 %v1491, %v1636
        %v1737 = vadd.f32 %v1492, %v1639
        %v1738 = vadd.f32 %v1493, %v1641
        %v1739 = vadd.f32 %v1494, %v1644
        %v1740 = vadd.f32 %v1495, %v1646
        %v1741 = vadd.f32 %v1496, %v1649
        %v1742 = vadd.f32 %v1497, %v1651
        %v1743 = vadd.f32 %v1498, %v1654
        %v1744 = vadd.f32 %v1499, %v1656
        %v1745 = vadd.f32 %v1500, %v1659
        %v1746 = vadd.f32 %v1501, %v1661
        %v1747 = vadd.f32 %v1502, %v1664
        %v1748 = vadd.f32 %v1503, %v1666
        %v1749 = vadd.f32 %v1504, %v1669
        %v1750 = vadd.f32 %v1505, %v1671
        %v1751 = vadd.f32 %v1506, %v1674
        %v1752 = vadd.f32 %v1507, %v1676
        %v1753 = vadd.f32 %v1508, %v1679
        %v1754 = vadd.f32 %v1509, %v1681
        %v1755 = vadd.f32 %v1510, %v1684
        %v1756 = vadd.f32 %v1511, %v1686
        %v1757 = vadd.f32 %v1512, %v1689
        %v1758 = vadd.f32 %v1513, %v1691
        %v1759 = vadd.f32 %v1514, %v1694
        %v1760 = vadd.f32 %v1515, %v1696
        %v1761 = vlaneseq
        %v1762 = vshrl.u32 %v1761, 7
        %v1763 = vsub.s32 6, %v1762
        %v1764 = vrot.slane %v406, %v1763
        %v1765 = vmul.f32 %v420, %v1764
        %v1766 = vmul.f32 %v421, %v1764
        %v1767 = vmul.f32 %v422, %v1764
        %v1768 = vmul.f32 %v423, %v1764
        %v1769 = vmul.f32 %v424, %v1764
        %v1770 = vmul.f32 %v425, %v1764
        %v1771 = vmul.f32 %v426, %v1764
        %v1772 = vmul.f32 %v427, %v1764
        %v1773 = vmul.f32 %v428, %v1764
        %v1774 = vmul.f32 %v429, %v1764
        %v1775 = vmul.f32 %v430, %v1764
        %v1776 = vmul.f32 %v431, %v1764
        %v1777 = vmul.f32 %v432, %v1764
        %v1778 = vmul.f32 %v433, %v1764
        %v1779 = vmul.f32 %v434, %v1764
        %v1780 = vmul.f32 %v435, %v1764
        %v1781 = vmul.f32 %v436, %v1764
        %v1782 = vmul.f32 %v437, %v1764
        %v1783 = vmul.f32 %v438, %v1764
        %v1784 = vmul.f32 %v439, %v1764
        %v1785 = vmul.f32 %v440, %v1764
        %v1786 = vmul.f32 %v441, %v1764
        %v1787 = vmul.f32 %v442, %v1764
        %v1788 = vmul.f32 %v443, %v1764
        %v1789 = vmul.f32 %v444, %v1764
        %v1790 = vmul.f32 %v445, %v1764
        %v1791 = vmul.f32 %v446, %v1764
        %v1792 = vmul.f32 %v447, %v1764
        %v1793 = vmul.f32 %v448, %v1764
        %v1794 = vmul.f32 %v449, %v1764
        %v1795 = vmul.f32 %v450, %v1764
        %v1796 = vmul.f32 %v451, %v1764
        %v1797 = vmul.f32 %v452, %v1764
        %v1798 = vmul.f32 %v453, %v1764
        %v1799 = vmul.f32 %v454, %v1764
        %v1800 = vmul.f32 %v455, %v1764
        %v1801 = vmul.f32 %v456, %v1764
        %v1802 = vmul.f32 %v457, %v1764
        %v1803 = vmul.f32 %v458, %v1764
        %v1804 = vmul.f32 %v459, %v1764
        %v1805 = vmul.f32 %v460, %v1764
        %v1806 = vmul.f32 %v461, %v1764
        %v1807 = vmul.f32 %v462, %v1764
        %v1808 = vmul.f32 %v463, %v1764
        %v1809 = vmul.f32 %v464, %v1764
        %v1810 = vmul.f32 %v465, %v1764
        %v1811 = vmul.f32 %v466, %v1764
        %v1812 = vmul.f32 %v467, %v1764
        %vm1861 = vcmask 1041408
        %v1862 = vrot.slane %v1765, 6
        %v1863 = vrot.slane %v1766, 6
        %v1864 = vsel %vm1861, %v1862, %v1863
        %v1865 = vrot.slane %v1767, 6
        %v1866 = vsel %vm1861, %v1863, %v1865
        %v1867 = vrot.slane %v1768, 6
        %v1868 = vrot.slane %v1769, 6
        %v1869 = vsel %vm1861, %v1867, %v1868
        %v1870 = vrot.slane %v1770, 6
        %v1871 = vsel %vm1861, %v1868, %v1870
        %v1872 = vrot.slane %v1771, 6
        %v1873 = vrot.slane %v1772, 6
        %v1874 = vsel %vm1861, %v1872, %v1873
        %v1875 = vrot.slane %v1773, 6
        %v1876 = vsel %vm1861, %v1873, %v1875
        %v1877 = vrot.slane %v1774, 6
        %v1878 = vrot.slane %v1775, 6
        %v1879 = vsel %vm1861, %v1877, %v1878
        %v1880 = vrot.slane %v1776, 6
        %v1881 = vsel %vm1861, %v1878, %v1880
        %v1882 = vrot.slane %v1777, 6
        %v1883 = vrot.slane %v1778, 6
        %v1884 = vsel %vm1861, %v1882, %v1883
        %v1885 = vrot.slane %v1779, 6
        %v1886 = vsel %vm1861, %v1883, %v1885
        %v1887 = vrot.slane %v1780, 6
        %v1888 = vrot.slane %v1781, 6
        %v1889 = vsel %vm1861, %v1887, %v1888
        %v1890 = vrot.slane %v1782, 6
        %v1891 = vsel %vm1861, %v1888, %v1890
        %v1892 = vrot.slane %v1783, 6
        %v1893 = vrot.slane %v1784, 6
        %v1894 = vsel %vm1861, %v1892, %v1893
        %v1895 = vrot.slane %v1785, 6
        %v1896 = vsel %vm1861, %v1893, %v1895
        %v1897 = vrot.slane %v1786, 6
        %v1898 = vrot.slane %v1787, 6
        %v1899 = vsel %vm1861, %v1897, %v1898
        %v1900 = vrot.slane %v1788, 6
        %v1901 = vsel %vm1861, %v1898, %v1900
        %v1902 = vrot.slane %v1789, 6
        %v1903 = vrot.slane %v1790, 6
        %v1904 = vsel %vm1861, %v1902, %v1903
        %v1905 = vrot.slane %v1791, 6
        %v1906 = vsel %vm1861, %v1903, %v1905
        %v1907 = vrot.slane %v1792, 6
        %v1908 = vrot.slane %v1793, 6
        %v1909 = vsel %vm1861, %v1907, %v1908
        %v1910 = vrot.slane %v1794, 6
        %v1911 = vsel %vm1861, %v1908, %v1910
        %v1912 = vrot.slane %v1795, 6
        %v1913 = vrot.slane %v1796, 6
        %v1914 = vsel %vm1861, %v1912, %v1913
        %v1915 = vrot.slane %v1797, 6
        %v1916 = vsel %vm1861, %v1913, %v1915
        %v1917 = vrot.slane %v1798, 6
        %v1918 = vrot.slane %v1799, 6
        %v1919 = vsel %vm1861, %v1917, %v1918
        %v1920 = vrot.slane %v1800, 6
        %v1921 = vsel %vm1861, %v1918, %v1920
        %v1922 = vrot.slane %v1801, 6
        %v1923 = vrot.slane %v1802, 6
        %v1924 = vsel %vm1861, %v1922, %v1923
        %v1925 = vrot.slane %v1803, 6
        %v1926 = vsel %vm1861, %v1923, %v1925
        %v1927 = vrot.slane %v1804, 6
        %v1928 = vrot.slane %v1805, 6
        %v1929 = vsel %vm1861, %v1927, %v1928
        %v1930 = vrot.slane %v1806, 6
        %v1931 = vsel %vm1861, %v1928, %v1930
        %v1932 = vrot.slane %v1807, 6
        %v1933 = vrot.slane %v1808, 6
        %v1934 = vsel %vm1861, %v1932, %v1933
        %v1935 = vrot.slane %v1809, 6
        %v1936 = vsel %vm1861, %v1933, %v1935
        %v1937 = vrot.slane %v1810, 6
        %v1938 = vrot.slane %v1811, 6
        %v1939 = vsel %vm1861, %v1937, %v1938
        %v1940 = vrot.slane %v1812, 6
        %v1941 = vsel %vm1861, %v1938, %v1940
        %v1974 = vadd.f32 %v1729, %v1864
        %v1975 = vadd.f32 %v1730, %v1866
        %v1976 = vadd.f32 %v1731, %v1869
        %v1977 = vadd.f32 %v1732, %v1871
        %v1978 = vadd.f32 %v1733, %v1874
        %v1979 = vadd.f32 %v1734, %v1876
        %v1980 = vadd.f32 %v1735, %v1879
        %v1981 = vadd.f32 %v1736, %v1881
        %v1982 = vadd.f32 %v1737, %v1884
        %v1983 = vadd.f32 %v1738, %v1886
        %v1984 = vadd.f32 %v1739, %v1889
        %v1985 = vadd.f32 %v1740, %v1891
        %v1986 = vadd.f32 %v1741, %v1894
        %v1987 = vadd.f32 %v1742, %v1896
        %v1988 = vadd.f32 %v1743, %v1899
        %v1989 = vadd.f32 %v1744, %v1901
        %v1990 = vadd.f32 %v1745, %v1904
        %v1991 = vadd.f32 %v1746, %v1906
        %v1992 = vadd.f32 %v1747, %v1909
        %v1993 = vadd.f32 %v1748, %v1911
        %v1994 = vadd.f32 %v1749, %v1914
        %v1995 = vadd.f32 %v1750, %v1916
        %v1996 = vadd.f32 %v1751, %v1919
        %v1997 = vadd.f32 %v1752, %v1921
        %v1998 = vadd.f32 %v1753, %v1924
        %v1999 = vadd.f32 %v1754, %v1926
        %v2000 = vadd.f32 %v1755, %v1929
        %v2001 = vadd.f32 %v1756, %v1931
        %v2002 = vadd.f32 %v1757, %v1934
        %v2003 = vadd.f32 %v1758, %v1936
        %v2004 = vadd.f32 %v1759, %v1939
        %v2005 = vadd.f32 %v1760, %v1941
        %s2006 = scalar_lea.vmem [#allocation2], 24
        %v2007 = vld [vmem:[%s2006] sm:$0xff]
        %v2008 = vld [vmem:[%s2006 + $0x8] sm:$0xff]
        %v2009 = vld [vmem:[%s2006 + $0x10] sm:$0x3f]
        %v2010 = vld [vmem:[%s2006 + $0x18] sm:$0xff]
        %v2011 = vld [vmem:[%s2006 + $0x20] sm:$0xff]
        %v2012 = vld [vmem:[%s2006 + $0x28] sm:$0x3f]
        %v2013 = vld [vmem:[%s2006 + $0x30] sm:$0xff]
        %v2014 = vld [vmem:[%s2006 + $0x38] sm:$0xff]
        %v2015 = vld [vmem:[%s2006 + $0x40] sm:$0x3f]
        %v2016 = vld [vmem:[%s2006 + $0x48] sm:$0xff]
        %v2017 = vld [vmem:[%s2006 + $0x50] sm:$0xff]
        %v2018 = vld [vmem:[%s2006 + $0x58] sm:$0x3f]
        %v2019 = vld [vmem:[%s2006 + $0x60] sm:$0xff]
        %v2020 = vld [vmem:[%s2006 + $0x68] sm:$0xff]
        %v2021 = vld [vmem:[%s2006 + $0x70] sm:$0x3f]
        %v2022 = vld [vmem:[%s2006 + $0x78] sm:$0xff]
        %v2023 = vld [vmem:[%s2006 + $0x80] sm:$0xff]
        %v2024 = vld [vmem:[%s2006 + $0x88] sm:$0x3f]
        %v2025 = vld [vmem:[%s2006 + $0x90] sm:$0xff]
        %v2026 = vld [vmem:[%s2006 + $0x98] sm:$0xff]
        %v2027 = vld [vmem:[%s2006 + $0xa0] sm:$0x3f]
        %v2028 = vld [vmem:[%s2006 + $0xa8] sm:$0xff]
        %v2029 = vld [vmem:[%s2006 + $0xb0] sm:$0xff]
        %v2030 = vld [vmem:[%s2006 + $0xb8] sm:$0x3f]
        %v2031 = vld [vmem:[%s2006 + $0xc0] sm:$0xff]
        %v2032 = vld [vmem:[%s2006 + $0xc8] sm:$0xff]
        %v2033 = vld [vmem:[%s2006 + $0xd0] sm:$0x3f]
        %v2034 = vld [vmem:[%s2006 + $0xd8] sm:$0xff]
        %v2035 = vld [vmem:[%s2006 + $0xe0] sm:$0xff]
        %v2036 = vld [vmem:[%s2006 + $0xe8] sm:$0x3f]
        %v2037 = vld [vmem:[%s2006 + $0xf0] sm:$0xff]
        %v2038 = vld [vmem:[%s2006 + $0xf8] sm:$0xff]
        %v2039 = vld [vmem:[%s2006 + $0x100] sm:$0x3f]
        %v2040 = vld [vmem:[%s2006 + $0x108] sm:$0xff]
        %v2041 = vld [vmem:[%s2006 + $0x110] sm:$0xff]
        %v2042 = vld [vmem:[%s2006 + $0x118] sm:$0x3f]
        %v2043 = vld [vmem:[%s2006 + $0x120] sm:$0xff]
        %v2044 = vld [vmem:[%s2006 + $0x128] sm:$0xff]
        %v2045 = vld [vmem:[%s2006 + $0x130] sm:$0x3f]
        %v2046 = vld [vmem:[%s2006 + $0x138] sm:$0xff]
        %v2047 = vld [vmem:[%s2006 + $0x140] sm:$0xff]
        %v2048 = vld [vmem:[%s2006 + $0x148] sm:$0x3f]
        %v2049 = vld [vmem:[%s2006 + $0x150] sm:$0xff]
        %v2050 = vld [vmem:[%s2006 + $0x158] sm:$0xff]
        %v2051 = vld [vmem:[%s2006 + $0x160] sm:$0x3f]
        %v2052 = vld [vmem:[%s2006 + $0x168] sm:$0xff]
        %v2053 = vld [vmem:[%s2006 + $0x170] sm:$0xff]
        %v2054 = vld [vmem:[%s2006 + $0x178] sm:$0x3f]
        %v2055 = vlaneseq
        %v2056 = vshrl.u32 %v2055, 7
        %v2057 = vsub.s32 0, %v2056
        %v2058 = vrot.slane %v407, %v2057
        %v2059 = vmul.f32 %v2007, %v2058
        %v2060 = vmul.f32 %v2008, %v2058
        %v2061 = vmul.f32 %v2010, %v2058
        %v2062 = vmul.f32 %v2011, %v2058
        %v2063 = vmul.f32 %v2013, %v2058
        %v2064 = vmul.f32 %v2014, %v2058
        %v2065 = vmul.f32 %v2016, %v2058
        %v2066 = vmul.f32 %v2017, %v2058
        %v2067 = vmul.f32 %v2019, %v2058
        %v2068 = vmul.f32 %v2020, %v2058
        %v2069 = vmul.f32 %v2022, %v2058
        %v2070 = vmul.f32 %v2023, %v2058
        %v2071 = vmul.f32 %v2025, %v2058
        %v2072 = vmul.f32 %v2026, %v2058
        %v2073 = vmul.f32 %v2028, %v2058
        %v2074 = vmul.f32 %v2029, %v2058
        %v2075 = vmul.f32 %v2031, %v2058
        %v2076 = vmul.f32 %v2032, %v2058
        %v2077 = vmul.f32 %v2034, %v2058
        %v2078 = vmul.f32 %v2035, %v2058
        %v2079 = vmul.f32 %v2037, %v2058
        %v2080 = vmul.f32 %v2038, %v2058
        %v2081 = vmul.f32 %v2040, %v2058
        %v2082 = vmul.f32 %v2041, %v2058
        %v2083 = vmul.f32 %v2043, %v2058
        %v2084 = vmul.f32 %v2044, %v2058
        %v2085 = vmul.f32 %v2046, %v2058
        %v2086 = vmul.f32 %v2047, %v2058
        %v2087 = vmul.f32 %v2049, %v2058
        %v2088 = vmul.f32 %v2050, %v2058
        %v2089 = vmul.f32 %v2052, %v2058
        %v2090 = vmul.f32 %v2053, %v2058
        %v2091 = vadd.f32 %v1974, %v2059
        %v2092 = vadd.f32 %v1975, %v2060
        %v2093 = vadd.f32 %v1976, %v2061
        %v2094 = vadd.f32 %v1977, %v2062
        %v2095 = vadd.f32 %v1978, %v2063
        %v2096 = vadd.f32 %v1979, %v2064
        %v2097 = vadd.f32 %v1980, %v2065
        %v2098 = vadd.f32 %v1981, %v2066
        %v2099 = vadd.f32 %v1982, %v2067
        %v2100 = vadd.f32 %v1983, %v2068
        %v2101 = vadd.f32 %v1984, %v2069
        %v2102 = vadd.f32 %v1985, %v2070
        %v2103 = vadd.f32 %v1986, %v2071
        %v2104 = vadd.f32 %v1987, %v2072
        %v2105 = vadd.f32 %v1988, %v2073
        %v2106 = vadd.f32 %v1989, %v2074
        %v2107 = vadd.f32 %v1990, %v2075
        %v2108 = vadd.f32 %v1991, %v2076
        %v2109 = vadd.f32 %v1992, %v2077
        %v2110 = vadd.f32 %v1993, %v2078
        %v2111 = vadd.f32 %v1994, %v2079
        %v2112 = vadd.f32 %v1995, %v2080
        %v2113 = vadd.f32 %v1996, %v2081
        %v2114 = vadd.f32 %v1997, %v2082
        %v2115 = vadd.f32 %v1998, %v2083
        %v2116 = vadd.f32 %v1999, %v2084
        %v2117 = vadd.f32 %v2000, %v2085
        %v2118 = vadd.f32 %v2001, %v2086
        %v2119 = vadd.f32 %v2002, %v2087
        %v2120 = vadd.f32 %v2003, %v2088
        %v2121 = vadd.f32 %v2004, %v2089
        %v2122 = vadd.f32 %v2005, %v2090
        %v2123 = vlaneseq
        %v2124 = vshrl.u32 %v2123, 7
        %v2125 = vsub.s32 1, %v2124
        %v2126 = vrot.slane %v407, %v2125
        %v2127 = vmul.f32 %v2007, %v2126
        %v2128 = vmul.f32 %v2008, %v2126
        %v2129 = vmul.f32 %v2009, %v2126
        %v2130 = vmul.f32 %v2010, %v2126
        %v2131 = vmul.f32 %v2011, %v2126
        %v2132 = vmul.f32 %v2012, %v2126
        %v2133 = vmul.f32 %v2013, %v2126
        %v2134 = vmul.f32 %v2014, %v2126
        %v2135 = vmul.f32 %v2015, %v2126
        %v2136 = vmul.f32 %v2016, %v2126
        %v2137 = vmul.f32 %v2017, %v2126
        %v2138 = vmul.f32 %v2018, %v2126
        %v2139 = vmul.f32 %v2019, %v2126
        %v2140 = vmul.f32 %v2020, %v2126
        %v2141 = vmul.f32 %v2021, %v2126
        %v2142 = vmul.f32 %v2022, %v2126
        %v2143 = vmul.f32 %v2023, %v2126
        %v2144 = vmul.f32 %v2024, %v2126
        %v2145 = vmul.f32 %v2025, %v2126
        %v2146 = vmul.f32 %v2026, %v2126
        %v2147 = vmul.f32 %v2027, %v2126
        %v2148 = vmul.f32 %v2028, %v2126
        %v2149 = vmul.f32 %v2029, %v2126
        %v2150 = vmul.f32 %v2030, %v2126
        %v2151 = vmul.f32 %v2031, %v2126
        %v2152 = vmul.f32 %v2032, %v2126
        %v2153 = vmul.f32 %v2033, %v2126
        %v2154 = vmul.f32 %v2034, %v2126
        %v2155 = vmul.f32 %v2035, %v2126
        %v2156 = vmul.f32 %v2036, %v2126
        %v2157 = vmul.f32 %v2037, %v2126
        %v2158 = vmul.f32 %v2038, %v2126
        %v2159 = vmul.f32 %v2039, %v2126
        %v2160 = vmul.f32 %v2040, %v2126
        %v2161 = vmul.f32 %v2041, %v2126
        %v2162 = vmul.f32 %v2042, %v2126
        %v2163 = vmul.f32 %v2043, %v2126
        %v2164 = vmul.f32 %v2044, %v2126
        %v2165 = vmul.f32 %v2045, %v2126
        %v2166 = vmul.f32 %v2046, %v2126
        %v2167 = vmul.f32 %v2047, %v2126
        %v2168 = vmul.f32 %v2048, %v2126
        %v2169 = vmul.f32 %v2049, %v2126
        %v2170 = vmul.f32 %v2050, %v2126
        %v2171 = vmul.f32 %v2051, %v2126
        %v2172 = vmul.f32 %v2052, %v2126
        %v2173 = vmul.f32 %v2053, %v2126
        %v2174 = vmul.f32 %v2054, %v2126
        %v2223 = vrot.slane %v2127, 1
        %v2224 = vrot.slane %v2128, 1
        %v2225 = vsel %vm636, %v2223, %v2224
        %v2226 = vrot.slane %v2129, 1
        %v2227 = vsel %vm636, %v2224, %v2226
        %v2228 = vrot.slane %v2130, 1
        %v2229 = vrot.slane %v2131, 1
        %v2230 = vsel %vm636, %v2228, %v2229
        %v2231 = vrot.slane %v2132, 1
        %v2232 = vsel %vm636, %v2229, %v2231
        %v2233 = vrot.slane %v2133, 1
        %v2234 = vrot.slane %v2134, 1
        %v2235 = vsel %vm636, %v2233, %v2234
        %v2236 = vrot.slane %v2135, 1
        %v2237 = vsel %vm636, %v2234, %v2236
        %v2238 = vrot.slane %v2136, 1
        %v2239 = vrot.slane %v2137, 1
        %v2240 = vsel %vm636, %v2238, %v2239
        %v2241 = vrot.slane %v2138, 1
        %v2242 = vsel %vm636, %v2239, %v2241
        %v2243 = vrot.slane %v2139, 1
        %v2244 = vrot.slane %v2140, 1
        %v2245 = vsel %vm636, %v2243, %v2244
        %v2246 = vrot.slane %v2141, 1
        %v2247 = vsel %vm636, %v2244, %v2246
        %v2248 = vrot.slane %v2142, 1
        %v2249 = vrot.slane %v2143, 1
        %v2250 = vsel %vm636, %v2248, %v2249
        %v2251 = vrot.slane %v2144, 1
        %v2252 = vsel %vm636, %v2249, %v2251
        %v2253 = vrot.slane %v2145, 1
        %v2254 = vrot.slane %v2146, 1
        %v2255 = vsel %vm636, %v2253, %v2254
        %v2256 = vrot.slane %v2147, 1
        %v2257 = vsel %vm636, %v2254, %v2256
        %v2258 = vrot.slane %v2148, 1
        %v2259 = vrot.slane %v2149, 1
        %v2260 = vsel %vm636, %v2258, %v2259
        %v2261 = vrot.slane %v2150, 1
        %v2262 = vsel %vm636, %v2259, %v2261
        %v2263 = vrot.slane %v2151, 1
        %v2264 = vrot.slane %v2152, 1
        %v2265 = vsel %vm636, %v2263, %v2264
        %v2266 = vrot.slane %v2153, 1
        %v2267 = vsel %vm636, %v2264, %v2266
        %v2268 = vrot.slane %v2154, 1
        %v2269 = vrot.slane %v2155, 1
        %v2270 = vsel %vm636, %v2268, %v2269
        %v2271 = vrot.slane %v2156, 1
        %v2272 = vsel %vm636, %v2269, %v2271
        %v2273 = vrot.slane %v2157, 1
        %v2274 = vrot.slane %v2158, 1
        %v2275 = vsel %vm636, %v2273, %v2274
        %v2276 = vrot.slane %v2159, 1
        %v2277 = vsel %vm636, %v2274, %v2276
        %v2278 = vrot.slane %v2160, 1
        %v2279 = vrot.slane %v2161, 1
        %v2280 = vsel %vm636, %v2278, %v2279
        %v2281 = vrot.slane %v2162, 1
        %v2282 = vsel %vm636, %v2279, %v2281
        %v2283 = vrot.slane %v2163, 1
        %v2284 = vrot.slane %v2164, 1
        %v2285 = vsel %vm636, %v2283, %v2284
        %v2286 = vrot.slane %v2165, 1
        %v2287 = vsel %vm636, %v2284, %v2286
        %v2288 = vrot.slane %v2166, 1
        %v2289 = vrot.slane %v2167, 1
        %v2290 = vsel %vm636, %v2288, %v2289
        %v2291 = vrot.slane %v2168, 1
        %v2292 = vsel %vm636, %v2289, %v2291
        %v2293 = vrot.slane %v2169, 1
        %v2294 = vrot.slane %v2170, 1
        %v2295 = vsel %vm636, %v2293, %v2294
        %v2296 = vrot.slane %v2171, 1
        %v2297 = vsel %vm636, %v2294, %v2296
        %v2298 = vrot.slane %v2172, 1
        %v2299 = vrot.slane %v2173, 1
        %v2300 = vsel %vm636, %v2298, %v2299
        %v2301 = vrot.slane %v2174, 1
        %v2302 = vsel %vm636, %v2299, %v2301
        %v2335 = vadd.f32 %v2091, %v2225
        %v2336 = vadd.f32 %v2092, %v2227
        %v2337 = vadd.f32 %v2093, %v2230
        %v2338 = vadd.f32 %v2094, %v2232
        %v2339 = vadd.f32 %v2095, %v2235
        %v2340 = vadd.f32 %v2096, %v2237
        %v2341 = vadd.f32 %v2097, %v2240
        %v2342 = vadd.f32 %v2098, %v2242
        %v2343 = vadd.f32 %v2099, %v2245
        %v2344 = vadd.f32 %v2100, %v2247
        %v2345 = vadd.f32 %v2101, %v2250
        %v2346 = vadd.f32 %v2102, %v2252
        %v2347 = vadd.f32 %v2103, %v2255
        %v2348 = vadd.f32 %v2104, %v2257
        %v2349 = vadd.f32 %v2105, %v2260
        %v2350 = vadd.f32 %v2106, %v2262
        %v2351 = vadd.f32 %v2107, %v2265
        %v2352 = vadd.f32 %v2108, %v2267
        %v2353 = vadd.f32 %v2109, %v2270
        %v2354 = vadd.f32 %v2110, %v2272
        %v2355 = vadd.f32 %v2111, %v2275
        %v2356 = vadd.f32 %v2112, %v2277
        %v2357 = vadd.f32 %v2113, %v2280
        %v2358 = vadd.f32 %v2114, %v2282
        %v2359 = vadd.f32 %v2115, %v2285
        %v2360 = vadd.f32 %v2116, %v2287
        %v2361 = vadd.f32 %v2117, %v2290
        %v2362 = vadd.f32 %v2118, %v2292
        %v2363 = vadd.f32 %v2119, %v2295
        %v2364 = vadd.f32 %v2120, %v2297
        %v2365 = vadd.f32 %v2121, %v2300
        %v2366 = vadd.f32 %v2122, %v2302
        %v2367 = vlaneseq
        %v2368 = vshrl.u32 %v2367, 7
        %v2369 = vsub.s32 2, %v2368
        %v2370 = vrot.slane %v407, %v2369
        %v2371 = vmul.f32 %v2007, %v2370
        %v2372 = vmul.f32 %v2008, %v2370
        %v2373 = vmul.f32 %v2009, %v2370
        %v2374 = vmul.f32 %v2010, %v2370
        %v2375 = vmul.f32 %v2011, %v2370
        %v2376 = vmul.f32 %v2012, %v2370
        %v2377 = vmul.f32 %v2013, %v2370
        %v2378 = vmul.f32 %v2014, %v2370
        %v2379 = vmul.f32 %v2015, %v2370
        %v2380 = vmul.f32 %v2016, %v2370
        %v2381 = vmul.f32 %v2017, %v2370
        %v2382 = vmul.f32 %v2018, %v2370
        %v2383 = vmul.f32 %v2019, %v2370
        %v2384 = vmul.f32 %v2020, %v2370
        %v2385 = vmul.f32 %v2021, %v2370
        %v2386 = vmul.f32 %v2022, %v2370
        %v2387 = vmul.f32 %v2023, %v2370
        %v2388 = vmul.f32 %v2024, %v2370
        %v2389 = vmul.f32 %v2025, %v2370
        %v2390 = vmul.f32 %v2026, %v2370
        %v2391 = vmul.f32 %v2027, %v2370
        %v2392 = vmul.f32 %v2028, %v2370
        %v2393 = vmul.f32 %v2029, %v2370
        %v2394 = vmul.f32 %v2030, %v2370
        %v2395 = vmul.f32 %v2031, %v2370
        %v2396 = vmul.f32 %v2032, %v2370
        %v2397 = vmul.f32 %v2033, %v2370
        %v2398 = vmul.f32 %v2034, %v2370
        %v2399 = vmul.f32 %v2035, %v2370
        %v2400 = vmul.f32 %v2036, %v2370
        %v2401 = vmul.f32 %v2037, %v2370
        %v2402 = vmul.f32 %v2038, %v2370
        %v2403 = vmul.f32 %v2039, %v2370
        %v2404 = vmul.f32 %v2040, %v2370
        %v2405 = vmul.f32 %v2041, %v2370
        %v2406 = vmul.f32 %v2042, %v2370
        %v2407 = vmul.f32 %v2043, %v2370
        %v2408 = vmul.f32 %v2044, %v2370
        %v2409 = vmul.f32 %v2045, %v2370
        %v2410 = vmul.f32 %v2046, %v2370
        %v2411 = vmul.f32 %v2047, %v2370
        %v2412 = vmul.f32 %v2048, %v2370
        %v2413 = vmul.f32 %v2049, %v2370
        %v2414 = vmul.f32 %v2050, %v2370
        %v2415 = vmul.f32 %v2051, %v2370
        %v2416 = vmul.f32 %v2052, %v2370
        %v2417 = vmul.f32 %v2053, %v2370
        %v2418 = vmul.f32 %v2054, %v2370
        %v2467 = vrot.slane %v2371, 2
        %v2468 = vrot.slane %v2372, 2
        %v2469 = vsel %vm881, %v2467, %v2468
        %v2470 = vrot.slane %v2373, 2
        %v2471 = vsel %vm881, %v2468, %v2470
        %v2472 = vrot.slane %v2374, 2
        %v2473 = vrot.slane %v2375, 2
        %v2474 = vsel %vm881, %v2472, %v2473
        %v2475 = vrot.slane %v2376, 2
        %v2476 = vsel %vm881, %v2473, %v2475
        %v2477 = vrot.slane %v2377, 2
        %v2478 = vrot.slane %v2378, 2
        %v2479 = vsel %vm881, %v2477, %v2478
        %v2480 = vrot.slane %v2379, 2
        %v2481 = vsel %vm881, %v2478, %v2480
        %v2482 = vrot.slane %v2380, 2
        %v2483 = vrot.slane %v2381, 2
        %v2484 = vsel %vm881, %v2482, %v2483
        %v2485 = vrot.slane %v2382, 2
        %v2486 = vsel %vm881, %v2483, %v2485
        %v2487 = vrot.slane %v2383, 2
        %v2488 = vrot.slane %v2384, 2
        %v2489 = vsel %vm881, %v2487, %v2488
        %v2490 = vrot.slane %v2385, 2
        %v2491 = vsel %vm881, %v2488, %v2490
        %v2492 = vrot.slane %v2386, 2
        %v2493 = vrot.slane %v2387, 2
        %v2494 = vsel %vm881, %v2492, %v2493
        %v2495 = vrot.slane %v2388, 2
        %v2496 = vsel %vm881, %v2493, %v2495
        %v2497 = vrot.slane %v2389, 2
        %v2498 = vrot.slane %v2390, 2
        %v2499 = vsel %vm881, %v2497, %v2498
        %v2500 = vrot.slane %v2391, 2
        %v2501 = vsel %vm881, %v2498, %v2500
        %v2502 = vrot.slane %v2392, 2
        %v2503 = vrot.slane %v2393, 2
        %v2504 = vsel %vm881, %v2502, %v2503
        %v2505 = vrot.slane %v2394, 2
        %v2506 = vsel %vm881, %v2503, %v2505
        %v2507 = vrot.slane %v2395, 2
        %v2508 = vrot.slane %v2396, 2
        %v2509 = vsel %vm881, %v2507, %v2508
        %v2510 = vrot.slane %v2397, 2
        %v2511 = vsel %vm881, %v2508, %v2510
        %v2512 = vrot.slane %v2398, 2
        %v2513 = vrot.slane %v2399, 2
        %v2514 = vsel %vm881, %v2512, %v2513
        %v2515 = vrot.slane %v2400, 2
        %v2516 = vsel %vm881, %v2513, %v2515
        %v2517 = vrot.slane %v2401, 2
        %v2518 = vrot.slane %v2402, 2
        %v2519 = vsel %vm881, %v2517, %v2518
        %v2520 = vrot.slane %v2403, 2
        %v2521 = vsel %vm881, %v2518, %v2520
        %v2522 = vrot.slane %v2404, 2
        %v2523 = vrot.slane %v2405, 2
        %v2524 = vsel %vm881, %v2522, %v2523
        %v2525 = vrot.slane %v2406, 2
        %v2526 = vsel %vm881, %v2523, %v2525
        %v2527 = vrot.slane %v2407, 2
        %v2528 = vrot.slane %v2408, 2
        %v2529 = vsel %vm881, %v2527, %v2528
        %v2530 = vrot.slane %v2409, 2
        %v2531 = vsel %vm881, %v2528, %v2530
        %v2532 = vrot.slane %v2410, 2
        %v2533 = vrot.slane %v2411, 2
        %v2534 = vsel %vm881, %v2532, %v2533
        %v2535 = vrot.slane %v2412, 2
        %v2536 = vsel %vm881, %v2533, %v2535
        %v2537 = vrot.slane %v2413, 2
        %v2538 = vrot.slane %v2414, 2
        %v2539 = vsel %vm881, %v2537, %v2538
        %v2540 = vrot.slane %v2415, 2
        %v2541 = vsel %vm881, %v2538, %v2540
        %v2542 = vrot.slane %v2416, 2
        %v2543 = vrot.slane %v2417, 2
        %v2544 = vsel %vm881, %v2542, %v2543
        %v2545 = vrot.slane %v2418, 2
        %v2546 = vsel %vm881, %v2543, %v2545
        %v2579 = vadd.f32 %v2335, %v2469
        %v2580 = vadd.f32 %v2336, %v2471
        %v2581 = vadd.f32 %v2337, %v2474
        %v2582 = vadd.f32 %v2338, %v2476
        %v2583 = vadd.f32 %v2339, %v2479
        %v2584 = vadd.f32 %v2340, %v2481
        %v2585 = vadd.f32 %v2341, %v2484
        %v2586 = vadd.f32 %v2342, %v2486
        %v2587 = vadd.f32 %v2343, %v2489
        %v2588 = vadd.f32 %v2344, %v2491
        %v2589 = vadd.f32 %v2345, %v2494
        %v2590 = vadd.f32 %v2346, %v2496
        %v2591 = vadd.f32 %v2347, %v2499
        %v2592 = vadd.f32 %v2348, %v2501
        %v2593 = vadd.f32 %v2349, %v2504
        %v2594 = vadd.f32 %v2350, %v2506
        %v2595 = vadd.f32 %v2351, %v2509
        %v2596 = vadd.f32 %v2352, %v2511
        %v2597 = vadd.f32 %v2353, %v2514
        %v2598 = vadd.f32 %v2354, %v2516
        %v2599 = vadd.f32 %v2355, %v2519
        %v2600 = vadd.f32 %v2356, %v2521
        %v2601 = vadd.f32 %v2357, %v2524
        %v2602 = vadd.f32 %v2358, %v2526
        %v2603 = vadd.f32 %v2359, %v2529
        %v2604 = vadd.f32 %v2360, %v2531
        %v2605 = vadd.f32 %v2361, %v2534
        %v2606 = vadd.f32 %v2362, %v2536
        %v2607 = vadd.f32 %v2363, %v2539
        %v2608 = vadd.f32 %v2364, %v2541
        %v2609 = vadd.f32 %v2365, %v2544
        %v2610 = vadd.f32 %v2366, %v2546
        %v2611 = vlaneseq
        %v2612 = vshrl.u32 %v2611, 7
        %v2613 = vsub.s32 3, %v2612
        %v2614 = vrot.slane %v407, %v2613
        %v2615 = vmul.f32 %v2007, %v2614
        %v2616 = vmul.f32 %v2008, %v2614
        %v2617 = vmul.f32 %v2009, %v2614
        %v2618 = vmul.f32 %v2010, %v2614
        %v2619 = vmul.f32 %v2011, %v2614
        %v2620 = vmul.f32 %v2012, %v2614
        %v2621 = vmul.f32 %v2013, %v2614
        %v2622 = vmul.f32 %v2014, %v2614
        %v2623 = vmul.f32 %v2015, %v2614
        %v2624 = vmul.f32 %v2016, %v2614
        %v2625 = vmul.f32 %v2017, %v2614
        %v2626 = vmul.f32 %v2018, %v2614
        %v2627 = vmul.f32 %v2019, %v2614
        %v2628 = vmul.f32 %v2020, %v2614
        %v2629 = vmul.f32 %v2021, %v2614
        %v2630 = vmul.f32 %v2022, %v2614
        %v2631 = vmul.f32 %v2023, %v2614
        %v2632 = vmul.f32 %v2024, %v2614
        %v2633 = vmul.f32 %v2025, %v2614
        %v2634 = vmul.f32 %v2026, %v2614
        %v2635 = vmul.f32 %v2027, %v2614
        %v2636 = vmul.f32 %v2028, %v2614
        %v2637 = vmul.f32 %v2029, %v2614
        %v2638 = vmul.f32 %v2030, %v2614
        %v2639 = vmul.f32 %v2031, %v2614
        %v2640 = vmul.f32 %v2032, %v2614
        %v2641 = vmul.f32 %v2033, %v2614
        %v2642 = vmul.f32 %v2034, %v2614
        %v2643 = vmul.f32 %v2035, %v2614
        %v2644 = vmul.f32 %v2036, %v2614
        %v2645 = vmul.f32 %v2037, %v2614
        %v2646 = vmul.f32 %v2038, %v2614
        %v2647 = vmul.f32 %v2039, %v2614
        %v2648 = vmul.f32 %v2040, %v2614
        %v2649 = vmul.f32 %v2041, %v2614
        %v2650 = vmul.f32 %v2042, %v2614
        %v2651 = vmul.f32 %v2043, %v2614
        %v2652 = vmul.f32 %v2044, %v2614
        %v2653 = vmul.f32 %v2045, %v2614
        %v2654 = vmul.f32 %v2046, %v2614
        %v2655 = vmul.f32 %v2047, %v2614
        %v2656 = vmul.f32 %v2048, %v2614
        %v2657 = vmul.f32 %v2049, %v2614
        %v2658 = vmul.f32 %v2050, %v2614
        %v2659 = vmul.f32 %v2051, %v2614
        %v2660 = vmul.f32 %v2052, %v2614
        %v2661 = vmul.f32 %v2053, %v2614
        %v2662 = vmul.f32 %v2054, %v2614
        %v2711 = vrot.slane %v2615, 3
        %v2712 = vrot.slane %v2616, 3
        %v2713 = vsel %vm1126, %v2711, %v2712
        %v2714 = vrot.slane %v2617, 3
        %v2715 = vsel %vm1126, %v2712, %v2714
        %v2716 = vrot.slane %v2618, 3
        %v2717 = vrot.slane %v2619, 3
        %v2718 = vsel %vm1126, %v2716, %v2717
        %v2719 = vrot.slane %v2620, 3
        %v2720 = vsel %vm1126, %v2717, %v2719
        %v2721 = vrot.slane %v2621, 3
        %v2722 = vrot.slane %v2622, 3
        %v2723 = vsel %vm1126, %v2721, %v2722
        %v2724 = vrot.slane %v2623, 3
        %v2725 = vsel %vm1126, %v2722, %v2724
        %v2726 = vrot.slane %v2624, 3
        %v2727 = vrot.slane %v2625, 3
        %v2728 = vsel %vm1126, %v2726, %v2727
        %v2729 = vrot.slane %v2626, 3
        %v2730 = vsel %vm1126, %v2727, %v2729
        %v2731 = vrot.slane %v2627, 3
        %v2732 = vrot.slane %v2628, 3
        %v2733 = vsel %vm1126, %v2731, %v2732
        %v2734 = vrot.slane %v2629, 3
        %v2735 = vsel %vm1126, %v2732, %v2734
        %v2736 = vrot.slane %v2630, 3
        %v2737 = vrot.slane %v2631, 3
        %v2738 = vsel %vm1126, %v2736, %v2737
        %v2739 = vrot.slane %v2632, 3
        %v2740 = vsel %vm1126, %v2737, %v2739
        %v2741 = vrot.slane %v2633, 3
        %v2742 = vrot.slane %v2634, 3
        %v2743 = vsel %vm1126, %v2741, %v2742
        %v2744 = vrot.slane %v2635, 3
        %v2745 = vsel %vm1126, %v2742, %v2744
        %v2746 = vrot.slane %v2636, 3
        %v2747 = vrot.slane %v2637, 3
        %v2748 = vsel %vm1126, %v2746, %v2747
        %v2749 = vrot.slane %v2638, 3
        %v2750 = vsel %vm1126, %v2747, %v2749
        %v2751 = vrot.slane %v2639, 3
        %v2752 = vrot.slane %v2640, 3
        %v2753 = vsel %vm1126, %v2751, %v2752
        %v2754 = vrot.slane %v2641, 3
        %v2755 = vsel %vm1126, %v2752, %v2754
        %v2756 = vrot.slane %v2642, 3
        %v2757 = vrot.slane %v2643, 3
        %v2758 = vsel %vm1126, %v2756, %v2757
        %v2759 = vrot.slane %v2644, 3
        %v2760 = vsel %vm1126, %v2757, %v2759
        %v2761 = vrot.slane %v2645, 3
        %v2762 = vrot.slane %v2646, 3
        %v2763 = vsel %vm1126, %v2761, %v2762
        %v2764 = vrot.slane %v2647, 3
        %v2765 = vsel %vm1126, %v2762, %v2764
        %v2766 = vrot.slane %v2648, 3
        %v2767 = vrot.slane %v2649, 3
        %v2768 = vsel %vm1126, %v2766, %v2767
        %v2769 = vrot.slane %v2650, 3
        %v2770 = vsel %vm1126, %v2767, %v2769
        %v2771 = vrot.slane %v2651, 3
        %v2772 = vrot.slane %v2652, 3
        %v2773 = vsel %vm1126, %v2771, %v2772
        %v2774 = vrot.slane %v2653, 3
        %v2775 = vsel %vm1126, %v2772, %v2774
        %v2776 = vrot.slane %v2654, 3
        %v2777 = vrot.slane %v2655, 3
        %v2778 = vsel %vm1126, %v2776, %v2777
        %v2779 = vrot.slane %v2656, 3
        %v2780 = vsel %vm1126, %v2777, %v2779
        %v2781 = vrot.slane %v2657, 3
        %v2782 = vrot.slane %v2658, 3
        %v2783 = vsel %vm1126, %v2781, %v2782
        %v2784 = vrot.slane %v2659, 3
        %v2785 = vsel %vm1126, %v2782, %v2784
        %v2786 = vrot.slane %v2660, 3
        %v2787 = vrot.slane %v2661, 3
        %v2788 = vsel %vm1126, %v2786, %v2787
        %v2789 = vrot.slane %v2662, 3
        %v2790 = vsel %vm1126, %v2787, %v2789
        %v2823 = vadd.f32 %v2579, %v2713
        %v2824 = vadd.f32 %v2580, %v2715
        %v2825 = vadd.f32 %v2581, %v2718
        %v2826 = vadd.f32 %v2582, %v2720
        %v2827 = vadd.f32 %v2583, %v2723
        %v2828 = vadd.f32 %v2584, %v2725
        %v2829 = vadd.f32 %v2585, %v2728
        %v2830 = vadd.f32 %v2586, %v2730
        %v2831 = vadd.f32 %v2587, %v2733
        %v2832 = vadd.f32 %v2588, %v2735
        %v2833 = vadd.f32 %v2589, %v2738
        %v2834 = vadd.f32 %v2590, %v2740
        %v2835 = vadd.f32 %v2591, %v2743
        %v2836 = vadd.f32 %v2592, %v2745
        %v2837 = vadd.f32 %v2593, %v2748
        %v2838 = vadd.f32 %v2594, %v2750
        %v2839 = vadd.f32 %v2595, %v2753
        %v2840 = vadd.f32 %v2596, %v2755
        %v2841 = vadd.f32 %v2597, %v2758
        %v2842 = vadd.f32 %v2598, %v2760
        %v2843 = vadd.f32 %v2599, %v2763
        %v2844 = vadd.f32 %v2600, %v2765
        %v2845 = vadd.f32 %v2601, %v2768
        %v2846 = vadd.f32 %v2602, %v2770
        %v2847 = vadd.f32 %v2603, %v2773
        %v2848 = vadd.f32 %v2604, %v2775
        %v2849 = vadd.f32 %v2605, %v2778
        %v2850 = vadd.f32 %v2606, %v2780
        %v2851 = vadd.f32 %v2607, %v2783
        %v2852 = vadd.f32 %v2608, %v2785
        %v2853 = vadd.f32 %v2609, %v2788
        %v2854 = vadd.f32 %v2610, %v2790
        %v2855 = vlaneseq
        %v2856 = vshrl.u32 %v2855, 7
        %v2857 = vsub.s32 4, %v2856
        %v2858 = vrot.slane %v407, %v2857
        %v2859 = vmul.f32 %v2007, %v2858
        %v2860 = vmul.f32 %v2008, %v2858
        %v2861 = vmul.f32 %v2009, %v2858
        %v2862 = vmul.f32 %v2010, %v2858
        %v2863 = vmul.f32 %v2011, %v2858
        %v2864 = vmul.f32 %v2012, %v2858
        %v2865 = vmul.f32 %v2013, %v2858
        %v2866 = vmul.f32 %v2014, %v2858
        %v2867 = vmul.f32 %v2015, %v2858
        %v2868 = vmul.f32 %v2016, %v2858
        %v2869 = vmul.f32 %v2017, %v2858
        %v2870 = vmul.f32 %v2018, %v2858
        %v2871 = vmul.f32 %v2019, %v2858
        %v2872 = vmul.f32 %v2020, %v2858
        %v2873 = vmul.f32 %v2021, %v2858
        %v2874 = vmul.f32 %v2022, %v2858
        %v2875 = vmul.f32 %v2023, %v2858
        %v2876 = vmul.f32 %v2024, %v2858
        %v2877 = vmul.f32 %v2025, %v2858
        %v2878 = vmul.f32 %v2026, %v2858
        %v2879 = vmul.f32 %v2027, %v2858
        %v2880 = vmul.f32 %v2028, %v2858
        %v2881 = vmul.f32 %v2029, %v2858
        %v2882 = vmul.f32 %v2030, %v2858
        %v2883 = vmul.f32 %v2031, %v2858
        %v2884 = vmul.f32 %v2032, %v2858
        %v2885 = vmul.f32 %v2033, %v2858
        %v2886 = vmul.f32 %v2034, %v2858
        %v2887 = vmul.f32 %v2035, %v2858
        %v2888 = vmul.f32 %v2036, %v2858
        %v2889 = vmul.f32 %v2037, %v2858
        %v2890 = vmul.f32 %v2038, %v2858
        %v2891 = vmul.f32 %v2039, %v2858
        %v2892 = vmul.f32 %v2040, %v2858
        %v2893 = vmul.f32 %v2041, %v2858
        %v2894 = vmul.f32 %v2042, %v2858
        %v2895 = vmul.f32 %v2043, %v2858
        %v2896 = vmul.f32 %v2044, %v2858
        %v2897 = vmul.f32 %v2045, %v2858
        %v2898 = vmul.f32 %v2046, %v2858
        %v2899 = vmul.f32 %v2047, %v2858
        %v2900 = vmul.f32 %v2048, %v2858
        %v2901 = vmul.f32 %v2049, %v2858
        %v2902 = vmul.f32 %v2050, %v2858
        %v2903 = vmul.f32 %v2051, %v2858
        %v2904 = vmul.f32 %v2052, %v2858
        %v2905 = vmul.f32 %v2053, %v2858
        %v2906 = vmul.f32 %v2054, %v2858
        %v2955 = vrot.slane %v2859, 4
        %v2956 = vrot.slane %v2860, 4
        %v2957 = vsel %vm1371, %v2955, %v2956
        %v2958 = vrot.slane %v2861, 4
        %v2959 = vsel %vm1371, %v2956, %v2958
        %v2960 = vrot.slane %v2862, 4
        %v2961 = vrot.slane %v2863, 4
        %v2962 = vsel %vm1371, %v2960, %v2961
        %v2963 = vrot.slane %v2864, 4
        %v2964 = vsel %vm1371, %v2961, %v2963
        %v2965 = vrot.slane %v2865, 4
        %v2966 = vrot.slane %v2866, 4
        %v2967 = vsel %vm1371, %v2965, %v2966
        %v2968 = vrot.slane %v2867, 4
        %v2969 = vsel %vm1371, %v2966, %v2968
        %v2970 = vrot.slane %v2868, 4
        %v2971 = vrot.slane %v2869, 4
        %v2972 = vsel %vm1371, %v2970, %v2971
        %v2973 = vrot.slane %v2870, 4
        %v2974 = vsel %vm1371, %v2971, %v2973
        %v2975 = vrot.slane %v2871, 4
        %v2976 = vrot.slane %v2872, 4
        %v2977 = vsel %vm1371, %v2975, %v2976
        %v2978 = vrot.slane %v2873, 4
        %v2979 = vsel %vm1371, %v2976, %v2978
        %v2980 = vrot.slane %v2874, 4
        %v2981 = vrot.slane %v2875, 4
        %v2982 = vsel %vm1371, %v2980, %v2981
        %v2983 = vrot.slane %v2876, 4
        %v2984 = vsel %vm1371, %v2981, %v2983
        %v2985 = vrot.slane %v2877, 4
        %v2986 = vrot.slane %v2878, 4
        %v2987 = vsel %vm1371, %v2985, %v2986
        %v2988 = vrot.slane %v2879, 4
        %v2989 = vsel %vm1371, %v2986, %v2988
        %v2990 = vrot.slane %v2880, 4
        %v2991 = vrot.slane %v2881, 4
        %v2992 = vsel %vm1371, %v2990, %v2991
        %v2993 = vrot.slane %v2882, 4
        %v2994 = vsel %vm1371, %v2991, %v2993
        %v2995 = vrot.slane %v2883, 4
        %v2996 = vrot.slane %v2884, 4
        %v2997 = vsel %vm1371, %v2995, %v2996
        %v2998 = vrot.slane %v2885, 4
        %v2999 = vsel %vm1371, %v2996, %v2998
        %v3000 = vrot.slane %v2886, 4
        %v3001 = vrot.slane %v2887, 4
        %v3002 = vsel %vm1371, %v3000, %v3001
        %v3003 = vrot.slane %v2888, 4
        %v3004 = vsel %vm1371, %v3001, %v3003
        %v3005 = vrot.slane %v2889, 4
        %v3006 = vrot.slane %v2890, 4
        %v3007 = vsel %vm1371, %v3005, %v3006
        %v3008 = vrot.slane %v2891, 4
        %v3009 = vsel %vm1371, %v3006, %v3008
        %v3010 = vrot.slane %v2892, 4
        %v3011 = vrot.slane %v2893, 4
        %v3012 = vsel %vm1371, %v3010, %v3011
        %v3013 = vrot.slane %v2894, 4
        %v3014 = vsel %vm1371, %v3011, %v3013
        %v3015 = vrot.slane %v2895, 4
        %v3016 = vrot.slane %v2896, 4
        %v3017 = vsel %vm1371, %v3015, %v3016
        %v3018 = vrot.slane %v2897, 4
        %v3019 = vsel %vm1371, %v3016, %v3018
        %v3020 = vrot.slane %v2898, 4
        %v3021 = vrot.slane %v2899, 4
        %v3022 = vsel %vm1371, %v3020, %v3021
        %v3023 = vrot.slane %v2900, 4
        %v3024 = vsel %vm1371, %v3021, %v3023
        %v3025 = vrot.slane %v2901, 4
        %v3026 = vrot.slane %v2902, 4
        %v3027 = vsel %vm1371, %v3025, %v3026
        %v3028 = vrot.slane %v2903, 4
        %v3029 = vsel %vm1371, %v3026, %v3028
        %v3030 = vrot.slane %v2904, 4
        %v3031 = vrot.slane %v2905, 4
        %v3032 = vsel %vm1371, %v3030, %v3031
        %v3033 = vrot.slane %v2906, 4
        %v3034 = vsel %vm1371, %v3031, %v3033
        %v3067 = vadd.f32 %v2823, %v2957
        %v3068 = vadd.f32 %v2824, %v2959
        %v3069 = vadd.f32 %v2825, %v2962
        %v3070 = vadd.f32 %v2826, %v2964
        %v3071 = vadd.f32 %v2827, %v2967
        %v3072 = vadd.f32 %v2828, %v2969
        %v3073 = vadd.f32 %v2829, %v2972
        %v3074 = vadd.f32 %v2830, %v2974
        %v3075 = vadd.f32 %v2831, %v2977
        %v3076 = vadd.f32 %v2832, %v2979
        %v3077 = vadd.f32 %v2833, %v2982
        %v3078 = vadd.f32 %v2834, %v2984
        %v3079 = vadd.f32 %v2835, %v2987
        %v3080 = vadd.f32 %v2836, %v2989
        %v3081 = vadd.f32 %v2837, %v2992
        %v3082 = vadd.f32 %v2838, %v2994
        %v3083 = vadd.f32 %v2839, %v2997
        %v3084 = vadd.f32 %v2840, %v2999
        %v3085 = vadd.f32 %v2841, %v3002
        %v3086 = vadd.f32 %v2842, %v3004
        %v3087 = vadd.f32 %v2843, %v3007
        %v3088 = vadd.f32 %v2844, %v3009
        %v3089 = vadd.f32 %v2845, %v3012
        %v3090 = vadd.f32 %v2846, %v3014
        %v3091 = vadd.f32 %v2847, %v3017
        %v3092 = vadd.f32 %v2848, %v3019
        %v3093 = vadd.f32 %v2849, %v3022
        %v3094 = vadd.f32 %v2850, %v3024
        %v3095 = vadd.f32 %v2851, %v3027
        %v3096 = vadd.f32 %v2852, %v3029
        %v3097 = vadd.f32 %v2853, %v3032
        %v3098 = vadd.f32 %v2854, %v3034
        %v3099 = vlaneseq
        %v3100 = vshrl.u32 %v3099, 7
        %v3101 = vsub.s32 5, %v3100
        %v3102 = vrot.slane %v407, %v3101
        %v3103 = vmul.f32 %v2007, %v3102
        %v3104 = vmul.f32 %v2008, %v3102
        %v3105 = vmul.f32 %v2009, %v3102
        %v3106 = vmul.f32 %v2010, %v3102
        %v3107 = vmul.f32 %v2011, %v3102
        %v3108 = vmul.f32 %v2012, %v3102
        %v3109 = vmul.f32 %v2013, %v3102
        %v3110 = vmul.f32 %v2014, %v3102
        %v3111 = vmul.f32 %v2015, %v3102
        %v3112 = vmul.f32 %v2016, %v3102
        %v3113 = vmul.f32 %v2017, %v3102
        %v3114 = vmul.f32 %v2018, %v3102
        %v3115 = vmul.f32 %v2019, %v3102
        %v3116 = vmul.f32 %v2020, %v3102
        %v3117 = vmul.f32 %v2021, %v3102
        %v3118 = vmul.f32 %v2022, %v3102
        %v3119 = vmul.f32 %v2023, %v3102
        %v3120 = vmul.f32 %v2024, %v3102
        %v3121 = vmul.f32 %v2025, %v3102
        %v3122 = vmul.f32 %v2026, %v3102
        %v3123 = vmul.f32 %v2027, %v3102
        %v3124 = vmul.f32 %v2028, %v3102
        %v3125 = vmul.f32 %v2029, %v3102
        %v3126 = vmul.f32 %v2030, %v3102
        %v3127 = vmul.f32 %v2031, %v3102
        %v3128 = vmul.f32 %v2032, %v3102
        %v3129 = vmul.f32 %v2033, %v3102
        %v3130 = vmul.f32 %v2034, %v3102
        %v3131 = vmul.f32 %v2035, %v3102
        %v3132 = vmul.f32 %v2036, %v3102
        %v3133 = vmul.f32 %v2037, %v3102
        %v3134 = vmul.f32 %v2038, %v3102
        %v3135 = vmul.f32 %v2039, %v3102
        %v3136 = vmul.f32 %v2040, %v3102
        %v3137 = vmul.f32 %v2041, %v3102
        %v3138 = vmul.f32 %v2042, %v3102
        %v3139 = vmul.f32 %v2043, %v3102
        %v3140 = vmul.f32 %v2044, %v3102
        %v3141 = vmul.f32 %v2045, %v3102
        %v3142 = vmul.f32 %v2046, %v3102
        %v3143 = vmul.f32 %v2047, %v3102
        %v3144 = vmul.f32 %v2048, %v3102
        %v3145 = vmul.f32 %v2049, %v3102
        %v3146 = vmul.f32 %v2050, %v3102
        %v3147 = vmul.f32 %v2051, %v3102
        %v3148 = vmul.f32 %v2052, %v3102
        %v3149 = vmul.f32 %v2053, %v3102
        %v3150 = vmul.f32 %v2054, %v3102
        %v3199 = vrot.slane %v3103, 5
        %v3200 = vrot.slane %v3104, 5
        %v3201 = vsel %vm1616, %v3199, %v3200
        %v3202 = vrot.slane %v3105, 5
        %v3203 = vsel %vm1616, %v3200, %v3202
        %v3204 = vrot.slane %v3106, 5
        %v3205 = vrot.slane %v3107, 5
        %v3206 = vsel %vm1616, %v3204, %v3205
        %v3207 = vrot.slane %v3108, 5
        %v3208 = vsel %vm1616, %v3205, %v3207
        %v3209 = vrot.slane %v3109, 5
        %v3210 = vrot.slane %v3110, 5
        %v3211 = vsel %vm1616, %v3209, %v3210
        %v3212 = vrot.slane %v3111, 5
        %v3213 = vsel %vm1616, %v3210, %v3212
        %v3214 = vrot.slane %v3112, 5
        %v3215 = vrot.slane %v3113, 5
        %v3216 = vsel %vm1616, %v3214, %v3215
        %v3217 = vrot.slane %v3114, 5
        %v3218 = vsel %vm1616, %v3215, %v3217
        %v3219 = vrot.slane %v3115, 5
        %v3220 = vrot.slane %v3116, 5
        %v3221 = vsel %vm1616, %v3219, %v3220
        %v3222 = vrot.slane %v3117, 5
        %v3223 = vsel %vm1616, %v3220, %v3222
        %v3224 = vrot.slane %v3118, 5
        %v3225 = vrot.slane %v3119, 5
        %v3226 = vsel %vm1616, %v3224, %v3225
        %v3227 = vrot.slane %v3120, 5
        %v3228 = vsel %vm1616, %v3225, %v3227
        %v3229 = vrot.slane %v3121, 5
        %v3230 = vrot.slane %v3122, 5
        %v3231 = vsel %vm1616, %v3229, %v3230
        %v3232 = vrot.slane %v3123, 5
        %v3233 = vsel %vm1616, %v3230, %v3232
        %v3234 = vrot.slane %v3124, 5
        %v3235 = vrot.slane %v3125, 5
        %v3236 = vsel %vm1616, %v3234, %v3235
        %v3237 = vrot.slane %v3126, 5
        %v3238 = vsel %vm1616, %v3235, %v3237
        %v3239 = vrot.slane %v3127, 5
        %v3240 = vrot.slane %v3128, 5
        %v3241 = vsel %vm1616, %v3239, %v3240
        %v3242 = vrot.slane %v3129, 5
        %v3243 = vsel %vm1616, %v3240, %v3242
        %v3244 = vrot.slane %v3130, 5
        %v3245 = vrot.slane %v3131, 5
        %v3246 = vsel %vm1616, %v3244, %v3245
        %v3247 = vrot.slane %v3132, 5
        %v3248 = vsel %vm1616, %v3245, %v3247
        %v3249 = vrot.slane %v3133, 5
        %v3250 = vrot.slane %v3134, 5
        %v3251 = vsel %vm1616, %v3249, %v3250
        %v3252 = vrot.slane %v3135, 5
        %v3253 = vsel %vm1616, %v3250, %v3252
        %v3254 = vrot.slane %v3136, 5
        %v3255 = vrot.slane %v3137, 5
        %v3256 = vsel %vm1616, %v3254, %v3255
        %v3257 = vrot.slane %v3138, 5
        %v3258 = vsel %vm1616, %v3255, %v3257
        %v3259 = vrot.slane %v3139, 5
        %v3260 = vrot.slane %v3140, 5
        %v3261 = vsel %vm1616, %v3259, %v3260
        %v3262 = vrot.slane %v3141, 5
        %v3263 = vsel %vm1616, %v3260, %v3262
        %v3264 = vrot.slane %v3142, 5
        %v3265 = vrot.slane %v3143, 5
        %v3266 = vsel %vm1616, %v3264, %v3265
        %v3267 = vrot.slane %v3144, 5
        %v3268 = vsel %vm1616, %v3265, %v3267
        %v3269 = vrot.slane %v3145, 5
        %v3270 = vrot.slane %v3146, 5
        %v3271 = vsel %vm1616, %v3269, %v3270
        %v3272 = vrot.slane %v3147, 5
        %v3273 = vsel %vm1616, %v3270, %v3272
        %v3274 = vrot.slane %v3148, 5
        %v3275 = vrot.slane %v3149, 5
        %v3276 = vsel %vm1616, %v3274, %v3275
        %v3277 = vrot.slane %v3150, 5
        %v3278 = vsel %vm1616, %v3275, %v3277
        %v3311 = vadd.f32 %v3067, %v3201
        %v3312 = vadd.f32 %v3068, %v3203
        %v3313 = vadd.f32 %v3069, %v3206
        %v3314 = vadd.f32 %v3070, %v3208
        %v3315 = vadd.f32 %v3071, %v3211
        %v3316 = vadd.f32 %v3072, %v3213
        %v3317 = vadd.f32 %v3073, %v3216
        %v3318 = vadd.f32 %v3074, %v3218
        %v3319 = vadd.f32 %v3075, %v3221
        %v3320 = vadd.f32 %v3076, %v3223
        %v3321 = vadd.f32 %v3077, %v3226
        %v3322 = vadd.f32 %v3078, %v3228
        %v3323 = vadd.f32 %v3079, %v3231
        %v3324 = vadd.f32 %v3080, %v3233
        %v3325 = vadd.f32 %v3081, %v3236
        %v3326 = vadd.f32 %v3082, %v3238
        %v3327 = vadd.f32 %v3083, %v3241
        %v3328 = vadd.f32 %v3084, %v3243
        %v3329 = vadd.f32 %v3085, %v3246
        %v3330 = vadd.f32 %v3086, %v3248
        %v3331 = vadd.f32 %v3087, %v3251
        %v3332 = vadd.f32 %v3088, %v3253
        %v3333 = vadd.f32 %v3089, %v3256
        %v3334 = vadd.f32 %v3090, %v3258
        %v3335 = vadd.f32 %v3091, %v3261
        %v3336 = vadd.f32 %v3092, %v3263
        %v3337 = vadd.f32 %v3093, %v3266
        %v3338 = vadd.f32 %v3094, %v3268
        %v3339 = vadd.f32 %v3095, %v3271
        %v3340 = vadd.f32 %v3096, %v3273
        %v3341 = vadd.f32 %v3097, %v3276
        %v3342 = vadd.f32 %v3098, %v3278
        %v3343 = vlaneseq
        %v3344 = vshrl.u32 %v3343, 7
        %v3345 = vsub.s32 6, %v3344
        %v3346 = vrot.slane %v407, %v3345
        %v3347 = vmul.f32 %v2007, %v3346
        %v3348 = vmul.f32 %v2008, %v3346
        %v3349 = vmul.f32 %v2009, %v3346
        %v3350 = vmul.f32 %v2010, %v3346
        %v3351 = vmul.f32 %v2011, %v3346
        %v3352 = vmul.f32 %v2012, %v3346
        %v3353 = vmul.f32 %v2013, %v3346
        %v3354 = vmul.f32 %v2014, %v3346
        %v3355 = vmul.f32 %v2015, %v3346
        %v3356 = vmul.f32 %v2016, %v3346
        %v3357 = vmul.f32 %v2017, %v3346
        %v3358 = vmul.f32 %v2018, %v3346
        %v3359 = vmul.f32 %v2019, %v3346
        %v3360 = vmul.f32 %v2020, %v3346
        %v3361 = vmul.f32 %v2021, %v3346
        %v3362 = vmul.f32 %v2022, %v3346
        %v3363 = vmul.f32 %v2023, %v3346
        %v3364 = vmul.f32 %v2024, %v3346
        %v3365 = vmul.f32 %v2025, %v3346
        %v3366 = vmul.f32 %v2026, %v3346
        %v3367 = vmul.f32 %v2027, %v3346
        %v3368 = vmul.f32 %v2028, %v3346
        %v3369 = vmul.f32 %v2029, %v3346
        %v3370 = vmul.f32 %v2030, %v3346
        %v3371 = vmul.f32 %v2031, %v3346
        %v3372 = vmul.f32 %v2032, %v3346
        %v3373 = vmul.f32 %v2033, %v3346
        %v3374 = vmul.f32 %v2034, %v3346
        %v3375 = vmul.f32 %v2035, %v3346
        %v3376 = vmul.f32 %v2036, %v3346
        %v3377 = vmul.f32 %v2037, %v3346
        %v3378 = vmul.f32 %v2038, %v3346
        %v3379 = vmul.f32 %v2039, %v3346
        %v3380 = vmul.f32 %v2040, %v3346
        %v3381 = vmul.f32 %v2041, %v3346
        %v3382 = vmul.f32 %v2042, %v3346
        %v3383 = vmul.f32 %v2043, %v3346
        %v3384 = vmul.f32 %v2044, %v3346
        %v3385 = vmul.f32 %v2045, %v3346
        %v3386 = vmul.f32 %v2046, %v3346
        %v3387 = vmul.f32 %v2047, %v3346
        %v3388 = vmul.f32 %v2048, %v3346
        %v3389 = vmul.f32 %v2049, %v3346
        %v3390 = vmul.f32 %v2050, %v3346
        %v3391 = vmul.f32 %v2051, %v3346
        %v3392 = vmul.f32 %v2052, %v3346
        %v3393 = vmul.f32 %v2053, %v3346
        %v3394 = vmul.f32 %v2054, %v3346
        %v3443 = vrot.slane %v3347, 6
        %v3444 = vrot.slane %v3348, 6
        %v3445 = vsel %vm1861, %v3443, %v3444
        %v3446 = vrot.slane %v3349, 6
        %v3447 = vsel %vm1861, %v3444, %v3446
        %v3448 = vrot.slane %v3350, 6
        %v3449 = vrot.slane %v3351, 6
        %v3450 = vsel %vm1861, %v3448, %v3449
        %v3451 = vrot.slane %v3352, 6
        %v3452 = vsel %vm1861, %v3449, %v3451
        %v3453 = vrot.slane %v3353, 6
        %v3454 = vrot.slane %v3354, 6
        %v3455 = vsel %vm1861, %v3453, %v3454
        %v3456 = vrot.slane %v3355, 6
        %v3457 = vsel %vm1861, %v3454, %v3456
        %v3458 = vrot.slane %v3356, 6
        %v3459 = vrot.slane %v3357, 6
        %v3460 = vsel %vm1861, %v3458, %v3459
        %v3461 = vrot.slane %v3358, 6
        %v3462 = vsel %vm1861, %v3459, %v3461
        %v3463 = vrot.slane %v3359, 6
        %v3464 = vrot.slane %v3360, 6
        %v3465 = vsel %vm1861, %v3463, %v3464
        %v3466 = vrot.slane %v3361, 6
        %v3467 = vsel %vm1861, %v3464, %v3466
        %v3468 = vrot.slane %v3362, 6
        %v3469 = vrot.slane %v3363, 6
        %v3470 = vsel %vm1861, %v3468, %v3469
        %v3471 = vrot.slane %v3364, 6
        %v3472 = vsel %vm1861, %v3469, %v3471
        %v3473 = vrot.slane %v3365, 6
        %v3474 = vrot.slane %v3366, 6
        %v3475 = vsel %vm1861, %v3473, %v3474
        %v3476 = vrot.slane %v3367, 6
        %v3477 = vsel %vm1861, %v3474, %v3476
        %v3478 = vrot.slane %v3368, 6
        %v3479 = vrot.slane %v3369, 6
        %v3480 = vsel %vm1861, %v3478, %v3479
        %v3481 = vrot.slane %v3370, 6
        %v3482 = vsel %vm1861, %v3479, %v3481
        %v3483 = vrot.slane %v3371, 6
        %v3484 = vrot.slane %v3372, 6
        %v3485 = vsel %vm1861, %v3483, %v3484
        %v3486 = vrot.slane %v3373, 6
        %v3487 = vsel %vm1861, %v3484, %v3486
        %v3488 = vrot.slane %v3374, 6
        %v3489 = vrot.slane %v3375, 6
        %v3490 = vsel %vm1861, %v3488, %v3489
        %v3491 = vrot.slane %v3376, 6
        %v3492 = vsel %vm1861, %v3489, %v3491
        %v3493 = vrot.slane %v3377, 6
        %v3494 = vrot.slane %v3378, 6
        %v3495 = vsel %vm1861, %v3493, %v3494
        %v3496 = vrot.slane %v3379, 6
        %v3497 = vsel %vm1861, %v3494, %v3496
        %v3498 = vrot.slane %v3380, 6
        %v3499 = vrot.slane %v3381, 6
        %v3500 = vsel %vm1861, %v3498, %v3499
        %v3501 = vrot.slane %v3382, 6
        %v3502 = vsel %vm1861, %v3499, %v3501
        %v3503 = vrot.slane %v3383, 6
        %v3504 = vrot.slane %v3384, 6
        %v3505 = vsel %vm1861, %v3503, %v3504
        %v3506 = vrot.slane %v3385, 6
        %v3507 = vsel %vm1861, %v3504, %v3506
        %v3508 = vrot.slane %v3386, 6
        %v3509 = vrot.slane %v3387, 6
        %v3510 = vsel %vm1861, %v3508, %v3509
        %v3511 = vrot.slane %v3388, 6
        %v3512 = vsel %vm1861, %v3509, %v3511
        %v3513 = vrot.slane %v3389, 6
        %v3514 = vrot.slane %v3390, 6
        %v3515 = vsel %vm1861, %v3513, %v3514
        %v3516 = vrot.slane %v3391, 6
        %v3517 = vsel %vm1861, %v3514, %v3516
        %v3518 = vrot.slane %v3392, 6
        %v3519 = vrot.slane %v3393, 6
        %v3520 = vsel %vm1861, %v3518, %v3519
        %v3521 = vrot.slane %v3394, 6
        %v3522 = vsel %vm1861, %v3519, %v3521
        %v3555 = vadd.f32 %v3311, %v3445
        %v3556 = vadd.f32 %v3312, %v3447
        %v3557 = vadd.f32 %v3313, %v3450
        %v3558 = vadd.f32 %v3314, %v3452
        %v3559 = vadd.f32 %v3315, %v3455
        %v3560 = vadd.f32 %v3316, %v3457
        %v3561 = vadd.f32 %v3317, %v3460
        %v3562 = vadd.f32 %v3318, %v3462
        %v3563 = vadd.f32 %v3319, %v3465
        %v3564 = vadd.f32 %v3320, %v3467
        %v3565 = vadd.f32 %v3321, %v3470
        %v3566 = vadd.f32 %v3322, %v3472
        %v3567 = vadd.f32 %v3323, %v3475
        %v3568 = vadd.f32 %v3324, %v3477
        %v3569 = vadd.f32 %v3325, %v3480
        %v3570 = vadd.f32 %v3326, %v3482
        %v3571 = vadd.f32 %v3327, %v3485
        %v3572 = vadd.f32 %v3328, %v3487
        %v3573 = vadd.f32 %v3329, %v3490
        %v3574 = vadd.f32 %v3330, %v3492
        %v3575 = vadd.f32 %v3331, %v3495
        %v3576 = vadd.f32 %v3332, %v3497
        %v3577 = vadd.f32 %v3333, %v3500
        %v3578 = vadd.f32 %v3334, %v3502
        %v3579 = vadd.f32 %v3335, %v3505
        %v3580 = vadd.f32 %v3336, %v3507
        %v3581 = vadd.f32 %v3337, %v3510
        %v3582 = vadd.f32 %v3338, %v3512
        %v3583 = vadd.f32 %v3339, %v3515
        %v3584 = vadd.f32 %v3340, %v3517
        %v3585 = vadd.f32 %v3341, %v3520
        %v3586 = vadd.f32 %v3342, %v3522
        %s3587 = scalar_lea.vmem [#allocation2], 48
        %v3588 = vld [vmem:[%s3587] sm:$0xff]
        %v3589 = vld [vmem:[%s3587 + $0x8] sm:$0xff]
        %v3590 = vld [vmem:[%s3587 + $0x10] sm:$0x3f]
        %v3591 = vld [vmem:[%s3587 + $0x18] sm:$0xff]
        %v3592 = vld [vmem:[%s3587 + $0x20] sm:$0xff]
        %v3593 = vld [vmem:[%s3587 + $0x28] sm:$0x3f]
        %v3594 = vld [vmem:[%s3587 + $0x30] sm:$0xff]
        %v3595 = vld [vmem:[%s3587 + $0x38] sm:$0xff]
        %v3596 = vld [vmem:[%s3587 + $0x40] sm:$0x3f]
        %v3597 = vld [vmem:[%s3587 + $0x48] sm:$0xff]
        %v3598 = vld [vmem:[%s3587 + $0x50] sm:$0xff]
        %v3599 = vld [vmem:[%s3587 + $0x58] sm:$0x3f]
        %v3600 = vld [vmem:[%s3587 + $0x60] sm:$0xff]
        %v3601 = vld [vmem:[%s3587 + $0x68] sm:$0xff]
        %v3602 = vld [vmem:[%s3587 + $0x70] sm:$0x3f]
        %v3603 = vld [vmem:[%s3587 + $0x78] sm:$0xff]
        %v3604 = vld [vmem:[%s3587 + $0x80] sm:$0xff]
        %v3605 = vld [vmem:[%s3587 + $0x88] sm:$0x3f]
        %v3606 = vld [vmem:[%s3587 + $0x90] sm:$0xff]
        %v3607 = vld [vmem:[%s3587 + $0x98] sm:$0xff]
        %v3608 = vld [vmem:[%s3587 + $0xa0] sm:$0x3f]
        %v3609 = vld [vmem:[%s3587 + $0xa8] sm:$0xff]
        %v3610 = vld [vmem:[%s3587 + $0xb0] sm:$0xff]
        %v3611 = vld [vmem:[%s3587 + $0xb8] sm:$0x3f]
        %v3612 = vld [vmem:[%s3587 + $0xc0] sm:$0xff]
        %v3613 = vld [vmem:[%s3587 + $0xc8] sm:$0xff]
        %v3614 = vld [vmem:[%s3587 + $0xd0] sm:$0x3f]
        %v3615 = vld [vmem:[%s3587 + $0xd8] sm:$0xff]
        %v3616 = vld [vmem:[%s3587 + $0xe0] sm:$0xff]
        %v3617 = vld [vmem:[%s3587 + $0xe8] sm:$0x3f]
        %v3618 = vld [vmem:[%s3587 + $0xf0] sm:$0xff]
        %v3619 = vld [vmem:[%s3587 + $0xf8] sm:$0xff]
        %v3620 = vld [vmem:[%s3587 + $0x100] sm:$0x3f]
        %v3621 = vld [vmem:[%s3587 + $0x108] sm:$0xff]
        %v3622 = vld [vmem:[%s3587 + $0x110] sm:$0xff]
        %v3623 = vld [vmem:[%s3587 + $0x118] sm:$0x3f]
        %v3624 = vld [vmem:[%s3587 + $0x120] sm:$0xff]
        %v3625 = vld [vmem:[%s3587 + $0x128] sm:$0xff]
        %v3626 = vld [vmem:[%s3587 + $0x130] sm:$0x3f]
        %v3627 = vld [vmem:[%s3587 + $0x138] sm:$0xff]
        %v3628 = vld [vmem:[%s3587 + $0x140] sm:$0xff]
        %v3629 = vld [vmem:[%s3587 + $0x148] sm:$0x3f]
        %v3630 = vld [vmem:[%s3587 + $0x150] sm:$0xff]
        %v3631 = vld [vmem:[%s3587 + $0x158] sm:$0xff]
        %v3632 = vld [vmem:[%s3587 + $0x160] sm:$0x3f]
        %v3633 = vld [vmem:[%s3587 + $0x168] sm:$0xff]
        %v3634 = vld [vmem:[%s3587 + $0x170] sm:$0xff]
        %v3635 = vld [vmem:[%s3587 + $0x178] sm:$0x3f]
        %v3636 = vlaneseq
        %v3637 = vshrl.u32 %v3636, 7
        %v3638 = vsub.s32 0, %v3637
        %v3639 = vrot.slane %v408, %v3638
        %v3640 = vmul.f32 %v3588, %v3639
        %v3641 = vmul.f32 %v3589, %v3639
        %v3642 = vmul.f32 %v3591, %v3639
        %v3643 = vmul.f32 %v3592, %v3639
        %v3644 = vmul.f32 %v3594, %v3639
        %v3645 = vmul.f32 %v3595, %v3639
        %v3646 = vmul.f32 %v3597, %v3639
        %v3647 = vmul.f32 %v3598, %v3639
        %v3648 = vmul.f32 %v3600, %v3639
        %v3649 = vmul.f32 %v3601, %v3639
        %v3650 = vmul.f32 %v3603, %v3639
        %v3651 = vmul.f32 %v3604, %v3639
        %v3652 = vmul.f32 %v3606, %v3639
        %v3653 = vmul.f32 %v3607, %v3639
        %v3654 = vmul.f32 %v3609, %v3639
        %v3655 = vmul.f32 %v3610, %v3639
        %v3656 = vmul.f32 %v3612, %v3639
        %v3657 = vmul.f32 %v3613, %v3639
        %v3658 = vmul.f32 %v3615, %v3639
        %v3659 = vmul.f32 %v3616, %v3639
        %v3660 = vmul.f32 %v3618, %v3639
        %v3661 = vmul.f32 %v3619, %v3639
        %v3662 = vmul.f32 %v3621, %v3639
        %v3663 = vmul.f32 %v3622, %v3639
        %v3664 = vmul.f32 %v3624, %v3639
        %v3665 = vmul.f32 %v3625, %v3639
        %v3666 = vmul.f32 %v3627, %v3639
        %v3667 = vmul.f32 %v3628, %v3639
        %v3668 = vmul.f32 %v3630, %v3639
        %v3669 = vmul.f32 %v3631, %v3639
        %v3670 = vmul.f32 %v3633, %v3639
        %v3671 = vmul.f32 %v3634, %v3639
        %v3672 = vadd.f32 %v3555, %v3640
        %v3673 = vadd.f32 %v3556, %v3641
        %v3674 = vadd.f32 %v3557, %v3642
        %v3675 = vadd.f32 %v3558, %v3643
        %v3676 = vadd.f32 %v3559, %v3644
        %v3677 = vadd.f32 %v3560, %v3645
        %v3678 = vadd.f32 %v3561, %v3646
        %v3679 = vadd.f32 %v3562, %v3647
        %v3680 = vadd.f32 %v3563, %v3648
        %v3681 = vadd.f32 %v3564, %v3649
        %v3682 = vadd.f32 %v3565, %v3650
        %v3683 = vadd.f32 %v3566, %v3651
        %v3684 = vadd.f32 %v3567, %v3652
        %v3685 = vadd.f32 %v3568, %v3653
        %v3686 = vadd.f32 %v3569, %v3654
        %v3687 = vadd.f32 %v3570, %v3655
        %v3688 = vadd.f32 %v3571, %v3656
        %v3689 = vadd.f32 %v3572, %v3657
        %v3690 = vadd.f32 %v3573, %v3658
        %v3691 = vadd.f32 %v3574, %v3659
        %v3692 = vadd.f32 %v3575, %v3660
        %v3693 = vadd.f32 %v3576, %v3661
        %v3694 = vadd.f32 %v3577, %v3662
        %v3695 = vadd.f32 %v3578, %v3663
        %v3696 = vadd.f32 %v3579, %v3664
        %v3697 = vadd.f32 %v3580, %v3665
        %v3698 = vadd.f32 %v3581, %v3666
        %v3699 = vadd.f32 %v3582, %v3667
        %v3700 = vadd.f32 %v3583, %v3668
        %v3701 = vadd.f32 %v3584, %v3669
        %v3702 = vadd.f32 %v3585, %v3670
        %v3703 = vadd.f32 %v3586, %v3671
        %v3704 = vlaneseq
        %v3705 = vshrl.u32 %v3704, 7
        %v3706 = vsub.s32 1, %v3705
        %v3707 = vrot.slane %v408, %v3706
        %v3708 = vmul.f32 %v3588, %v3707
        %v3709 = vmul.f32 %v3589, %v3707
        %v3710 = vmul.f32 %v3590, %v3707
        %v3711 = vmul.f32 %v3591, %v3707
        %v3712 = vmul.f32 %v3592, %v3707
        %v3713 = vmul.f32 %v3593, %v3707
        %v3714 = vmul.f32 %v3594, %v3707
        %v3715 = vmul.f32 %v3595, %v3707
        %v3716 = vmul.f32 %v3596, %v3707
        %v3717 = vmul.f32 %v3597, %v3707
        %v3718 = vmul.f32 %v3598, %v3707
        %v3719 = vmul.f32 %v3599, %v3707
        %v3720 = vmul.f32 %v3600, %v3707
        %v3721 = vmul.f32 %v3601, %v3707
        %v3722 = vmul.f32 %v3602, %v3707
        %v3723 = vmul.f32 %v3603, %v3707
        %v3724 = vmul.f32 %v3604, %v3707
        %v3725 = vmul.f32 %v3605, %v3707
        %v3726 = vmul.f32 %v3606, %v3707
        %v3727 = vmul.f32 %v3607, %v3707
        %v3728 = vmul.f32 %v3608, %v3707
        %v3729 = vmul.f32 %v3609, %v3707
        %v3730 = vmul.f32 %v3610, %v3707
        %v3731 = vmul.f32 %v3611, %v3707
        %v3732 = vmul.f32 %v3612, %v3707
        %v3733 = vmul.f32 %v3613, %v3707
        %v3734 = vmul.f32 %v3614, %v3707
        %v3735 = vmul.f32 %v3615, %v3707
        %v3736 = vmul.f32 %v3616, %v3707
        %v3737 = vmul.f32 %v3617, %v3707
        %v3738 = vmul.f32 %v3618, %v3707
        %v3739 = vmul.f32 %v3619, %v3707
        %v3740 = vmul.f32 %v3620, %v3707
        %v3741 = vmul.f32 %v3621, %v3707
        %v3742 = vmul.f32 %v3622, %v3707
        %v3743 = vmul.f32 %v3623, %v3707
        %v3744 = vmul.f32 %v3624, %v3707
        %v3745 = vmul.f32 %v3625, %v3707
        %v3746 = vmul.f32 %v3626, %v3707
        %v3747 = vmul.f32 %v3627, %v3707
        %v3748 = vmul.f32 %v3628, %v3707
        %v3749 = vmul.f32 %v3629, %v3707
        %v3750 = vmul.f32 %v3630, %v3707
        %v3751 = vmul.f32 %v3631, %v3707
        %v3752 = vmul.f32 %v3632, %v3707
        %v3753 = vmul.f32 %v3633, %v3707
        %v3754 = vmul.f32 %v3634, %v3707
        %v3755 = vmul.f32 %v3635, %v3707
        %v3804 = vrot.slane %v3708, 1
        %v3805 = vrot.slane %v3709, 1
        %v3806 = vsel %vm636, %v3804, %v3805
        %v3807 = vrot.slane %v3710, 1
        %v3808 = vsel %vm636, %v3805, %v3807
        %v3809 = vrot.slane %v3711, 1
        %v3810 = vrot.slane %v3712, 1
        %v3811 = vsel %vm636, %v3809, %v3810
        %v3812 = vrot.slane %v3713, 1
        %v3813 = vsel %vm636, %v3810, %v3812
        %v3814 = vrot.slane %v3714, 1
        %v3815 = vrot.slane %v3715, 1
        %v3816 = vsel %vm636, %v3814, %v3815
        %v3817 = vrot.slane %v3716, 1
        %v3818 = vsel %vm636, %v3815, %v3817
        %v3819 = vrot.slane %v3717, 1
        %v3820 = vrot.slane %v3718, 1
        %v3821 = vsel %vm636, %v3819, %v3820
        %v3822 = vrot.slane %v3719, 1
        %v3823 = vsel %vm636, %v3820, %v3822
        %v3824 = vrot.slane %v3720, 1
        %v3825 = vrot.slane %v3721, 1
        %v3826 = vsel %vm636, %v3824, %v3825
        %v3827 = vrot.slane %v3722, 1
        %v3828 = vsel %vm636, %v3825, %v3827
        %v3829 = vrot.slane %v3723, 1
        %v3830 = vrot.slane %v3724, 1
        %v3831 = vsel %vm636, %v3829, %v3830
        %v3832 = vrot.slane %v3725, 1
        %v3833 = vsel %vm636, %v3830, %v3832
        %v3834 = vrot.slane %v3726, 1
        %v3835 = vrot.slane %v3727, 1
        %v3836 = vsel %vm636, %v3834, %v3835
        %v3837 = vrot.slane %v3728, 1
        %v3838 = vsel %vm636, %v3835, %v3837
        %v3839 = vrot.slane %v3729, 1
        %v3840 = vrot.slane %v3730, 1
        %v3841 = vsel %vm636, %v3839, %v3840
        %v3842 = vrot.slane %v3731, 1
        %v3843 = vsel %vm636, %v3840, %v3842
        %v3844 = vrot.slane %v3732, 1
        %v3845 = vrot.slane %v3733, 1
        %v3846 = vsel %vm636, %v3844, %v3845
        %v3847 = vrot.slane %v3734, 1
        %v3848 = vsel %vm636, %v3845, %v3847
        %v3849 = vrot.slane %v3735, 1
        %v3850 = vrot.slane %v3736, 1
        %v3851 = vsel %vm636, %v3849, %v3850
        %v3852 = vrot.slane %v3737, 1
        %v3853 = vsel %vm636, %v3850, %v3852
        %v3854 = vrot.slane %v3738, 1
        %v3855 = vrot.slane %v3739, 1
        %v3856 = vsel %vm636, %v3854, %v3855
        %v3857 = vrot.slane %v3740, 1
        %v3858 = vsel %vm636, %v3855, %v3857
        %v3859 = vrot.slane %v3741, 1
        %v3860 = vrot.slane %v3742, 1
        %v3861 = vsel %vm636, %v3859, %v3860
        %v3862 = vrot.slane %v3743, 1
        %v3863 = vsel %vm636, %v3860, %v3862
        %v3864 = vrot.slane %v3744, 1
        %v3865 = vrot.slane %v3745, 1
        %v3866 = vsel %vm636, %v3864, %v3865
        %v3867 = vrot.slane %v3746, 1
        %v3868 = vsel %vm636, %v3865, %v3867
        %v3869 = vrot.slane %v3747, 1
        %v3870 = vrot.slane %v3748, 1
        %v3871 = vsel %vm636, %v3869, %v3870
        %v3872 = vrot.slane %v3749, 1
        %v3873 = vsel %vm636, %v3870, %v3872
        %v3874 = vrot.slane %v3750, 1
        %v3875 = vrot.slane %v3751, 1
        %v3876 = vsel %vm636, %v3874, %v3875
        %v3877 = vrot.slane %v3752, 1
        %v3878 = vsel %vm636, %v3875, %v3877
        %v3879 = vrot.slane %v3753, 1
        %v3880 = vrot.slane %v3754, 1
        %v3881 = vsel %vm636, %v3879, %v3880
        %v3882 = vrot.slane %v3755, 1
        %v3883 = vsel %vm636, %v3880, %v3882
        %v3916 = vadd.f32 %v3672, %v3806
        %v3917 = vadd.f32 %v3673, %v3808
        %v3918 = vadd.f32 %v3674, %v3811
        %v3919 = vadd.f32 %v3675, %v3813
        %v3920 = vadd.f32 %v3676, %v3816
        %v3921 = vadd.f32 %v3677, %v3818
        %v3922 = vadd.f32 %v3678, %v3821
        %v3923 = vadd.f32 %v3679, %v3823
        %v3924 = vadd.f32 %v3680, %v3826
        %v3925 = vadd.f32 %v3681, %v3828
        %v3926 = vadd.f32 %v3682, %v3831
        %v3927 = vadd.f32 %v3683, %v3833
        %v3928 = vadd.f32 %v3684, %v3836
        %v3929 = vadd.f32 %v3685, %v3838
        %v3930 = vadd.f32 %v3686, %v3841
        %v3931 = vadd.f32 %v3687, %v3843
        %v3932 = vadd.f32 %v3688, %v3846
        %v3933 = vadd.f32 %v3689, %v3848
        %v3934 = vadd.f32 %v3690, %v3851
        %v3935 = vadd.f32 %v3691, %v3853
        %v3936 = vadd.f32 %v3692, %v3856
        %v3937 = vadd.f32 %v3693, %v3858
        %v3938 = vadd.f32 %v3694, %v3861
        %v3939 = vadd.f32 %v3695, %v3863
        %v3940 = vadd.f32 %v3696, %v3866
        %v3941 = vadd.f32 %v3697, %v3868
        %v3942 = vadd.f32 %v3698, %v3871
        %v3943 = vadd.f32 %v3699, %v3873
        %v3944 = vadd.f32 %v3700, %v3876
        %v3945 = vadd.f32 %v3701, %v3878
        %v3946 = vadd.f32 %v3702, %v3881
        %v3947 = vadd.f32 %v3703, %v3883
        %v3948 = vlaneseq
        %v3949 = vshrl.u32 %v3948, 7
        %v3950 = vsub.s32 2, %v3949
        %v3951 = vrot.slane %v408, %v3950
        %v3952 = vmul.f32 %v3588, %v3951
        %v3953 = vmul.f32 %v3589, %v3951
        %v3954 = vmul.f32 %v3590, %v3951
        %v3955 = vmul.f32 %v3591, %v3951
        %v3956 = vmul.f32 %v3592, %v3951
        %v3957 = vmul.f32 %v3593, %v3951
        %v3958 = vmul.f32 %v3594, %v3951
        %v3959 = vmul.f32 %v3595, %v3951
        %v3960 = vmul.f32 %v3596, %v3951
        %v3961 = vmul.f32 %v3597, %v3951
        %v3962 = vmul.f32 %v3598, %v3951
        %v3963 = vmul.f32 %v3599, %v3951
        %v3964 = vmul.f32 %v3600, %v3951
        %v3965 = vmul.f32 %v3601, %v3951
        %v3966 = vmul.f32 %v3602, %v3951
        %v3967 = vmul.f32 %v3603, %v3951
        %v3968 = vmul.f32 %v3604, %v3951
        %v3969 = vmul.f32 %v3605, %v3951
        %v3970 = vmul.f32 %v3606, %v3951
        %v3971 = vmul.f32 %v3607, %v3951
        %v3972 = vmul.f32 %v3608, %v3951
        %v3973 = vmul.f32 %v3609, %v3951
        %v3974 = vmul.f32 %v3610, %v3951
        %v3975 = vmul.f32 %v3611, %v3951
        %v3976 = vmul.f32 %v3612, %v3951
        %v3977 = vmul.f32 %v3613, %v3951
        %v3978 = vmul.f32 %v3614, %v3951
        %v3979 = vmul.f32 %v3615, %v3951
        %v3980 = vmul.f32 %v3616, %v3951
        %v3981 = vmul.f32 %v3617, %v3951
        %v3982 = vmul.f32 %v3618, %v3951
        %v3983 = vmul.f32 %v3619, %v3951
        %v3984 = vmul.f32 %v3620, %v3951
        %v3985 = vmul.f32 %v3621, %v3951
        %v3986 = vmul.f32 %v3622, %v3951
        %v3987 = vmul.f32 %v3623, %v3951
        %v3988 = vmul.f32 %v3624, %v3951
        %v3989 = vmul.f32 %v3625, %v3951
        %v3990 = vmul.f32 %v3626, %v3951
        %v3991 = vmul.f32 %v3627, %v3951
        %v3992 = vmul.f32 %v3628, %v3951
        %v3993 = vmul.f32 %v3629, %v3951
        %v3994 = vmul.f32 %v3630, %v3951
        %v3995 = vmul.f32 %v3631, %v3951
        %v3996 = vmul.f32 %v3632, %v3951
        %v3997 = vmul.f32 %v3633, %v3951
        %v3998 = vmul.f32 %v3634, %v3951
        %v3999 = vmul.f32 %v3635, %v3951
        %v4048 = vrot.slane %v3952, 2
        %v4049 = vrot.slane %v3953, 2
        %v4050 = vsel %vm881, %v4048, %v4049
        %v4051 = vrot.slane %v3954, 2
        %v4052 = vsel %vm881, %v4049, %v4051
        %v4053 = vrot.slane %v3955, 2
        %v4054 = vrot.slane %v3956, 2
        %v4055 = vsel %vm881, %v4053, %v4054
        %v4056 = vrot.slane %v3957, 2
        %v4057 = vsel %vm881, %v4054, %v4056
        %v4058 = vrot.slane %v3958, 2
        %v4059 = vrot.slane %v3959, 2
        %v4060 = vsel %vm881, %v4058, %v4059
        %v4061 = vrot.slane %v3960, 2
        %v4062 = vsel %vm881, %v4059, %v4061
        %v4063 = vrot.slane %v3961, 2
        %v4064 = vrot.slane %v3962, 2
        %v4065 = vsel %vm881, %v4063, %v4064
        %v4066 = vrot.slane %v3963, 2
        %v4067 = vsel %vm881, %v4064, %v4066
        %v4068 = vrot.slane %v3964, 2
        %v4069 = vrot.slane %v3965, 2
        %v4070 = vsel %vm881, %v4068, %v4069
        %v4071 = vrot.slane %v3966, 2
        %v4072 = vsel %vm881, %v4069, %v4071
        %v4073 = vrot.slane %v3967, 2
        %v4074 = vrot.slane %v3968, 2
        %v4075 = vsel %vm881, %v4073, %v4074
        %v4076 = vrot.slane %v3969, 2
        %v4077 = vsel %vm881, %v4074, %v4076
        %v4078 = vrot.slane %v3970, 2
        %v4079 = vrot.slane %v3971, 2
        %v4080 = vsel %vm881, %v4078, %v4079
        %v4081 = vrot.slane %v3972, 2
        %v4082 = vsel %vm881, %v4079, %v4081
        %v4083 = vrot.slane %v3973, 2
        %v4084 = vrot.slane %v3974, 2
        %v4085 = vsel %vm881, %v4083, %v4084
        %v4086 = vrot.slane %v3975, 2
        %v4087 = vsel %vm881, %v4084, %v4086
        %v4088 = vrot.slane %v3976, 2
        %v4089 = vrot.slane %v3977, 2
        %v4090 = vsel %vm881, %v4088, %v4089
        %v4091 = vrot.slane %v3978, 2
        %v4092 = vsel %vm881, %v4089, %v4091
        %v4093 = vrot.slane %v3979, 2
        %v4094 = vrot.slane %v3980, 2
        %v4095 = vsel %vm881, %v4093, %v4094
        %v4096 = vrot.slane %v3981, 2
        %v4097 = vsel %vm881, %v4094, %v4096
        %v4098 = vrot.slane %v3982, 2
        %v4099 = vrot.slane %v3983, 2
        %v4100 = vsel %vm881, %v4098, %v4099
        %v4101 = vrot.slane %v3984, 2
        %v4102 = vsel %vm881, %v4099, %v4101
        %v4103 = vrot.slane %v3985, 2
        %v4104 = vrot.slane %v3986, 2
        %v4105 = vsel %vm881, %v4103, %v4104
        %v4106 = vrot.slane %v3987, 2
        %v4107 = vsel %vm881, %v4104, %v4106
        %v4108 = vrot.slane %v3988, 2
        %v4109 = vrot.slane %v3989, 2
        %v4110 = vsel %vm881, %v4108, %v4109
        %v4111 = vrot.slane %v3990, 2
        %v4112 = vsel %vm881, %v4109, %v4111
        %v4113 = vrot.slane %v3991, 2
        %v4114 = vrot.slane %v3992, 2
        %v4115 = vsel %vm881, %v4113, %v4114
        %v4116 = vrot.slane %v3993, 2
        %v4117 = vsel %vm881, %v4114, %v4116
        %v4118 = vrot.slane %v3994, 2
        %v4119 = vrot.slane %v3995, 2
        %v4120 = vsel %vm881, %v4118, %v4119
        %v4121 = vrot.slane %v3996, 2
        %v4122 = vsel %vm881, %v4119, %v4121
        %v4123 = vrot.slane %v3997, 2
        %v4124 = vrot.slane %v3998, 2
        %v4125 = vsel %vm881, %v4123, %v4124
        %v4126 = vrot.slane %v3999, 2
        %v4127 = vsel %vm881, %v4124, %v4126
        %v4160 = vadd.f32 %v3916, %v4050
        %v4161 = vadd.f32 %v3917, %v4052
        %v4162 = vadd.f32 %v3918, %v4055
        %v4163 = vadd.f32 %v3919, %v4057
        %v4164 = vadd.f32 %v3920, %v4060
        %v4165 = vadd.f32 %v3921, %v4062
        %v4166 = vadd.f32 %v3922, %v4065
        %v4167 = vadd.f32 %v3923, %v4067
        %v4168 = vadd.f32 %v3924, %v4070
        %v4169 = vadd.f32 %v3925, %v4072
        %v4170 = vadd.f32 %v3926, %v4075
        %v4171 = vadd.f32 %v3927, %v4077
        %v4172 = vadd.f32 %v3928, %v4080
        %v4173 = vadd.f32 %v3929, %v4082
        %v4174 = vadd.f32 %v3930, %v4085
        %v4175 = vadd.f32 %v3931, %v4087
        %v4176 = vadd.f32 %v3932, %v4090
        %v4177 = vadd.f32 %v3933, %v4092
        %v4178 = vadd.f32 %v3934, %v4095
        %v4179 = vadd.f32 %v3935, %v4097
        %v4180 = vadd.f32 %v3936, %v4100
        %v4181 = vadd.f32 %v3937, %v4102
        %v4182 = vadd.f32 %v3938, %v4105
        %v4183 = vadd.f32 %v3939, %v4107
        %v4184 = vadd.f32 %v3940, %v4110
        %v4185 = vadd.f32 %v3941, %v4112
        %v4186 = vadd.f32 %v3942, %v4115
        %v4187 = vadd.f32 %v3943, %v4117
        %v4188 = vadd.f32 %v3944, %v4120
        %v4189 = vadd.f32 %v3945, %v4122
        %v4190 = vadd.f32 %v3946, %v4125
        %v4191 = vadd.f32 %v3947, %v4127
        %v4192 = vlaneseq
        %v4193 = vshrl.u32 %v4192, 7
        %v4194 = vsub.s32 3, %v4193
        %v4195 = vrot.slane %v408, %v4194
        %v4196 = vmul.f32 %v3588, %v4195
        %v4197 = vmul.f32 %v3589, %v4195
        %v4198 = vmul.f32 %v3590, %v4195
        %v4199 = vmul.f32 %v3591, %v4195
        %v4200 = vmul.f32 %v3592, %v4195
        %v4201 = vmul.f32 %v3593, %v4195
        %v4202 = vmul.f32 %v3594, %v4195
        %v4203 = vmul.f32 %v3595, %v4195
        %v4204 = vmul.f32 %v3596, %v4195
        %v4205 = vmul.f32 %v3597, %v4195
        %v4206 = vmul.f32 %v3598, %v4195
        %v4207 = vmul.f32 %v3599, %v4195
        %v4208 = vmul.f32 %v3600, %v4195
        %v4209 = vmul.f32 %v3601, %v4195
        %v4210 = vmul.f32 %v3602, %v4195
        %v4211 = vmul.f32 %v3603, %v4195
        %v4212 = vmul.f32 %v3604, %v4195
        %v4213 = vmul.f32 %v3605, %v4195
        %v4214 = vmul.f32 %v3606, %v4195
        %v4215 = vmul.f32 %v3607, %v4195
        %v4216 = vmul.f32 %v3608, %v4195
        %v4217 = vmul.f32 %v3609, %v4195
        %v4218 = vmul.f32 %v3610, %v4195
        %v4219 = vmul.f32 %v3611, %v4195
        %v4220 = vmul.f32 %v3612, %v4195
        %v4221 = vmul.f32 %v3613, %v4195
        %v4222 = vmul.f32 %v3614, %v4195
        %v4223 = vmul.f32 %v3615, %v4195
        %v4224 = vmul.f32 %v3616, %v4195
        %v4225 = vmul.f32 %v3617, %v4195
        %v4226 = vmul.f32 %v3618, %v4195
        %v4227 = vmul.f32 %v3619, %v4195
        %v4228 = vmul.f32 %v3620, %v4195
        %v4229 = vmul.f32 %v3621, %v4195
        %v4230 = vmul.f32 %v3622, %v4195
        %v4231 = vmul.f32 %v3623, %v4195
        %v4232 = vmul.f32 %v3624, %v4195
        %v4233 = vmul.f32 %v3625, %v4195
        %v4234 = vmul.f32 %v3626, %v4195
        %v4235 = vmul.f32 %v3627, %v4195
        %v4236 = vmul.f32 %v3628, %v4195
        %v4237 = vmul.f32 %v3629, %v4195
        %v4238 = vmul.f32 %v3630, %v4195
        %v4239 = vmul.f32 %v3631, %v4195
        %v4240 = vmul.f32 %v3632, %v4195
        %v4241 = vmul.f32 %v3633, %v4195
        %v4242 = vmul.f32 %v3634, %v4195
        %v4243 = vmul.f32 %v3635, %v4195
        %v4292 = vrot.slane %v4196, 3
        %v4293 = vrot.slane %v4197, 3
        %v4294 = vsel %vm1126, %v4292, %v4293
        %v4295 = vrot.slane %v4198, 3
        %v4296 = vsel %vm1126, %v4293, %v4295
        %v4297 = vrot.slane %v4199, 3
        %v4298 = vrot.slane %v4200, 3
        %v4299 = vsel %vm1126, %v4297, %v4298
        %v4300 = vrot.slane %v4201, 3
        %v4301 = vsel %vm1126, %v4298, %v4300
        %v4302 = vrot.slane %v4202, 3
        %v4303 = vrot.slane %v4203, 3
        %v4304 = vsel %vm1126, %v4302, %v4303
        %v4305 = vrot.slane %v4204, 3
        %v4306 = vsel %vm1126, %v4303, %v4305
        %v4307 = vrot.slane %v4205, 3
        %v4308 = vrot.slane %v4206, 3
        %v4309 = vsel %vm1126, %v4307, %v4308
        %v4310 = vrot.slane %v4207, 3
        %v4311 = vsel %vm1126, %v4308, %v4310
        %v4312 = vrot.slane %v4208, 3
        %v4313 = vrot.slane %v4209, 3
        %v4314 = vsel %vm1126, %v4312, %v4313
        %v4315 = vrot.slane %v4210, 3
        %v4316 = vsel %vm1126, %v4313, %v4315
        %v4317 = vrot.slane %v4211, 3
        %v4318 = vrot.slane %v4212, 3
        %v4319 = vsel %vm1126, %v4317, %v4318
        %v4320 = vrot.slane %v4213, 3
        %v4321 = vsel %vm1126, %v4318, %v4320
        %v4322 = vrot.slane %v4214, 3
        %v4323 = vrot.slane %v4215, 3
        %v4324 = vsel %vm1126, %v4322, %v4323
        %v4325 = vrot.slane %v4216, 3
        %v4326 = vsel %vm1126, %v4323, %v4325
        %v4327 = vrot.slane %v4217, 3
        %v4328 = vrot.slane %v4218, 3
        %v4329 = vsel %vm1126, %v4327, %v4328
        %v4330 = vrot.slane %v4219, 3
        %v4331 = vsel %vm1126, %v4328, %v4330
        %v4332 = vrot.slane %v4220, 3
        %v4333 = vrot.slane %v4221, 3
        %v4334 = vsel %vm1126, %v4332, %v4333
        %v4335 = vrot.slane %v4222, 3
        %v4336 = vsel %vm1126, %v4333, %v4335
        %v4337 = vrot.slane %v4223, 3
        %v4338 = vrot.slane %v4224, 3
        %v4339 = vsel %vm1126, %v4337, %v4338
        %v4340 = vrot.slane %v4225, 3
        %v4341 = vsel %vm1126, %v4338, %v4340
        %v4342 = vrot.slane %v4226, 3
        %v4343 = vrot.slane %v4227, 3
        %v4344 = vsel %vm1126, %v4342, %v4343
        %v4345 = vrot.slane %v4228, 3
        %v4346 = vsel %vm1126, %v4343, %v4345
        %v4347 = vrot.slane %v4229, 3
        %v4348 = vrot.slane %v4230, 3
        %v4349 = vsel %vm1126, %v4347, %v4348
        %v4350 = vrot.slane %v4231, 3
        %v4351 = vsel %vm1126, %v4348, %v4350
        %v4352 = vrot.slane %v4232, 3
        %v4353 = vrot.slane %v4233, 3
        %v4354 = vsel %vm1126, %v4352, %v4353
        %v4355 = vrot.slane %v4234, 3
        %v4356 = vsel %vm1126, %v4353, %v4355
        %v4357 = vrot.slane %v4235, 3
        %v4358 = vrot.slane %v4236, 3
        %v4359 = vsel %vm1126, %v4357, %v4358
        %v4360 = vrot.slane %v4237, 3
        %v4361 = vsel %vm1126, %v4358, %v4360
        %v4362 = vrot.slane %v4238, 3
        %v4363 = vrot.slane %v4239, 3
        %v4364 = vsel %vm1126, %v4362, %v4363
        %v4365 = vrot.slane %v4240, 3
        %v4366 = vsel %vm1126, %v4363, %v4365
        %v4367 = vrot.slane %v4241, 3
        %v4368 = vrot.slane %v4242, 3
        %v4369 = vsel %vm1126, %v4367, %v4368
        %v4370 = vrot.slane %v4243, 3
        %v4371 = vsel %vm1126, %v4368, %v4370
        %v4404 = vadd.f32 %v4160, %v4294
        %v4405 = vadd.f32 %v4161, %v4296
        %v4406 = vadd.f32 %v4162, %v4299
        %v4407 = vadd.f32 %v4163, %v4301
        %v4408 = vadd.f32 %v4164, %v4304
        %v4409 = vadd.f32 %v4165, %v4306
        %v4410 = vadd.f32 %v4166, %v4309
        %v4411 = vadd.f32 %v4167, %v4311
        %v4412 = vadd.f32 %v4168, %v4314
        %v4413 = vadd.f32 %v4169, %v4316
        %v4414 = vadd.f32 %v4170, %v4319
        %v4415 = vadd.f32 %v4171, %v4321
        %v4416 = vadd.f32 %v4172, %v4324
        %v4417 = vadd.f32 %v4173, %v4326
        %v4418 = vadd.f32 %v4174, %v4329
        %v4419 = vadd.f32 %v4175, %v4331
        %v4420 = vadd.f32 %v4176, %v4334
        %v4421 = vadd.f32 %v4177, %v4336
        %v4422 = vadd.f32 %v4178, %v4339
        %v4423 = vadd.f32 %v4179, %v4341
        %v4424 = vadd.f32 %v4180, %v4344
        %v4425 = vadd.f32 %v4181, %v4346
        %v4426 = vadd.f32 %v4182, %v4349
        %v4427 = vadd.f32 %v4183, %v4351
        %v4428 = vadd.f32 %v4184, %v4354
        %v4429 = vadd.f32 %v4185, %v4356
        %v4430 = vadd.f32 %v4186, %v4359
        %v4431 = vadd.f32 %v4187, %v4361
        %v4432 = vadd.f32 %v4188, %v4364
        %v4433 = vadd.f32 %v4189, %v4366
        %v4434 = vadd.f32 %v4190, %v4369
        %v4435 = vadd.f32 %v4191, %v4371
        %v4436 = vlaneseq
        %v4437 = vshrl.u32 %v4436, 7
        %v4438 = vsub.s32 4, %v4437
        %v4439 = vrot.slane %v408, %v4438
        %v4440 = vmul.f32 %v3588, %v4439
        %v4441 = vmul.f32 %v3589, %v4439
        %v4442 = vmul.f32 %v3590, %v4439
        %v4443 = vmul.f32 %v3591, %v4439
        %v4444 = vmul.f32 %v3592, %v4439
        %v4445 = vmul.f32 %v3593, %v4439
        %v4446 = vmul.f32 %v3594, %v4439
        %v4447 = vmul.f32 %v3595, %v4439
        %v4448 = vmul.f32 %v3596, %v4439
        %v4449 = vmul.f32 %v3597, %v4439
        %v4450 = vmul.f32 %v3598, %v4439
        %v4451 = vmul.f32 %v3599, %v4439
        %v4452 = vmul.f32 %v3600, %v4439
        %v4453 = vmul.f32 %v3601, %v4439
        %v4454 = vmul.f32 %v3602, %v4439
        %v4455 = vmul.f32 %v3603, %v4439
        %v4456 = vmul.f32 %v3604, %v4439
        %v4457 = vmul.f32 %v3605, %v4439
        %v4458 = vmul.f32 %v3606, %v4439
        %v4459 = vmul.f32 %v3607, %v4439
        %v4460 = vmul.f32 %v3608, %v4439
        %v4461 = vmul.f32 %v3609, %v4439
        %v4462 = vmul.f32 %v3610, %v4439
        %v4463 = vmul.f32 %v3611, %v4439
        %v4464 = vmul.f32 %v3612, %v4439
        %v4465 = vmul.f32 %v3613, %v4439
        %v4466 = vmul.f32 %v3614, %v4439
        %v4467 = vmul.f32 %v3615, %v4439
        %v4468 = vmul.f32 %v3616, %v4439
        %v4469 = vmul.f32 %v3617, %v4439
        %v4470 = vmul.f32 %v3618, %v4439
        %v4471 = vmul.f32 %v3619, %v4439
        %v4472 = vmul.f32 %v3620, %v4439
        %v4473 = vmul.f32 %v3621, %v4439
        %v4474 = vmul.f32 %v3622, %v4439
        %v4475 = vmul.f32 %v3623, %v4439
        %v4476 = vmul.f32 %v3624, %v4439
        %v4477 = vmul.f32 %v3625, %v4439
        %v4478 = vmul.f32 %v3626, %v4439
        %v4479 = vmul.f32 %v3627, %v4439
        %v4480 = vmul.f32 %v3628, %v4439
        %v4481 = vmul.f32 %v3629, %v4439
        %v4482 = vmul.f32 %v3630, %v4439
        %v4483 = vmul.f32 %v3631, %v4439
        %v4484 = vmul.f32 %v3632, %v4439
        %v4485 = vmul.f32 %v3633, %v4439
        %v4486 = vmul.f32 %v3634, %v4439
        %v4487 = vmul.f32 %v3635, %v4439
        %v4536 = vrot.slane %v4440, 4
        %v4537 = vrot.slane %v4441, 4
        %v4538 = vsel %vm1371, %v4536, %v4537
        %v4539 = vrot.slane %v4442, 4
        %v4540 = vsel %vm1371, %v4537, %v4539
        %v4541 = vrot.slane %v4443, 4
        %v4542 = vrot.slane %v4444, 4
        %v4543 = vsel %vm1371, %v4541, %v4542
        %v4544 = vrot.slane %v4445, 4
        %v4545 = vsel %vm1371, %v4542, %v4544
        %v4546 = vrot.slane %v4446, 4
        %v4547 = vrot.slane %v4447, 4
        %v4548 = vsel %vm1371, %v4546, %v4547
        %v4549 = vrot.slane %v4448, 4
        %v4550 = vsel %vm1371, %v4547, %v4549
        %v4551 = vrot.slane %v4449, 4
        %v4552 = vrot.slane %v4450, 4
        %v4553 = vsel %vm1371, %v4551, %v4552
        %v4554 = vrot.slane %v4451, 4
        %v4555 = vsel %vm1371, %v4552, %v4554
        %v4556 = vrot.slane %v4452, 4
        %v4557 = vrot.slane %v4453, 4
        %v4558 = vsel %vm1371, %v4556, %v4557
        %v4559 = vrot.slane %v4454, 4
        %v4560 = vsel %vm1371, %v4557, %v4559
        %v4561 = vrot.slane %v4455, 4
        %v4562 = vrot.slane %v4456, 4
        %v4563 = vsel %vm1371, %v4561, %v4562
        %v4564 = vrot.slane %v4457, 4
        %v4565 = vsel %vm1371, %v4562, %v4564
        %v4566 = vrot.slane %v4458, 4
        %v4567 = vrot.slane %v4459, 4
        %v4568 = vsel %vm1371, %v4566, %v4567
        %v4569 = vrot.slane %v4460, 4
        %v4570 = vsel %vm1371, %v4567, %v4569
        %v4571 = vrot.slane %v4461, 4
        %v4572 = vrot.slane %v4462, 4
        %v4573 = vsel %vm1371, %v4571, %v4572
        %v4574 = vrot.slane %v4463, 4
        %v4575 = vsel %vm1371, %v4572, %v4574
        %v4576 = vrot.slane %v4464, 4
        %v4577 = vrot.slane %v4465, 4
        %v4578 = vsel %vm1371, %v4576, %v4577
        %v4579 = vrot.slane %v4466, 4
        %v4580 = vsel %vm1371, %v4577, %v4579
        %v4581 = vrot.slane %v4467, 4
        %v4582 = vrot.slane %v4468, 4
        %v4583 = vsel %vm1371, %v4581, %v4582
        %v4584 = vrot.slane %v4469, 4
        %v4585 = vsel %vm1371, %v4582, %v4584
        %v4586 = vrot.slane %v4470, 4
        %v4587 = vrot.slane %v4471, 4
        %v4588 = vsel %vm1371, %v4586, %v4587
        %v4589 = vrot.slane %v4472, 4
        %v4590 = vsel %vm1371, %v4587, %v4589
        %v4591 = vrot.slane %v4473, 4
        %v4592 = vrot.slane %v4474, 4
        %v4593 = vsel %vm1371, %v4591, %v4592
        %v4594 = vrot.slane %v4475, 4
        %v4595 = vsel %vm1371, %v4592, %v4594
        %v4596 = vrot.slane %v4476, 4
        %v4597 = vrot.slane %v4477, 4
        %v4598 = vsel %vm1371, %v4596, %v4597
        %v4599 = vrot.slane %v4478, 4
        %v4600 = vsel %vm1371, %v4597, %v4599
        %v4601 = vrot.slane %v4479, 4
        %v4602 = vrot.slane %v4480, 4
        %v4603 = vsel %vm1371, %v4601, %v4602
        %v4604 = vrot.slane %v4481, 4
        %v4605 = vsel %vm1371, %v4602, %v4604
        %v4606 = vrot.slane %v4482, 4
        %v4607 = vrot.slane %v4483, 4
        %v4608 = vsel %vm1371, %v4606, %v4607
        %v4609 = vrot.slane %v4484, 4
        %v4610 = vsel %vm1371, %v4607, %v4609
        %v4611 = vrot.slane %v4485, 4
        %v4612 = vrot.slane %v4486, 4
        %v4613 = vsel %vm1371, %v4611, %v4612
        %v4614 = vrot.slane %v4487, 4
        %v4615 = vsel %vm1371, %v4612, %v4614
        %v4648 = vadd.f32 %v4404, %v4538
        %v4649 = vadd.f32 %v4405, %v4540
        %v4650 = vadd.f32 %v4406, %v4543
        %v4651 = vadd.f32 %v4407, %v4545
        %v4652 = vadd.f32 %v4408, %v4548
        %v4653 = vadd.f32 %v4409, %v4550
        %v4654 = vadd.f32 %v4410, %v4553
        %v4655 = vadd.f32 %v4411, %v4555
        %v4656 = vadd.f32 %v4412, %v4558
        %v4657 = vadd.f32 %v4413, %v4560
        %v4658 = vadd.f32 %v4414, %v4563
        %v4659 = vadd.f32 %v4415, %v4565
        %v4660 = vadd.f32 %v4416, %v4568
        %v4661 = vadd.f32 %v4417, %v4570
        %v4662 = vadd.f32 %v4418, %v4573
        %v4663 = vadd.f32 %v4419, %v4575
        %v4664 = vadd.f32 %v4420, %v4578
        %v4665 = vadd.f32 %v4421, %v4580
        %v4666 = vadd.f32 %v4422, %v4583
        %v4667 = vadd.f32 %v4423, %v4585
        %v4668 = vadd.f32 %v4424, %v4588
        %v4669 = vadd.f32 %v4425, %v4590
        %v4670 = vadd.f32 %v4426, %v4593
        %v4671 = vadd.f32 %v4427, %v4595
        %v4672 = vadd.f32 %v4428, %v4598
        %v4673 = vadd.f32 %v4429, %v4600
        %v4674 = vadd.f32 %v4430, %v4603
        %v4675 = vadd.f32 %v4431, %v4605
        %v4676 = vadd.f32 %v4432, %v4608
        %v4677 = vadd.f32 %v4433, %v4610
        %v4678 = vadd.f32 %v4434, %v4613
        %v4679 = vadd.f32 %v4435, %v4615
        %v4680 = vlaneseq
        %v4681 = vshrl.u32 %v4680, 7
        %v4682 = vsub.s32 5, %v4681
        %v4683 = vrot.slane %v408, %v4682
        %v4684 = vmul.f32 %v3588, %v4683
        %v4685 = vmul.f32 %v3589, %v4683
        %v4686 = vmul.f32 %v3590, %v4683
        %v4687 = vmul.f32 %v3591, %v4683
        %v4688 = vmul.f32 %v3592, %v4683
        %v4689 = vmul.f32 %v3593, %v4683
        %v4690 = vmul.f32 %v3594, %v4683
        %v4691 = vmul.f32 %v3595, %v4683
        %v4692 = vmul.f32 %v3596, %v4683
        %v4693 = vmul.f32 %v3597, %v4683
        %v4694 = vmul.f32 %v3598, %v4683
        %v4695 = vmul.f32 %v3599, %v4683
        %v4696 = vmul.f32 %v3600, %v4683
        %v4697 = vmul.f32 %v3601, %v4683
        %v4698 = vmul.f32 %v3602, %v4683
        %v4699 = vmul.f32 %v3603, %v4683
        %v4700 = vmul.f32 %v3604, %v4683
        %v4701 = vmul.f32 %v3605, %v4683
        %v4702 = vmul.f32 %v3606, %v4683
        %v4703 = vmul.f32 %v3607, %v4683
        %v4704 = vmul.f32 %v3608, %v4683
        %v4705 = vmul.f32 %v3609, %v4683
        %v4706 = vmul.f32 %v3610, %v4683
        %v4707 = vmul.f32 %v3611, %v4683
        %v4708 = vmul.f32 %v3612, %v4683
        %v4709 = vmul.f32 %v3613, %v4683
        %v4710 = vmul.f32 %v3614, %v4683
        %v4711 = vmul.f32 %v3615, %v4683
        %v4712 = vmul.f32 %v3616, %v4683
        %v4713 = vmul.f32 %v3617, %v4683
        %v4714 = vmul.f32 %v3618, %v4683
        %v4715 = vmul.f32 %v3619, %v4683
        %v4716 = vmul.f32 %v3620, %v4683
        %v4717 = vmul.f32 %v3621, %v4683
        %v4718 = vmul.f32 %v3622, %v4683
        %v4719 = vmul.f32 %v3623, %v4683
        %v4720 = vmul.f32 %v3624, %v4683
        %v4721 = vmul.f32 %v3625, %v4683
        %v4722 = vmul.f32 %v3626, %v4683
        %v4723 = vmul.f32 %v3627, %v4683
        %v4724 = vmul.f32 %v3628, %v4683
        %v4725 = vmul.f32 %v3629, %v4683
        %v4726 = vmul.f32 %v3630, %v4683
        %v4727 = vmul.f32 %v3631, %v4683
        %v4728 = vmul.f32 %v3632, %v4683
        %v4729 = vmul.f32 %v3633, %v4683
        %v4730 = vmul.f32 %v3634, %v4683
        %v4731 = vmul.f32 %v3635, %v4683
        %v4780 = vrot.slane %v4684, 5
        %v4781 = vrot.slane %v4685, 5
        %v4782 = vsel %vm1616, %v4780, %v4781
        %v4783 = vrot.slane %v4686, 5
        %v4784 = vsel %vm1616, %v4781, %v4783
        %v4785 = vrot.slane %v4687, 5
        %v4786 = vrot.slane %v4688, 5
        %v4787 = vsel %vm1616, %v4785, %v4786
        %v4788 = vrot.slane %v4689, 5
        %v4789 = vsel %vm1616, %v4786, %v4788
        %v4790 = vrot.slane %v4690, 5
        %v4791 = vrot.slane %v4691, 5
        %v4792 = vsel %vm1616, %v4790, %v4791
        %v4793 = vrot.slane %v4692, 5
        %v4794 = vsel %vm1616, %v4791, %v4793
        %v4795 = vrot.slane %v4693, 5
        %v4796 = vrot.slane %v4694, 5
        %v4797 = vsel %vm1616, %v4795, %v4796
        %v4798 = vrot.slane %v4695, 5
        %v4799 = vsel %vm1616, %v4796, %v4798
        %v4800 = vrot.slane %v4696, 5
        %v4801 = vrot.slane %v4697, 5
        %v4802 = vsel %vm1616, %v4800, %v4801
        %v4803 = vrot.slane %v4698, 5
        %v4804 = vsel %vm1616, %v4801, %v4803
        %v4805 = vrot.slane %v4699, 5
        %v4806 = vrot.slane %v4700, 5
        %v4807 = vsel %vm1616, %v4805, %v4806
        %v4808 = vrot.slane %v4701, 5
        %v4809 = vsel %vm1616, %v4806, %v4808
        %v4810 = vrot.slane %v4702, 5
        %v4811 = vrot.slane %v4703, 5
        %v4812 = vsel %vm1616, %v4810, %v4811
        %v4813 = vrot.slane %v4704, 5
        %v4814 = vsel %vm1616, %v4811, %v4813
        %v4815 = vrot.slane %v4705, 5
        %v4816 = vrot.slane %v4706, 5
        %v4817 = vsel %vm1616, %v4815, %v4816
        %v4818 = vrot.slane %v4707, 5
        %v4819 = vsel %vm1616, %v4816, %v4818
        %v4820 = vrot.slane %v4708, 5
        %v4821 = vrot.slane %v4709, 5
        %v4822 = vsel %vm1616, %v4820, %v4821
        %v4823 = vrot.slane %v4710, 5
        %v4824 = vsel %vm1616, %v4821, %v4823
        %v4825 = vrot.slane %v4711, 5
        %v4826 = vrot.slane %v4712, 5
        %v4827 = vsel %vm1616, %v4825, %v4826
        %v4828 = vrot.slane %v4713, 5
        %v4829 = vsel %vm1616, %v4826, %v4828
        %v4830 = vrot.slane %v4714, 5
        %v4831 = vrot.slane %v4715, 5
        %v4832 = vsel %vm1616, %v4830, %v4831
        %v4833 = vrot.slane %v4716, 5
        %v4834 = vsel %vm1616, %v4831, %v4833
        %v4835 = vrot.slane %v4717, 5
        %v4836 = vrot.slane %v4718, 5
        %v4837 = vsel %vm1616, %v4835, %v4836
        %v4838 = vrot.slane %v4719, 5
        %v4839 = vsel %vm1616, %v4836, %v4838
        %v4840 = vrot.slane %v4720, 5
        %v4841 = vrot.slane %v4721, 5
        %v4842 = vsel %vm1616, %v4840, %v4841
        %v4843 = vrot.slane %v4722, 5
        %v4844 = vsel %vm1616, %v4841, %v4843
        %v4845 = vrot.slane %v4723, 5
        %v4846 = vrot.slane %v4724, 5
        %v4847 = vsel %vm1616, %v4845, %v4846
        %v4848 = vrot.slane %v4725, 5
        %v4849 = vsel %vm1616, %v4846, %v4848
        %v4850 = vrot.slane %v4726, 5
        %v4851 = vrot.slane %v4727, 5
        %v4852 = vsel %vm1616, %v4850, %v4851
        %v4853 = vrot.slane %v4728, 5
        %v4854 = vsel %vm1616, %v4851, %v4853
        %v4855 = vrot.slane %v4729, 5
        %v4856 = vrot.slane %v4730, 5
        %v4857 = vsel %vm1616, %v4855, %v4856
        %v4858 = vrot.slane %v4731, 5
        %v4859 = vsel %vm1616, %v4856, %v4858
        %v4892 = vadd.f32 %v4648, %v4782
        %v4893 = vadd.f32 %v4649, %v4784
        %v4894 = vadd.f32 %v4650, %v4787
        %v4895 = vadd.f32 %v4651, %v4789
        %v4896 = vadd.f32 %v4652, %v4792
        %v4897 = vadd.f32 %v4653, %v4794
        %v4898 = vadd.f32 %v4654, %v4797
        %v4899 = vadd.f32 %v4655, %v4799
        %v4900 = vadd.f32 %v4656, %v4802
        %v4901 = vadd.f32 %v4657, %v4804
        %v4902 = vadd.f32 %v4658, %v4807
        %v4903 = vadd.f32 %v4659, %v4809
        %v4904 = vadd.f32 %v4660, %v4812
        %v4905 = vadd.f32 %v4661, %v4814
        %v4906 = vadd.f32 %v4662, %v4817
        %v4907 = vadd.f32 %v4663, %v4819
        %v4908 = vadd.f32 %v4664, %v4822
        %v4909 = vadd.f32 %v4665, %v4824
        %v4910 = vadd.f32 %v4666, %v4827
        %v4911 = vadd.f32 %v4667, %v4829
        %v4912 = vadd.f32 %v4668, %v4832
        %v4913 = vadd.f32 %v4669, %v4834
        %v4914 = vadd.f32 %v4670, %v4837
        %v4915 = vadd.f32 %v4671, %v4839
        %v4916 = vadd.f32 %v4672, %v4842
        %v4917 = vadd.f32 %v4673, %v4844
        %v4918 = vadd.f32 %v4674, %v4847
        %v4919 = vadd.f32 %v4675, %v4849
        %v4920 = vadd.f32 %v4676, %v4852
        %v4921 = vadd.f32 %v4677, %v4854
        %v4922 = vadd.f32 %v4678, %v4857
        %v4923 = vadd.f32 %v4679, %v4859
        %v4924 = vlaneseq
        %v4925 = vshrl.u32 %v4924, 7
        %v4926 = vsub.s32 6, %v4925
        %v4927 = vrot.slane %v408, %v4926
        %v4928 = vmul.f32 %v3588, %v4927
        %v4929 = vmul.f32 %v3589, %v4927
        %v4930 = vmul.f32 %v3590, %v4927
        %v4931 = vmul.f32 %v3591, %v4927
        %v4932 = vmul.f32 %v3592, %v4927
        %v4933 = vmul.f32 %v3593, %v4927
        %v4934 = vmul.f32 %v3594, %v4927
        %v4935 = vmul.f32 %v3595, %v4927
        %v4936 = vmul.f32 %v3596, %v4927
        %v4937 = vmul.f32 %v3597, %v4927
        %v4938 = vmul.f32 %v3598, %v4927
        %v4939 = vmul.f32 %v3599, %v4927
        %v4940 = vmul.f32 %v3600, %v4927
        %v4941 = vmul.f32 %v3601, %v4927
        %v4942 = vmul.f32 %v3602, %v4927
        %v4943 = vmul.f32 %v3603, %v4927
        %v4944 = vmul.f32 %v3604, %v4927
        %v4945 = vmul.f32 %v3605, %v4927
        %v4946 = vmul.f32 %v3606, %v4927
        %v4947 = vmul.f32 %v3607, %v4927
        %v4948 = vmul.f32 %v3608, %v4927
        %v4949 = vmul.f32 %v3609, %v4927
        %v4950 = vmul.f32 %v3610, %v4927
        %v4951 = vmul.f32 %v3611, %v4927
        %v4952 = vmul.f32 %v3612, %v4927
        %v4953 = vmul.f32 %v3613, %v4927
        %v4954 = vmul.f32 %v3614, %v4927
        %v4955 = vmul.f32 %v3615, %v4927
        %v4956 = vmul.f32 %v3616, %v4927
        %v4957 = vmul.f32 %v3617, %v4927
        %v4958 = vmul.f32 %v3618, %v4927
        %v4959 = vmul.f32 %v3619, %v4927
        %v4960 = vmul.f32 %v3620, %v4927
        %v4961 = vmul.f32 %v3621, %v4927
        %v4962 = vmul.f32 %v3622, %v4927
        %v4963 = vmul.f32 %v3623, %v4927
        %v4964 = vmul.f32 %v3624, %v4927
        %v4965 = vmul.f32 %v3625, %v4927
        %v4966 = vmul.f32 %v3626, %v4927
        %v4967 = vmul.f32 %v3627, %v4927
        %v4968 = vmul.f32 %v3628, %v4927
        %v4969 = vmul.f32 %v3629, %v4927
        %v4970 = vmul.f32 %v3630, %v4927
        %v4971 = vmul.f32 %v3631, %v4927
        %v4972 = vmul.f32 %v3632, %v4927
        %v4973 = vmul.f32 %v3633, %v4927
        %v4974 = vmul.f32 %v3634, %v4927
        %v4975 = vmul.f32 %v3635, %v4927
        %v5024 = vrot.slane %v4928, 6
        %v5025 = vrot.slane %v4929, 6
        %v5026 = vsel %vm1861, %v5024, %v5025
        %v5027 = vrot.slane %v4930, 6
        %v5028 = vsel %vm1861, %v5025, %v5027
        %v5029 = vrot.slane %v4931, 6
        %v5030 = vrot.slane %v4932, 6
        %v5031 = vsel %vm1861, %v5029, %v5030
        %v5032 = vrot.slane %v4933, 6
        %v5033 = vsel %vm1861, %v5030, %v5032
        %v5034 = vrot.slane %v4934, 6
        %v5035 = vrot.slane %v4935, 6
        %v5036 = vsel %vm1861, %v5034, %v5035
        %v5037 = vrot.slane %v4936, 6
        %v5038 = vsel %vm1861, %v5035, %v5037
        %v5039 = vrot.slane %v4937, 6
        %v5040 = vrot.slane %v4938, 6
        %v5041 = vsel %vm1861, %v5039, %v5040
        %v5042 = vrot.slane %v4939, 6
        %v5043 = vsel %vm1861, %v5040, %v5042
        %v5044 = vrot.slane %v4940, 6
        %v5045 = vrot.slane %v4941, 6
        %v5046 = vsel %vm1861, %v5044, %v5045
        %v5047 = vrot.slane %v4942, 6
        %v5048 = vsel %vm1861, %v5045, %v5047
        %v5049 = vrot.slane %v4943, 6
        %v5050 = vrot.slane %v4944, 6
        %v5051 = vsel %vm1861, %v5049, %v5050
        %v5052 = vrot.slane %v4945, 6
        %v5053 = vsel %vm1861, %v5050, %v5052
        %v5054 = vrot.slane %v4946, 6
        %v5055 = vrot.slane %v4947, 6
        %v5056 = vsel %vm1861, %v5054, %v5055
        %v5057 = vrot.slane %v4948, 6
        %v5058 = vsel %vm1861, %v5055, %v5057
        %v5059 = vrot.slane %v4949, 6
        %v5060 = vrot.slane %v4950, 6
        %v5061 = vsel %vm1861, %v5059, %v5060
        %v5062 = vrot.slane %v4951, 6
        %v5063 = vsel %vm1861, %v5060, %v5062
        %v5064 = vrot.slane %v4952, 6
        %v5065 = vrot.slane %v4953, 6
        %v5066 = vsel %vm1861, %v5064, %v5065
        %v5067 = vrot.slane %v4954, 6
        %v5068 = vsel %vm1861, %v5065, %v5067
        %v5069 = vrot.slane %v4955, 6
        %v5070 = vrot.slane %v4956, 6
        %v5071 = vsel %vm1861, %v5069, %v5070
        %v5072 = vrot.slane %v4957, 6
        %v5073 = vsel %vm1861, %v5070, %v5072
        %v5074 = vrot.slane %v4958, 6
        %v5075 = vrot.slane %v4959, 6
        %v5076 = vsel %vm1861, %v5074, %v5075
        %v5077 = vrot.slane %v4960, 6
        %v5078 = vsel %vm1861, %v5075, %v5077
        %v5079 = vrot.slane %v4961, 6
        %v5080 = vrot.slane %v4962, 6
        %v5081 = vsel %vm1861, %v5079, %v5080
        %v5082 = vrot.slane %v4963, 6
        %v5083 = vsel %vm1861, %v5080, %v5082
        %v5084 = vrot.slane %v4964, 6
        %v5085 = vrot.slane %v4965, 6
        %v5086 = vsel %vm1861, %v5084, %v5085
        %v5087 = vrot.slane %v4966, 6
        %v5088 = vsel %vm1861, %v5085, %v5087
        %v5089 = vrot.slane %v4967, 6
        %v5090 = vrot.slane %v4968, 6
        %v5091 = vsel %vm1861, %v5089, %v5090
        %v5092 = vrot.slane %v4969, 6
        %v5093 = vsel %vm1861, %v5090, %v5092
        %v5094 = vrot.slane %v4970, 6
        %v5095 = vrot.slane %v4971, 6
        %v5096 = vsel %vm1861, %v5094, %v5095
        %v5097 = vrot.slane %v4972, 6
        %v5098 = vsel %vm1861, %v5095, %v5097
        %v5099 = vrot.slane %v4973, 6
        %v5100 = vrot.slane %v4974, 6
        %v5101 = vsel %vm1861, %v5099, %v5100
        %v5102 = vrot.slane %v4975, 6
        %v5103 = vsel %vm1861, %v5100, %v5102
        %v5136 = vadd.f32 %v4892, %v5026
        %v5137 = vadd.f32 %v4893, %v5028
        %v5138 = vadd.f32 %v4894, %v5031
        %v5139 = vadd.f32 %v4895, %v5033
        %v5140 = vadd.f32 %v4896, %v5036
        %v5141 = vadd.f32 %v4897, %v5038
        %v5142 = vadd.f32 %v4898, %v5041
        %v5143 = vadd.f32 %v4899, %v5043
        %v5144 = vadd.f32 %v4900, %v5046
        %v5145 = vadd.f32 %v4901, %v5048
        %v5146 = vadd.f32 %v4902, %v5051
        %v5147 = vadd.f32 %v4903, %v5053
        %v5148 = vadd.f32 %v4904, %v5056
        %v5149 = vadd.f32 %v4905, %v5058
        %v5150 = vadd.f32 %v4906, %v5061
        %v5151 = vadd.f32 %v4907, %v5063
        %v5152 = vadd.f32 %v4908, %v5066
        %v5153 = vadd.f32 %v4909, %v5068
        %v5154 = vadd.f32 %v4910, %v5071
        %v5155 = vadd.f32 %v4911, %v5073
        %v5156 = vadd.f32 %v4912, %v5076
        %v5157 = vadd.f32 %v4913, %v5078
        %v5158 = vadd.f32 %v4914, %v5081
        %v5159 = vadd.f32 %v4915, %v5083
        %v5160 = vadd.f32 %v4916, %v5086
        %v5161 = vadd.f32 %v4917, %v5088
        %v5162 = vadd.f32 %v4918, %v5091
        %v5163 = vadd.f32 %v4919, %v5093
        %v5164 = vadd.f32 %v4920, %v5096
        %v5165 = vadd.f32 %v4921, %v5098
        %v5166 = vadd.f32 %v4922, %v5101
        %v5167 = vadd.f32 %v4923, %v5103
        %v5168 = vld [vmem:[%s373] sm:$0xff]
        %v5169 = vld [vmem:[%s373 + $0x8] sm:$0xff]
        %v5170 = vld [vmem:[%s373 + $0x10] sm:$0x3f]
        %v5171 = vld [vmem:[%s373 + $0x18] sm:$0xff]
        %v5172 = vld [vmem:[%s373 + $0x20] sm:$0xff]
        %v5173 = vld [vmem:[%s373 + $0x28] sm:$0x3f]
        %v5174 = vld [vmem:[%s373 + $0x30] sm:$0xff]
        %v5175 = vld [vmem:[%s373 + $0x38] sm:$0xff]
        %v5176 = vld [vmem:[%s373 + $0x40] sm:$0x3f]
        %v5177 = vld [vmem:[%s373 + $0x48] sm:$0xff]
        %v5178 = vld [vmem:[%s373 + $0x50] sm:$0xff]
        %v5179 = vld [vmem:[%s373 + $0x58] sm:$0x3f]
        %v5180 = vld [vmem:[%s373 + $0x60] sm:$0xff]
        %v5181 = vld [vmem:[%s373 + $0x68] sm:$0xff]
        %v5182 = vld [vmem:[%s373 + $0x70] sm:$0x3f]
        %v5183 = vld [vmem:[%s373 + $0x78] sm:$0xff]
        %v5184 = vld [vmem:[%s373 + $0x80] sm:$0xff]
        %v5185 = vld [vmem:[%s373 + $0x88] sm:$0x3f]
        %v5186 = vld [vmem:[%s373 + $0x90] sm:$0xff]
        %v5187 = vld [vmem:[%s373 + $0x98] sm:$0xff]
        %v5188 = vld [vmem:[%s373 + $0xa0] sm:$0x3f]
        %v5189 = vld [vmem:[%s373 + $0xa8] sm:$0xff]
        %v5190 = vld [vmem:[%s373 + $0xb0] sm:$0xff]
        %v5191 = vld [vmem:[%s373 + $0xb8] sm:$0x3f]
        %v5192 = vld [vmem:[%s373 + $0xc0] sm:$0xff]
        %v5193 = vld [vmem:[%s373 + $0xc8] sm:$0xff]
        %v5194 = vld [vmem:[%s373 + $0xd0] sm:$0x3f]
        %v5195 = vld [vmem:[%s373 + $0xd8] sm:$0xff]
        %v5196 = vld [vmem:[%s373 + $0xe0] sm:$0xff]
        %v5197 = vld [vmem:[%s373 + $0xe8] sm:$0x3f]
        %v5198 = vld [vmem:[%s373 + $0xf0] sm:$0xff]
        %v5199 = vld [vmem:[%s373 + $0xf8] sm:$0xff]
        %v5200 = vld [vmem:[%s373 + $0x100] sm:$0x3f]
        %v5201 = vld [vmem:[%s373 + $0x108] sm:$0xff]
        %v5202 = vld [vmem:[%s373 + $0x110] sm:$0xff]
        %v5203 = vld [vmem:[%s373 + $0x118] sm:$0x3f]
        %v5204 = vld [vmem:[%s373 + $0x120] sm:$0xff]
        %v5205 = vld [vmem:[%s373 + $0x128] sm:$0xff]
        %v5206 = vld [vmem:[%s373 + $0x130] sm:$0x3f]
        %v5207 = vld [vmem:[%s373 + $0x138] sm:$0xff]
        %v5208 = vld [vmem:[%s373 + $0x140] sm:$0xff]
        %v5209 = vld [vmem:[%s373 + $0x148] sm:$0x3f]
        %v5210 = vld [vmem:[%s373 + $0x150] sm:$0xff]
        %v5211 = vld [vmem:[%s373 + $0x158] sm:$0xff]
        %v5212 = vld [vmem:[%s373 + $0x160] sm:$0x3f]
        %v5213 = vld [vmem:[%s373 + $0x168] sm:$0xff]
        %v5214 = vld [vmem:[%s373 + $0x170] sm:$0xff]
        %v5215 = vld [vmem:[%s373 + $0x178] sm:$0x3f]
        %v5216 = vlaneseq
        %v5217 = vshrl.u32 %v5216, 7
        %v5218 = vsub.s32 0, %v5217
        %v5219 = vrot.slane %v409, %v5218
        %v5220 = vmul.f32 %v5168, %v5219
        %v5221 = vmul.f32 %v5169, %v5219
        %v5222 = vmul.f32 %v5171, %v5219
        %v5223 = vmul.f32 %v5172, %v5219
        %v5224 = vmul.f32 %v5174, %v5219
        %v5225 = vmul.f32 %v5175, %v5219
        %v5226 = vmul.f32 %v5177, %v5219
        %v5227 = vmul.f32 %v5178, %v5219
        %v5228 = vmul.f32 %v5180, %v5219
        %v5229 = vmul.f32 %v5181, %v5219
        %v5230 = vmul.f32 %v5183, %v5219
        %v5231 = vmul.f32 %v5184, %v5219
        %v5232 = vmul.f32 %v5186, %v5219
        %v5233 = vmul.f32 %v5187, %v5219
        %v5234 = vmul.f32 %v5189, %v5219
        %v5235 = vmul.f32 %v5190, %v5219
        %v5236 = vmul.f32 %v5192, %v5219
        %v5237 = vmul.f32 %v5193, %v5219
        %v5238 = vmul.f32 %v5195, %v5219
        %v5239 = vmul.f32 %v5196, %v5219
        %v5240 = vmul.f32 %v5198, %v5219
        %v5241 = vmul.f32 %v5199, %v5219
        %v5242 = vmul.f32 %v5201, %v5219
        %v5243 = vmul.f32 %v5202, %v5219
        %v5244 = vmul.f32 %v5204, %v5219
        %v5245 = vmul.f32 %v5205, %v5219
        %v5246 = vmul.f32 %v5207, %v5219
        %v5247 = vmul.f32 %v5208, %v5219
        %v5248 = vmul.f32 %v5210, %v5219
        %v5249 = vmul.f32 %v5211, %v5219
        %v5250 = vmul.f32 %v5213, %v5219
        %v5251 = vmul.f32 %v5214, %v5219
        %v5252 = vadd.f32 %v5136, %v5220
        %v5253 = vadd.f32 %v5137, %v5221
        %v5254 = vadd.f32 %v5138, %v5222
        %v5255 = vadd.f32 %v5139, %v5223
        %v5256 = vadd.f32 %v5140, %v5224
        %v5257 = vadd.f32 %v5141, %v5225
        %v5258 = vadd.f32 %v5142, %v5226
        %v5259 = vadd.f32 %v5143, %v5227
        %v5260 = vadd.f32 %v5144, %v5228
        %v5261 = vadd.f32 %v5145, %v5229
        %v5262 = vadd.f32 %v5146, %v5230
        %v5263 = vadd.f32 %v5147, %v5231
        %v5264 = vadd.f32 %v5148, %v5232
        %v5265 = vadd.f32 %v5149, %v5233
        %v5266 = vadd.f32 %v5150, %v5234
        %v5267 = vadd.f32 %v5151, %v5235
        %v5268 = vadd.f32 %v5152, %v5236
        %v5269 = vadd.f32 %v5153, %v5237
        %v5270 = vadd.f32 %v5154, %v5238
        %v5271 = vadd.f32 %v5155, %v5239
        %v5272 = vadd.f32 %v5156, %v5240
        %v5273 = vadd.f32 %v5157, %v5241
        %v5274 = vadd.f32 %v5158, %v5242
        %v5275 = vadd.f32 %v5159, %v5243
        %v5276 = vadd.f32 %v5160, %v5244
        %v5277 = vadd.f32 %v5161, %v5245
        %v5278 = vadd.f32 %v5162, %v5246
        %v5279 = vadd.f32 %v5163, %v5247
        %v5280 = vadd.f32 %v5164, %v5248
        %v5281 = vadd.f32 %v5165, %v5249
        %v5282 = vadd.f32 %v5166, %v5250
        %v5283 = vadd.f32 %v5167, %v5251
        %v5284 = vlaneseq
        %v5285 = vshrl.u32 %v5284, 7
        %v5286 = vsub.s32 1, %v5285
        %v5287 = vrot.slane %v409, %v5286
        %v5288 = vmul.f32 %v5168, %v5287
        %v5289 = vmul.f32 %v5169, %v5287
        %v5290 = vmul.f32 %v5170, %v5287
        %v5291 = vmul.f32 %v5171, %v5287
        %v5292 = vmul.f32 %v5172, %v5287
        %v5293 = vmul.f32 %v5173, %v5287
        %v5294 = vmul.f32 %v5174, %v5287
        %v5295 = vmul.f32 %v5175, %v5287
        %v5296 = vmul.f32 %v5176, %v5287
        %v5297 = vmul.f32 %v5177, %v5287
        %v5298 = vmul.f32 %v5178, %v5287
        %v5299 = vmul.f32 %v5179, %v5287
        %v5300 = vmul.f32 %v5180, %v5287
        %v5301 = vmul.f32 %v5181, %v5287
        %v5302 = vmul.f32 %v5182, %v5287
        %v5303 = vmul.f32 %v5183, %v5287
        %v5304 = vmul.f32 %v5184, %v5287
        %v5305 = vmul.f32 %v5185, %v5287
        %v5306 = vmul.f32 %v5186, %v5287
        %v5307 = vmul.f32 %v5187, %v5287
        %v5308 = vmul.f32 %v5188, %v5287
        %v5309 = vmul.f32 %v5189, %v5287
        %v5310 = vmul.f32 %v5190, %v5287
        %v5311 = vmul.f32 %v5191, %v5287
        %v5312 = vmul.f32 %v5192, %v5287
        %v5313 = vmul.f32 %v5193, %v5287
        %v5314 = vmul.f32 %v5194, %v5287
        %v5315 = vmul.f32 %v5195, %v5287
        %v5316 = vmul.f32 %v5196, %v5287
        %v5317 = vmul.f32 %v5197, %v5287
        %v5318 = vmul.f32 %v5198, %v5287
        %v5319 = vmul.f32 %v5199, %v5287
        %v5320 = vmul.f32 %v5200, %v5287
        %v5321 = vmul.f32 %v5201, %v5287
        %v5322 = vmul.f32 %v5202, %v5287
        %v5323 = vmul.f32 %v5203, %v5287
        %v5324 = vmul.f32 %v5204, %v5287
        %v5325 = vmul.f32 %v5205, %v5287
        %v5326 = vmul.f32 %v5206, %v5287
        %v5327 = vmul.f32 %v5207, %v5287
        %v5328 = vmul.f32 %v5208, %v5287
        %v5329 = vmul.f32 %v5209, %v5287
        %v5330 = vmul.f32 %v5210, %v5287
        %v5331 = vmul.f32 %v5211, %v5287
        %v5332 = vmul.f32 %v5212, %v5287
        %v5333 = vmul.f32 %v5213, %v5287
        %v5334 = vmul.f32 %v5214, %v5287
        %v5335 = vmul.f32 %v5215, %v5287
        %v5384 = vrot.slane %v5288, 1
        %v5385 = vrot.slane %v5289, 1
        %v5386 = vsel %vm636, %v5384, %v5385
        %v5387 = vrot.slane %v5290, 1
        %v5388 = vsel %vm636, %v5385, %v5387
        %v5389 = vrot.slane %v5291, 1
        %v5390 = vrot.slane %v5292, 1
        %v5391 = vsel %vm636, %v5389, %v5390
        %v5392 = vrot.slane %v5293, 1
        %v5393 = vsel %vm636, %v5390, %v5392
        %v5394 = vrot.slane %v5294, 1
        %v5395 = vrot.slane %v5295, 1
        %v5396 = vsel %vm636, %v5394, %v5395
        %v5397 = vrot.slane %v5296, 1
        %v5398 = vsel %vm636, %v5395, %v5397
        %v5399 = vrot.slane %v5297, 1
        %v5400 = vrot.slane %v5298, 1
        %v5401 = vsel %vm636, %v5399, %v5400
        %v5402 = vrot.slane %v5299, 1
        %v5403 = vsel %vm636, %v5400, %v5402
        %v5404 = vrot.slane %v5300, 1
        %v5405 = vrot.slane %v5301, 1
        %v5406 = vsel %vm636, %v5404, %v5405
        %v5407 = vrot.slane %v5302, 1
        %v5408 = vsel %vm636, %v5405, %v5407
        %v5409 = vrot.slane %v5303, 1
        %v5410 = vrot.slane %v5304, 1
        %v5411 = vsel %vm636, %v5409, %v5410
        %v5412 = vrot.slane %v5305, 1
        %v5413 = vsel %vm636, %v5410, %v5412
        %v5414 = vrot.slane %v5306, 1
        %v5415 = vrot.slane %v5307, 1
        %v5416 = vsel %vm636, %v5414, %v5415
        %v5417 = vrot.slane %v5308, 1
        %v5418 = vsel %vm636, %v5415, %v5417
        %v5419 = vrot.slane %v5309, 1
        %v5420 = vrot.slane %v5310, 1
        %v5421 = vsel %vm636, %v5419, %v5420
        %v5422 = vrot.slane %v5311, 1
        %v5423 = vsel %vm636, %v5420, %v5422
        %v5424 = vrot.slane %v5312, 1
        %v5425 = vrot.slane %v5313, 1
        %v5426 = vsel %vm636, %v5424, %v5425
        %v5427 = vrot.slane %v5314, 1
        %v5428 = vsel %vm636, %v5425, %v5427
        %v5429 = vrot.slane %v5315, 1
        %v5430 = vrot.slane %v5316, 1
        %v5431 = vsel %vm636, %v5429, %v5430
        %v5432 = vrot.slane %v5317, 1
        %v5433 = vsel %vm636, %v5430, %v5432
        %v5434 = vrot.slane %v5318, 1
        %v5435 = vrot.slane %v5319, 1
        %v5436 = vsel %vm636, %v5434, %v5435
        %v5437 = vrot.slane %v5320, 1
        %v5438 = vsel %vm636, %v5435, %v5437
        %v5439 = vrot.slane %v5321, 1
        %v5440 = vrot.slane %v5322, 1
        %v5441 = vsel %vm636, %v5439, %v5440
        %v5442 = vrot.slane %v5323, 1
        %v5443 = vsel %vm636, %v5440, %v5442
        %v5444 = vrot.slane %v5324, 1
        %v5445 = vrot.slane %v5325, 1
        %v5446 = vsel %vm636, %v5444, %v5445
        %v5447 = vrot.slane %v5326, 1
        %v5448 = vsel %vm636, %v5445, %v5447
        %v5449 = vrot.slane %v5327, 1
        %v5450 = vrot.slane %v5328, 1
        %v5451 = vsel %vm636, %v5449, %v5450
        %v5452 = vrot.slane %v5329, 1
        %v5453 = vsel %vm636, %v5450, %v5452
        %v5454 = vrot.slane %v5330, 1
        %v5455 = vrot.slane %v5331, 1
        %v5456 = vsel %vm636, %v5454, %v5455
        %v5457 = vrot.slane %v5332, 1
        %v5458 = vsel %vm636, %v5455, %v5457
        %v5459 = vrot.slane %v5333, 1
        %v5460 = vrot.slane %v5334, 1
        %v5461 = vsel %vm636, %v5459, %v5460
        %v5462 = vrot.slane %v5335, 1
        %v5463 = vsel %vm636, %v5460, %v5462
        %v5496 = vadd.f32 %v5252, %v5386
        %v5497 = vadd.f32 %v5253, %v5388
        %v5498 = vadd.f32 %v5254, %v5391
        %v5499 = vadd.f32 %v5255, %v5393
        %v5500 = vadd.f32 %v5256, %v5396
        %v5501 = vadd.f32 %v5257, %v5398
        %v5502 = vadd.f32 %v5258, %v5401
        %v5503 = vadd.f32 %v5259, %v5403
        %v5504 = vadd.f32 %v5260, %v5406
        %v5505 = vadd.f32 %v5261, %v5408
        %v5506 = vadd.f32 %v5262, %v5411
        %v5507 = vadd.f32 %v5263, %v5413
        %v5508 = vadd.f32 %v5264, %v5416
        %v5509 = vadd.f32 %v5265, %v5418
        %v5510 = vadd.f32 %v5266, %v5421
        %v5511 = vadd.f32 %v5267, %v5423
        %v5512 = vadd.f32 %v5268, %v5426
        %v5513 = vadd.f32 %v5269, %v5428
        %v5514 = vadd.f32 %v5270, %v5431
        %v5515 = vadd.f32 %v5271, %v5433
        %v5516 = vadd.f32 %v5272, %v5436
        %v5517 = vadd.f32 %v5273, %v5438
        %v5518 = vadd.f32 %v5274, %v5441
        %v5519 = vadd.f32 %v5275, %v5443
        %v5520 = vadd.f32 %v5276, %v5446
        %v5521 = vadd.f32 %v5277, %v5448
        %v5522 = vadd.f32 %v5278, %v5451
        %v5523 = vadd.f32 %v5279, %v5453
        %v5524 = vadd.f32 %v5280, %v5456
        %v5525 = vadd.f32 %v5281, %v5458
        %v5526 = vadd.f32 %v5282, %v5461
        %v5527 = vadd.f32 %v5283, %v5463
        %v5528 = vlaneseq
        %v5529 = vshrl.u32 %v5528, 7
        %v5530 = vsub.s32 2, %v5529
        %v5531 = vrot.slane %v409, %v5530
        %v5532 = vmul.f32 %v5168, %v5531
        %v5533 = vmul.f32 %v5169, %v5531
        %v5534 = vmul.f32 %v5170, %v5531
        %v5535 = vmul.f32 %v5171, %v5531
        %v5536 = vmul.f32 %v5172, %v5531
        %v5537 = vmul.f32 %v5173, %v5531
        %v5538 = vmul.f32 %v5174, %v5531
        %v5539 = vmul.f32 %v5175, %v5531
        %v5540 = vmul.f32 %v5176, %v5531
        %v5541 = vmul.f32 %v5177, %v5531
        %v5542 = vmul.f32 %v5178, %v5531
        %v5543 = vmul.f32 %v5179, %v5531
        %v5544 = vmul.f32 %v5180, %v5531
        %v5545 = vmul.f32 %v5181, %v5531
        %v5546 = vmul.f32 %v5182, %v5531
        %v5547 = vmul.f32 %v5183, %v5531
        %v5548 = vmul.f32 %v5184, %v5531
        %v5549 = vmul.f32 %v5185, %v5531
        %v5550 = vmul.f32 %v5186, %v5531
        %v5551 = vmul.f32 %v5187, %v5531
        %v5552 = vmul.f32 %v5188, %v5531
        %v5553 = vmul.f32 %v5189, %v5531
        %v5554 = vmul.f32 %v5190, %v5531
        %v5555 = vmul.f32 %v5191, %v5531
        %v5556 = vmul.f32 %v5192, %v5531
        %v5557 = vmul.f32 %v5193, %v5531
        %v5558 = vmul.f32 %v5194, %v5531
        %v5559 = vmul.f32 %v5195, %v5531
        %v5560 = vmul.f32 %v5196, %v5531
        %v5561 = vmul.f32 %v5197, %v5531
        %v5562 = vmul.f32 %v5198, %v5531
        %v5563 = vmul.f32 %v5199, %v5531
        %v5564 = vmul.f32 %v5200, %v5531
        %v5565 = vmul.f32 %v5201, %v5531
        %v5566 = vmul.f32 %v5202, %v5531
        %v5567 = vmul.f32 %v5203, %v5531
        %v5568 = vmul.f32 %v5204, %v5531
        %v5569 = vmul.f32 %v5205, %v5531
        %v5570 = vmul.f32 %v5206, %v5531
        %v5571 = vmul.f32 %v5207, %v5531
        %v5572 = vmul.f32 %v5208, %v5531
        %v5573 = vmul.f32 %v5209, %v5531
        %v5574 = vmul.f32 %v5210, %v5531
        %v5575 = vmul.f32 %v5211, %v5531
        %v5576 = vmul.f32 %v5212, %v5531
        %v5577 = vmul.f32 %v5213, %v5531
        %v5578 = vmul.f32 %v5214, %v5531
        %v5579 = vmul.f32 %v5215, %v5531
        %v5628 = vrot.slane %v5532, 2
        %v5629 = vrot.slane %v5533, 2
        %v5630 = vsel %vm881, %v5628, %v5629
        %v5631 = vrot.slane %v5534, 2
        %v5632 = vsel %vm881, %v5629, %v5631
        %v5633 = vrot.slane %v5535, 2
        %v5634 = vrot.slane %v5536, 2
        %v5635 = vsel %vm881, %v5633, %v5634
        %v5636 = vrot.slane %v5537, 2
        %v5637 = vsel %vm881, %v5634, %v5636
        %v5638 = vrot.slane %v5538, 2
        %v5639 = vrot.slane %v5539, 2
        %v5640 = vsel %vm881, %v5638, %v5639
        %v5641 = vrot.slane %v5540, 2
        %v5642 = vsel %vm881, %v5639, %v5641
        %v5643 = vrot.slane %v5541, 2
        %v5644 = vrot.slane %v5542, 2
        %v5645 = vsel %vm881, %v5643, %v5644
        %v5646 = vrot.slane %v5543, 2
        %v5647 = vsel %vm881, %v5644, %v5646
        %v5648 = vrot.slane %v5544, 2
        %v5649 = vrot.slane %v5545, 2
        %v5650 = vsel %vm881, %v5648, %v5649
        %v5651 = vrot.slane %v5546, 2
        %v5652 = vsel %vm881, %v5649, %v5651
        %v5653 = vrot.slane %v5547, 2
        %v5654 = vrot.slane %v5548, 2
        %v5655 = vsel %vm881, %v5653, %v5654
        %v5656 = vrot.slane %v5549, 2
        %v5657 = vsel %vm881, %v5654, %v5656
        %v5658 = vrot.slane %v5550, 2
        %v5659 = vrot.slane %v5551, 2
        %v5660 = vsel %vm881, %v5658, %v5659
        %v5661 = vrot.slane %v5552, 2
        %v5662 = vsel %vm881, %v5659, %v5661
        %v5663 = vrot.slane %v5553, 2
        %v5664 = vrot.slane %v5554, 2
        %v5665 = vsel %vm881, %v5663, %v5664
        %v5666 = vrot.slane %v5555, 2
        %v5667 = vsel %vm881, %v5664, %v5666
        %v5668 = vrot.slane %v5556, 2
        %v5669 = vrot.slane %v5557, 2
        %v5670 = vsel %vm881, %v5668, %v5669
        %v5671 = vrot.slane %v5558, 2
        %v5672 = vsel %vm881, %v5669, %v5671
        %v5673 = vrot.slane %v5559, 2
        %v5674 = vrot.slane %v5560, 2
        %v5675 = vsel %vm881, %v5673, %v5674
        %v5676 = vrot.slane %v5561, 2
        %v5677 = vsel %vm881, %v5674, %v5676
        %v5678 = vrot.slane %v5562, 2
        %v5679 = vrot.slane %v5563, 2
        %v5680 = vsel %vm881, %v5678, %v5679
        %v5681 = vrot.slane %v5564, 2
        %v5682 = vsel %vm881, %v5679, %v5681
        %v5683 = vrot.slane %v5565, 2
        %v5684 = vrot.slane %v5566, 2
        %v5685 = vsel %vm881, %v5683, %v5684
        %v5686 = vrot.slane %v5567, 2
        %v5687 = vsel %vm881, %v5684, %v5686
        %v5688 = vrot.slane %v5568, 2
        %v5689 = vrot.slane %v5569, 2
        %v5690 = vsel %vm881, %v5688, %v5689
        %v5691 = vrot.slane %v5570, 2
        %v5692 = vsel %vm881, %v5689, %v5691
        %v5693 = vrot.slane %v5571, 2
        %v5694 = vrot.slane %v5572, 2
        %v5695 = vsel %vm881, %v5693, %v5694
        %v5696 = vrot.slane %v5573, 2
        %v5697 = vsel %vm881, %v5694, %v5696
        %v5698 = vrot.slane %v5574, 2
        %v5699 = vrot.slane %v5575, 2
        %v5700 = vsel %vm881, %v5698, %v5699
        %v5701 = vrot.slane %v5576, 2
        %v5702 = vsel %vm881, %v5699, %v5701
        %v5703 = vrot.slane %v5577, 2
        %v5704 = vrot.slane %v5578, 2
        %v5705 = vsel %vm881, %v5703, %v5704
        %v5706 = vrot.slane %v5579, 2
        %v5707 = vsel %vm881, %v5704, %v5706
        %v5740 = vadd.f32 %v5496, %v5630
        %v5741 = vadd.f32 %v5497, %v5632
        %v5742 = vadd.f32 %v5498, %v5635
        %v5743 = vadd.f32 %v5499, %v5637
        %v5744 = vadd.f32 %v5500, %v5640
        %v5745 = vadd.f32 %v5501, %v5642
        %v5746 = vadd.f32 %v5502, %v5645
        %v5747 = vadd.f32 %v5503, %v5647
        %v5748 = vadd.f32 %v5504, %v5650
        %v5749 = vadd.f32 %v5505, %v5652
        %v5750 = vadd.f32 %v5506, %v5655
        %v5751 = vadd.f32 %v5507, %v5657
        %v5752 = vadd.f32 %v5508, %v5660
        %v5753 = vadd.f32 %v5509, %v5662
        %v5754 = vadd.f32 %v5510, %v5665
        %v5755 = vadd.f32 %v5511, %v5667
        %v5756 = vadd.f32 %v5512, %v5670
        %v5757 = vadd.f32 %v5513, %v5672
        %v5758 = vadd.f32 %v5514, %v5675
        %v5759 = vadd.f32 %v5515, %v5677
        %v5760 = vadd.f32 %v5516, %v5680
        %v5761 = vadd.f32 %v5517, %v5682
        %v5762 = vadd.f32 %v5518, %v5685
        %v5763 = vadd.f32 %v5519, %v5687
        %v5764 = vadd.f32 %v5520, %v5690
        %v5765 = vadd.f32 %v5521, %v5692
        %v5766 = vadd.f32 %v5522, %v5695
        %v5767 = vadd.f32 %v5523, %v5697
        %v5768 = vadd.f32 %v5524, %v5700
        %v5769 = vadd.f32 %v5525, %v5702
        %v5770 = vadd.f32 %v5526, %v5705
        %v5771 = vadd.f32 %v5527, %v5707
        %v5772 = vlaneseq
        %v5773 = vshrl.u32 %v5772, 7
        %v5774 = vsub.s32 3, %v5773
        %v5775 = vrot.slane %v409, %v5774
        %v5776 = vmul.f32 %v5168, %v5775
        %v5777 = vmul.f32 %v5169, %v5775
        %v5778 = vmul.f32 %v5170, %v5775
        %v5779 = vmul.f32 %v5171, %v5775
        %v5780 = vmul.f32 %v5172, %v5775
        %v5781 = vmul.f32 %v5173, %v5775
        %v5782 = vmul.f32 %v5174, %v5775
        %v5783 = vmul.f32 %v5175, %v5775
        %v5784 = vmul.f32 %v5176, %v5775
        %v5785 = vmul.f32 %v5177, %v5775
        %v5786 = vmul.f32 %v5178, %v5775
        %v5787 = vmul.f32 %v5179, %v5775
        %v5788 = vmul.f32 %v5180, %v5775
        %v5789 = vmul.f32 %v5181, %v5775
        %v5790 = vmul.f32 %v5182, %v5775
        %v5791 = vmul.f32 %v5183, %v5775
        %v5792 = vmul.f32 %v5184, %v5775
        %v5793 = vmul.f32 %v5185, %v5775
        %v5794 = vmul.f32 %v5186, %v5775
        %v5795 = vmul.f32 %v5187, %v5775
        %v5796 = vmul.f32 %v5188, %v5775
        %v5797 = vmul.f32 %v5189, %v5775
        %v5798 = vmul.f32 %v5190, %v5775
        %v5799 = vmul.f32 %v5191, %v5775
        %v5800 = vmul.f32 %v5192, %v5775
        %v5801 = vmul.f32 %v5193, %v5775
        %v5802 = vmul.f32 %v5194, %v5775
        %v5803 = vmul.f32 %v5195, %v5775
        %v5804 = vmul.f32 %v5196, %v5775
        %v5805 = vmul.f32 %v5197, %v5775
        %v5806 = vmul.f32 %v5198, %v5775
        %v5807 = vmul.f32 %v5199, %v5775
        %v5808 = vmul.f32 %v5200, %v5775
        %v5809 = vmul.f32 %v5201, %v5775
        %v5810 = vmul.f32 %v5202, %v5775
        %v5811 = vmul.f32 %v5203, %v5775
        %v5812 = vmul.f32 %v5204, %v5775
        %v5813 = vmul.f32 %v5205, %v5775
        %v5814 = vmul.f32 %v5206, %v5775
        %v5815 = vmul.f32 %v5207, %v5775
        %v5816 = vmul.f32 %v5208, %v5775
        %v5817 = vmul.f32 %v5209, %v5775
        %v5818 = vmul.f32 %v5210, %v5775
        %v5819 = vmul.f32 %v5211, %v5775
        %v5820 = vmul.f32 %v5212, %v5775
        %v5821 = vmul.f32 %v5213, %v5775
        %v5822 = vmul.f32 %v5214, %v5775
        %v5823 = vmul.f32 %v5215, %v5775
        %v5872 = vrot.slane %v5776, 3
        %v5873 = vrot.slane %v5777, 3
        %v5874 = vsel %vm1126, %v5872, %v5873
        %v5875 = vrot.slane %v5778, 3
        %v5876 = vsel %vm1126, %v5873, %v5875
        %v5877 = vrot.slane %v5779, 3
        %v5878 = vrot.slane %v5780, 3
        %v5879 = vsel %vm1126, %v5877, %v5878
        %v5880 = vrot.slane %v5781, 3
        %v5881 = vsel %vm1126, %v5878, %v5880
        %v5882 = vrot.slane %v5782, 3
        %v5883 = vrot.slane %v5783, 3
        %v5884 = vsel %vm1126, %v5882, %v5883
        %v5885 = vrot.slane %v5784, 3
        %v5886 = vsel %vm1126, %v5883, %v5885
        %v5887 = vrot.slane %v5785, 3
        %v5888 = vrot.slane %v5786, 3
        %v5889 = vsel %vm1126, %v5887, %v5888
        %v5890 = vrot.slane %v5787, 3
        %v5891 = vsel %vm1126, %v5888, %v5890
        %v5892 = vrot.slane %v5788, 3
        %v5893 = vrot.slane %v5789, 3
        %v5894 = vsel %vm1126, %v5892, %v5893
        %v5895 = vrot.slane %v5790, 3
        %v5896 = vsel %vm1126, %v5893, %v5895
        %v5897 = vrot.slane %v5791, 3
        %v5898 = vrot.slane %v5792, 3
        %v5899 = vsel %vm1126, %v5897, %v5898
        %v5900 = vrot.slane %v5793, 3
        %v5901 = vsel %vm1126, %v5898, %v5900
        %v5902 = vrot.slane %v5794, 3
        %v5903 = vrot.slane %v5795, 3
        %v5904 = vsel %vm1126, %v5902, %v5903
        %v5905 = vrot.slane %v5796, 3
        %v5906 = vsel %vm1126, %v5903, %v5905
        %v5907 = vrot.slane %v5797, 3
        %v5908 = vrot.slane %v5798, 3
        %v5909 = vsel %vm1126, %v5907, %v5908
        %v5910 = vrot.slane %v5799, 3
        %v5911 = vsel %vm1126, %v5908, %v5910
        %v5912 = vrot.slane %v5800, 3
        %v5913 = vrot.slane %v5801, 3
        %v5914 = vsel %vm1126, %v5912, %v5913
        %v5915 = vrot.slane %v5802, 3
        %v5916 = vsel %vm1126, %v5913, %v5915
        %v5917 = vrot.slane %v5803, 3
        %v5918 = vrot.slane %v5804, 3
        %v5919 = vsel %vm1126, %v5917, %v5918
        %v5920 = vrot.slane %v5805, 3
        %v5921 = vsel %vm1126, %v5918, %v5920
        %v5922 = vrot.slane %v5806, 3
        %v5923 = vrot.slane %v5807, 3
        %v5924 = vsel %vm1126, %v5922, %v5923
        %v5925 = vrot.slane %v5808, 3
        %v5926 = vsel %vm1126, %v5923, %v5925
        %v5927 = vrot.slane %v5809, 3
        %v5928 = vrot.slane %v5810, 3
        %v5929 = vsel %vm1126, %v5927, %v5928
        %v5930 = vrot.slane %v5811, 3
        %v5931 = vsel %vm1126, %v5928, %v5930
        %v5932 = vrot.slane %v5812, 3
        %v5933 = vrot.slane %v5813, 3
        %v5934 = vsel %vm1126, %v5932, %v5933
        %v5935 = vrot.slane %v5814, 3
        %v5936 = vsel %vm1126, %v5933, %v5935
        %v5937 = vrot.slane %v5815, 3
        %v5938 = vrot.slane %v5816, 3
        %v5939 = vsel %vm1126, %v5937, %v5938
        %v5940 = vrot.slane %v5817, 3
        %v5941 = vsel %vm1126, %v5938, %v5940
        %v5942 = vrot.slane %v5818, 3
        %v5943 = vrot.slane %v5819, 3
        %v5944 = vsel %vm1126, %v5942, %v5943
        %v5945 = vrot.slane %v5820, 3
        %v5946 = vsel %vm1126, %v5943, %v5945
        %v5947 = vrot.slane %v5821, 3
        %v5948 = vrot.slane %v5822, 3
        %v5949 = vsel %vm1126, %v5947, %v5948
        %v5950 = vrot.slane %v5823, 3
        %v5951 = vsel %vm1126, %v5948, %v5950
        %v5984 = vadd.f32 %v5740, %v5874
        %v5985 = vadd.f32 %v5741, %v5876
        %v5986 = vadd.f32 %v5742, %v5879
        %v5987 = vadd.f32 %v5743, %v5881
        %v5988 = vadd.f32 %v5744, %v5884
        %v5989 = vadd.f32 %v5745, %v5886
        %v5990 = vadd.f32 %v5746, %v5889
        %v5991 = vadd.f32 %v5747, %v5891
        %v5992 = vadd.f32 %v5748, %v5894
        %v5993 = vadd.f32 %v5749, %v5896
        %v5994 = vadd.f32 %v5750, %v5899
        %v5995 = vadd.f32 %v5751, %v5901
        %v5996 = vadd.f32 %v5752, %v5904
        %v5997 = vadd.f32 %v5753, %v5906
        %v5998 = vadd.f32 %v5754, %v5909
        %v5999 = vadd.f32 %v5755, %v5911
        %v6000 = vadd.f32 %v5756, %v5914
        %v6001 = vadd.f32 %v5757, %v5916
        %v6002 = vadd.f32 %v5758, %v5919
        %v6003 = vadd.f32 %v5759, %v5921
        %v6004 = vadd.f32 %v5760, %v5924
        %v6005 = vadd.f32 %v5761, %v5926
        %v6006 = vadd.f32 %v5762, %v5929
        %v6007 = vadd.f32 %v5763, %v5931
        %v6008 = vadd.f32 %v5764, %v5934
        %v6009 = vadd.f32 %v5765, %v5936
        %v6010 = vadd.f32 %v5766, %v5939
        %v6011 = vadd.f32 %v5767, %v5941
        %v6012 = vadd.f32 %v5768, %v5944
        %v6013 = vadd.f32 %v5769, %v5946
        %v6014 = vadd.f32 %v5770, %v5949
        %v6015 = vadd.f32 %v5771, %v5951
        %v6016 = vlaneseq
        %v6017 = vshrl.u32 %v6016, 7
        %v6018 = vsub.s32 4, %v6017
        %v6019 = vrot.slane %v409, %v6018
        %v6020 = vmul.f32 %v5168, %v6019
        %v6021 = vmul.f32 %v5169, %v6019
        %v6022 = vmul.f32 %v5170, %v6019
        %v6023 = vmul.f32 %v5171, %v6019
        %v6024 = vmul.f32 %v5172, %v6019
        %v6025 = vmul.f32 %v5173, %v6019
        %v6026 = vmul.f32 %v5174, %v6019
        %v6027 = vmul.f32 %v5175, %v6019
        %v6028 = vmul.f32 %v5176, %v6019
        %v6029 = vmul.f32 %v5177, %v6019
        %v6030 = vmul.f32 %v5178, %v6019
        %v6031 = vmul.f32 %v5179, %v6019
        %v6032 = vmul.f32 %v5180, %v6019
        %v6033 = vmul.f32 %v5181, %v6019
        %v6034 = vmul.f32 %v5182, %v6019
        %v6035 = vmul.f32 %v5183, %v6019
        %v6036 = vmul.f32 %v5184, %v6019
        %v6037 = vmul.f32 %v5185, %v6019
        %v6038 = vmul.f32 %v5186, %v6019
        %v6039 = vmul.f32 %v5187, %v6019
        %v6040 = vmul.f32 %v5188, %v6019
        %v6041 = vmul.f32 %v5189, %v6019
        %v6042 = vmul.f32 %v5190, %v6019
        %v6043 = vmul.f32 %v5191, %v6019
        %v6044 = vmul.f32 %v5192, %v6019
        %v6045 = vmul.f32 %v5193, %v6019
        %v6046 = vmul.f32 %v5194, %v6019
        %v6047 = vmul.f32 %v5195, %v6019
        %v6048 = vmul.f32 %v5196, %v6019
        %v6049 = vmul.f32 %v5197, %v6019
        %v6050 = vmul.f32 %v5198, %v6019
        %v6051 = vmul.f32 %v5199, %v6019
        %v6052 = vmul.f32 %v5200, %v6019
        %v6053 = vmul.f32 %v5201, %v6019
        %v6054 = vmul.f32 %v5202, %v6019
        %v6055 = vmul.f32 %v5203, %v6019
        %v6056 = vmul.f32 %v5204, %v6019
        %v6057 = vmul.f32 %v5205, %v6019
        %v6058 = vmul.f32 %v5206, %v6019
        %v6059 = vmul.f32 %v5207, %v6019
        %v6060 = vmul.f32 %v5208, %v6019
        %v6061 = vmul.f32 %v5209, %v6019
        %v6062 = vmul.f32 %v5210, %v6019
        %v6063 = vmul.f32 %v5211, %v6019
        %v6064 = vmul.f32 %v5212, %v6019
        %v6065 = vmul.f32 %v5213, %v6019
        %v6066 = vmul.f32 %v5214, %v6019
        %v6067 = vmul.f32 %v5215, %v6019
        %v6116 = vrot.slane %v6020, 4
        %v6117 = vrot.slane %v6021, 4
        %v6118 = vsel %vm1371, %v6116, %v6117
        %v6119 = vrot.slane %v6022, 4
        %v6120 = vsel %vm1371, %v6117, %v6119
        %v6121 = vrot.slane %v6023, 4
        %v6122 = vrot.slane %v6024, 4
        %v6123 = vsel %vm1371, %v6121, %v6122
        %v6124 = vrot.slane %v6025, 4
        %v6125 = vsel %vm1371, %v6122, %v6124
        %v6126 = vrot.slane %v6026, 4
        %v6127 = vrot.slane %v6027, 4
        %v6128 = vsel %vm1371, %v6126, %v6127
        %v6129 = vrot.slane %v6028, 4
        %v6130 = vsel %vm1371, %v6127, %v6129
        %v6131 = vrot.slane %v6029, 4
        %v6132 = vrot.slane %v6030, 4
        %v6133 = vsel %vm1371, %v6131, %v6132
        %v6134 = vrot.slane %v6031, 4
        %v6135 = vsel %vm1371, %v6132, %v6134
        %v6136 = vrot.slane %v6032, 4
        %v6137 = vrot.slane %v6033, 4
        %v6138 = vsel %vm1371, %v6136, %v6137
        %v6139 = vrot.slane %v6034, 4
        %v6140 = vsel %vm1371, %v6137, %v6139
        %v6141 = vrot.slane %v6035, 4
        %v6142 = vrot.slane %v6036, 4
        %v6143 = vsel %vm1371, %v6141, %v6142
        %v6144 = vrot.slane %v6037, 4
        %v6145 = vsel %vm1371, %v6142, %v6144
        %v6146 = vrot.slane %v6038, 4
        %v6147 = vrot.slane %v6039, 4
        %v6148 = vsel %vm1371, %v6146, %v6147
        %v6149 = vrot.slane %v6040, 4
        %v6150 = vsel %vm1371, %v6147, %v6149
        %v6151 = vrot.slane %v6041, 4
        %v6152 = vrot.slane %v6042, 4
        %v6153 = vsel %vm1371, %v6151, %v6152
        %v6154 = vrot.slane %v6043, 4
        %v6155 = vsel %vm1371, %v6152, %v6154
        %v6156 = vrot.slane %v6044, 4
        %v6157 = vrot.slane %v6045, 4
        %v6158 = vsel %vm1371, %v6156, %v6157
        %v6159 = vrot.slane %v6046, 4
        %v6160 = vsel %vm1371, %v6157, %v6159
        %v6161 = vrot.slane %v6047, 4
        %v6162 = vrot.slane %v6048, 4
        %v6163 = vsel %vm1371, %v6161, %v6162
        %v6164 = vrot.slane %v6049, 4
        %v6165 = vsel %vm1371, %v6162, %v6164
        %v6166 = vrot.slane %v6050, 4
        %v6167 = vrot.slane %v6051, 4
        %v6168 = vsel %vm1371, %v6166, %v6167
        %v6169 = vrot.slane %v6052, 4
        %v6170 = vsel %vm1371, %v6167, %v6169
        %v6171 = vrot.slane %v6053, 4
        %v6172 = vrot.slane %v6054, 4
        %v6173 = vsel %vm1371, %v6171, %v6172
        %v6174 = vrot.slane %v6055, 4
        %v6175 = vsel %vm1371, %v6172, %v6174
        %v6176 = vrot.slane %v6056, 4
        %v6177 = vrot.slane %v6057, 4
        %v6178 = vsel %vm1371, %v6176, %v6177
        %v6179 = vrot.slane %v6058, 4
        %v6180 = vsel %vm1371, %v6177, %v6179
        %v6181 = vrot.slane %v6059, 4
        %v6182 = vrot.slane %v6060, 4
        %v6183 = vsel %vm1371, %v6181, %v6182
        %v6184 = vrot.slane %v6061, 4
        %v6185 = vsel %vm1371, %v6182, %v6184
        %v6186 = vrot.slane %v6062, 4
        %v6187 = vrot.slane %v6063, 4
        %v6188 = vsel %vm1371, %v6186, %v6187
        %v6189 = vrot.slane %v6064, 4
        %v6190 = vsel %vm1371, %v6187, %v6189
        %v6191 = vrot.slane %v6065, 4
        %v6192 = vrot.slane %v6066, 4
        %v6193 = vsel %vm1371, %v6191, %v6192
        %v6194 = vrot.slane %v6067, 4
        %v6195 = vsel %vm1371, %v6192, %v6194
        %v6228 = vadd.f32 %v5984, %v6118
        %v6229 = vadd.f32 %v5985, %v6120
        %v6230 = vadd.f32 %v5986, %v6123
        %v6231 = vadd.f32 %v5987, %v6125
        %v6232 = vadd.f32 %v5988, %v6128
        %v6233 = vadd.f32 %v5989, %v6130
        %v6234 = vadd.f32 %v5990, %v6133
        %v6235 = vadd.f32 %v5991, %v6135
        %v6236 = vadd.f32 %v5992, %v6138
        %v6237 = vadd.f32 %v5993, %v6140
        %v6238 = vadd.f32 %v5994, %v6143
        %v6239 = vadd.f32 %v5995, %v6145
        %v6240 = vadd.f32 %v5996, %v6148
        %v6241 = vadd.f32 %v5997, %v6150
        %v6242 = vadd.f32 %v5998, %v6153
        %v6243 = vadd.f32 %v5999, %v6155
        %v6244 = vadd.f32 %v6000, %v6158
        %v6245 = vadd.f32 %v6001, %v6160
        %v6246 = vadd.f32 %v6002, %v6163
        %v6247 = vadd.f32 %v6003, %v6165
        %v6248 = vadd.f32 %v6004, %v6168
        %v6249 = vadd.f32 %v6005, %v6170
        %v6250 = vadd.f32 %v6006, %v6173
        %v6251 = vadd.f32 %v6007, %v6175
        %v6252 = vadd.f32 %v6008, %v6178
        %v6253 = vadd.f32 %v6009, %v6180
        %v6254 = vadd.f32 %v6010, %v6183
        %v6255 = vadd.f32 %v6011, %v6185
        %v6256 = vadd.f32 %v6012, %v6188
        %v6257 = vadd.f32 %v6013, %v6190
        %v6258 = vadd.f32 %v6014, %v6193
        %v6259 = vadd.f32 %v6015, %v6195
        %v6260 = vlaneseq
        %v6261 = vshrl.u32 %v6260, 7
        %v6262 = vsub.s32 5, %v6261
        %v6263 = vrot.slane %v409, %v6262
        %v6264 = vmul.f32 %v5168, %v6263
        %v6265 = vmul.f32 %v5169, %v6263
        %v6266 = vmul.f32 %v5170, %v6263
        %v6267 = vmul.f32 %v5171, %v6263
        %v6268 = vmul.f32 %v5172, %v6263
        %v6269 = vmul.f32 %v5173, %v6263
        %v6270 = vmul.f32 %v5174, %v6263
        %v6271 = vmul.f32 %v5175, %v6263
        %v6272 = vmul.f32 %v5176, %v6263
        %v6273 = vmul.f32 %v5177, %v6263
        %v6274 = vmul.f32 %v5178, %v6263
        %v6275 = vmul.f32 %v5179, %v6263
        %v6276 = vmul.f32 %v5180, %v6263
        %v6277 = vmul.f32 %v5181, %v6263
        %v6278 = vmul.f32 %v5182, %v6263
        %v6279 = vmul.f32 %v5183, %v6263
        %v6280 = vmul.f32 %v5184, %v6263
        %v6281 = vmul.f32 %v5185, %v6263
        %v6282 = vmul.f32 %v5186, %v6263
        %v6283 = vmul.f32 %v5187, %v6263
        %v6284 = vmul.f32 %v5188, %v6263
        %v6285 = vmul.f32 %v5189, %v6263
        %v6286 = vmul.f32 %v5190, %v6263
        %v6287 = vmul.f32 %v5191, %v6263
        %v6288 = vmul.f32 %v5192, %v6263
        %v6289 = vmul.f32 %v5193, %v6263
        %v6290 = vmul.f32 %v5194, %v6263
        %v6291 = vmul.f32 %v5195, %v6263
        %v6292 = vmul.f32 %v5196, %v6263
        %v6293 = vmul.f32 %v5197, %v6263
        %v6294 = vmul.f32 %v5198, %v6263
        %v6295 = vmul.f32 %v5199, %v6263
        %v6296 = vmul.f32 %v5200, %v6263
        %v6297 = vmul.f32 %v5201, %v6263
        %v6298 = vmul.f32 %v5202, %v6263
        %v6299 = vmul.f32 %v5203, %v6263
        %v6300 = vmul.f32 %v5204, %v6263
        %v6301 = vmul.f32 %v5205, %v6263
        %v6302 = vmul.f32 %v5206, %v6263
        %v6303 = vmul.f32 %v5207, %v6263
        %v6304 = vmul.f32 %v5208, %v6263
        %v6305 = vmul.f32 %v5209, %v6263
        %v6306 = vmul.f32 %v5210, %v6263
        %v6307 = vmul.f32 %v5211, %v6263
        %v6308 = vmul.f32 %v5212, %v6263
        %v6309 = vmul.f32 %v5213, %v6263
        %v6310 = vmul.f32 %v5214, %v6263
        %v6311 = vmul.f32 %v5215, %v6263
        %v6360 = vrot.slane %v6264, 5
        %v6361 = vrot.slane %v6265, 5
        %v6362 = vsel %vm1616, %v6360, %v6361
        %v6363 = vrot.slane %v6266, 5
        %v6364 = vsel %vm1616, %v6361, %v6363
        %v6365 = vrot.slane %v6267, 5
        %v6366 = vrot.slane %v6268, 5
        %v6367 = vsel %vm1616, %v6365, %v6366
        %v6368 = vrot.slane %v6269, 5
        %v6369 = vsel %vm1616, %v6366, %v6368
        %v6370 = vrot.slane %v6270, 5
        %v6371 = vrot.slane %v6271, 5
        %v6372 = vsel %vm1616, %v6370, %v6371
        %v6373 = vrot.slane %v6272, 5
        %v6374 = vsel %vm1616, %v6371, %v6373
        %v6375 = vrot.slane %v6273, 5
        %v6376 = vrot.slane %v6274, 5
        %v6377 = vsel %vm1616, %v6375, %v6376
        %v6378 = vrot.slane %v6275, 5
        %v6379 = vsel %vm1616, %v6376, %v6378
        %v6380 = vrot.slane %v6276, 5
        %v6381 = vrot.slane %v6277, 5
        %v6382 = vsel %vm1616, %v6380, %v6381
        %v6383 = vrot.slane %v6278, 5
        %v6384 = vsel %vm1616, %v6381, %v6383
        %v6385 = vrot.slane %v6279, 5
        %v6386 = vrot.slane %v6280, 5
        %v6387 = vsel %vm1616, %v6385, %v6386
        %v6388 = vrot.slane %v6281, 5
        %v6389 = vsel %vm1616, %v6386, %v6388
        %v6390 = vrot.slane %v6282, 5
        %v6391 = vrot.slane %v6283, 5
        %v6392 = vsel %vm1616, %v6390, %v6391
        %v6393 = vrot.slane %v6284, 5
        %v6394 = vsel %vm1616, %v6391, %v6393
        %v6395 = vrot.slane %v6285, 5
        %v6396 = vrot.slane %v6286, 5
        %v6397 = vsel %vm1616, %v6395, %v6396
        %v6398 = vrot.slane %v6287, 5
        %v6399 = vsel %vm1616, %v6396, %v6398
        %v6400 = vrot.slane %v6288, 5
        %v6401 = vrot.slane %v6289, 5
        %v6402 = vsel %vm1616, %v6400, %v6401
        %v6403 = vrot.slane %v6290, 5
        %v6404 = vsel %vm1616, %v6401, %v6403
        %v6405 = vrot.slane %v6291, 5
        %v6406 = vrot.slane %v6292, 5
        %v6407 = vsel %vm1616, %v6405, %v6406
        %v6408 = vrot.slane %v6293, 5
        %v6409 = vsel %vm1616, %v6406, %v6408
        %v6410 = vrot.slane %v6294, 5
        %v6411 = vrot.slane %v6295, 5
        %v6412 = vsel %vm1616, %v6410, %v6411
        %v6413 = vrot.slane %v6296, 5
        %v6414 = vsel %vm1616, %v6411, %v6413
        %v6415 = vrot.slane %v6297, 5
        %v6416 = vrot.slane %v6298, 5
        %v6417 = vsel %vm1616, %v6415, %v6416
        %v6418 = vrot.slane %v6299, 5
        %v6419 = vsel %vm1616, %v6416, %v6418
        %v6420 = vrot.slane %v6300, 5
        %v6421 = vrot.slane %v6301, 5
        %v6422 = vsel %vm1616, %v6420, %v6421
        %v6423 = vrot.slane %v6302, 5
        %v6424 = vsel %vm1616, %v6421, %v6423
        %v6425 = vrot.slane %v6303, 5
        %v6426 = vrot.slane %v6304, 5
        %v6427 = vsel %vm1616, %v6425, %v6426
        %v6428 = vrot.slane %v6305, 5
        %v6429 = vsel %vm1616, %v6426, %v6428
        %v6430 = vrot.slane %v6306, 5
        %v6431 = vrot.slane %v6307, 5
        %v6432 = vsel %vm1616, %v6430, %v6431
        %v6433 = vrot.slane %v6308, 5
        %v6434 = vsel %vm1616, %v6431, %v6433
        %v6435 = vrot.slane %v6309, 5
        %v6436 = vrot.slane %v6310, 5
        %v6437 = vsel %vm1616, %v6435, %v6436
        %v6438 = vrot.slane %v6311, 5
        %v6439 = vsel %vm1616, %v6436, %v6438
        %v6472 = vadd.f32 %v6228, %v6362
        %v6473 = vadd.f32 %v6229, %v6364
        %v6474 = vadd.f32 %v6230, %v6367
        %v6475 = vadd.f32 %v6231, %v6369
        %v6476 = vadd.f32 %v6232, %v6372
        %v6477 = vadd.f32 %v6233, %v6374
        %v6478 = vadd.f32 %v6234, %v6377
        %v6479 = vadd.f32 %v6235, %v6379
        %v6480 = vadd.f32 %v6236, %v6382
        %v6481 = vadd.f32 %v6237, %v6384
        %v6482 = vadd.f32 %v6238, %v6387
        %v6483 = vadd.f32 %v6239, %v6389
        %v6484 = vadd.f32 %v6240, %v6392
        %v6485 = vadd.f32 %v6241, %v6394
        %v6486 = vadd.f32 %v6242, %v6397
        %v6487 = vadd.f32 %v6243, %v6399
        %v6488 = vadd.f32 %v6244, %v6402
        %v6489 = vadd.f32 %v6245, %v6404
        %v6490 = vadd.f32 %v6246, %v6407
        %v6491 = vadd.f32 %v6247, %v6409
        %v6492 = vadd.f32 %v6248, %v6412
        %v6493 = vadd.f32 %v6249, %v6414
        %v6494 = vadd.f32 %v6250, %v6417
        %v6495 = vadd.f32 %v6251, %v6419
        %v6496 = vadd.f32 %v6252, %v6422
        %v6497 = vadd.f32 %v6253, %v6424
        %v6498 = vadd.f32 %v6254, %v6427
        %v6499 = vadd.f32 %v6255, %v6429
        %v6500 = vadd.f32 %v6256, %v6432
        %v6501 = vadd.f32 %v6257, %v6434
        %v6502 = vadd.f32 %v6258, %v6437
        %v6503 = vadd.f32 %v6259, %v6439
        %v6504 = vlaneseq
        %v6505 = vshrl.u32 %v6504, 7
        %v6506 = vsub.s32 6, %v6505
        %v6507 = vrot.slane %v409, %v6506
        %v6508 = vmul.f32 %v5168, %v6507
        %v6509 = vmul.f32 %v5169, %v6507
        %v6510 = vmul.f32 %v5170, %v6507
        %v6511 = vmul.f32 %v5171, %v6507
        %v6512 = vmul.f32 %v5172, %v6507
        %v6513 = vmul.f32 %v5173, %v6507
        %v6514 = vmul.f32 %v5174, %v6507
        %v6515 = vmul.f32 %v5175, %v6507
        %v6516 = vmul.f32 %v5176, %v6507
        %v6517 = vmul.f32 %v5177, %v6507
        %v6518 = vmul.f32 %v5178, %v6507
        %v6519 = vmul.f32 %v5179, %v6507
        %v6520 = vmul.f32 %v5180, %v6507
        %v6521 = vmul.f32 %v5181, %v6507
        %v6522 = vmul.f32 %v5182, %v6507
        %v6523 = vmul.f32 %v5183, %v6507
        %v6524 = vmul.f32 %v5184, %v6507
        %v6525 = vmul.f32 %v5185, %v6507
        %v6526 = vmul.f32 %v5186, %v6507
        %v6527 = vmul.f32 %v5187, %v6507
        %v6528 = vmul.f32 %v5188, %v6507
        %v6529 = vmul.f32 %v5189, %v6507
        %v6530 = vmul.f32 %v5190, %v6507
        %v6531 = vmul.f32 %v5191, %v6507
        %v6532 = vmul.f32 %v5192, %v6507
        %v6533 = vmul.f32 %v5193, %v6507
        %v6534 = vmul.f32 %v5194, %v6507
        %v6535 = vmul.f32 %v5195, %v6507
        %v6536 = vmul.f32 %v5196, %v6507
        %v6537 = vmul.f32 %v5197, %v6507
        %v6538 = vmul.f32 %v5198, %v6507
        %v6539 = vmul.f32 %v5199, %v6507
        %v6540 = vmul.f32 %v5200, %v6507
        %v6541 = vmul.f32 %v5201, %v6507
        %v6542 = vmul.f32 %v5202, %v6507
        %v6543 = vmul.f32 %v5203, %v6507
        %v6544 = vmul.f32 %v5204, %v6507
        %v6545 = vmul.f32 %v5205, %v6507
        %v6546 = vmul.f32 %v5206, %v6507
        %v6547 = vmul.f32 %v5207, %v6507
        %v6548 = vmul.f32 %v5208, %v6507
        %v6549 = vmul.f32 %v5209, %v6507
        %v6550 = vmul.f32 %v5210, %v6507
        %v6551 = vmul.f32 %v5211, %v6507
        %v6552 = vmul.f32 %v5212, %v6507
        %v6553 = vmul.f32 %v5213, %v6507
        %v6554 = vmul.f32 %v5214, %v6507
        %v6555 = vmul.f32 %v5215, %v6507
        %v6604 = vrot.slane %v6508, 6
        %v6605 = vrot.slane %v6509, 6
        %v6606 = vsel %vm1861, %v6604, %v6605
        %v6607 = vrot.slane %v6510, 6
        %v6608 = vsel %vm1861, %v6605, %v6607
        %v6609 = vrot.slane %v6511, 6
        %v6610 = vrot.slane %v6512, 6
        %v6611 = vsel %vm1861, %v6609, %v6610
        %v6612 = vrot.slane %v6513, 6
        %v6613 = vsel %vm1861, %v6610, %v6612
        %v6614 = vrot.slane %v6514, 6
        %v6615 = vrot.slane %v6515, 6
        %v6616 = vsel %vm1861, %v6614, %v6615
        %v6617 = vrot.slane %v6516, 6
        %v6618 = vsel %vm1861, %v6615, %v6617
        %v6619 = vrot.slane %v6517, 6
        %v6620 = vrot.slane %v6518, 6
        %v6621 = vsel %vm1861, %v6619, %v6620
        %v6622 = vrot.slane %v6519, 6
        %v6623 = vsel %vm1861, %v6620, %v6622
        %v6624 = vrot.slane %v6520, 6
        %v6625 = vrot.slane %v6521, 6
        %v6626 = vsel %vm1861, %v6624, %v6625
        %v6627 = vrot.slane %v6522, 6
        %v6628 = vsel %vm1861, %v6625, %v6627
        %v6629 = vrot.slane %v6523, 6
        %v6630 = vrot.slane %v6524, 6
        %v6631 = vsel %vm1861, %v6629, %v6630
        %v6632 = vrot.slane %v6525, 6
        %v6633 = vsel %vm1861, %v6630, %v6632
        %v6634 = vrot.slane %v6526, 6
        %v6635 = vrot.slane %v6527, 6
        %v6636 = vsel %vm1861, %v6634, %v6635
        %v6637 = vrot.slane %v6528, 6
        %v6638 = vsel %vm1861, %v6635, %v6637
        %v6639 = vrot.slane %v6529, 6
        %v6640 = vrot.slane %v6530, 6
        %v6641 = vsel %vm1861, %v6639, %v6640
        %v6642 = vrot.slane %v6531, 6
        %v6643 = vsel %vm1861, %v6640, %v6642
        %v6644 = vrot.slane %v6532, 6
        %v6645 = vrot.slane %v6533, 6
        %v6646 = vsel %vm1861, %v6644, %v6645
        %v6647 = vrot.slane %v6534, 6
        %v6648 = vsel %vm1861, %v6645, %v6647
        %v6649 = vrot.slane %v6535, 6
        %v6650 = vrot.slane %v6536, 6
        %v6651 = vsel %vm1861, %v6649, %v6650
        %v6652 = vrot.slane %v6537, 6
        %v6653 = vsel %vm1861, %v6650, %v6652
        %v6654 = vrot.slane %v6538, 6
        %v6655 = vrot.slane %v6539, 6
        %v6656 = vsel %vm1861, %v6654, %v6655
        %v6657 = vrot.slane %v6540, 6
        %v6658 = vsel %vm1861, %v6655, %v6657
        %v6659 = vrot.slane %v6541, 6
        %v6660 = vrot.slane %v6542, 6
        %v6661 = vsel %vm1861, %v6659, %v6660
        %v6662 = vrot.slane %v6543, 6
        %v6663 = vsel %vm1861, %v6660, %v6662
        %v6664 = vrot.slane %v6544, 6
        %v6665 = vrot.slane %v6545, 6
        %v6666 = vsel %vm1861, %v6664, %v6665
        %v6667 = vrot.slane %v6546, 6
        %v6668 = vsel %vm1861, %v6665, %v6667
        %v6669 = vrot.slane %v6547, 6
        %v6670 = vrot.slane %v6548, 6
        %v6671 = vsel %vm1861, %v6669, %v6670
        %v6672 = vrot.slane %v6549, 6
        %v6673 = vsel %vm1861, %v6670, %v6672
        %v6674 = vrot.slane %v6550, 6
        %v6675 = vrot.slane %v6551, 6
        %v6676 = vsel %vm1861, %v6674, %v6675
        %v6677 = vrot.slane %v6552, 6
        %v6678 = vsel %vm1861, %v6675, %v6677
        %v6679 = vrot.slane %v6553, 6
        %v6680 = vrot.slane %v6554, 6
        %v6681 = vsel %vm1861, %v6679, %v6680
        %v6682 = vrot.slane %v6555, 6
        %v6683 = vsel %vm1861, %v6680, %v6682
        %v6716 = vadd.f32 %v6472, %v6606
        %v6717 = vadd.f32 %v6473, %v6608
        %v6718 = vadd.f32 %v6474, %v6611
        %v6719 = vadd.f32 %v6475, %v6613
        %v6720 = vadd.f32 %v6476, %v6616
        %v6721 = vadd.f32 %v6477, %v6618
        %v6722 = vadd.f32 %v6478, %v6621
        %v6723 = vadd.f32 %v6479, %v6623
        %v6724 = vadd.f32 %v6480, %v6626
        %v6725 = vadd.f32 %v6481, %v6628
        %v6726 = vadd.f32 %v6482, %v6631
        %v6727 = vadd.f32 %v6483, %v6633
        %v6728 = vadd.f32 %v6484, %v6636
        %v6729 = vadd.f32 %v6485, %v6638
        %v6730 = vadd.f32 %v6486, %v6641
        %v6731 = vadd.f32 %v6487, %v6643
        %v6732 = vadd.f32 %v6488, %v6646
        %v6733 = vadd.f32 %v6489, %v6648
        %v6734 = vadd.f32 %v6490, %v6651
        %v6735 = vadd.f32 %v6491, %v6653
        %v6736 = vadd.f32 %v6492, %v6656
        %v6737 = vadd.f32 %v6493, %v6658
        %v6738 = vadd.f32 %v6494, %v6661
        %v6739 = vadd.f32 %v6495, %v6663
        %v6740 = vadd.f32 %v6496, %v6666
        %v6741 = vadd.f32 %v6497, %v6668
        %v6742 = vadd.f32 %v6498, %v6671
        %v6743 = vadd.f32 %v6499, %v6673
        %v6744 = vadd.f32 %v6500, %v6676
        %v6745 = vadd.f32 %v6501, %v6678
        %v6746 = vadd.f32 %v6502, %v6681
        %v6747 = vadd.f32 %v6503, %v6683
        %s6748 = scalar_lea.vmem [#allocation2], 96
        %v6749 = vld [vmem:[%s6748] sm:$0xff]
        %v6750 = vld [vmem:[%s6748 + $0x8] sm:$0xff]
        %v6751 = vld [vmem:[%s6748 + $0x10] sm:$0x3f]
        %v6752 = vld [vmem:[%s6748 + $0x18] sm:$0xff]
        %v6753 = vld [vmem:[%s6748 + $0x20] sm:$0xff]
        %v6754 = vld [vmem:[%s6748 + $0x28] sm:$0x3f]
        %v6755 = vld [vmem:[%s6748 + $0x30] sm:$0xff]
        %v6756 = vld [vmem:[%s6748 + $0x38] sm:$0xff]
        %v6757 = vld [vmem:[%s6748 + $0x40] sm:$0x3f]
        %v6758 = vld [vmem:[%s6748 + $0x48] sm:$0xff]
        %v6759 = vld [vmem:[%s6748 + $0x50] sm:$0xff]
        %v6760 = vld [vmem:[%s6748 + $0x58] sm:$0x3f]
        %v6761 = vld [vmem:[%s6748 + $0x60] sm:$0xff]
        %v6762 = vld [vmem:[%s6748 + $0x68] sm:$0xff]
        %v6763 = vld [vmem:[%s6748 + $0x70] sm:$0x3f]
        %v6764 = vld [vmem:[%s6748 + $0x78] sm:$0xff]
        %v6765 = vld [vmem:[%s6748 + $0x80] sm:$0xff]
        %v6766 = vld [vmem:[%s6748 + $0x88] sm:$0x3f]
        %v6767 = vld [vmem:[%s6748 + $0x90] sm:$0xff]
        %v6768 = vld [vmem:[%s6748 + $0x98] sm:$0xff]
        %v6769 = vld [vmem:[%s6748 + $0xa0] sm:$0x3f]
        %v6770 = vld [vmem:[%s6748 + $0xa8] sm:$0xff]
        %v6771 = vld [vmem:[%s6748 + $0xb0] sm:$0xff]
        %v6772 = vld [vmem:[%s6748 + $0xb8] sm:$0x3f]
        %v6773 = vld [vmem:[%s6748 + $0xc0] sm:$0xff]
        %v6774 = vld [vmem:[%s6748 + $0xc8] sm:$0xff]
        %v6775 = vld [vmem:[%s6748 + $0xd0] sm:$0x3f]
        %v6776 = vld [vmem:[%s6748 + $0xd8] sm:$0xff]
        %v6777 = vld [vmem:[%s6748 + $0xe0] sm:$0xff]
        %v6778 = vld [vmem:[%s6748 + $0xe8] sm:$0x3f]
        %v6779 = vld [vmem:[%s6748 + $0xf0] sm:$0xff]
        %v6780 = vld [vmem:[%s6748 + $0xf8] sm:$0xff]
        %v6781 = vld [vmem:[%s6748 + $0x100] sm:$0x3f]
        %v6782 = vld [vmem:[%s6748 + $0x108] sm:$0xff]
        %v6783 = vld [vmem:[%s6748 + $0x110] sm:$0xff]
        %v6784 = vld [vmem:[%s6748 + $0x118] sm:$0x3f]
        %v6785 = vld [vmem:[%s6748 + $0x120] sm:$0xff]
        %v6786 = vld [vmem:[%s6748 + $0x128] sm:$0xff]
        %v6787 = vld [vmem:[%s6748 + $0x130] sm:$0x3f]
        %v6788 = vld [vmem:[%s6748 + $0x138] sm:$0xff]
        %v6789 = vld [vmem:[%s6748 + $0x140] sm:$0xff]
        %v6790 = vld [vmem:[%s6748 + $0x148] sm:$0x3f]
        %v6791 = vld [vmem:[%s6748 + $0x150] sm:$0xff]
        %v6792 = vld [vmem:[%s6748 + $0x158] sm:$0xff]
        %v6793 = vld [vmem:[%s6748 + $0x160] sm:$0x3f]
        %v6794 = vld [vmem:[%s6748 + $0x168] sm:$0xff]
        %v6795 = vld [vmem:[%s6748 + $0x170] sm:$0xff]
        %v6796 = vld [vmem:[%s6748 + $0x178] sm:$0x3f]
        %v6797 = vlaneseq
        %v6798 = vshrl.u32 %v6797, 7
        %v6799 = vsub.s32 0, %v6798
        %v6800 = vrot.slane %v410, %v6799
        %v6801 = vmul.f32 %v6749, %v6800
        %v6802 = vmul.f32 %v6750, %v6800
        %v6803 = vmul.f32 %v6752, %v6800
        %v6804 = vmul.f32 %v6753, %v6800
        %v6805 = vmul.f32 %v6755, %v6800
        %v6806 = vmul.f32 %v6756, %v6800
        %v6807 = vmul.f32 %v6758, %v6800
        %v6808 = vmul.f32 %v6759, %v6800
        %v6809 = vmul.f32 %v6761, %v6800
        %v6810 = vmul.f32 %v6762, %v6800
        %v6811 = vmul.f32 %v6764, %v6800
        %v6812 = vmul.f32 %v6765, %v6800
        %v6813 = vmul.f32 %v6767, %v6800
        %v6814 = vmul.f32 %v6768, %v6800
        %v6815 = vmul.f32 %v6770, %v6800
        %v6816 = vmul.f32 %v6771, %v6800
        %v6817 = vmul.f32 %v6773, %v6800
        %v6818 = vmul.f32 %v6774, %v6800
        %v6819 = vmul.f32 %v6776, %v6800
        %v6820 = vmul.f32 %v6777, %v6800
        %v6821 = vmul.f32 %v6779, %v6800
        %v6822 = vmul.f32 %v6780, %v6800
        %v6823 = vmul.f32 %v6782, %v6800
        %v6824 = vmul.f32 %v6783, %v6800
        %v6825 = vmul.f32 %v6785, %v6800
        %v6826 = vmul.f32 %v6786, %v6800
        %v6827 = vmul.f32 %v6788, %v6800
        %v6828 = vmul.f32 %v6789, %v6800
        %v6829 = vmul.f32 %v6791, %v6800
        %v6830 = vmul.f32 %v6792, %v6800
        %v6831 = vmul.f32 %v6794, %v6800
        %v6832 = vmul.f32 %v6795, %v6800
        %v6833 = vadd.f32 %v6716, %v6801
        %v6834 = vadd.f32 %v6717, %v6802
        %v6835 = vadd.f32 %v6718, %v6803
        %v6836 = vadd.f32 %v6719, %v6804
        %v6837 = vadd.f32 %v6720, %v6805
        %v6838 = vadd.f32 %v6721, %v6806
        %v6839 = vadd.f32 %v6722, %v6807
        %v6840 = vadd.f32 %v6723, %v6808
        %v6841 = vadd.f32 %v6724, %v6809
        %v6842 = vadd.f32 %v6725, %v6810
        %v6843 = vadd.f32 %v6726, %v6811
        %v6844 = vadd.f32 %v6727, %v6812
        %v6845 = vadd.f32 %v6728, %v6813
        %v6846 = vadd.f32 %v6729, %v6814
        %v6847 = vadd.f32 %v6730, %v6815
        %v6848 = vadd.f32 %v6731, %v6816
        %v6849 = vadd.f32 %v6732, %v6817
        %v6850 = vadd.f32 %v6733, %v6818
        %v6851 = vadd.f32 %v6734, %v6819
        %v6852 = vadd.f32 %v6735, %v6820
        %v6853 = vadd.f32 %v6736, %v6821
        %v6854 = vadd.f32 %v6737, %v6822
        %v6855 = vadd.f32 %v6738, %v6823
        %v6856 = vadd.f32 %v6739, %v6824
        %v6857 = vadd.f32 %v6740, %v6825
        %v6858 = vadd.f32 %v6741, %v6826
        %v6859 = vadd.f32 %v6742, %v6827
        %v6860 = vadd.f32 %v6743, %v6828
        %v6861 = vadd.f32 %v6744, %v6829
        %v6862 = vadd.f32 %v6745, %v6830
        %v6863 = vadd.f32 %v6746, %v6831
        %v6864 = vadd.f32 %v6747, %v6832
        %v6865 = vlaneseq
        %v6866 = vshrl.u32 %v6865, 7
        %v6867 = vsub.s32 1, %v6866
        %v6868 = vrot.slane %v410, %v6867
        %v6869 = vmul.f32 %v6749, %v6868
        %v6870 = vmul.f32 %v6750, %v6868
        %v6871 = vmul.f32 %v6751, %v6868
        %v6872 = vmul.f32 %v6752, %v6868
        %v6873 = vmul.f32 %v6753, %v6868
        %v6874 = vmul.f32 %v6754, %v6868
        %v6875 = vmul.f32 %v6755, %v6868
        %v6876 = vmul.f32 %v6756, %v6868
        %v6877 = vmul.f32 %v6757, %v6868
        %v6878 = vmul.f32 %v6758, %v6868
        %v6879 = vmul.f32 %v6759, %v6868
        %v6880 = vmul.f32 %v6760, %v6868
        %v6881 = vmul.f32 %v6761, %v6868
        %v6882 = vmul.f32 %v6762, %v6868
        %v6883 = vmul.f32 %v6763, %v6868
        %v6884 = vmul.f32 %v6764, %v6868
        %v6885 = vmul.f32 %v6765, %v6868
        %v6886 = vmul.f32 %v6766, %v6868
        %v6887 = vmul.f32 %v6767, %v6868
        %v6888 = vmul.f32 %v6768, %v6868
        %v6889 = vmul.f32 %v6769, %v6868
        %v6890 = vmul.f32 %v6770, %v6868
        %v6891 = vmul.f32 %v6771, %v6868
        %v6892 = vmul.f32 %v6772, %v6868
        %v6893 = vmul.f32 %v6773, %v6868
        %v6894 = vmul.f32 %v6774, %v6868
        %v6895 = vmul.f32 %v6775, %v6868
        %v6896 = vmul.f32 %v6776, %v6868
        %v6897 = vmul.f32 %v6777, %v6868
        %v6898 = vmul.f32 %v6778, %v6868
        %v6899 = vmul.f32 %v6779, %v6868
        %v6900 = vmul.f32 %v6780, %v6868
        %v6901 = vmul.f32 %v6781, %v6868
        %v6902 = vmul.f32 %v6782, %v6868
        %v6903 = vmul.f32 %v6783, %v6868
        %v6904 = vmul.f32 %v6784, %v6868
        %v6905 = vmul.f32 %v6785, %v6868
        %v6906 = vmul.f32 %v6786, %v6868
        %v6907 = vmul.f32 %v6787, %v6868
        %v6908 = vmul.f32 %v6788, %v6868
        %v6909 = vmul.f32 %v6789, %v6868
        %v6910 = vmul.f32 %v6790, %v6868
        %v6911 = vmul.f32 %v6791, %v6868
        %v6912 = vmul.f32 %v6792, %v6868
        %v6913 = vmul.f32 %v6793, %v6868
        %v6914 = vmul.f32 %v6794, %v6868
        %v6915 = vmul.f32 %v6795, %v6868
        %v6916 = vmul.f32 %v6796, %v6868
        %v6965 = vrot.slane %v6869, 1
        %v6966 = vrot.slane %v6870, 1
        %v6967 = vsel %vm636, %v6965, %v6966
        %v6968 = vrot.slane %v6871, 1
        %v6969 = vsel %vm636, %v6966, %v6968
        %v6970 = vrot.slane %v6872, 1
        %v6971 = vrot.slane %v6873, 1
        %v6972 = vsel %vm636, %v6970, %v6971
        %v6973 = vrot.slane %v6874, 1
        %v6974 = vsel %vm636, %v6971, %v6973
        %v6975 = vrot.slane %v6875, 1
        %v6976 = vrot.slane %v6876, 1
        %v6977 = vsel %vm636, %v6975, %v6976
        %v6978 = vrot.slane %v6877, 1
        %v6979 = vsel %vm636, %v6976, %v6978
        %v6980 = vrot.slane %v6878, 1
        %v6981 = vrot.slane %v6879, 1
        %v6982 = vsel %vm636, %v6980, %v6981
        %v6983 = vrot.slane %v6880, 1
        %v6984 = vsel %vm636, %v6981, %v6983
        %v6985 = vrot.slane %v6881, 1
        %v6986 = vrot.slane %v6882, 1
        %v6987 = vsel %vm636, %v6985, %v6986
        %v6988 = vrot.slane %v6883, 1
        %v6989 = vsel %vm636, %v6986, %v6988
        %v6990 = vrot.slane %v6884, 1
        %v6991 = vrot.slane %v6885, 1
        %v6992 = vsel %vm636, %v6990, %v6991
        %v6993 = vrot.slane %v6886, 1
        %v6994 = vsel %vm636, %v6991, %v6993
        %v6995 = vrot.slane %v6887, 1
        %v6996 = vrot.slane %v6888, 1
        %v6997 = vsel %vm636, %v6995, %v6996
        %v6998 = vrot.slane %v6889, 1
        %v6999 = vsel %vm636, %v6996, %v6998
        %v7000 = vrot.slane %v6890, 1
        %v7001 = vrot.slane %v6891, 1
        %v7002 = vsel %vm636, %v7000, %v7001
        %v7003 = vrot.slane %v6892, 1
        %v7004 = vsel %vm636, %v7001, %v7003
        %v7005 = vrot.slane %v6893, 1
        %v7006 = vrot.slane %v6894, 1
        %v7007 = vsel %vm636, %v7005, %v7006
        %v7008 = vrot.slane %v6895, 1
        %v7009 = vsel %vm636, %v7006, %v7008
        %v7010 = vrot.slane %v6896, 1
        %v7011 = vrot.slane %v6897, 1
        %v7012 = vsel %vm636, %v7010, %v7011
        %v7013 = vrot.slane %v6898, 1
        %v7014 = vsel %vm636, %v7011, %v7013
        %v7015 = vrot.slane %v6899, 1
        %v7016 = vrot.slane %v6900, 1
        %v7017 = vsel %vm636, %v7015, %v7016
        %v7018 = vrot.slane %v6901, 1
        %v7019 = vsel %vm636, %v7016, %v7018
        %v7020 = vrot.slane %v6902, 1
        %v7021 = vrot.slane %v6903, 1
        %v7022 = vsel %vm636, %v7020, %v7021
        %v7023 = vrot.slane %v6904, 1
        %v7024 = vsel %vm636, %v7021, %v7023
        %v7025 = vrot.slane %v6905, 1
        %v7026 = vrot.slane %v6906, 1
        %v7027 = vsel %vm636, %v7025, %v7026
        %v7028 = vrot.slane %v6907, 1
        %v7029 = vsel %vm636, %v7026, %v7028
        %v7030 = vrot.slane %v6908, 1
        %v7031 = vrot.slane %v6909, 1
        %v7032 = vsel %vm636, %v7030, %v7031
        %v7033 = vrot.slane %v6910, 1
        %v7034 = vsel %vm636, %v7031, %v7033
        %v7035 = vrot.slane %v6911, 1
        %v7036 = vrot.slane %v6912, 1
        %v7037 = vsel %vm636, %v7035, %v7036
        %v7038 = vrot.slane %v6913, 1
        %v7039 = vsel %vm636, %v7036, %v7038
        %v7040 = vrot.slane %v6914, 1
        %v7041 = vrot.slane %v6915, 1
        %v7042 = vsel %vm636, %v7040, %v7041
        %v7043 = vrot.slane %v6916, 1
        %v7044 = vsel %vm636, %v7041, %v7043
        %v7077 = vadd.f32 %v6833, %v6967
        %v7078 = vadd.f32 %v6834, %v6969
        %v7079 = vadd.f32 %v6835, %v6972
        %v7080 = vadd.f32 %v6836, %v6974
        %v7081 = vadd.f32 %v6837, %v6977
        %v7082 = vadd.f32 %v6838, %v6979
        %v7083 = vadd.f32 %v6839, %v6982
        %v7084 = vadd.f32 %v6840, %v6984
        %v7085 = vadd.f32 %v6841, %v6987
        %v7086 = vadd.f32 %v6842, %v6989
        %v7087 = vadd.f32 %v6843, %v6992
        %v7088 = vadd.f32 %v6844, %v6994
        %v7089 = vadd.f32 %v6845, %v6997
        %v7090 = vadd.f32 %v6846, %v6999
        %v7091 = vadd.f32 %v6847, %v7002
        %v7092 = vadd.f32 %v6848, %v7004
        %v7093 = vadd.f32 %v6849, %v7007
        %v7094 = vadd.f32 %v6850, %v7009
        %v7095 = vadd.f32 %v6851, %v7012
        %v7096 = vadd.f32 %v6852, %v7014
        %v7097 = vadd.f32 %v6853, %v7017
        %v7098 = vadd.f32 %v6854, %v7019
        %v7099 = vadd.f32 %v6855, %v7022
        %v7100 = vadd.f32 %v6856, %v7024
        %v7101 = vadd.f32 %v6857, %v7027
        %v7102 = vadd.f32 %v6858, %v7029
        %v7103 = vadd.f32 %v6859, %v7032
        %v7104 = vadd.f32 %v6860, %v7034
        %v7105 = vadd.f32 %v6861, %v7037
        %v7106 = vadd.f32 %v6862, %v7039
        %v7107 = vadd.f32 %v6863, %v7042
        %v7108 = vadd.f32 %v6864, %v7044
        %v7109 = vlaneseq
        %v7110 = vshrl.u32 %v7109, 7
        %v7111 = vsub.s32 2, %v7110
        %v7112 = vrot.slane %v410, %v7111
        %v7113 = vmul.f32 %v6749, %v7112
        %v7114 = vmul.f32 %v6750, %v7112
        %v7115 = vmul.f32 %v6751, %v7112
        %v7116 = vmul.f32 %v6752, %v7112
        %v7117 = vmul.f32 %v6753, %v7112
        %v7118 = vmul.f32 %v6754, %v7112
        %v7119 = vmul.f32 %v6755, %v7112
        %v7120 = vmul.f32 %v6756, %v7112
        %v7121 = vmul.f32 %v6757, %v7112
        %v7122 = vmul.f32 %v6758, %v7112
        %v7123 = vmul.f32 %v6759, %v7112
        %v7124 = vmul.f32 %v6760, %v7112
        %v7125 = vmul.f32 %v6761, %v7112
        %v7126 = vmul.f32 %v6762, %v7112
        %v7127 = vmul.f32 %v6763, %v7112
        %v7128 = vmul.f32 %v6764, %v7112
        %v7129 = vmul.f32 %v6765, %v7112
        %v7130 = vmul.f32 %v6766, %v7112
        %v7131 = vmul.f32 %v6767, %v7112
        %v7132 = vmul.f32 %v6768, %v7112
        %v7133 = vmul.f32 %v6769, %v7112
        %v7134 = vmul.f32 %v6770, %v7112
        %v7135 = vmul.f32 %v6771, %v7112
        %v7136 = vmul.f32 %v6772, %v7112
        %v7137 = vmul.f32 %v6773, %v7112
        %v7138 = vmul.f32 %v6774, %v7112
        %v7139 = vmul.f32 %v6775, %v7112
        %v7140 = vmul.f32 %v6776, %v7112
        %v7141 = vmul.f32 %v6777, %v7112
        %v7142 = vmul.f32 %v6778, %v7112
        %v7143 = vmul.f32 %v6779, %v7112
        %v7144 = vmul.f32 %v6780, %v7112
        %v7145 = vmul.f32 %v6781, %v7112
        %v7146 = vmul.f32 %v6782, %v7112
        %v7147 = vmul.f32 %v6783, %v7112
        %v7148 = vmul.f32 %v6784, %v7112
        %v7149 = vmul.f32 %v6785, %v7112
        %v7150 = vmul.f32 %v6786, %v7112
        %v7151 = vmul.f32 %v6787, %v7112
        %v7152 = vmul.f32 %v6788, %v7112
        %v7153 = vmul.f32 %v6789, %v7112
        %v7154 = vmul.f32 %v6790, %v7112
        %v7155 = vmul.f32 %v6791, %v7112
        %v7156 = vmul.f32 %v6792, %v7112
        %v7157 = vmul.f32 %v6793, %v7112
        %v7158 = vmul.f32 %v6794, %v7112
        %v7159 = vmul.f32 %v6795, %v7112
        %v7160 = vmul.f32 %v6796, %v7112
        %v7209 = vrot.slane %v7113, 2
        %v7210 = vrot.slane %v7114, 2
        %v7211 = vsel %vm881, %v7209, %v7210
        %v7212 = vrot.slane %v7115, 2
        %v7213 = vsel %vm881, %v7210, %v7212
        %v7214 = vrot.slane %v7116, 2
        %v7215 = vrot.slane %v7117, 2
        %v7216 = vsel %vm881, %v7214, %v7215
        %v7217 = vrot.slane %v7118, 2
        %v7218 = vsel %vm881, %v7215, %v7217
        %v7219 = vrot.slane %v7119, 2
        %v7220 = vrot.slane %v7120, 2
        %v7221 = vsel %vm881, %v7219, %v7220
        %v7222 = vrot.slane %v7121, 2
        %v7223 = vsel %vm881, %v7220, %v7222
        %v7224 = vrot.slane %v7122, 2
        %v7225 = vrot.slane %v7123, 2
        %v7226 = vsel %vm881, %v7224, %v7225
        %v7227 = vrot.slane %v7124, 2
        %v7228 = vsel %vm881, %v7225, %v7227
        %v7229 = vrot.slane %v7125, 2
        %v7230 = vrot.slane %v7126, 2
        %v7231 = vsel %vm881, %v7229, %v7230
        %v7232 = vrot.slane %v7127, 2
        %v7233 = vsel %vm881, %v7230, %v7232
        %v7234 = vrot.slane %v7128, 2
        %v7235 = vrot.slane %v7129, 2
        %v7236 = vsel %vm881, %v7234, %v7235
        %v7237 = vrot.slane %v7130, 2
        %v7238 = vsel %vm881, %v7235, %v7237
        %v7239 = vrot.slane %v7131, 2
        %v7240 = vrot.slane %v7132, 2
        %v7241 = vsel %vm881, %v7239, %v7240
        %v7242 = vrot.slane %v7133, 2
        %v7243 = vsel %vm881, %v7240, %v7242
        %v7244 = vrot.slane %v7134, 2
        %v7245 = vrot.slane %v7135, 2
        %v7246 = vsel %vm881, %v7244, %v7245
        %v7247 = vrot.slane %v7136, 2
        %v7248 = vsel %vm881, %v7245, %v7247
        %v7249 = vrot.slane %v7137, 2
        %v7250 = vrot.slane %v7138, 2
        %v7251 = vsel %vm881, %v7249, %v7250
        %v7252 = vrot.slane %v7139, 2
        %v7253 = vsel %vm881, %v7250, %v7252
        %v7254 = vrot.slane %v7140, 2
        %v7255 = vrot.slane %v7141, 2
        %v7256 = vsel %vm881, %v7254, %v7255
        %v7257 = vrot.slane %v7142, 2
        %v7258 = vsel %vm881, %v7255, %v7257
        %v7259 = vrot.slane %v7143, 2
        %v7260 = vrot.slane %v7144, 2
        %v7261 = vsel %vm881, %v7259, %v7260
        %v7262 = vrot.slane %v7145, 2
        %v7263 = vsel %vm881, %v7260, %v7262
        %v7264 = vrot.slane %v7146, 2
        %v7265 = vrot.slane %v7147, 2
        %v7266 = vsel %vm881, %v7264, %v7265
        %v7267 = vrot.slane %v7148, 2
        %v7268 = vsel %vm881, %v7265, %v7267
        %v7269 = vrot.slane %v7149, 2
        %v7270 = vrot.slane %v7150, 2
        %v7271 = vsel %vm881, %v7269, %v7270
        %v7272 = vrot.slane %v7151, 2
        %v7273 = vsel %vm881, %v7270, %v7272
        %v7274 = vrot.slane %v7152, 2
        %v7275 = vrot.slane %v7153, 2
        %v7276 = vsel %vm881, %v7274, %v7275
        %v7277 = vrot.slane %v7154, 2
        %v7278 = vsel %vm881, %v7275, %v7277
        %v7279 = vrot.slane %v7155, 2
        %v7280 = vrot.slane %v7156, 2
        %v7281 = vsel %vm881, %v7279, %v7280
        %v7282 = vrot.slane %v7157, 2
        %v7283 = vsel %vm881, %v7280, %v7282
        %v7284 = vrot.slane %v7158, 2
        %v7285 = vrot.slane %v7159, 2
        %v7286 = vsel %vm881, %v7284, %v7285
        %v7287 = vrot.slane %v7160, 2
        %v7288 = vsel %vm881, %v7285, %v7287
        %v7321 = vadd.f32 %v7077, %v7211
        %v7322 = vadd.f32 %v7078, %v7213
        %v7323 = vadd.f32 %v7079, %v7216
        %v7324 = vadd.f32 %v7080, %v7218
        %v7325 = vadd.f32 %v7081, %v7221
        %v7326 = vadd.f32 %v7082, %v7223
        %v7327 = vadd.f32 %v7083, %v7226
        %v7328 = vadd.f32 %v7084, %v7228
        %v7329 = vadd.f32 %v7085, %v7231
        %v7330 = vadd.f32 %v7086, %v7233
        %v7331 = vadd.f32 %v7087, %v7236
        %v7332 = vadd.f32 %v7088, %v7238
        %v7333 = vadd.f32 %v7089, %v7241
        %v7334 = vadd.f32 %v7090, %v7243
        %v7335 = vadd.f32 %v7091, %v7246
        %v7336 = vadd.f32 %v7092, %v7248
        %v7337 = vadd.f32 %v7093, %v7251
        %v7338 = vadd.f32 %v7094, %v7253
        %v7339 = vadd.f32 %v7095, %v7256
        %v7340 = vadd.f32 %v7096, %v7258
        %v7341 = vadd.f32 %v7097, %v7261
        %v7342 = vadd.f32 %v7098, %v7263
        %v7343 = vadd.f32 %v7099, %v7266
        %v7344 = vadd.f32 %v7100, %v7268
        %v7345 = vadd.f32 %v7101, %v7271
        %v7346 = vadd.f32 %v7102, %v7273
        %v7347 = vadd.f32 %v7103, %v7276
        %v7348 = vadd.f32 %v7104, %v7278
        %v7349 = vadd.f32 %v7105, %v7281
        %v7350 = vadd.f32 %v7106, %v7283
        %v7351 = vadd.f32 %v7107, %v7286
        %v7352 = vadd.f32 %v7108, %v7288
        %v7353 = vlaneseq
        %v7354 = vshrl.u32 %v7353, 7
        %v7355 = vsub.s32 3, %v7354
        %v7356 = vrot.slane %v410, %v7355
        %v7357 = vmul.f32 %v6749, %v7356
        %v7358 = vmul.f32 %v6750, %v7356
        %v7359 = vmul.f32 %v6751, %v7356
        %v7360 = vmul.f32 %v6752, %v7356
        %v7361 = vmul.f32 %v6753, %v7356
        %v7362 = vmul.f32 %v6754, %v7356
        %v7363 = vmul.f32 %v6755, %v7356
        %v7364 = vmul.f32 %v6756, %v7356
        %v7365 = vmul.f32 %v6757, %v7356
        %v7366 = vmul.f32 %v6758, %v7356
        %v7367 = vmul.f32 %v6759, %v7356
        %v7368 = vmul.f32 %v6760, %v7356
        %v7369 = vmul.f32 %v6761, %v7356
        %v7370 = vmul.f32 %v6762, %v7356
        %v7371 = vmul.f32 %v6763, %v7356
        %v7372 = vmul.f32 %v6764, %v7356
        %v7373 = vmul.f32 %v6765, %v7356
        %v7374 = vmul.f32 %v6766, %v7356
        %v7375 = vmul.f32 %v6767, %v7356
        %v7376 = vmul.f32 %v6768, %v7356
        %v7377 = vmul.f32 %v6769, %v7356
        %v7378 = vmul.f32 %v6770, %v7356
        %v7379 = vmul.f32 %v6771, %v7356
        %v7380 = vmul.f32 %v6772, %v7356
        %v7381 = vmul.f32 %v6773, %v7356
        %v7382 = vmul.f32 %v6774, %v7356
        %v7383 = vmul.f32 %v6775, %v7356
        %v7384 = vmul.f32 %v6776, %v7356
        %v7385 = vmul.f32 %v6777, %v7356
        %v7386 = vmul.f32 %v6778, %v7356
        %v7387 = vmul.f32 %v6779, %v7356
        %v7388 = vmul.f32 %v6780, %v7356
        %v7389 = vmul.f32 %v6781, %v7356
        %v7390 = vmul.f32 %v6782, %v7356
        %v7391 = vmul.f32 %v6783, %v7356
        %v7392 = vmul.f32 %v6784, %v7356
        %v7393 = vmul.f32 %v6785, %v7356
        %v7394 = vmul.f32 %v6786, %v7356
        %v7395 = vmul.f32 %v6787, %v7356
        %v7396 = vmul.f32 %v6788, %v7356
        %v7397 = vmul.f32 %v6789, %v7356
        %v7398 = vmul.f32 %v6790, %v7356
        %v7399 = vmul.f32 %v6791, %v7356
        %v7400 = vmul.f32 %v6792, %v7356
        %v7401 = vmul.f32 %v6793, %v7356
        %v7402 = vmul.f32 %v6794, %v7356
        %v7403 = vmul.f32 %v6795, %v7356
        %v7404 = vmul.f32 %v6796, %v7356
        %v7453 = vrot.slane %v7357, 3
        %v7454 = vrot.slane %v7358, 3
        %v7455 = vsel %vm1126, %v7453, %v7454
        %v7456 = vrot.slane %v7359, 3
        %v7457 = vsel %vm1126, %v7454, %v7456
        %v7458 = vrot.slane %v7360, 3
        %v7459 = vrot.slane %v7361, 3
        %v7460 = vsel %vm1126, %v7458, %v7459
        %v7461 = vrot.slane %v7362, 3
        %v7462 = vsel %vm1126, %v7459, %v7461
        %v7463 = vrot.slane %v7363, 3
        %v7464 = vrot.slane %v7364, 3
        %v7465 = vsel %vm1126, %v7463, %v7464
        %v7466 = vrot.slane %v7365, 3
        %v7467 = vsel %vm1126, %v7464, %v7466
        %v7468 = vrot.slane %v7366, 3
        %v7469 = vrot.slane %v7367, 3
        %v7470 = vsel %vm1126, %v7468, %v7469
        %v7471 = vrot.slane %v7368, 3
        %v7472 = vsel %vm1126, %v7469, %v7471
        %v7473 = vrot.slane %v7369, 3
        %v7474 = vrot.slane %v7370, 3
        %v7475 = vsel %vm1126, %v7473, %v7474
        %v7476 = vrot.slane %v7371, 3
        %v7477 = vsel %vm1126, %v7474, %v7476
        %v7478 = vrot.slane %v7372, 3
        %v7479 = vrot.slane %v7373, 3
        %v7480 = vsel %vm1126, %v7478, %v7479
        %v7481 = vrot.slane %v7374, 3
        %v7482 = vsel %vm1126, %v7479, %v7481
        %v7483 = vrot.slane %v7375, 3
        %v7484 = vrot.slane %v7376, 3
        %v7485 = vsel %vm1126, %v7483, %v7484
        %v7486 = vrot.slane %v7377, 3
        %v7487 = vsel %vm1126, %v7484, %v7486
        %v7488 = vrot.slane %v7378, 3
        %v7489 = vrot.slane %v7379, 3
        %v7490 = vsel %vm1126, %v7488, %v7489
        %v7491 = vrot.slane %v7380, 3
        %v7492 = vsel %vm1126, %v7489, %v7491
        %v7493 = vrot.slane %v7381, 3
        %v7494 = vrot.slane %v7382, 3
        %v7495 = vsel %vm1126, %v7493, %v7494
        %v7496 = vrot.slane %v7383, 3
        %v7497 = vsel %vm1126, %v7494, %v7496
        %v7498 = vrot.slane %v7384, 3
        %v7499 = vrot.slane %v7385, 3
        %v7500 = vsel %vm1126, %v7498, %v7499
        %v7501 = vrot.slane %v7386, 3
        %v7502 = vsel %vm1126, %v7499, %v7501
        %v7503 = vrot.slane %v7387, 3
        %v7504 = vrot.slane %v7388, 3
        %v7505 = vsel %vm1126, %v7503, %v7504
        %v7506 = vrot.slane %v7389, 3
        %v7507 = vsel %vm1126, %v7504, %v7506
        %v7508 = vrot.slane %v7390, 3
        %v7509 = vrot.slane %v7391, 3
        %v7510 = vsel %vm1126, %v7508, %v7509
        %v7511 = vrot.slane %v7392, 3
        %v7512 = vsel %vm1126, %v7509, %v7511
        %v7513 = vrot.slane %v7393, 3
        %v7514 = vrot.slane %v7394, 3
        %v7515 = vsel %vm1126, %v7513, %v7514
        %v7516 = vrot.slane %v7395, 3
        %v7517 = vsel %vm1126, %v7514, %v7516
        %v7518 = vrot.slane %v7396, 3
        %v7519 = vrot.slane %v7397, 3
        %v7520 = vsel %vm1126, %v7518, %v7519
        %v7521 = vrot.slane %v7398, 3
        %v7522 = vsel %vm1126, %v7519, %v7521
        %v7523 = vrot.slane %v7399, 3
        %v7524 = vrot.slane %v7400, 3
        %v7525 = vsel %vm1126, %v7523, %v7524
        %v7526 = vrot.slane %v7401, 3
        %v7527 = vsel %vm1126, %v7524, %v7526
        %v7528 = vrot.slane %v7402, 3
        %v7529 = vrot.slane %v7403, 3
        %v7530 = vsel %vm1126, %v7528, %v7529
        %v7531 = vrot.slane %v7404, 3
        %v7532 = vsel %vm1126, %v7529, %v7531
        %v7565 = vadd.f32 %v7321, %v7455
        %v7566 = vadd.f32 %v7322, %v7457
        %v7567 = vadd.f32 %v7323, %v7460
        %v7568 = vadd.f32 %v7324, %v7462
        %v7569 = vadd.f32 %v7325, %v7465
        %v7570 = vadd.f32 %v7326, %v7467
        %v7571 = vadd.f32 %v7327, %v7470
        %v7572 = vadd.f32 %v7328, %v7472
        %v7573 = vadd.f32 %v7329, %v7475
        %v7574 = vadd.f32 %v7330, %v7477
        %v7575 = vadd.f32 %v7331, %v7480
        %v7576 = vadd.f32 %v7332, %v7482
        %v7577 = vadd.f32 %v7333, %v7485
        %v7578 = vadd.f32 %v7334, %v7487
        %v7579 = vadd.f32 %v7335, %v7490
        %v7580 = vadd.f32 %v7336, %v7492
        %v7581 = vadd.f32 %v7337, %v7495
        %v7582 = vadd.f32 %v7338, %v7497
        %v7583 = vadd.f32 %v7339, %v7500
        %v7584 = vadd.f32 %v7340, %v7502
        %v7585 = vadd.f32 %v7341, %v7505
        %v7586 = vadd.f32 %v7342, %v7507
        %v7587 = vadd.f32 %v7343, %v7510
        %v7588 = vadd.f32 %v7344, %v7512
        %v7589 = vadd.f32 %v7345, %v7515
        %v7590 = vadd.f32 %v7346, %v7517
        %v7591 = vadd.f32 %v7347, %v7520
        %v7592 = vadd.f32 %v7348, %v7522
        %v7593 = vadd.f32 %v7349, %v7525
        %v7594 = vadd.f32 %v7350, %v7527
        %v7595 = vadd.f32 %v7351, %v7530
        %v7596 = vadd.f32 %v7352, %v7532
        %v7597 = vlaneseq
        %v7598 = vshrl.u32 %v7597, 7
        %v7599 = vsub.s32 4, %v7598
        %v7600 = vrot.slane %v410, %v7599
        %v7601 = vmul.f32 %v6749, %v7600
        %v7602 = vmul.f32 %v6750, %v7600
        %v7603 = vmul.f32 %v6751, %v7600
        %v7604 = vmul.f32 %v6752, %v7600
        %v7605 = vmul.f32 %v6753, %v7600
        %v7606 = vmul.f32 %v6754, %v7600
        %v7607 = vmul.f32 %v6755, %v7600
        %v7608 = vmul.f32 %v6756, %v7600
        %v7609 = vmul.f32 %v6757, %v7600
        %v7610 = vmul.f32 %v6758, %v7600
        %v7611 = vmul.f32 %v6759, %v7600
        %v7612 = vmul.f32 %v6760, %v7600
        %v7613 = vmul.f32 %v6761, %v7600
        %v7614 = vmul.f32 %v6762, %v7600
        %v7615 = vmul.f32 %v6763, %v7600
        %v7616 = vmul.f32 %v6764, %v7600
        %v7617 = vmul.f32 %v6765, %v7600
        %v7618 = vmul.f32 %v6766, %v7600
        %v7619 = vmul.f32 %v6767, %v7600
        %v7620 = vmul.f32 %v6768, %v7600
        %v7621 = vmul.f32 %v6769, %v7600
        %v7622 = vmul.f32 %v6770, %v7600
        %v7623 = vmul.f32 %v6771, %v7600
        %v7624 = vmul.f32 %v6772, %v7600
        %v7625 = vmul.f32 %v6773, %v7600
        %v7626 = vmul.f32 %v6774, %v7600
        %v7627 = vmul.f32 %v6775, %v7600
        %v7628 = vmul.f32 %v6776, %v7600
        %v7629 = vmul.f32 %v6777, %v7600
        %v7630 = vmul.f32 %v6778, %v7600
        %v7631 = vmul.f32 %v6779, %v7600
        %v7632 = vmul.f32 %v6780, %v7600
        %v7633 = vmul.f32 %v6781, %v7600
        %v7634 = vmul.f32 %v6782, %v7600
        %v7635 = vmul.f32 %v6783, %v7600
        %v7636 = vmul.f32 %v6784, %v7600
        %v7637 = vmul.f32 %v6785, %v7600
        %v7638 = vmul.f32 %v6786, %v7600
        %v7639 = vmul.f32 %v6787, %v7600
        %v7640 = vmul.f32 %v6788, %v7600
        %v7641 = vmul.f32 %v6789, %v7600
        %v7642 = vmul.f32 %v6790, %v7600
        %v7643 = vmul.f32 %v6791, %v7600
        %v7644 = vmul.f32 %v6792, %v7600
        %v7645 = vmul.f32 %v6793, %v7600
        %v7646 = vmul.f32 %v6794, %v7600
        %v7647 = vmul.f32 %v6795, %v7600
        %v7648 = vmul.f32 %v6796, %v7600
        %v7697 = vrot.slane %v7601, 4
        %v7698 = vrot.slane %v7602, 4
        %v7699 = vsel %vm1371, %v7697, %v7698
        %v7700 = vrot.slane %v7603, 4
        %v7701 = vsel %vm1371, %v7698, %v7700
        %v7702 = vrot.slane %v7604, 4
        %v7703 = vrot.slane %v7605, 4
        %v7704 = vsel %vm1371, %v7702, %v7703
        %v7705 = vrot.slane %v7606, 4
        %v7706 = vsel %vm1371, %v7703, %v7705
        %v7707 = vrot.slane %v7607, 4
        %v7708 = vrot.slane %v7608, 4
        %v7709 = vsel %vm1371, %v7707, %v7708
        %v7710 = vrot.slane %v7609, 4
        %v7711 = vsel %vm1371, %v7708, %v7710
        %v7712 = vrot.slane %v7610, 4
        %v7713 = vrot.slane %v7611, 4
        %v7714 = vsel %vm1371, %v7712, %v7713
        %v7715 = vrot.slane %v7612, 4
        %v7716 = vsel %vm1371, %v7713, %v7715
        %v7717 = vrot.slane %v7613, 4
        %v7718 = vrot.slane %v7614, 4
        %v7719 = vsel %vm1371, %v7717, %v7718
        %v7720 = vrot.slane %v7615, 4
        %v7721 = vsel %vm1371, %v7718, %v7720
        %v7722 = vrot.slane %v7616, 4
        %v7723 = vrot.slane %v7617, 4
        %v7724 = vsel %vm1371, %v7722, %v7723
        %v7725 = vrot.slane %v7618, 4
        %v7726 = vsel %vm1371, %v7723, %v7725
        %v7727 = vrot.slane %v7619, 4
        %v7728 = vrot.slane %v7620, 4
        %v7729 = vsel %vm1371, %v7727, %v7728
        %v7730 = vrot.slane %v7621, 4
        %v7731 = vsel %vm1371, %v7728, %v7730
        %v7732 = vrot.slane %v7622, 4
        %v7733 = vrot.slane %v7623, 4
        %v7734 = vsel %vm1371, %v7732, %v7733
        %v7735 = vrot.slane %v7624, 4
        %v7736 = vsel %vm1371, %v7733, %v7735
        %v7737 = vrot.slane %v7625, 4
        %v7738 = vrot.slane %v7626, 4
        %v7739 = vsel %vm1371, %v7737, %v7738
        %v7740 = vrot.slane %v7627, 4
        %v7741 = vsel %vm1371, %v7738, %v7740
        %v7742 = vrot.slane %v7628, 4
        %v7743 = vrot.slane %v7629, 4
        %v7744 = vsel %vm1371, %v7742, %v7743
        %v7745 = vrot.slane %v7630, 4
        %v7746 = vsel %vm1371, %v7743, %v7745
        %v7747 = vrot.slane %v7631, 4
        %v7748 = vrot.slane %v7632, 4
        %v7749 = vsel %vm1371, %v7747, %v7748
        %v7750 = vrot.slane %v7633, 4
        %v7751 = vsel %vm1371, %v7748, %v7750
        %v7752 = vrot.slane %v7634, 4
        %v7753 = vrot.slane %v7635, 4
        %v7754 = vsel %vm1371, %v7752, %v7753
        %v7755 = vrot.slane %v7636, 4
        %v7756 = vsel %vm1371, %v7753, %v7755
        %v7757 = vrot.slane %v7637, 4
        %v7758 = vrot.slane %v7638, 4
        %v7759 = vsel %vm1371, %v7757, %v7758
        %v7760 = vrot.slane %v7639, 4
        %v7761 = vsel %vm1371, %v7758, %v7760
        %v7762 = vrot.slane %v7640, 4
        %v7763 = vrot.slane %v7641, 4
        %v7764 = vsel %vm1371, %v7762, %v7763
        %v7765 = vrot.slane %v7642, 4
        %v7766 = vsel %vm1371, %v7763, %v7765
        %v7767 = vrot.slane %v7643, 4
        %v7768 = vrot.slane %v7644, 4
        %v7769 = vsel %vm1371, %v7767, %v7768
        %v7770 = vrot.slane %v7645, 4
        %v7771 = vsel %vm1371, %v7768, %v7770
        %v7772 = vrot.slane %v7646, 4
        %v7773 = vrot.slane %v7647, 4
        %v7774 = vsel %vm1371, %v7772, %v7773
        %v7775 = vrot.slane %v7648, 4
        %v7776 = vsel %vm1371, %v7773, %v7775
        %v7809 = vadd.f32 %v7565, %v7699
        %v7810 = vadd.f32 %v7566, %v7701
        %v7811 = vadd.f32 %v7567, %v7704
        %v7812 = vadd.f32 %v7568, %v7706
        %v7813 = vadd.f32 %v7569, %v7709
        %v7814 = vadd.f32 %v7570, %v7711
        %v7815 = vadd.f32 %v7571, %v7714
        %v7816 = vadd.f32 %v7572, %v7716
        %v7817 = vadd.f32 %v7573, %v7719
        %v7818 = vadd.f32 %v7574, %v7721
        %v7819 = vadd.f32 %v7575, %v7724
        %v7820 = vadd.f32 %v7576, %v7726
        %v7821 = vadd.f32 %v7577, %v7729
        %v7822 = vadd.f32 %v7578, %v7731
        %v7823 = vadd.f32 %v7579, %v7734
        %v7824 = vadd.f32 %v7580, %v7736
        %v7825 = vadd.f32 %v7581, %v7739
        %v7826 = vadd.f32 %v7582, %v7741
        %v7827 = vadd.f32 %v7583, %v7744
        %v7828 = vadd.f32 %v7584, %v7746
        %v7829 = vadd.f32 %v7585, %v7749
        %v7830 = vadd.f32 %v7586, %v7751
        %v7831 = vadd.f32 %v7587, %v7754
        %v7832 = vadd.f32 %v7588, %v7756
        %v7833 = vadd.f32 %v7589, %v7759
        %v7834 = vadd.f32 %v7590, %v7761
        %v7835 = vadd.f32 %v7591, %v7764
        %v7836 = vadd.f32 %v7592, %v7766
        %v7837 = vadd.f32 %v7593, %v7769
        %v7838 = vadd.f32 %v7594, %v7771
        %v7839 = vadd.f32 %v7595, %v7774
        %v7840 = vadd.f32 %v7596, %v7776
        %v7841 = vlaneseq
        %v7842 = vshrl.u32 %v7841, 7
        %v7843 = vsub.s32 5, %v7842
        %v7844 = vrot.slane %v410, %v7843
        %v7845 = vmul.f32 %v6749, %v7844
        %v7846 = vmul.f32 %v6750, %v7844
        %v7847 = vmul.f32 %v6751, %v7844
        %v7848 = vmul.f32 %v6752, %v7844
        %v7849 = vmul.f32 %v6753, %v7844
        %v7850 = vmul.f32 %v6754, %v7844
        %v7851 = vmul.f32 %v6755, %v7844
        %v7852 = vmul.f32 %v6756, %v7844
        %v7853 = vmul.f32 %v6757, %v7844
        %v7854 = vmul.f32 %v6758, %v7844
        %v7855 = vmul.f32 %v6759, %v7844
        %v7856 = vmul.f32 %v6760, %v7844
        %v7857 = vmul.f32 %v6761, %v7844
        %v7858 = vmul.f32 %v6762, %v7844
        %v7859 = vmul.f32 %v6763, %v7844
        %v7860 = vmul.f32 %v6764, %v7844
        %v7861 = vmul.f32 %v6765, %v7844
        %v7862 = vmul.f32 %v6766, %v7844
        %v7863 = vmul.f32 %v6767, %v7844
        %v7864 = vmul.f32 %v6768, %v7844
        %v7865 = vmul.f32 %v6769, %v7844
        %v7866 = vmul.f32 %v6770, %v7844
        %v7867 = vmul.f32 %v6771, %v7844
        %v7868 = vmul.f32 %v6772, %v7844
        %v7869 = vmul.f32 %v6773, %v7844
        %v7870 = vmul.f32 %v6774, %v7844
        %v7871 = vmul.f32 %v6775, %v7844
        %v7872 = vmul.f32 %v6776, %v7844
        %v7873 = vmul.f32 %v6777, %v7844
        %v7874 = vmul.f32 %v6778, %v7844
        %v7875 = vmul.f32 %v6779, %v7844
        %v7876 = vmul.f32 %v6780, %v7844
        %v7877 = vmul.f32 %v6781, %v7844
        %v7878 = vmul.f32 %v6782, %v7844
        %v7879 = vmul.f32 %v6783, %v7844
        %v7880 = vmul.f32 %v6784, %v7844
        %v7881 = vmul.f32 %v6785, %v7844
        %v7882 = vmul.f32 %v6786, %v7844
        %v7883 = vmul.f32 %v6787, %v7844
        %v7884 = vmul.f32 %v6788, %v7844
        %v7885 = vmul.f32 %v6789, %v7844
        %v7886 = vmul.f32 %v6790, %v7844
        %v7887 = vmul.f32 %v6791, %v7844
        %v7888 = vmul.f32 %v6792, %v7844
        %v7889 = vmul.f32 %v6793, %v7844
        %v7890 = vmul.f32 %v6794, %v7844
        %v7891 = vmul.f32 %v6795, %v7844
        %v7892 = vmul.f32 %v6796, %v7844
        %v7941 = vrot.slane %v7845, 5
        %v7942 = vrot.slane %v7846, 5
        %v7943 = vsel %vm1616, %v7941, %v7942
        %v7944 = vrot.slane %v7847, 5
        %v7945 = vsel %vm1616, %v7942, %v7944
        %v7946 = vrot.slane %v7848, 5
        %v7947 = vrot.slane %v7849, 5
        %v7948 = vsel %vm1616, %v7946, %v7947
        %v7949 = vrot.slane %v7850, 5
        %v7950 = vsel %vm1616, %v7947, %v7949
        %v7951 = vrot.slane %v7851, 5
        %v7952 = vrot.slane %v7852, 5
        %v7953 = vsel %vm1616, %v7951, %v7952
        %v7954 = vrot.slane %v7853, 5
        %v7955 = vsel %vm1616, %v7952, %v7954
        %v7956 = vrot.slane %v7854, 5
        %v7957 = vrot.slane %v7855, 5
        %v7958 = vsel %vm1616, %v7956, %v7957
        %v7959 = vrot.slane %v7856, 5
        %v7960 = vsel %vm1616, %v7957, %v7959
        %v7961 = vrot.slane %v7857, 5
        %v7962 = vrot.slane %v7858, 5
        %v7963 = vsel %vm1616, %v7961, %v7962
        %v7964 = vrot.slane %v7859, 5
        %v7965 = vsel %vm1616, %v7962, %v7964
        %v7966 = vrot.slane %v7860, 5
        %v7967 = vrot.slane %v7861, 5
        %v7968 = vsel %vm1616, %v7966, %v7967
        %v7969 = vrot.slane %v7862, 5
        %v7970 = vsel %vm1616, %v7967, %v7969
        %v7971 = vrot.slane %v7863, 5
        %v7972 = vrot.slane %v7864, 5
        %v7973 = vsel %vm1616, %v7971, %v7972
        %v7974 = vrot.slane %v7865, 5
        %v7975 = vsel %vm1616, %v7972, %v7974
        %v7976 = vrot.slane %v7866, 5
        %v7977 = vrot.slane %v7867, 5
        %v7978 = vsel %vm1616, %v7976, %v7977
        %v7979 = vrot.slane %v7868, 5
        %v7980 = vsel %vm1616, %v7977, %v7979
        %v7981 = vrot.slane %v7869, 5
        %v7982 = vrot.slane %v7870, 5
        %v7983 = vsel %vm1616, %v7981, %v7982
        %v7984 = vrot.slane %v7871, 5
        %v7985 = vsel %vm1616, %v7982, %v7984
        %v7986 = vrot.slane %v7872, 5
        %v7987 = vrot.slane %v7873, 5
        %v7988 = vsel %vm1616, %v7986, %v7987
        %v7989 = vrot.slane %v7874, 5
        %v7990 = vsel %vm1616, %v7987, %v7989
        %v7991 = vrot.slane %v7875, 5
        %v7992 = vrot.slane %v7876, 5
        %v7993 = vsel %vm1616, %v7991, %v7992
        %v7994 = vrot.slane %v7877, 5
        %v7995 = vsel %vm1616, %v7992, %v7994
        %v7996 = vrot.slane %v7878, 5
        %v7997 = vrot.slane %v7879, 5
        %v7998 = vsel %vm1616, %v7996, %v7997
        %v7999 = vrot.slane %v7880, 5
        %v8000 = vsel %vm1616, %v7997, %v7999
        %v8001 = vrot.slane %v7881, 5
        %v8002 = vrot.slane %v7882, 5
        %v8003 = vsel %vm1616, %v8001, %v8002
        %v8004 = vrot.slane %v7883, 5
        %v8005 = vsel %vm1616, %v8002, %v8004
        %v8006 = vrot.slane %v7884, 5
        %v8007 = vrot.slane %v7885, 5
        %v8008 = vsel %vm1616, %v8006, %v8007
        %v8009 = vrot.slane %v7886, 5
        %v8010 = vsel %vm1616, %v8007, %v8009
        %v8011 = vrot.slane %v7887, 5
        %v8012 = vrot.slane %v7888, 5
        %v8013 = vsel %vm1616, %v8011, %v8012
        %v8014 = vrot.slane %v7889, 5
        %v8015 = vsel %vm1616, %v8012, %v8014
        %v8016 = vrot.slane %v7890, 5
        %v8017 = vrot.slane %v7891, 5
        %v8018 = vsel %vm1616, %v8016, %v8017
        %v8019 = vrot.slane %v7892, 5
        %v8020 = vsel %vm1616, %v8017, %v8019
        %v8053 = vadd.f32 %v7809, %v7943
        %v8054 = vadd.f32 %v7810, %v7945
        %v8055 = vadd.f32 %v7811, %v7948
        %v8056 = vadd.f32 %v7812, %v7950
        %v8057 = vadd.f32 %v7813, %v7953
        %v8058 = vadd.f32 %v7814, %v7955
        %v8059 = vadd.f32 %v7815, %v7958
        %v8060 = vadd.f32 %v7816, %v7960
        %v8061 = vadd.f32 %v7817, %v7963
        %v8062 = vadd.f32 %v7818, %v7965
        %v8063 = vadd.f32 %v7819, %v7968
        %v8064 = vadd.f32 %v7820, %v7970
        %v8065 = vadd.f32 %v7821, %v7973
        %v8066 = vadd.f32 %v7822, %v7975
        %v8067 = vadd.f32 %v7823, %v7978
        %v8068 = vadd.f32 %v7824, %v7980
        %v8069 = vadd.f32 %v7825, %v7983
        %v8070 = vadd.f32 %v7826, %v7985
        %v8071 = vadd.f32 %v7827, %v7988
        %v8072 = vadd.f32 %v7828, %v7990
        %v8073 = vadd.f32 %v7829, %v7993
        %v8074 = vadd.f32 %v7830, %v7995
        %v8075 = vadd.f32 %v7831, %v7998
        %v8076 = vadd.f32 %v7832, %v8000
        %v8077 = vadd.f32 %v7833, %v8003
        %v8078 = vadd.f32 %v7834, %v8005
        %v8079 = vadd.f32 %v7835, %v8008
        %v8080 = vadd.f32 %v7836, %v8010
        %v8081 = vadd.f32 %v7837, %v8013
        %v8082 = vadd.f32 %v7838, %v8015
        %v8083 = vadd.f32 %v7839, %v8018
        %v8084 = vadd.f32 %v7840, %v8020
        %v8085 = vlaneseq
        %v8086 = vshrl.u32 %v8085, 7
        %v8087 = vsub.s32 6, %v8086
        %v8088 = vrot.slane %v410, %v8087
        %v8089 = vmul.f32 %v6749, %v8088
        %v8090 = vmul.f32 %v6750, %v8088
        %v8091 = vmul.f32 %v6751, %v8088
        %v8092 = vmul.f32 %v6752, %v8088
        %v8093 = vmul.f32 %v6753, %v8088
        %v8094 = vmul.f32 %v6754, %v8088
        %v8095 = vmul.f32 %v6755, %v8088
        %v8096 = vmul.f32 %v6756, %v8088
        %v8097 = vmul.f32 %v6757, %v8088
        %v8098 = vmul.f32 %v6758, %v8088
        %v8099 = vmul.f32 %v6759, %v8088
        %v8100 = vmul.f32 %v6760, %v8088
        %v8101 = vmul.f32 %v6761, %v8088
        %v8102 = vmul.f32 %v6762, %v8088
        %v8103 = vmul.f32 %v6763, %v8088
        %v8104 = vmul.f32 %v6764, %v8088
        %v8105 = vmul.f32 %v6765, %v8088
        %v8106 = vmul.f32 %v6766, %v8088
        %v8107 = vmul.f32 %v6767, %v8088
        %v8108 = vmul.f32 %v6768, %v8088
        %v8109 = vmul.f32 %v6769, %v8088
        %v8110 = vmul.f32 %v6770, %v8088
        %v8111 = vmul.f32 %v6771, %v8088
        %v8112 = vmul.f32 %v6772, %v8088
        %v8113 = vmul.f32 %v6773, %v8088
        %v8114 = vmul.f32 %v6774, %v8088
        %v8115 = vmul.f32 %v6775, %v8088
        %v8116 = vmul.f32 %v6776, %v8088
        %v8117 = vmul.f32 %v6777, %v8088
        %v8118 = vmul.f32 %v6778, %v8088
        %v8119 = vmul.f32 %v6779, %v8088
        %v8120 = vmul.f32 %v6780, %v8088
        %v8121 = vmul.f32 %v6781, %v8088
        %v8122 = vmul.f32 %v6782, %v8088
        %v8123 = vmul.f32 %v6783, %v8088
        %v8124 = vmul.f32 %v6784, %v8088
        %v8125 = vmul.f32 %v6785, %v8088
        %v8126 = vmul.f32 %v6786, %v8088
        %v8127 = vmul.f32 %v6787, %v8088
        %v8128 = vmul.f32 %v6788, %v8088
        %v8129 = vmul.f32 %v6789, %v8088
        %v8130 = vmul.f32 %v6790, %v8088
        %v8131 = vmul.f32 %v6791, %v8088
        %v8132 = vmul.f32 %v6792, %v8088
        %v8133 = vmul.f32 %v6793, %v8088
        %v8134 = vmul.f32 %v6794, %v8088
        %v8135 = vmul.f32 %v6795, %v8088
        %v8136 = vmul.f32 %v6796, %v8088
        %v8185 = vrot.slane %v8089, 6
        %v8186 = vrot.slane %v8090, 6
        %v8187 = vsel %vm1861, %v8185, %v8186
        %v8188 = vrot.slane %v8091, 6
        %v8189 = vsel %vm1861, %v8186, %v8188
        %v8190 = vrot.slane %v8092, 6
        %v8191 = vrot.slane %v8093, 6
        %v8192 = vsel %vm1861, %v8190, %v8191
        %v8193 = vrot.slane %v8094, 6
        %v8194 = vsel %vm1861, %v8191, %v8193
        %v8195 = vrot.slane %v8095, 6
        %v8196 = vrot.slane %v8096, 6
        %v8197 = vsel %vm1861, %v8195, %v8196
        %v8198 = vrot.slane %v8097, 6
        %v8199 = vsel %vm1861, %v8196, %v8198
        %v8200 = vrot.slane %v8098, 6
        %v8201 = vrot.slane %v8099, 6
        %v8202 = vsel %vm1861, %v8200, %v8201
        %v8203 = vrot.slane %v8100, 6
        %v8204 = vsel %vm1861, %v8201, %v8203
        %v8205 = vrot.slane %v8101, 6
        %v8206 = vrot.slane %v8102, 6
        %v8207 = vsel %vm1861, %v8205, %v8206
        %v8208 = vrot.slane %v8103, 6
        %v8209 = vsel %vm1861, %v8206, %v8208
        %v8210 = vrot.slane %v8104, 6
        %v8211 = vrot.slane %v8105, 6
        %v8212 = vsel %vm1861, %v8210, %v8211
        %v8213 = vrot.slane %v8106, 6
        %v8214 = vsel %vm1861, %v8211, %v8213
        %v8215 = vrot.slane %v8107, 6
        %v8216 = vrot.slane %v8108, 6
        %v8217 = vsel %vm1861, %v8215, %v8216
        %v8218 = vrot.slane %v8109, 6
        %v8219 = vsel %vm1861, %v8216, %v8218
        %v8220 = vrot.slane %v8110, 6
        %v8221 = vrot.slane %v8111, 6
        %v8222 = vsel %vm1861, %v8220, %v8221
        %v8223 = vrot.slane %v8112, 6
        %v8224 = vsel %vm1861, %v8221, %v8223
        %v8225 = vrot.slane %v8113, 6
        %v8226 = vrot.slane %v8114, 6
        %v8227 = vsel %vm1861, %v8225, %v8226
        %v8228 = vrot.slane %v8115, 6
        %v8229 = vsel %vm1861, %v8226, %v8228
        %v8230 = vrot.slane %v8116, 6
        %v8231 = vrot.slane %v8117, 6
        %v8232 = vsel %vm1861, %v8230, %v8231
        %v8233 = vrot.slane %v8118, 6
        %v8234 = vsel %vm1861, %v8231, %v8233
        %v8235 = vrot.slane %v8119, 6
        %v8236 = vrot.slane %v8120, 6
        %v8237 = vsel %vm1861, %v8235, %v8236
        %v8238 = vrot.slane %v8121, 6
        %v8239 = vsel %vm1861, %v8236, %v8238
        %v8240 = vrot.slane %v8122, 6
        %v8241 = vrot.slane %v8123, 6
        %v8242 = vsel %vm1861, %v8240, %v8241
        %v8243 = vrot.slane %v8124, 6
        %v8244 = vsel %vm1861, %v8241, %v8243
        %v8245 = vrot.slane %v8125, 6
        %v8246 = vrot.slane %v8126, 6
        %v8247 = vsel %vm1861, %v8245, %v8246
        %v8248 = vrot.slane %v8127, 6
        %v8249 = vsel %vm1861, %v8246, %v8248
        %v8250 = vrot.slane %v8128, 6
        %v8251 = vrot.slane %v8129, 6
        %v8252 = vsel %vm1861, %v8250, %v8251
        %v8253 = vrot.slane %v8130, 6
        %v8254 = vsel %vm1861, %v8251, %v8253
        %v8255 = vrot.slane %v8131, 6
        %v8256 = vrot.slane %v8132, 6
        %v8257 = vsel %vm1861, %v8255, %v8256
        %v8258 = vrot.slane %v8133, 6
        %v8259 = vsel %vm1861, %v8256, %v8258
        %v8260 = vrot.slane %v8134, 6
        %v8261 = vrot.slane %v8135, 6
        %v8262 = vsel %vm1861, %v8260, %v8261
        %v8263 = vrot.slane %v8136, 6
        %v8264 = vsel %vm1861, %v8261, %v8263
        %v8297 = vadd.f32 %v8053, %v8187
        %v8298 = vadd.f32 %v8054, %v8189
        %v8299 = vadd.f32 %v8055, %v8192
        %v8300 = vadd.f32 %v8056, %v8194
        %v8301 = vadd.f32 %v8057, %v8197
        %v8302 = vadd.f32 %v8058, %v8199
        %v8303 = vadd.f32 %v8059, %v8202
        %v8304 = vadd.f32 %v8060, %v8204
        %v8305 = vadd.f32 %v8061, %v8207
        %v8306 = vadd.f32 %v8062, %v8209
        %v8307 = vadd.f32 %v8063, %v8212
        %v8308 = vadd.f32 %v8064, %v8214
        %v8309 = vadd.f32 %v8065, %v8217
        %v8310 = vadd.f32 %v8066, %v8219
        %v8311 = vadd.f32 %v8067, %v8222
        %v8312 = vadd.f32 %v8068, %v8224
        %v8313 = vadd.f32 %v8069, %v8227
        %v8314 = vadd.f32 %v8070, %v8229
        %v8315 = vadd.f32 %v8071, %v8232
        %v8316 = vadd.f32 %v8072, %v8234
        %v8317 = vadd.f32 %v8073, %v8237
        %v8318 = vadd.f32 %v8074, %v8239
        %v8319 = vadd.f32 %v8075, %v8242
        %v8320 = vadd.f32 %v8076, %v8244
        %v8321 = vadd.f32 %v8077, %v8247
        %v8322 = vadd.f32 %v8078, %v8249
        %v8323 = vadd.f32 %v8079, %v8252
        %v8324 = vadd.f32 %v8080, %v8254
        %v8325 = vadd.f32 %v8081, %v8257
        %v8326 = vadd.f32 %v8082, %v8259
        %v8327 = vadd.f32 %v8083, %v8262
        %v8328 = vadd.f32 %v8084, %v8264
        %s8329 = scalar_lea.vmem [#allocation2], 120
        %v8330 = vld [vmem:[%s8329] sm:$0xff]
        %v8331 = vld [vmem:[%s8329 + $0x8] sm:$0xff]
        %v8332 = vld [vmem:[%s8329 + $0x10] sm:$0x3f]
        %v8333 = vld [vmem:[%s8329 + $0x18] sm:$0xff]
        %v8334 = vld [vmem:[%s8329 + $0x20] sm:$0xff]
        %v8335 = vld [vmem:[%s8329 + $0x28] sm:$0x3f]
        %v8336 = vld [vmem:[%s8329 + $0x30] sm:$0xff]
        %v8337 = vld [vmem:[%s8329 + $0x38] sm:$0xff]
        %v8338 = vld [vmem:[%s8329 + $0x40] sm:$0x3f]
        %v8339 = vld [vmem:[%s8329 + $0x48] sm:$0xff]
        %v8340 = vld [vmem:[%s8329 + $0x50] sm:$0xff]
        %v8341 = vld [vmem:[%s8329 + $0x58] sm:$0x3f]
        %v8342 = vld [vmem:[%s8329 + $0x60] sm:$0xff]
        %v8343 = vld [vmem:[%s8329 + $0x68] sm:$0xff]
        %v8344 = vld [vmem:[%s8329 + $0x70] sm:$0x3f]
        %v8345 = vld [vmem:[%s8329 + $0x78] sm:$0xff]
        %v8346 = vld [vmem:[%s8329 + $0x80] sm:$0xff]
        %v8347 = vld [vmem:[%s8329 + $0x88] sm:$0x3f]
        %v8348 = vld [vmem:[%s8329 + $0x90] sm:$0xff]
        %v8349 = vld [vmem:[%s8329 + $0x98] sm:$0xff]
        %v8350 = vld [vmem:[%s8329 + $0xa0] sm:$0x3f]
        %v8351 = vld [vmem:[%s8329 + $0xa8] sm:$0xff]
        %v8352 = vld [vmem:[%s8329 + $0xb0] sm:$0xff]
        %v8353 = vld [vmem:[%s8329 + $0xb8] sm:$0x3f]
        %v8354 = vld [vmem:[%s8329 + $0xc0] sm:$0xff]
        %v8355 = vld [vmem:[%s8329 + $0xc8] sm:$0xff]
        %v8356 = vld [vmem:[%s8329 + $0xd0] sm:$0x3f]
        %v8357 = vld [vmem:[%s8329 + $0xd8] sm:$0xff]
        %v8358 = vld [vmem:[%s8329 + $0xe0] sm:$0xff]
        %v8359 = vld [vmem:[%s8329 + $0xe8] sm:$0x3f]
        %v8360 = vld [vmem:[%s8329 + $0xf0] sm:$0xff]
        %v8361 = vld [vmem:[%s8329 + $0xf8] sm:$0xff]
        %v8362 = vld [vmem:[%s8329 + $0x100] sm:$0x3f]
        %v8363 = vld [vmem:[%s8329 + $0x108] sm:$0xff]
        %v8364 = vld [vmem:[%s8329 + $0x110] sm:$0xff]
        %v8365 = vld [vmem:[%s8329 + $0x118] sm:$0x3f]
        %v8366 = vld [vmem:[%s8329 + $0x120] sm:$0xff]
        %v8367 = vld [vmem:[%s8329 + $0x128] sm:$0xff]
        %v8368 = vld [vmem:[%s8329 + $0x130] sm:$0x3f]
        %v8369 = vld [vmem:[%s8329 + $0x138] sm:$0xff]
        %v8370 = vld [vmem:[%s8329 + $0x140] sm:$0xff]
        %v8371 = vld [vmem:[%s8329 + $0x148] sm:$0x3f]
        %v8372 = vld [vmem:[%s8329 + $0x150] sm:$0xff]
        %v8373 = vld [vmem:[%s8329 + $0x158] sm:$0xff]
        %v8374 = vld [vmem:[%s8329 + $0x160] sm:$0x3f]
        %v8375 = vld [vmem:[%s8329 + $0x168] sm:$0xff]
        %v8376 = vld [vmem:[%s8329 + $0x170] sm:$0xff]
        %v8377 = vld [vmem:[%s8329 + $0x178] sm:$0x3f]
        %v8378 = vlaneseq
        %v8379 = vshrl.u32 %v8378, 7
        %v8380 = vsub.s32 0, %v8379
        %v8381 = vrot.slane %v411, %v8380
        %v8382 = vmul.f32 %v8330, %v8381
        %v8383 = vmul.f32 %v8331, %v8381
        %v8384 = vmul.f32 %v8333, %v8381
        %v8385 = vmul.f32 %v8334, %v8381
        %v8386 = vmul.f32 %v8336, %v8381
        %v8387 = vmul.f32 %v8337, %v8381
        %v8388 = vmul.f32 %v8339, %v8381
        %v8389 = vmul.f32 %v8340, %v8381
        %v8390 = vmul.f32 %v8342, %v8381
        %v8391 = vmul.f32 %v8343, %v8381
        %v8392 = vmul.f32 %v8345, %v8381
        %v8393 = vmul.f32 %v8346, %v8381
        %v8394 = vmul.f32 %v8348, %v8381
        %v8395 = vmul.f32 %v8349, %v8381
        %v8396 = vmul.f32 %v8351, %v8381
        %v8397 = vmul.f32 %v8352, %v8381
        %v8398 = vmul.f32 %v8354, %v8381
        %v8399 = vmul.f32 %v8355, %v8381
        %v8400 = vmul.f32 %v8357, %v8381
        %v8401 = vmul.f32 %v8358, %v8381
        %v8402 = vmul.f32 %v8360, %v8381
        %v8403 = vmul.f32 %v8361, %v8381
        %v8404 = vmul.f32 %v8363, %v8381
        %v8405 = vmul.f32 %v8364, %v8381
        %v8406 = vmul.f32 %v8366, %v8381
        %v8407 = vmul.f32 %v8367, %v8381
        %v8408 = vmul.f32 %v8369, %v8381
        %v8409 = vmul.f32 %v8370, %v8381
        %v8410 = vmul.f32 %v8372, %v8381
        %v8411 = vmul.f32 %v8373, %v8381
        %v8412 = vmul.f32 %v8375, %v8381
        %v8413 = vmul.f32 %v8376, %v8381
        %v8414 = vadd.f32 %v8297, %v8382
        %v8415 = vadd.f32 %v8298, %v8383
        %v8416 = vadd.f32 %v8299, %v8384
        %v8417 = vadd.f32 %v8300, %v8385
        %v8418 = vadd.f32 %v8301, %v8386
        %v8419 = vadd.f32 %v8302, %v8387
        %v8420 = vadd.f32 %v8303, %v8388
        %v8421 = vadd.f32 %v8304, %v8389
        %v8422 = vadd.f32 %v8305, %v8390
        %v8423 = vadd.f32 %v8306, %v8391
        %v8424 = vadd.f32 %v8307, %v8392
        %v8425 = vadd.f32 %v8308, %v8393
        %v8426 = vadd.f32 %v8309, %v8394
        %v8427 = vadd.f32 %v8310, %v8395
        %v8428 = vadd.f32 %v8311, %v8396
        %v8429 = vadd.f32 %v8312, %v8397
        %v8430 = vadd.f32 %v8313, %v8398
        %v8431 = vadd.f32 %v8314, %v8399
        %v8432 = vadd.f32 %v8315, %v8400
        %v8433 = vadd.f32 %v8316, %v8401
        %v8434 = vadd.f32 %v8317, %v8402
        %v8435 = vadd.f32 %v8318, %v8403
        %v8436 = vadd.f32 %v8319, %v8404
        %v8437 = vadd.f32 %v8320, %v8405
        %v8438 = vadd.f32 %v8321, %v8406
        %v8439 = vadd.f32 %v8322, %v8407
        %v8440 = vadd.f32 %v8323, %v8408
        %v8441 = vadd.f32 %v8324, %v8409
        %v8442 = vadd.f32 %v8325, %v8410
        %v8443 = vadd.f32 %v8326, %v8411
        %v8444 = vadd.f32 %v8327, %v8412
        %v8445 = vadd.f32 %v8328, %v8413
        %v8446 = vlaneseq
        %v8447 = vshrl.u32 %v8446, 7
        %v8448 = vsub.s32 1, %v8447
        %v8449 = vrot.slane %v411, %v8448
        %v8450 = vmul.f32 %v8330, %v8449
        %v8451 = vmul.f32 %v8331, %v8449
        %v8452 = vmul.f32 %v8332, %v8449
        %v8453 = vmul.f32 %v8333, %v8449
        %v8454 = vmul.f32 %v8334, %v8449
        %v8455 = vmul.f32 %v8335, %v8449
        %v8456 = vmul.f32 %v8336, %v8449
        %v8457 = vmul.f32 %v8337, %v8449
        %v8458 = vmul.f32 %v8338, %v8449
        %v8459 = vmul.f32 %v8339, %v8449
        %v8460 = vmul.f32 %v8340, %v8449
        %v8461 = vmul.f32 %v8341, %v8449
        %v8462 = vmul.f32 %v8342, %v8449
        %v8463 = vmul.f32 %v8343, %v8449
        %v8464 = vmul.f32 %v8344, %v8449
        %v8465 = vmul.f32 %v8345, %v8449
        %v8466 = vmul.f32 %v8346, %v8449
        %v8467 = vmul.f32 %v8347, %v8449
        %v8468 = vmul.f32 %v8348, %v8449
        %v8469 = vmul.f32 %v8349, %v8449
        %v8470 = vmul.f32 %v8350, %v8449
        %v8471 = vmul.f32 %v8351, %v8449
        %v8472 = vmul.f32 %v8352, %v8449
        %v8473 = vmul.f32 %v8353, %v8449
        %v8474 = vmul.f32 %v8354, %v8449
        %v8475 = vmul.f32 %v8355, %v8449
        %v8476 = vmul.f32 %v8356, %v8449
        %v8477 = vmul.f32 %v8357, %v8449
        %v8478 = vmul.f32 %v8358, %v8449
        %v8479 = vmul.f32 %v8359, %v8449
        %v8480 = vmul.f32 %v8360, %v8449
        %v8481 = vmul.f32 %v8361, %v8449
        %v8482 = vmul.f32 %v8362, %v8449
        %v8483 = vmul.f32 %v8363, %v8449
        %v8484 = vmul.f32 %v8364, %v8449
        %v8485 = vmul.f32 %v8365, %v8449
        %v8486 = vmul.f32 %v8366, %v8449
        %v8487 = vmul.f32 %v8367, %v8449
        %v8488 = vmul.f32 %v8368, %v8449
        %v8489 = vmul.f32 %v8369, %v8449
        %v8490 = vmul.f32 %v8370, %v8449
        %v8491 = vmul.f32 %v8371, %v8449
        %v8492 = vmul.f32 %v8372, %v8449
        %v8493 = vmul.f32 %v8373, %v8449
        %v8494 = vmul.f32 %v8374, %v8449
        %v8495 = vmul.f32 %v8375, %v8449
        %v8496 = vmul.f32 %v8376, %v8449
        %v8497 = vmul.f32 %v8377, %v8449
        %v8546 = vrot.slane %v8450, 1
        %v8547 = vrot.slane %v8451, 1
        %v8548 = vsel %vm636, %v8546, %v8547
        %v8549 = vrot.slane %v8452, 1
        %v8550 = vsel %vm636, %v8547, %v8549
        %v8551 = vrot.slane %v8453, 1
        %v8552 = vrot.slane %v8454, 1
        %v8553 = vsel %vm636, %v8551, %v8552
        %v8554 = vrot.slane %v8455, 1
        %v8555 = vsel %vm636, %v8552, %v8554
        %v8556 = vrot.slane %v8456, 1
        %v8557 = vrot.slane %v8457, 1
        %v8558 = vsel %vm636, %v8556, %v8557
        %v8559 = vrot.slane %v8458, 1
        %v8560 = vsel %vm636, %v8557, %v8559
        %v8561 = vrot.slane %v8459, 1
        %v8562 = vrot.slane %v8460, 1
        %v8563 = vsel %vm636, %v8561, %v8562
        %v8564 = vrot.slane %v8461, 1
        %v8565 = vsel %vm636, %v8562, %v8564
        %v8566 = vrot.slane %v8462, 1
        %v8567 = vrot.slane %v8463, 1
        %v8568 = vsel %vm636, %v8566, %v8567
        %v8569 = vrot.slane %v8464, 1
        %v8570 = vsel %vm636, %v8567, %v8569
        %v8571 = vrot.slane %v8465, 1
        %v8572 = vrot.slane %v8466, 1
        %v8573 = vsel %vm636, %v8571, %v8572
        %v8574 = vrot.slane %v8467, 1
        %v8575 = vsel %vm636, %v8572, %v8574
        %v8576 = vrot.slane %v8468, 1
        %v8577 = vrot.slane %v8469, 1
        %v8578 = vsel %vm636, %v8576, %v8577
        %v8579 = vrot.slane %v8470, 1
        %v8580 = vsel %vm636, %v8577, %v8579
        %v8581 = vrot.slane %v8471, 1
        %v8582 = vrot.slane %v8472, 1
        %v8583 = vsel %vm636, %v8581, %v8582
        %v8584 = vrot.slane %v8473, 1
        %v8585 = vsel %vm636, %v8582, %v8584
        %v8586 = vrot.slane %v8474, 1
        %v8587 = vrot.slane %v8475, 1
        %v8588 = vsel %vm636, %v8586, %v8587
        %v8589 = vrot.slane %v8476, 1
        %v8590 = vsel %vm636, %v8587, %v8589
        %v8591 = vrot.slane %v8477, 1
        %v8592 = vrot.slane %v8478, 1
        %v8593 = vsel %vm636, %v8591, %v8592
        %v8594 = vrot.slane %v8479, 1
        %v8595 = vsel %vm636, %v8592, %v8594
        %v8596 = vrot.slane %v8480, 1
        %v8597 = vrot.slane %v8481, 1
        %v8598 = vsel %vm636, %v8596, %v8597
        %v8599 = vrot.slane %v8482, 1
        %v8600 = vsel %vm636, %v8597, %v8599
        %v8601 = vrot.slane %v8483, 1
        %v8602 = vrot.slane %v8484, 1
        %v8603 = vsel %vm636, %v8601, %v8602
        %v8604 = vrot.slane %v8485, 1
        %v8605 = vsel %vm636, %v8602, %v8604
        %v8606 = vrot.slane %v8486, 1
        %v8607 = vrot.slane %v8487, 1
        %v8608 = vsel %vm636, %v8606, %v8607
        %v8609 = vrot.slane %v8488, 1
        %v8610 = vsel %vm636, %v8607, %v8609
        %v8611 = vrot.slane %v8489, 1
        %v8612 = vrot.slane %v8490, 1
        %v8613 = vsel %vm636, %v8611, %v8612
        %v8614 = vrot.slane %v8491, 1
        %v8615 = vsel %vm636, %v8612, %v8614
        %v8616 = vrot.slane %v8492, 1
        %v8617 = vrot.slane %v8493, 1
        %v8618 = vsel %vm636, %v8616, %v8617
        %v8619 = vrot.slane %v8494, 1
        %v8620 = vsel %vm636, %v8617, %v8619
        %v8621 = vrot.slane %v8495, 1
        %v8622 = vrot.slane %v8496, 1
        %v8623 = vsel %vm636, %v8621, %v8622
        %v8624 = vrot.slane %v8497, 1
        %v8625 = vsel %vm636, %v8622, %v8624
        %v8658 = vadd.f32 %v8414, %v8548
        %v8659 = vadd.f32 %v8415, %v8550
        %v8660 = vadd.f32 %v8416, %v8553
        %v8661 = vadd.f32 %v8417, %v8555
        %v8662 = vadd.f32 %v8418, %v8558
        %v8663 = vadd.f32 %v8419, %v8560
        %v8664 = vadd.f32 %v8420, %v8563
        %v8665 = vadd.f32 %v8421, %v8565
        %v8666 = vadd.f32 %v8422, %v8568
        %v8667 = vadd.f32 %v8423, %v8570
        %v8668 = vadd.f32 %v8424, %v8573
        %v8669 = vadd.f32 %v8425, %v8575
        %v8670 = vadd.f32 %v8426, %v8578
        %v8671 = vadd.f32 %v8427, %v8580
        %v8672 = vadd.f32 %v8428, %v8583
        %v8673 = vadd.f32 %v8429, %v8585
        %v8674 = vadd.f32 %v8430, %v8588
        %v8675 = vadd.f32 %v8431, %v8590
        %v8676 = vadd.f32 %v8432, %v8593
        %v8677 = vadd.f32 %v8433, %v8595
        %v8678 = vadd.f32 %v8434, %v8598
        %v8679 = vadd.f32 %v8435, %v8600
        %v8680 = vadd.f32 %v8436, %v8603
        %v8681 = vadd.f32 %v8437, %v8605
        %v8682 = vadd.f32 %v8438, %v8608
        %v8683 = vadd.f32 %v8439, %v8610
        %v8684 = vadd.f32 %v8440, %v8613
        %v8685 = vadd.f32 %v8441, %v8615
        %v8686 = vadd.f32 %v8442, %v8618
        %v8687 = vadd.f32 %v8443, %v8620
        %v8688 = vadd.f32 %v8444, %v8623
        %v8689 = vadd.f32 %v8445, %v8625
        %v8690 = vlaneseq
        %v8691 = vshrl.u32 %v8690, 7
        %v8692 = vsub.s32 2, %v8691
        %v8693 = vrot.slane %v411, %v8692
        %v8694 = vmul.f32 %v8330, %v8693
        %v8695 = vmul.f32 %v8331, %v8693
        %v8696 = vmul.f32 %v8332, %v8693
        %v8697 = vmul.f32 %v8333, %v8693
        %v8698 = vmul.f32 %v8334, %v8693
        %v8699 = vmul.f32 %v8335, %v8693
        %v8700 = vmul.f32 %v8336, %v8693
        %v8701 = vmul.f32 %v8337, %v8693
        %v8702 = vmul.f32 %v8338, %v8693
        %v8703 = vmul.f32 %v8339, %v8693
        %v8704 = vmul.f32 %v8340, %v8693
        %v8705 = vmul.f32 %v8341, %v8693
        %v8706 = vmul.f32 %v8342, %v8693
        %v8707 = vmul.f32 %v8343, %v8693
        %v8708 = vmul.f32 %v8344, %v8693
        %v8709 = vmul.f32 %v8345, %v8693
        %v8710 = vmul.f32 %v8346, %v8693
        %v8711 = vmul.f32 %v8347, %v8693
        %v8712 = vmul.f32 %v8348, %v8693
        %v8713 = vmul.f32 %v8349, %v8693
        %v8714 = vmul.f32 %v8350, %v8693
        %v8715 = vmul.f32 %v8351, %v8693
        %v8716 = vmul.f32 %v8352, %v8693
        %v8717 = vmul.f32 %v8353, %v8693
        %v8718 = vmul.f32 %v8354, %v8693
        %v8719 = vmul.f32 %v8355, %v8693
        %v8720 = vmul.f32 %v8356, %v8693
        %v8721 = vmul.f32 %v8357, %v8693
        %v8722 = vmul.f32 %v8358, %v8693
        %v8723 = vmul.f32 %v8359, %v8693
        %v8724 = vmul.f32 %v8360, %v8693
        %v8725 = vmul.f32 %v8361, %v8693
        %v8726 = vmul.f32 %v8362, %v8693
        %v8727 = vmul.f32 %v8363, %v8693
        %v8728 = vmul.f32 %v8364, %v8693
        %v8729 = vmul.f32 %v8365, %v8693
        %v8730 = vmul.f32 %v8366, %v8693
        %v8731 = vmul.f32 %v8367, %v8693
        %v8732 = vmul.f32 %v8368, %v8693
        %v8733 = vmul.f32 %v8369, %v8693
        %v8734 = vmul.f32 %v8370, %v8693
        %v8735 = vmul.f32 %v8371, %v8693
        %v8736 = vmul.f32 %v8372, %v8693
        %v8737 = vmul.f32 %v8373, %v8693
        %v8738 = vmul.f32 %v8374, %v8693
        %v8739 = vmul.f32 %v8375, %v8693
        %v8740 = vmul.f32 %v8376, %v8693
        %v8741 = vmul.f32 %v8377, %v8693
        %v8790 = vrot.slane %v8694, 2
        %v8791 = vrot.slane %v8695, 2
        %v8792 = vsel %vm881, %v8790, %v8791
        %v8793 = vrot.slane %v8696, 2
        %v8794 = vsel %vm881, %v8791, %v8793
        %v8795 = vrot.slane %v8697, 2
        %v8796 = vrot.slane %v8698, 2
        %v8797 = vsel %vm881, %v8795, %v8796
        %v8798 = vrot.slane %v8699, 2
        %v8799 = vsel %vm881, %v8796, %v8798
        %v8800 = vrot.slane %v8700, 2
        %v8801 = vrot.slane %v8701, 2
        %v8802 = vsel %vm881, %v8800, %v8801
        %v8803 = vrot.slane %v8702, 2
        %v8804 = vsel %vm881, %v8801, %v8803
        %v8805 = vrot.slane %v8703, 2
        %v8806 = vrot.slane %v8704, 2
        %v8807 = vsel %vm881, %v8805, %v8806
        %v8808 = vrot.slane %v8705, 2
        %v8809 = vsel %vm881, %v8806, %v8808
        %v8810 = vrot.slane %v8706, 2
        %v8811 = vrot.slane %v8707, 2
        %v8812 = vsel %vm881, %v8810, %v8811
        %v8813 = vrot.slane %v8708, 2
        %v8814 = vsel %vm881, %v8811, %v8813
        %v8815 = vrot.slane %v8709, 2
        %v8816 = vrot.slane %v8710, 2
        %v8817 = vsel %vm881, %v8815, %v8816
        %v8818 = vrot.slane %v8711, 2
        %v8819 = vsel %vm881, %v8816, %v8818
        %v8820 = vrot.slane %v8712, 2
        %v8821 = vrot.slane %v8713, 2
        %v8822 = vsel %vm881, %v8820, %v8821
        %v8823 = vrot.slane %v8714, 2
        %v8824 = vsel %vm881, %v8821, %v8823
        %v8825 = vrot.slane %v8715, 2
        %v8826 = vrot.slane %v8716, 2
        %v8827 = vsel %vm881, %v8825, %v8826
        %v8828 = vrot.slane %v8717, 2
        %v8829 = vsel %vm881, %v8826, %v8828
        %v8830 = vrot.slane %v8718, 2
        %v8831 = vrot.slane %v8719, 2
        %v8832 = vsel %vm881, %v8830, %v8831
        %v8833 = vrot.slane %v8720, 2
        %v8834 = vsel %vm881, %v8831, %v8833
        %v8835 = vrot.slane %v8721, 2
        %v8836 = vrot.slane %v8722, 2
        %v8837 = vsel %vm881, %v8835, %v8836
        %v8838 = vrot.slane %v8723, 2
        %v8839 = vsel %vm881, %v8836, %v8838
        %v8840 = vrot.slane %v8724, 2
        %v8841 = vrot.slane %v8725, 2
        %v8842 = vsel %vm881, %v8840, %v8841
        %v8843 = vrot.slane %v8726, 2
        %v8844 = vsel %vm881, %v8841, %v8843
        %v8845 = vrot.slane %v8727, 2
        %v8846 = vrot.slane %v8728, 2
        %v8847 = vsel %vm881, %v8845, %v8846
        %v8848 = vrot.slane %v8729, 2
        %v8849 = vsel %vm881, %v8846, %v8848
        %v8850 = vrot.slane %v8730, 2
        %v8851 = vrot.slane %v8731, 2
        %v8852 = vsel %vm881, %v8850, %v8851
        %v8853 = vrot.slane %v8732, 2
        %v8854 = vsel %vm881, %v8851, %v8853
        %v8855 = vrot.slane %v8733, 2
        %v8856 = vrot.slane %v8734, 2
        %v8857 = vsel %vm881, %v8855, %v8856
        %v8858 = vrot.slane %v8735, 2
        %v8859 = vsel %vm881, %v8856, %v8858
        %v8860 = vrot.slane %v8736, 2
        %v8861 = vrot.slane %v8737, 2
        %v8862 = vsel %vm881, %v8860, %v8861
        %v8863 = vrot.slane %v8738, 2
        %v8864 = vsel %vm881, %v8861, %v8863
        %v8865 = vrot.slane %v8739, 2
        %v8866 = vrot.slane %v8740, 2
        %v8867 = vsel %vm881, %v8865, %v8866
        %v8868 = vrot.slane %v8741, 2
        %v8869 = vsel %vm881, %v8866, %v8868
        %v8902 = vadd.f32 %v8658, %v8792
        %v8903 = vadd.f32 %v8659, %v8794
        %v8904 = vadd.f32 %v8660, %v8797
        %v8905 = vadd.f32 %v8661, %v8799
        %v8906 = vadd.f32 %v8662, %v8802
        %v8907 = vadd.f32 %v8663, %v8804
        %v8908 = vadd.f32 %v8664, %v8807
        %v8909 = vadd.f32 %v8665, %v8809
        %v8910 = vadd.f32 %v8666, %v8812
        %v8911 = vadd.f32 %v8667, %v8814
        %v8912 = vadd.f32 %v8668, %v8817
        %v8913 = vadd.f32 %v8669, %v8819
        %v8914 = vadd.f32 %v8670, %v8822
        %v8915 = vadd.f32 %v8671, %v8824
        %v8916 = vadd.f32 %v8672, %v8827
        %v8917 = vadd.f32 %v8673, %v8829
        %v8918 = vadd.f32 %v8674, %v8832
        %v8919 = vadd.f32 %v8675, %v8834
        %v8920 = vadd.f32 %v8676, %v8837
        %v8921 = vadd.f32 %v8677, %v8839
        %v8922 = vadd.f32 %v8678, %v8842
        %v8923 = vadd.f32 %v8679, %v8844
        %v8924 = vadd.f32 %v8680, %v8847
        %v8925 = vadd.f32 %v8681, %v8849
        %v8926 = vadd.f32 %v8682, %v8852
        %v8927 = vadd.f32 %v8683, %v8854
        %v8928 = vadd.f32 %v8684, %v8857
        %v8929 = vadd.f32 %v8685, %v8859
        %v8930 = vadd.f32 %v8686, %v8862
        %v8931 = vadd.f32 %v8687, %v8864
        %v8932 = vadd.f32 %v8688, %v8867
        %v8933 = vadd.f32 %v8689, %v8869
        %v8934 = vlaneseq
        %v8935 = vshrl.u32 %v8934, 7
        %v8936 = vsub.s32 3, %v8935
        %v8937 = vrot.slane %v411, %v8936
        %v8938 = vmul.f32 %v8330, %v8937
        %v8939 = vmul.f32 %v8331, %v8937
        %v8940 = vmul.f32 %v8332, %v8937
        %v8941 = vmul.f32 %v8333, %v8937
        %v8942 = vmul.f32 %v8334, %v8937
        %v8943 = vmul.f32 %v8335, %v8937
        %v8944 = vmul.f32 %v8336, %v8937
        %v8945 = vmul.f32 %v8337, %v8937
        %v8946 = vmul.f32 %v8338, %v8937
        %v8947 = vmul.f32 %v8339, %v8937
        %v8948 = vmul.f32 %v8340, %v8937
        %v8949 = vmul.f32 %v8341, %v8937
        %v8950 = vmul.f32 %v8342, %v8937
        %v8951 = vmul.f32 %v8343, %v8937
        %v8952 = vmul.f32 %v8344, %v8937
        %v8953 = vmul.f32 %v8345, %v8937
        %v8954 = vmul.f32 %v8346, %v8937
        %v8955 = vmul.f32 %v8347, %v8937
        %v8956 = vmul.f32 %v8348, %v8937
        %v8957 = vmul.f32 %v8349, %v8937
        %v8958 = vmul.f32 %v8350, %v8937
        %v8959 = vmul.f32 %v8351, %v8937
        %v8960 = vmul.f32 %v8352, %v8937
        %v8961 = vmul.f32 %v8353, %v8937
        %v8962 = vmul.f32 %v8354, %v8937
        %v8963 = vmul.f32 %v8355, %v8937
        %v8964 = vmul.f32 %v8356, %v8937
        %v8965 = vmul.f32 %v8357, %v8937
        %v8966 = vmul.f32 %v8358, %v8937
        %v8967 = vmul.f32 %v8359, %v8937
        %v8968 = vmul.f32 %v8360, %v8937
        %v8969 = vmul.f32 %v8361, %v8937
        %v8970 = vmul.f32 %v8362, %v8937
        %v8971 = vmul.f32 %v8363, %v8937
        %v8972 = vmul.f32 %v8364, %v8937
        %v8973 = vmul.f32 %v8365, %v8937
        %v8974 = vmul.f32 %v8366, %v8937
        %v8975 = vmul.f32 %v8367, %v8937
        %v8976 = vmul.f32 %v8368, %v8937
        %v8977 = vmul.f32 %v8369, %v8937
        %v8978 = vmul.f32 %v8370, %v8937
        %v8979 = vmul.f32 %v8371, %v8937
        %v8980 = vmul.f32 %v8372, %v8937
        %v8981 = vmul.f32 %v8373, %v8937
        %v8982 = vmul.f32 %v8374, %v8937
        %v8983 = vmul.f32 %v8375, %v8937
        %v8984 = vmul.f32 %v8376, %v8937
        %v8985 = vmul.f32 %v8377, %v8937
        %v9034 = vrot.slane %v8938, 3
        %v9035 = vrot.slane %v8939, 3
        %v9036 = vsel %vm1126, %v9034, %v9035
        %v9037 = vrot.slane %v8940, 3
        %v9038 = vsel %vm1126, %v9035, %v9037
        %v9039 = vrot.slane %v8941, 3
        %v9040 = vrot.slane %v8942, 3
        %v9041 = vsel %vm1126, %v9039, %v9040
        %v9042 = vrot.slane %v8943, 3
        %v9043 = vsel %vm1126, %v9040, %v9042
        %v9044 = vrot.slane %v8944, 3
        %v9045 = vrot.slane %v8945, 3
        %v9046 = vsel %vm1126, %v9044, %v9045
        %v9047 = vrot.slane %v8946, 3
        %v9048 = vsel %vm1126, %v9045, %v9047
        %v9049 = vrot.slane %v8947, 3
        %v9050 = vrot.slane %v8948, 3
        %v9051 = vsel %vm1126, %v9049, %v9050
        %v9052 = vrot.slane %v8949, 3
        %v9053 = vsel %vm1126, %v9050, %v9052
        %v9054 = vrot.slane %v8950, 3
        %v9055 = vrot.slane %v8951, 3
        %v9056 = vsel %vm1126, %v9054, %v9055
        %v9057 = vrot.slane %v8952, 3
        %v9058 = vsel %vm1126, %v9055, %v9057
        %v9059 = vrot.slane %v8953, 3
        %v9060 = vrot.slane %v8954, 3
        %v9061 = vsel %vm1126, %v9059, %v9060
        %v9062 = vrot.slane %v8955, 3
        %v9063 = vsel %vm1126, %v9060, %v9062
        %v9064 = vrot.slane %v8956, 3
        %v9065 = vrot.slane %v8957, 3
        %v9066 = vsel %vm1126, %v9064, %v9065
        %v9067 = vrot.slane %v8958, 3
        %v9068 = vsel %vm1126, %v9065, %v9067
        %v9069 = vrot.slane %v8959, 3
        %v9070 = vrot.slane %v8960, 3
        %v9071 = vsel %vm1126, %v9069, %v9070
        %v9072 = vrot.slane %v8961, 3
        %v9073 = vsel %vm1126, %v9070, %v9072
        %v9074 = vrot.slane %v8962, 3
        %v9075 = vrot.slane %v8963, 3
        %v9076 = vsel %vm1126, %v9074, %v9075
        %v9077 = vrot.slane %v8964, 3
        %v9078 = vsel %vm1126, %v9075, %v9077
        %v9079 = vrot.slane %v8965, 3
        %v9080 = vrot.slane %v8966, 3
        %v9081 = vsel %vm1126, %v9079, %v9080
        %v9082 = vrot.slane %v8967, 3
        %v9083 = vsel %vm1126, %v9080, %v9082
        %v9084 = vrot.slane %v8968, 3
        %v9085 = vrot.slane %v8969, 3
        %v9086 = vsel %vm1126, %v9084, %v9085
        %v9087 = vrot.slane %v8970, 3
        %v9088 = vsel %vm1126, %v9085, %v9087
        %v9089 = vrot.slane %v8971, 3
        %v9090 = vrot.slane %v8972, 3
        %v9091 = vsel %vm1126, %v9089, %v9090
        %v9092 = vrot.slane %v8973, 3
        %v9093 = vsel %vm1126, %v9090, %v9092
        %v9094 = vrot.slane %v8974, 3
        %v9095 = vrot.slane %v8975, 3
        %v9096 = vsel %vm1126, %v9094, %v9095
        %v9097 = vrot.slane %v8976, 3
        %v9098 = vsel %vm1126, %v9095, %v9097
        %v9099 = vrot.slane %v8977, 3
        %v9100 = vrot.slane %v8978, 3
        %v9101 = vsel %vm1126, %v9099, %v9100
        %v9102 = vrot.slane %v8979, 3
        %v9103 = vsel %vm1126, %v9100, %v9102
        %v9104 = vrot.slane %v8980, 3
        %v9105 = vrot.slane %v8981, 3
        %v9106 = vsel %vm1126, %v9104, %v9105
        %v9107 = vrot.slane %v8982, 3
        %v9108 = vsel %vm1126, %v9105, %v9107
        %v9109 = vrot.slane %v8983, 3
        %v9110 = vrot.slane %v8984, 3
        %v9111 = vsel %vm1126, %v9109, %v9110
        %v9112 = vrot.slane %v8985, 3
        %v9113 = vsel %vm1126, %v9110, %v9112
        %v9146 = vadd.f32 %v8902, %v9036
        %v9147 = vadd.f32 %v8903, %v9038
        %v9148 = vadd.f32 %v8904, %v9041
        %v9149 = vadd.f32 %v8905, %v9043
        %v9150 = vadd.f32 %v8906, %v9046
        %v9151 = vadd.f32 %v8907, %v9048
        %v9152 = vadd.f32 %v8908, %v9051
        %v9153 = vadd.f32 %v8909, %v9053
        %v9154 = vadd.f32 %v8910, %v9056
        %v9155 = vadd.f32 %v8911, %v9058
        %v9156 = vadd.f32 %v8912, %v9061
        %v9157 = vadd.f32 %v8913, %v9063
        %v9158 = vadd.f32 %v8914, %v9066
        %v9159 = vadd.f32 %v8915, %v9068
        %v9160 = vadd.f32 %v8916, %v9071
        %v9161 = vadd.f32 %v8917, %v9073
        %v9162 = vadd.f32 %v8918, %v9076
        %v9163 = vadd.f32 %v8919, %v9078
        %v9164 = vadd.f32 %v8920, %v9081
        %v9165 = vadd.f32 %v8921, %v9083
        %v9166 = vadd.f32 %v8922, %v9086
        %v9167 = vadd.f32 %v8923, %v9088
        %v9168 = vadd.f32 %v8924, %v9091
        %v9169 = vadd.f32 %v8925, %v9093
        %v9170 = vadd.f32 %v8926, %v9096
        %v9171 = vadd.f32 %v8927, %v9098
        %v9172 = vadd.f32 %v8928, %v9101
        %v9173 = vadd.f32 %v8929, %v9103
        %v9174 = vadd.f32 %v8930, %v9106
        %v9175 = vadd.f32 %v8931, %v9108
        %v9176 = vadd.f32 %v8932, %v9111
        %v9177 = vadd.f32 %v8933, %v9113
        %v9178 = vlaneseq
        %v9179 = vshrl.u32 %v9178, 7
        %v9180 = vsub.s32 4, %v9179
        %v9181 = vrot.slane %v411, %v9180
        %v9182 = vmul.f32 %v8330, %v9181
        %v9183 = vmul.f32 %v8331, %v9181
        %v9184 = vmul.f32 %v8332, %v9181
        %v9185 = vmul.f32 %v8333, %v9181
        %v9186 = vmul.f32 %v8334, %v9181
        %v9187 = vmul.f32 %v8335, %v9181
        %v9188 = vmul.f32 %v8336, %v9181
        %v9189 = vmul.f32 %v8337, %v9181
        %v9190 = vmul.f32 %v8338, %v9181
        %v9191 = vmul.f32 %v8339, %v9181
        %v9192 = vmul.f32 %v8340, %v9181
        %v9193 = vmul.f32 %v8341, %v9181
        %v9194 = vmul.f32 %v8342, %v9181
        %v9195 = vmul.f32 %v8343, %v9181
        %v9196 = vmul.f32 %v8344, %v9181
        %v9197 = vmul.f32 %v8345, %v9181
        %v9198 = vmul.f32 %v8346, %v9181
        %v9199 = vmul.f32 %v8347, %v9181
        %v9200 = vmul.f32 %v8348, %v9181
        %v9201 = vmul.f32 %v8349, %v9181
        %v9202 = vmul.f32 %v8350, %v9181
        %v9203 = vmul.f32 %v8351, %v9181
        %v9204 = vmul.f32 %v8352, %v9181
        %v9205 = vmul.f32 %v8353, %v9181
        %v9206 = vmul.f32 %v8354, %v9181
        %v9207 = vmul.f32 %v8355, %v9181
        %v9208 = vmul.f32 %v8356, %v9181
        %v9209 = vmul.f32 %v8357, %v9181
        %v9210 = vmul.f32 %v8358, %v9181
        %v9211 = vmul.f32 %v8359, %v9181
        %v9212 = vmul.f32 %v8360, %v9181
        %v9213 = vmul.f32 %v8361, %v9181
        %v9214 = vmul.f32 %v8362, %v9181
        %v9215 = vmul.f32 %v8363, %v9181
        %v9216 = vmul.f32 %v8364, %v9181
        %v9217 = vmul.f32 %v8365, %v9181
        %v9218 = vmul.f32 %v8366, %v9181
        %v9219 = vmul.f32 %v8367, %v9181
        %v9220 = vmul.f32 %v8368, %v9181
        %v9221 = vmul.f32 %v8369, %v9181
        %v9222 = vmul.f32 %v8370, %v9181
        %v9223 = vmul.f32 %v8371, %v9181
        %v9224 = vmul.f32 %v8372, %v9181
        %v9225 = vmul.f32 %v8373, %v9181
        %v9226 = vmul.f32 %v8374, %v9181
        %v9227 = vmul.f32 %v8375, %v9181
        %v9228 = vmul.f32 %v8376, %v9181
        %v9229 = vmul.f32 %v8377, %v9181
        %v9278 = vrot.slane %v9182, 4
        %v9279 = vrot.slane %v9183, 4
        %v9280 = vsel %vm1371, %v9278, %v9279
        %v9281 = vrot.slane %v9184, 4
        %v9282 = vsel %vm1371, %v9279, %v9281
        %v9283 = vrot.slane %v9185, 4
        %v9284 = vrot.slane %v9186, 4
        %v9285 = vsel %vm1371, %v9283, %v9284
        %v9286 = vrot.slane %v9187, 4
        %v9287 = vsel %vm1371, %v9284, %v9286
        %v9288 = vrot.slane %v9188, 4
        %v9289 = vrot.slane %v9189, 4
        %v9290 = vsel %vm1371, %v9288, %v9289
        %v9291 = vrot.slane %v9190, 4
        %v9292 = vsel %vm1371, %v9289, %v9291
        %v9293 = vrot.slane %v9191, 4
        %v9294 = vrot.slane %v9192, 4
        %v9295 = vsel %vm1371, %v9293, %v9294
        %v9296 = vrot.slane %v9193, 4
        %v9297 = vsel %vm1371, %v9294, %v9296
        %v9298 = vrot.slane %v9194, 4
        %v9299 = vrot.slane %v9195, 4
        %v9300 = vsel %vm1371, %v9298, %v9299
        %v9301 = vrot.slane %v9196, 4
        %v9302 = vsel %vm1371, %v9299, %v9301
        %v9303 = vrot.slane %v9197, 4
        %v9304 = vrot.slane %v9198, 4
        %v9305 = vsel %vm1371, %v9303, %v9304
        %v9306 = vrot.slane %v9199, 4
        %v9307 = vsel %vm1371, %v9304, %v9306
        %v9308 = vrot.slane %v9200, 4
        %v9309 = vrot.slane %v9201, 4
        %v9310 = vsel %vm1371, %v9308, %v9309
        %v9311 = vrot.slane %v9202, 4
        %v9312 = vsel %vm1371, %v9309, %v9311
        %v9313 = vrot.slane %v9203, 4
        %v9314 = vrot.slane %v9204, 4
        %v9315 = vsel %vm1371, %v9313, %v9314
        %v9316 = vrot.slane %v9205, 4
        %v9317 = vsel %vm1371, %v9314, %v9316
        %v9318 = vrot.slane %v9206, 4
        %v9319 = vrot.slane %v9207, 4
        %v9320 = vsel %vm1371, %v9318, %v9319
        %v9321 = vrot.slane %v9208, 4
        %v9322 = vsel %vm1371, %v9319, %v9321
        %v9323 = vrot.slane %v9209, 4
        %v9324 = vrot.slane %v9210, 4
        %v9325 = vsel %vm1371, %v9323, %v9324
        %v9326 = vrot.slane %v9211, 4
        %v9327 = vsel %vm1371, %v9324, %v9326
        %v9328 = vrot.slane %v9212, 4
        %v9329 = vrot.slane %v9213, 4
        %v9330 = vsel %vm1371, %v9328, %v9329
        %v9331 = vrot.slane %v9214, 4
        %v9332 = vsel %vm1371, %v9329, %v9331
        %v9333 = vrot.slane %v9215, 4
        %v9334 = vrot.slane %v9216, 4
        %v9335 = vsel %vm1371, %v9333, %v9334
        %v9336 = vrot.slane %v9217, 4
        %v9337 = vsel %vm1371, %v9334, %v9336
        %v9338 = vrot.slane %v9218, 4
        %v9339 = vrot.slane %v9219, 4
        %v9340 = vsel %vm1371, %v9338, %v9339
        %v9341 = vrot.slane %v9220, 4
        %v9342 = vsel %vm1371, %v9339, %v9341
        %v9343 = vrot.slane %v9221, 4
        %v9344 = vrot.slane %v9222, 4
        %v9345 = vsel %vm1371, %v9343, %v9344
        %v9346 = vrot.slane %v9223, 4
        %v9347 = vsel %vm1371, %v9344, %v9346
        %v9348 = vrot.slane %v9224, 4
        %v9349 = vrot.slane %v9225, 4
        %v9350 = vsel %vm1371, %v9348, %v9349
        %v9351 = vrot.slane %v9226, 4
        %v9352 = vsel %vm1371, %v9349, %v9351
        %v9353 = vrot.slane %v9227, 4
        %v9354 = vrot.slane %v9228, 4
        %v9355 = vsel %vm1371, %v9353, %v9354
        %v9356 = vrot.slane %v9229, 4
        %v9357 = vsel %vm1371, %v9354, %v9356
        %v9390 = vadd.f32 %v9146, %v9280
        %v9391 = vadd.f32 %v9147, %v9282
        %v9392 = vadd.f32 %v9148, %v9285
        %v9393 = vadd.f32 %v9149, %v9287
        %v9394 = vadd.f32 %v9150, %v9290
        %v9395 = vadd.f32 %v9151, %v9292
        %v9396 = vadd.f32 %v9152, %v9295
        %v9397 = vadd.f32 %v9153, %v9297
        %v9398 = vadd.f32 %v9154, %v9300
        %v9399 = vadd.f32 %v9155, %v9302
        %v9400 = vadd.f32 %v9156, %v9305
        %v9401 = vadd.f32 %v9157, %v9307
        %v9402 = vadd.f32 %v9158, %v9310
        %v9403 = vadd.f32 %v9159, %v9312
        %v9404 = vadd.f32 %v9160, %v9315
        %v9405 = vadd.f32 %v9161, %v9317
        %v9406 = vadd.f32 %v9162, %v9320
        %v9407 = vadd.f32 %v9163, %v9322
        %v9408 = vadd.f32 %v9164, %v9325
        %v9409 = vadd.f32 %v9165, %v9327
        %v9410 = vadd.f32 %v9166, %v9330
        %v9411 = vadd.f32 %v9167, %v9332
        %v9412 = vadd.f32 %v9168, %v9335
        %v9413 = vadd.f32 %v9169, %v9337
        %v9414 = vadd.f32 %v9170, %v9340
        %v9415 = vadd.f32 %v9171, %v9342
        %v9416 = vadd.f32 %v9172, %v9345
        %v9417 = vadd.f32 %v9173, %v9347
        %v9418 = vadd.f32 %v9174, %v9350
        %v9419 = vadd.f32 %v9175, %v9352
        %v9420 = vadd.f32 %v9176, %v9355
        %v9421 = vadd.f32 %v9177, %v9357
        %v9422 = vlaneseq
        %v9423 = vshrl.u32 %v9422, 7
        %v9424 = vsub.s32 5, %v9423
        %v9425 = vrot.slane %v411, %v9424
        %v9426 = vmul.f32 %v8330, %v9425
        %v9427 = vmul.f32 %v8331, %v9425
        %v9428 = vmul.f32 %v8332, %v9425
        %v9429 = vmul.f32 %v8333, %v9425
        %v9430 = vmul.f32 %v8334, %v9425
        %v9431 = vmul.f32 %v8335, %v9425
        %v9432 = vmul.f32 %v8336, %v9425
        %v9433 = vmul.f32 %v8337, %v9425
        %v9434 = vmul.f32 %v8338, %v9425
        %v9435 = vmul.f32 %v8339, %v9425
        %v9436 = vmul.f32 %v8340, %v9425
        %v9437 = vmul.f32 %v8341, %v9425
        %v9438 = vmul.f32 %v8342, %v9425
        %v9439 = vmul.f32 %v8343, %v9425
        %v9440 = vmul.f32 %v8344, %v9425
        %v9441 = vmul.f32 %v8345, %v9425
        %v9442 = vmul.f32 %v8346, %v9425
        %v9443 = vmul.f32 %v8347, %v9425
        %v9444 = vmul.f32 %v8348, %v9425
        %v9445 = vmul.f32 %v8349, %v9425
        %v9446 = vmul.f32 %v8350, %v9425
        %v9447 = vmul.f32 %v8351, %v9425
        %v9448 = vmul.f32 %v8352, %v9425
        %v9449 = vmul.f32 %v8353, %v9425
        %v9450 = vmul.f32 %v8354, %v9425
        %v9451 = vmul.f32 %v8355, %v9425
        %v9452 = vmul.f32 %v8356, %v9425
        %v9453 = vmul.f32 %v8357, %v9425
        %v9454 = vmul.f32 %v8358, %v9425
        %v9455 = vmul.f32 %v8359, %v9425
        %v9456 = vmul.f32 %v8360, %v9425
        %v9457 = vmul.f32 %v8361, %v9425
        %v9458 = vmul.f32 %v8362, %v9425
        %v9459 = vmul.f32 %v8363, %v9425
        %v9460 = vmul.f32 %v8364, %v9425
        %v9461 = vmul.f32 %v8365, %v9425
        %v9462 = vmul.f32 %v8366, %v9425
        %v9463 = vmul.f32 %v8367, %v9425
        %v9464 = vmul.f32 %v8368, %v9425
        %v9465 = vmul.f32 %v8369, %v9425
        %v9466 = vmul.f32 %v8370, %v9425
        %v9467 = vmul.f32 %v8371, %v9425
        %v9468 = vmul.f32 %v8372, %v9425
        %v9469 = vmul.f32 %v8373, %v9425
        %v9470 = vmul.f32 %v8374, %v9425
        %v9471 = vmul.f32 %v8375, %v9425
        %v9472 = vmul.f32 %v8376, %v9425
        %v9473 = vmul.f32 %v8377, %v9425
        %v9522 = vrot.slane %v9426, 5
        %v9523 = vrot.slane %v9427, 5
        %v9524 = vsel %vm1616, %v9522, %v9523
        %v9525 = vrot.slane %v9428, 5
        %v9526 = vsel %vm1616, %v9523, %v9525
        %v9527 = vrot.slane %v9429, 5
        %v9528 = vrot.slane %v9430, 5
        %v9529 = vsel %vm1616, %v9527, %v9528
        %v9530 = vrot.slane %v9431, 5
        %v9531 = vsel %vm1616, %v9528, %v9530
        %v9532 = vrot.slane %v9432, 5
        %v9533 = vrot.slane %v9433, 5
        %v9534 = vsel %vm1616, %v9532, %v9533
        %v9535 = vrot.slane %v9434, 5
        %v9536 = vsel %vm1616, %v9533, %v9535
        %v9537 = vrot.slane %v9435, 5
        %v9538 = vrot.slane %v9436, 5
        %v9539 = vsel %vm1616, %v9537, %v9538
        %v9540 = vrot.slane %v9437, 5
        %v9541 = vsel %vm1616, %v9538, %v9540
        %v9542 = vrot.slane %v9438, 5
        %v9543 = vrot.slane %v9439, 5
        %v9544 = vsel %vm1616, %v9542, %v9543
        %v9545 = vrot.slane %v9440, 5
        %v9546 = vsel %vm1616, %v9543, %v9545
        %v9547 = vrot.slane %v9441, 5
        %v9548 = vrot.slane %v9442, 5
        %v9549 = vsel %vm1616, %v9547, %v9548
        %v9550 = vrot.slane %v9443, 5
        %v9551 = vsel %vm1616, %v9548, %v9550
        %v9552 = vrot.slane %v9444, 5
        %v9553 = vrot.slane %v9445, 5
        %v9554 = vsel %vm1616, %v9552, %v9553
        %v9555 = vrot.slane %v9446, 5
        %v9556 = vsel %vm1616, %v9553, %v9555
        %v9557 = vrot.slane %v9447, 5
        %v9558 = vrot.slane %v9448, 5
        %v9559 = vsel %vm1616, %v9557, %v9558
        %v9560 = vrot.slane %v9449, 5
        %v9561 = vsel %vm1616, %v9558, %v9560
        %v9562 = vrot.slane %v9450, 5
        %v9563 = vrot.slane %v9451, 5
        %v9564 = vsel %vm1616, %v9562, %v9563
        %v9565 = vrot.slane %v9452, 5
        %v9566 = vsel %vm1616, %v9563, %v9565
        %v9567 = vrot.slane %v9453, 5
        %v9568 = vrot.slane %v9454, 5
        %v9569 = vsel %vm1616, %v9567, %v9568
        %v9570 = vrot.slane %v9455, 5
        %v9571 = vsel %vm1616, %v9568, %v9570
        %v9572 = vrot.slane %v9456, 5
        %v9573 = vrot.slane %v9457, 5
        %v9574 = vsel %vm1616, %v9572, %v9573
        %v9575 = vrot.slane %v9458, 5
        %v9576 = vsel %vm1616, %v9573, %v9575
        %v9577 = vrot.slane %v9459, 5
        %v9578 = vrot.slane %v9460, 5
        %v9579 = vsel %vm1616, %v9577, %v9578
        %v9580 = vrot.slane %v9461, 5
        %v9581 = vsel %vm1616, %v9578, %v9580
        %v9582 = vrot.slane %v9462, 5
        %v9583 = vrot.slane %v9463, 5
        %v9584 = vsel %vm1616, %v9582, %v9583
        %v9585 = vrot.slane %v9464, 5
        %v9586 = vsel %vm1616, %v9583, %v9585
        %v9587 = vrot.slane %v9465, 5
        %v9588 = vrot.slane %v9466, 5
        %v9589 = vsel %vm1616, %v9587, %v9588
        %v9590 = vrot.slane %v9467, 5
        %v9591 = vsel %vm1616, %v9588, %v9590
        %v9592 = vrot.slane %v9468, 5
        %v9593 = vrot.slane %v9469, 5
        %v9594 = vsel %vm1616, %v9592, %v9593
        %v9595 = vrot.slane %v9470, 5
        %v9596 = vsel %vm1616, %v9593, %v9595
        %v9597 = vrot.slane %v9471, 5
        %v9598 = vrot.slane %v9472, 5
        %v9599 = vsel %vm1616, %v9597, %v9598
        %v9600 = vrot.slane %v9473, 5
        %v9601 = vsel %vm1616, %v9598, %v9600
        %v9634 = vadd.f32 %v9390, %v9524
        %v9635 = vadd.f32 %v9391, %v9526
        %v9636 = vadd.f32 %v9392, %v9529
        %v9637 = vadd.f32 %v9393, %v9531
        %v9638 = vadd.f32 %v9394, %v9534
        %v9639 = vadd.f32 %v9395, %v9536
        %v9640 = vadd.f32 %v9396, %v9539
        %v9641 = vadd.f32 %v9397, %v9541
        %v9642 = vadd.f32 %v9398, %v9544
        %v9643 = vadd.f32 %v9399, %v9546
        %v9644 = vadd.f32 %v9400, %v9549
        %v9645 = vadd.f32 %v9401, %v9551
        %v9646 = vadd.f32 %v9402, %v9554
        %v9647 = vadd.f32 %v9403, %v9556
        %v9648 = vadd.f32 %v9404, %v9559
        %v9649 = vadd.f32 %v9405, %v9561
        %v9650 = vadd.f32 %v9406, %v9564
        %v9651 = vadd.f32 %v9407, %v9566
        %v9652 = vadd.f32 %v9408, %v9569
        %v9653 = vadd.f32 %v9409, %v9571
        %v9654 = vadd.f32 %v9410, %v9574
        %v9655 = vadd.f32 %v9411, %v9576
        %v9656 = vadd.f32 %v9412, %v9579
        %v9657 = vadd.f32 %v9413, %v9581
        %v9658 = vadd.f32 %v9414, %v9584
        %v9659 = vadd.f32 %v9415, %v9586
        %v9660 = vadd.f32 %v9416, %v9589
        %v9661 = vadd.f32 %v9417, %v9591
        %v9662 = vadd.f32 %v9418, %v9594
        %v9663 = vadd.f32 %v9419, %v9596
        %v9664 = vadd.f32 %v9420, %v9599
        %v9665 = vadd.f32 %v9421, %v9601
        %v9666 = vlaneseq
        %v9667 = vshrl.u32 %v9666, 7
        %v9668 = vsub.s32 6, %v9667
        %v9669 = vrot.slane %v411, %v9668
        %v9670 = vmul.f32 %v8330, %v9669
        %v9671 = vmul.f32 %v8331, %v9669
        %v9672 = vmul.f32 %v8332, %v9669
        %v9673 = vmul.f32 %v8333, %v9669
        %v9674 = vmul.f32 %v8334, %v9669
        %v9675 = vmul.f32 %v8335, %v9669
        %v9676 = vmul.f32 %v8336, %v9669
        %v9677 = vmul.f32 %v8337, %v9669
        %v9678 = vmul.f32 %v8338, %v9669
        %v9679 = vmul.f32 %v8339, %v9669
        %v9680 = vmul.f32 %v8340, %v9669
        %v9681 = vmul.f32 %v8341, %v9669
        %v9682 = vmul.f32 %v8342, %v9669
        %v9683 = vmul.f32 %v8343, %v9669
        %v9684 = vmul.f32 %v8344, %v9669
        %v9685 = vmul.f32 %v8345, %v9669
        %v9686 = vmul.f32 %v8346, %v9669
        %v9687 = vmul.f32 %v8347, %v9669
        %v9688 = vmul.f32 %v8348, %v9669
        %v9689 = vmul.f32 %v8349, %v9669
        %v9690 = vmul.f32 %v8350, %v9669
        %v9691 = vmul.f32 %v8351, %v9669
        %v9692 = vmul.f32 %v8352, %v9669
        %v9693 = vmul.f32 %v8353, %v9669
        %v9694 = vmul.f32 %v8354, %v9669
        %v9695 = vmul.f32 %v8355, %v9669
        %v9696 = vmul.f32 %v8356, %v9669
        %v9697 = vmul.f32 %v8357, %v9669
        %v9698 = vmul.f32 %v8358, %v9669
        %v9699 = vmul.f32 %v8359, %v9669
        %v9700 = vmul.f32 %v8360, %v9669
        %v9701 = vmul.f32 %v8361, %v9669
        %v9702 = vmul.f32 %v8362, %v9669
        %v9703 = vmul.f32 %v8363, %v9669
        %v9704 = vmul.f32 %v8364, %v9669
        %v9705 = vmul.f32 %v8365, %v9669
        %v9706 = vmul.f32 %v8366, %v9669
        %v9707 = vmul.f32 %v8367, %v9669
        %v9708 = vmul.f32 %v8368, %v9669
        %v9709 = vmul.f32 %v8369, %v9669
        %v9710 = vmul.f32 %v8370, %v9669
        %v9711 = vmul.f32 %v8371, %v9669
        %v9712 = vmul.f32 %v8372, %v9669
        %v9713 = vmul.f32 %v8373, %v9669
        %v9714 = vmul.f32 %v8374, %v9669
        %v9715 = vmul.f32 %v8375, %v9669
        %v9716 = vmul.f32 %v8376, %v9669
        %v9717 = vmul.f32 %v8377, %v9669
        %v9766 = vrot.slane %v9670, 6
        %v9767 = vrot.slane %v9671, 6
        %v9768 = vsel %vm1861, %v9766, %v9767
        %v9769 = vrot.slane %v9672, 6
        %v9770 = vsel %vm1861, %v9767, %v9769
        %v9771 = vrot.slane %v9673, 6
        %v9772 = vrot.slane %v9674, 6
        %v9773 = vsel %vm1861, %v9771, %v9772
        %v9774 = vrot.slane %v9675, 6
        %v9775 = vsel %vm1861, %v9772, %v9774
        %v9776 = vrot.slane %v9676, 6
        %v9777 = vrot.slane %v9677, 6
        %v9778 = vsel %vm1861, %v9776, %v9777
        %v9779 = vrot.slane %v9678, 6
        %v9780 = vsel %vm1861, %v9777, %v9779
        %v9781 = vrot.slane %v9679, 6
        %v9782 = vrot.slane %v9680, 6
        %v9783 = vsel %vm1861, %v9781, %v9782
        %v9784 = vrot.slane %v9681, 6
        %v9785 = vsel %vm1861, %v9782, %v9784
        %v9786 = vrot.slane %v9682, 6
        %v9787 = vrot.slane %v9683, 6
        %v9788 = vsel %vm1861, %v9786, %v9787
        %v9789 = vrot.slane %v9684, 6
        %v9790 = vsel %vm1861, %v9787, %v9789
        %v9791 = vrot.slane %v9685, 6
        %v9792 = vrot.slane %v9686, 6
        %v9793 = vsel %vm1861, %v9791, %v9792
        %v9794 = vrot.slane %v9687, 6
        %v9795 = vsel %vm1861, %v9792, %v9794
        %v9796 = vrot.slane %v9688, 6
        %v9797 = vrot.slane %v9689, 6
        %v9798 = vsel %vm1861, %v9796, %v9797
        %v9799 = vrot.slane %v9690, 6
        %v9800 = vsel %vm1861, %v9797, %v9799
        %v9801 = vrot.slane %v9691, 6
        %v9802 = vrot.slane %v9692, 6
        %v9803 = vsel %vm1861, %v9801, %v9802
        %v9804 = vrot.slane %v9693, 6
        %v9805 = vsel %vm1861, %v9802, %v9804
        %v9806 = vrot.slane %v9694, 6
        %v9807 = vrot.slane %v9695, 6
        %v9808 = vsel %vm1861, %v9806, %v9807
        %v9809 = vrot.slane %v9696, 6
        %v9810 = vsel %vm1861, %v9807, %v9809
        %v9811 = vrot.slane %v9697, 6
        %v9812 = vrot.slane %v9698, 6
        %v9813 = vsel %vm1861, %v9811, %v9812
        %v9814 = vrot.slane %v9699, 6
        %v9815 = vsel %vm1861, %v9812, %v9814
        %v9816 = vrot.slane %v9700, 6
        %v9817 = vrot.slane %v9701, 6
        %v9818 = vsel %vm1861, %v9816, %v9817
        %v9819 = vrot.slane %v9702, 6
        %v9820 = vsel %vm1861, %v9817, %v9819
        %v9821 = vrot.slane %v9703, 6
        %v9822 = vrot.slane %v9704, 6
        %v9823 = vsel %vm1861, %v9821, %v9822
        %v9824 = vrot.slane %v9705, 6
        %v9825 = vsel %vm1861, %v9822, %v9824
        %v9826 = vrot.slane %v9706, 6
        %v9827 = vrot.slane %v9707, 6
        %v9828 = vsel %vm1861, %v9826, %v9827
        %v9829 = vrot.slane %v9708, 6
        %v9830 = vsel %vm1861, %v9827, %v9829
        %v9831 = vrot.slane %v9709, 6
        %v9832 = vrot.slane %v9710, 6
        %v9833 = vsel %vm1861, %v9831, %v9832
        %v9834 = vrot.slane %v9711, 6
        %v9835 = vsel %vm1861, %v9832, %v9834
        %v9836 = vrot.slane %v9712, 6
        %v9837 = vrot.slane %v9713, 6
        %v9838 = vsel %vm1861, %v9836, %v9837
        %v9839 = vrot.slane %v9714, 6
        %v9840 = vsel %vm1861, %v9837, %v9839
        %v9841 = vrot.slane %v9715, 6
        %v9842 = vrot.slane %v9716, 6
        %v9843 = vsel %vm1861, %v9841, %v9842
        %v9844 = vrot.slane %v9717, 6
        %v9845 = vsel %vm1861, %v9842, %v9844
        %v9878 = vadd.f32 %v9634, %v9768
        %v9879 = vadd.f32 %v9635, %v9770
        %v9880 = vadd.f32 %v9636, %v9773
        %v9881 = vadd.f32 %v9637, %v9775
        %v9882 = vadd.f32 %v9638, %v9778
        %v9883 = vadd.f32 %v9639, %v9780
        %v9884 = vadd.f32 %v9640, %v9783
        %v9885 = vadd.f32 %v9641, %v9785
        %v9886 = vadd.f32 %v9642, %v9788
        %v9887 = vadd.f32 %v9643, %v9790
        %v9888 = vadd.f32 %v9644, %v9793
        %v9889 = vadd.f32 %v9645, %v9795
        %v9890 = vadd.f32 %v9646, %v9798
        %v9891 = vadd.f32 %v9647, %v9800
        %v9892 = vadd.f32 %v9648, %v9803
        %v9893 = vadd.f32 %v9649, %v9805
        %v9894 = vadd.f32 %v9650, %v9808
        %v9895 = vadd.f32 %v9651, %v9810
        %v9896 = vadd.f32 %v9652, %v9813
        %v9897 = vadd.f32 %v9653, %v9815
        %v9898 = vadd.f32 %v9654, %v9818
        %v9899 = vadd.f32 %v9655, %v9820
        %v9900 = vadd.f32 %v9656, %v9823
        %v9901 = vadd.f32 %v9657, %v9825
        %v9902 = vadd.f32 %v9658, %v9828
        %v9903 = vadd.f32 %v9659, %v9830
        %v9904 = vadd.f32 %v9660, %v9833
        %v9905 = vadd.f32 %v9661, %v9835
        %v9906 = vadd.f32 %v9662, %v9838
        %v9907 = vadd.f32 %v9663, %v9840
        %v9908 = vadd.f32 %v9664, %v9843
        %v9909 = vadd.f32 %v9665, %v9845
        %s9910 = scalar_lea.vmem [#allocation2], 144
        %v9911 = vld [vmem:[%s9910] sm:$0xff]
        %v9912 = vld [vmem:[%s9910 + $0x8] sm:$0xff]
        %v9913 = vld [vmem:[%s9910 + $0x10] sm:$0x3f]
        %v9914 = vld [vmem:[%s9910 + $0x18] sm:$0xff]
        %v9915 = vld [vmem:[%s9910 + $0x20] sm:$0xff]
        %v9916 = vld [vmem:[%s9910 + $0x28] sm:$0x3f]
        %v9917 = vld [vmem:[%s9910 + $0x30] sm:$0xff]
        %v9918 = vld [vmem:[%s9910 + $0x38] sm:$0xff]
        %v9919 = vld [vmem:[%s9910 + $0x40] sm:$0x3f]
        %v9920 = vld [vmem:[%s9910 + $0x48] sm:$0xff]
        %v9921 = vld [vmem:[%s9910 + $0x50] sm:$0xff]
        %v9922 = vld [vmem:[%s9910 + $0x58] sm:$0x3f]
        %v9923 = vld [vmem:[%s9910 + $0x60] sm:$0xff]
        %v9924 = vld [vmem:[%s9910 + $0x68] sm:$0xff]
        %v9925 = vld [vmem:[%s9910 + $0x70] sm:$0x3f]
        %v9926 = vld [vmem:[%s9910 + $0x78] sm:$0xff]
        %v9927 = vld [vmem:[%s9910 + $0x80] sm:$0xff]
        %v9928 = vld [vmem:[%s9910 + $0x88] sm:$0x3f]
        %v9929 = vld [vmem:[%s9910 + $0x90] sm:$0xff]
        %v9930 = vld [vmem:[%s9910 + $0x98] sm:$0xff]
        %v9931 = vld [vmem:[%s9910 + $0xa0] sm:$0x3f]
        %v9932 = vld [vmem:[%s9910 + $0xa8] sm:$0xff]
        %v9933 = vld [vmem:[%s9910 + $0xb0] sm:$0xff]
        %v9934 = vld [vmem:[%s9910 + $0xb8] sm:$0x3f]
        %v9935 = vld [vmem:[%s9910 + $0xc0] sm:$0xff]
        %v9936 = vld [vmem:[%s9910 + $0xc8] sm:$0xff]
        %v9937 = vld [vmem:[%s9910 + $0xd0] sm:$0x3f]
        %v9938 = vld [vmem:[%s9910 + $0xd8] sm:$0xff]
        %v9939 = vld [vmem:[%s9910 + $0xe0] sm:$0xff]
        %v9940 = vld [vmem:[%s9910 + $0xe8] sm:$0x3f]
        %v9941 = vld [vmem:[%s9910 + $0xf0] sm:$0xff]
        %v9942 = vld [vmem:[%s9910 + $0xf8] sm:$0xff]
        %v9943 = vld [vmem:[%s9910 + $0x100] sm:$0x3f]
        %v9944 = vld [vmem:[%s9910 + $0x108] sm:$0xff]
        %v9945 = vld [vmem:[%s9910 + $0x110] sm:$0xff]
        %v9946 = vld [vmem:[%s9910 + $0x118] sm:$0x3f]
        %v9947 = vld [vmem:[%s9910 + $0x120] sm:$0xff]
        %v9948 = vld [vmem:[%s9910 + $0x128] sm:$0xff]
        %v9949 = vld [vmem:[%s9910 + $0x130] sm:$0x3f]
        %v9950 = vld [vmem:[%s9910 + $0x138] sm:$0xff]
        %v9951 = vld [vmem:[%s9910 + $0x140] sm:$0xff]
        %v9952 = vld [vmem:[%s9910 + $0x148] sm:$0x3f]
        %v9953 = vld [vmem:[%s9910 + $0x150] sm:$0xff]
        %v9954 = vld [vmem:[%s9910 + $0x158] sm:$0xff]
        %v9955 = vld [vmem:[%s9910 + $0x160] sm:$0x3f]
        %v9956 = vld [vmem:[%s9910 + $0x168] sm:$0xff]
        %v9957 = vld [vmem:[%s9910 + $0x170] sm:$0xff]
        %v9958 = vld [vmem:[%s9910 + $0x178] sm:$0x3f]
        %v9959 = vlaneseq
        %v9960 = vshrl.u32 %v9959, 7
        %v9961 = vsub.s32 0, %v9960
        %v9962 = vrot.slane %v412, %v9961
        %v9963 = vmul.f32 %v9911, %v9962
        %v9964 = vmul.f32 %v9912, %v9962
        %v9965 = vmul.f32 %v9914, %v9962
        %v9966 = vmul.f32 %v9915, %v9962
        %v9967 = vmul.f32 %v9917, %v9962
        %v9968 = vmul.f32 %v9918, %v9962
        %v9969 = vmul.f32 %v9920, %v9962
        %v9970 = vmul.f32 %v9921, %v9962
        %v9971 = vmul.f32 %v9923, %v9962
        %v9972 = vmul.f32 %v9924, %v9962
        %v9973 = vmul.f32 %v9926, %v9962
        %v9974 = vmul.f32 %v9927, %v9962
        %v9975 = vmul.f32 %v9929, %v9962
        %v9976 = vmul.f32 %v9930, %v9962
        %v9977 = vmul.f32 %v9932, %v9962
        %v9978 = vmul.f32 %v9933, %v9962
        %v9979 = vmul.f32 %v9935, %v9962
        %v9980 = vmul.f32 %v9936, %v9962
        %v9981 = vmul.f32 %v9938, %v9962
        %v9982 = vmul.f32 %v9939, %v9962
        %v9983 = vmul.f32 %v9941, %v9962
        %v9984 = vmul.f32 %v9942, %v9962
        %v9985 = vmul.f32 %v9944, %v9962
        %v9986 = vmul.f32 %v9945, %v9962
        %v9987 = vmul.f32 %v9947, %v9962
        %v9988 = vmul.f32 %v9948, %v9962
        %v9989 = vmul.f32 %v9950, %v9962
        %v9990 = vmul.f32 %v9951, %v9962
        %v9991 = vmul.f32 %v9953, %v9962
        %v9992 = vmul.f32 %v9954, %v9962
        %v9993 = vmul.f32 %v9956, %v9962
        %v9994 = vmul.f32 %v9957, %v9962
        %v9995 = vadd.f32 %v9878, %v9963
        %v9996 = vadd.f32 %v9879, %v9964
        %v9997 = vadd.f32 %v9880, %v9965
        %v9998 = vadd.f32 %v9881, %v9966
        %v9999 = vadd.f32 %v9882, %v9967
        %v10000 = vadd.f32 %v9883, %v9968
        %v10001 = vadd.f32 %v9884, %v9969
        %v10002 = vadd.f32 %v9885, %v9970
        %v10003 = vadd.f32 %v9886, %v9971
        %v10004 = vadd.f32 %v9887, %v9972
        %v10005 = vadd.f32 %v9888, %v9973
        %v10006 = vadd.f32 %v9889, %v9974
        %v10007 = vadd.f32 %v9890, %v9975
        %v10008 = vadd.f32 %v9891, %v9976
        %v10009 = vadd.f32 %v9892, %v9977
        %v10010 = vadd.f32 %v9893, %v9978
        %v10011 = vadd.f32 %v9894, %v9979
        %v10012 = vadd.f32 %v9895, %v9980
        %v10013 = vadd.f32 %v9896, %v9981
        %v10014 = vadd.f32 %v9897, %v9982
        %v10015 = vadd.f32 %v9898, %v9983
        %v10016 = vadd.f32 %v9899, %v9984
        %v10017 = vadd.f32 %v9900, %v9985
        %v10018 = vadd.f32 %v9901, %v9986
        %v10019 = vadd.f32 %v9902, %v9987
        %v10020 = vadd.f32 %v9903, %v9988
        %v10021 = vadd.f32 %v9904, %v9989
        %v10022 = vadd.f32 %v9905, %v9990
        %v10023 = vadd.f32 %v9906, %v9991
        %v10024 = vadd.f32 %v9907, %v9992
        %v10025 = vadd.f32 %v9908, %v9993
        %v10026 = vadd.f32 %v9909, %v9994
        %v10027 = vlaneseq
        %v10028 = vshrl.u32 %v10027, 7
        %v10029 = vsub.s32 1, %v10028
        %v10030 = vrot.slane %v412, %v10029
        %v10031 = vmul.f32 %v9911, %v10030
        %v10032 = vmul.f32 %v9912, %v10030
        %v10033 = vmul.f32 %v9913, %v10030
        %v10034 = vmul.f32 %v9914, %v10030
        %v10035 = vmul.f32 %v9915, %v10030
        %v10036 = vmul.f32 %v9916, %v10030
        %v10037 = vmul.f32 %v9917, %v10030
        %v10038 = vmul.f32 %v9918, %v10030
        %v10039 = vmul.f32 %v9919, %v10030
        %v10040 = vmul.f32 %v9920, %v10030
        %v10041 = vmul.f32 %v9921, %v10030
        %v10042 = vmul.f32 %v9922, %v10030
        %v10043 = vmul.f32 %v9923, %v10030
        %v10044 = vmul.f32 %v9924, %v10030
        %v10045 = vmul.f32 %v9925, %v10030
        %v10046 = vmul.f32 %v9926, %v10030
        %v10047 = vmul.f32 %v9927, %v10030
        %v10048 = vmul.f32 %v9928, %v10030
        %v10049 = vmul.f32 %v9929, %v10030
        %v10050 = vmul.f32 %v9930, %v10030
        %v10051 = vmul.f32 %v9931, %v10030
        %v10052 = vmul.f32 %v9932, %v10030
        %v10053 = vmul.f32 %v9933, %v10030
        %v10054 = vmul.f32 %v9934, %v10030
        %v10055 = vmul.f32 %v9935, %v10030
        %v10056 = vmul.f32 %v9936, %v10030
        %v10057 = vmul.f32 %v9937, %v10030
        %v10058 = vmul.f32 %v9938, %v10030
        %v10059 = vmul.f32 %v9939, %v10030
        %v10060 = vmul.f32 %v9940, %v10030
        %v10061 = vmul.f32 %v9941, %v10030
        %v10062 = vmul.f32 %v9942, %v10030
        %v10063 = vmul.f32 %v9943, %v10030
        %v10064 = vmul.f32 %v9944, %v10030
        %v10065 = vmul.f32 %v9945, %v10030
        %v10066 = vmul.f32 %v9946, %v10030
        %v10067 = vmul.f32 %v9947, %v10030
        %v10068 = vmul.f32 %v9948, %v10030
        %v10069 = vmul.f32 %v9949, %v10030
        %v10070 = vmul.f32 %v9950, %v10030
        %v10071 = vmul.f32 %v9951, %v10030
        %v10072 = vmul.f32 %v9952, %v10030
        %v10073 = vmul.f32 %v9953, %v10030
        %v10074 = vmul.f32 %v9954, %v10030
        %v10075 = vmul.f32 %v9955, %v10030
        %v10076 = vmul.f32 %v9956, %v10030
        %v10077 = vmul.f32 %v9957, %v10030
        %v10078 = vmul.f32 %v9958, %v10030
        %v10127 = vrot.slane %v10031, 1
        %v10128 = vrot.slane %v10032, 1
        %v10129 = vsel %vm636, %v10127, %v10128
        %v10130 = vrot.slane %v10033, 1
        %v10131 = vsel %vm636, %v10128, %v10130
        %v10132 = vrot.slane %v10034, 1
        %v10133 = vrot.slane %v10035, 1
        %v10134 = vsel %vm636, %v10132, %v10133
        %v10135 = vrot.slane %v10036, 1
        %v10136 = vsel %vm636, %v10133, %v10135
        %v10137 = vrot.slane %v10037, 1
        %v10138 = vrot.slane %v10038, 1
        %v10139 = vsel %vm636, %v10137, %v10138
        %v10140 = vrot.slane %v10039, 1
        %v10141 = vsel %vm636, %v10138, %v10140
        %v10142 = vrot.slane %v10040, 1
        %v10143 = vrot.slane %v10041, 1
        %v10144 = vsel %vm636, %v10142, %v10143
        %v10145 = vrot.slane %v10042, 1
        %v10146 = vsel %vm636, %v10143, %v10145
        %v10147 = vrot.slane %v10043, 1
        %v10148 = vrot.slane %v10044, 1
        %v10149 = vsel %vm636, %v10147, %v10148
        %v10150 = vrot.slane %v10045, 1
        %v10151 = vsel %vm636, %v10148, %v10150
        %v10152 = vrot.slane %v10046, 1
        %v10153 = vrot.slane %v10047, 1
        %v10154 = vsel %vm636, %v10152, %v10153
        %v10155 = vrot.slane %v10048, 1
        %v10156 = vsel %vm636, %v10153, %v10155
        %v10157 = vrot.slane %v10049, 1
        %v10158 = vrot.slane %v10050, 1
        %v10159 = vsel %vm636, %v10157, %v10158
        %v10160 = vrot.slane %v10051, 1
        %v10161 = vsel %vm636, %v10158, %v10160
        %v10162 = vrot.slane %v10052, 1
        %v10163 = vrot.slane %v10053, 1
        %v10164 = vsel %vm636, %v10162, %v10163
        %v10165 = vrot.slane %v10054, 1
        %v10166 = vsel %vm636, %v10163, %v10165
        %v10167 = vrot.slane %v10055, 1
        %v10168 = vrot.slane %v10056, 1
        %v10169 = vsel %vm636, %v10167, %v10168
        %v10170 = vrot.slane %v10057, 1
        %v10171 = vsel %vm636, %v10168, %v10170
        %v10172 = vrot.slane %v10058, 1
        %v10173 = vrot.slane %v10059, 1
        %v10174 = vsel %vm636, %v10172, %v10173
        %v10175 = vrot.slane %v10060, 1
        %v10176 = vsel %vm636, %v10173, %v10175
        %v10177 = vrot.slane %v10061, 1
        %v10178 = vrot.slane %v10062, 1
        %v10179 = vsel %vm636, %v10177, %v10178
        %v10180 = vrot.slane %v10063, 1
        %v10181 = vsel %vm636, %v10178, %v10180
        %v10182 = vrot.slane %v10064, 1
        %v10183 = vrot.slane %v10065, 1
        %v10184 = vsel %vm636, %v10182, %v10183
        %v10185 = vrot.slane %v10066, 1
        %v10186 = vsel %vm636, %v10183, %v10185
        %v10187 = vrot.slane %v10067, 1
        %v10188 = vrot.slane %v10068, 1
        %v10189 = vsel %vm636, %v10187, %v10188
        %v10190 = vrot.slane %v10069, 1
        %v10191 = vsel %vm636, %v10188, %v10190
        %v10192 = vrot.slane %v10070, 1
        %v10193 = vrot.slane %v10071, 1
        %v10194 = vsel %vm636, %v10192, %v10193
        %v10195 = vrot.slane %v10072, 1
        %v10196 = vsel %vm636, %v10193, %v10195
        %v10197 = vrot.slane %v10073, 1
        %v10198 = vrot.slane %v10074, 1
        %v10199 = vsel %vm636, %v10197, %v10198
        %v10200 = vrot.slane %v10075, 1
        %v10201 = vsel %vm636, %v10198, %v10200
        %v10202 = vrot.slane %v10076, 1
        %v10203 = vrot.slane %v10077, 1
        %v10204 = vsel %vm636, %v10202, %v10203
        %v10205 = vrot.slane %v10078, 1
        %v10206 = vsel %vm636, %v10203, %v10205
        %v10239 = vadd.f32 %v9995, %v10129
        %v10240 = vadd.f32 %v9996, %v10131
        %v10241 = vadd.f32 %v9997, %v10134
        %v10242 = vadd.f32 %v9998, %v10136
        %v10243 = vadd.f32 %v9999, %v10139
        %v10244 = vadd.f32 %v10000, %v10141
        %v10245 = vadd.f32 %v10001, %v10144
        %v10246 = vadd.f32 %v10002, %v10146
        %v10247 = vadd.f32 %v10003, %v10149
        %v10248 = vadd.f32 %v10004, %v10151
        %v10249 = vadd.f32 %v10005, %v10154
        %v10250 = vadd.f32 %v10006, %v10156
        %v10251 = vadd.f32 %v10007, %v10159
        %v10252 = vadd.f32 %v10008, %v10161
        %v10253 = vadd.f32 %v10009, %v10164
        %v10254 = vadd.f32 %v10010, %v10166
        %v10255 = vadd.f32 %v10011, %v10169
        %v10256 = vadd.f32 %v10012, %v10171
        %v10257 = vadd.f32 %v10013, %v10174
        %v10258 = vadd.f32 %v10014, %v10176
        %v10259 = vadd.f32 %v10015, %v10179
        %v10260 = vadd.f32 %v10016, %v10181
        %v10261 = vadd.f32 %v10017, %v10184
        %v10262 = vadd.f32 %v10018, %v10186
        %v10263 = vadd.f32 %v10019, %v10189
        %v10264 = vadd.f32 %v10020, %v10191
        %v10265 = vadd.f32 %v10021, %v10194
        %v10266 = vadd.f32 %v10022, %v10196
        %v10267 = vadd.f32 %v10023, %v10199
        %v10268 = vadd.f32 %v10024, %v10201
        %v10269 = vadd.f32 %v10025, %v10204
        %v10270 = vadd.f32 %v10026, %v10206
        %v10271 = vlaneseq
        %v10272 = vshrl.u32 %v10271, 7
        %v10273 = vsub.s32 2, %v10272
        %v10274 = vrot.slane %v412, %v10273
        %v10275 = vmul.f32 %v9911, %v10274
        %v10276 = vmul.f32 %v9912, %v10274
        %v10277 = vmul.f32 %v9913, %v10274
        %v10278 = vmul.f32 %v9914, %v10274
        %v10279 = vmul.f32 %v9915, %v10274
        %v10280 = vmul.f32 %v9916, %v10274
        %v10281 = vmul.f32 %v9917, %v10274
        %v10282 = vmul.f32 %v9918, %v10274
        %v10283 = vmul.f32 %v9919, %v10274
        %v10284 = vmul.f32 %v9920, %v10274
        %v10285 = vmul.f32 %v9921, %v10274
        %v10286 = vmul.f32 %v9922, %v10274
        %v10287 = vmul.f32 %v9923, %v10274
        %v10288 = vmul.f32 %v9924, %v10274
        %v10289 = vmul.f32 %v9925, %v10274
        %v10290 = vmul.f32 %v9926, %v10274
        %v10291 = vmul.f32 %v9927, %v10274
        %v10292 = vmul.f32 %v9928, %v10274
        %v10293 = vmul.f32 %v9929, %v10274
        %v10294 = vmul.f32 %v9930, %v10274
        %v10295 = vmul.f32 %v9931, %v10274
        %v10296 = vmul.f32 %v9932, %v10274
        %v10297 = vmul.f32 %v9933, %v10274
        %v10298 = vmul.f32 %v9934, %v10274
        %v10299 = vmul.f32 %v9935, %v10274
        %v10300 = vmul.f32 %v9936, %v10274
        %v10301 = vmul.f32 %v9937, %v10274
        %v10302 = vmul.f32 %v9938, %v10274
        %v10303 = vmul.f32 %v9939, %v10274
        %v10304 = vmul.f32 %v9940, %v10274
        %v10305 = vmul.f32 %v9941, %v10274
        %v10306 = vmul.f32 %v9942, %v10274
        %v10307 = vmul.f32 %v9943, %v10274
        %v10308 = vmul.f32 %v9944, %v10274
        %v10309 = vmul.f32 %v9945, %v10274
        %v10310 = vmul.f32 %v9946, %v10274
        %v10311 = vmul.f32 %v9947, %v10274
        %v10312 = vmul.f32 %v9948, %v10274
        %v10313 = vmul.f32 %v9949, %v10274
        %v10314 = vmul.f32 %v9950, %v10274
        %v10315 = vmul.f32 %v9951, %v10274
        %v10316 = vmul.f32 %v9952, %v10274
        %v10317 = vmul.f32 %v9953, %v10274
        %v10318 = vmul.f32 %v9954, %v10274
        %v10319 = vmul.f32 %v9955, %v10274
        %v10320 = vmul.f32 %v9956, %v10274
        %v10321 = vmul.f32 %v9957, %v10274
        %v10322 = vmul.f32 %v9958, %v10274
        %v10371 = vrot.slane %v10275, 2
        %v10372 = vrot.slane %v10276, 2
        %v10373 = vsel %vm881, %v10371, %v10372
        %v10374 = vrot.slane %v10277, 2
        %v10375 = vsel %vm881, %v10372, %v10374
        %v10376 = vrot.slane %v10278, 2
        %v10377 = vrot.slane %v10279, 2
        %v10378 = vsel %vm881, %v10376, %v10377
        %v10379 = vrot.slane %v10280, 2
        %v10380 = vsel %vm881, %v10377, %v10379
        %v10381 = vrot.slane %v10281, 2
        %v10382 = vrot.slane %v10282, 2
        %v10383 = vsel %vm881, %v10381, %v10382
        %v10384 = vrot.slane %v10283, 2
        %v10385 = vsel %vm881, %v10382, %v10384
        %v10386 = vrot.slane %v10284, 2
        %v10387 = vrot.slane %v10285, 2
        %v10388 = vsel %vm881, %v10386, %v10387
        %v10389 = vrot.slane %v10286, 2
        %v10390 = vsel %vm881, %v10387, %v10389
        %v10391 = vrot.slane %v10287, 2
        %v10392 = vrot.slane %v10288, 2
        %v10393 = vsel %vm881, %v10391, %v10392
        %v10394 = vrot.slane %v10289, 2
        %v10395 = vsel %vm881, %v10392, %v10394
        %v10396 = vrot.slane %v10290, 2
        %v10397 = vrot.slane %v10291, 2
        %v10398 = vsel %vm881, %v10396, %v10397
        %v10399 = vrot.slane %v10292, 2
        %v10400 = vsel %vm881, %v10397, %v10399
        %v10401 = vrot.slane %v10293, 2
        %v10402 = vrot.slane %v10294, 2
        %v10403 = vsel %vm881, %v10401, %v10402
        %v10404 = vrot.slane %v10295, 2
        %v10405 = vsel %vm881, %v10402, %v10404
        %v10406 = vrot.slane %v10296, 2
        %v10407 = vrot.slane %v10297, 2
        %v10408 = vsel %vm881, %v10406, %v10407
        %v10409 = vrot.slane %v10298, 2
        %v10410 = vsel %vm881, %v10407, %v10409
        %v10411 = vrot.slane %v10299, 2
        %v10412 = vrot.slane %v10300, 2
        %v10413 = vsel %vm881, %v10411, %v10412
        %v10414 = vrot.slane %v10301, 2
        %v10415 = vsel %vm881, %v10412, %v10414
        %v10416 = vrot.slane %v10302, 2
        %v10417 = vrot.slane %v10303, 2
        %v10418 = vsel %vm881, %v10416, %v10417
        %v10419 = vrot.slane %v10304, 2
        %v10420 = vsel %vm881, %v10417, %v10419
        %v10421 = vrot.slane %v10305, 2
        %v10422 = vrot.slane %v10306, 2
        %v10423 = vsel %vm881, %v10421, %v10422
        %v10424 = vrot.slane %v10307, 2
        %v10425 = vsel %vm881, %v10422, %v10424
        %v10426 = vrot.slane %v10308, 2
        %v10427 = vrot.slane %v10309, 2
        %v10428 = vsel %vm881, %v10426, %v10427
        %v10429 = vrot.slane %v10310, 2
        %v10430 = vsel %vm881, %v10427, %v10429
        %v10431 = vrot.slane %v10311, 2
        %v10432 = vrot.slane %v10312, 2
        %v10433 = vsel %vm881, %v10431, %v10432
        %v10434 = vrot.slane %v10313, 2
        %v10435 = vsel %vm881, %v10432, %v10434
        %v10436 = vrot.slane %v10314, 2
        %v10437 = vrot.slane %v10315, 2
        %v10438 = vsel %vm881, %v10436, %v10437
        %v10439 = vrot.slane %v10316, 2
        %v10440 = vsel %vm881, %v10437, %v10439
        %v10441 = vrot.slane %v10317, 2
        %v10442 = vrot.slane %v10318, 2
        %v10443 = vsel %vm881, %v10441, %v10442
        %v10444 = vrot.slane %v10319, 2
        %v10445 = vsel %vm881, %v10442, %v10444
        %v10446 = vrot.slane %v10320, 2
        %v10447 = vrot.slane %v10321, 2
        %v10448 = vsel %vm881, %v10446, %v10447
        %v10449 = vrot.slane %v10322, 2
        %v10450 = vsel %vm881, %v10447, %v10449
        %v10483 = vadd.f32 %v10239, %v10373
        %v10484 = vadd.f32 %v10240, %v10375
        %v10485 = vadd.f32 %v10241, %v10378
        %v10486 = vadd.f32 %v10242, %v10380
        %v10487 = vadd.f32 %v10243, %v10383
        %v10488 = vadd.f32 %v10244, %v10385
        %v10489 = vadd.f32 %v10245, %v10388
        %v10490 = vadd.f32 %v10246, %v10390
        %v10491 = vadd.f32 %v10247, %v10393
        %v10492 = vadd.f32 %v10248, %v10395
        %v10493 = vadd.f32 %v10249, %v10398
        %v10494 = vadd.f32 %v10250, %v10400
        %v10495 = vadd.f32 %v10251, %v10403
        %v10496 = vadd.f32 %v10252, %v10405
        %v10497 = vadd.f32 %v10253, %v10408
        %v10498 = vadd.f32 %v10254, %v10410
        %v10499 = vadd.f32 %v10255, %v10413
        %v10500 = vadd.f32 %v10256, %v10415
        %v10501 = vadd.f32 %v10257, %v10418
        %v10502 = vadd.f32 %v10258, %v10420
        %v10503 = vadd.f32 %v10259, %v10423
        %v10504 = vadd.f32 %v10260, %v10425
        %v10505 = vadd.f32 %v10261, %v10428
        %v10506 = vadd.f32 %v10262, %v10430
        %v10507 = vadd.f32 %v10263, %v10433
        %v10508 = vadd.f32 %v10264, %v10435
        %v10509 = vadd.f32 %v10265, %v10438
        %v10510 = vadd.f32 %v10266, %v10440
        %v10511 = vadd.f32 %v10267, %v10443
        %v10512 = vadd.f32 %v10268, %v10445
        %v10513 = vadd.f32 %v10269, %v10448
        %v10514 = vadd.f32 %v10270, %v10450
        %v10515 = vlaneseq
        %v10516 = vshrl.u32 %v10515, 7
        %v10517 = vsub.s32 3, %v10516
        %v10518 = vrot.slane %v412, %v10517
        %v10519 = vmul.f32 %v9911, %v10518
        %v10520 = vmul.f32 %v9912, %v10518
        %v10521 = vmul.f32 %v9913, %v10518
        %v10522 = vmul.f32 %v9914, %v10518
        %v10523 = vmul.f32 %v9915, %v10518
        %v10524 = vmul.f32 %v9916, %v10518
        %v10525 = vmul.f32 %v9917, %v10518
        %v10526 = vmul.f32 %v9918, %v10518
        %v10527 = vmul.f32 %v9919, %v10518
        %v10528 = vmul.f32 %v9920, %v10518
        %v10529 = vmul.f32 %v9921, %v10518
        %v10530 = vmul.f32 %v9922, %v10518
        %v10531 = vmul.f32 %v9923, %v10518
        %v10532 = vmul.f32 %v9924, %v10518
        %v10533 = vmul.f32 %v9925, %v10518
        %v10534 = vmul.f32 %v9926, %v10518
        %v10535 = vmul.f32 %v9927, %v10518
        %v10536 = vmul.f32 %v9928, %v10518
        %v10537 = vmul.f32 %v9929, %v10518
        %v10538 = vmul.f32 %v9930, %v10518
        %v10539 = vmul.f32 %v9931, %v10518
        %v10540 = vmul.f32 %v9932, %v10518
        %v10541 = vmul.f32 %v9933, %v10518
        %v10542 = vmul.f32 %v9934, %v10518
        %v10543 = vmul.f32 %v9935, %v10518
        %v10544 = vmul.f32 %v9936, %v10518
        %v10545 = vmul.f32 %v9937, %v10518
        %v10546 = vmul.f32 %v9938, %v10518
        %v10547 = vmul.f32 %v9939, %v10518
        %v10548 = vmul.f32 %v9940, %v10518
        %v10549 = vmul.f32 %v9941, %v10518
        %v10550 = vmul.f32 %v9942, %v10518
        %v10551 = vmul.f32 %v9943, %v10518
        %v10552 = vmul.f32 %v9944, %v10518
        %v10553 = vmul.f32 %v9945, %v10518
        %v10554 = vmul.f32 %v9946, %v10518
        %v10555 = vmul.f32 %v9947, %v10518
        %v10556 = vmul.f32 %v9948, %v10518
        %v10557 = vmul.f32 %v9949, %v10518
        %v10558 = vmul.f32 %v9950, %v10518
        %v10559 = vmul.f32 %v9951, %v10518
        %v10560 = vmul.f32 %v9952, %v10518
        %v10561 = vmul.f32 %v9953, %v10518
        %v10562 = vmul.f32 %v9954, %v10518
        %v10563 = vmul.f32 %v9955, %v10518
        %v10564 = vmul.f32 %v9956, %v10518
        %v10565 = vmul.f32 %v9957, %v10518
        %v10566 = vmul.f32 %v9958, %v10518
        %v10615 = vrot.slane %v10519, 3
        %v10616 = vrot.slane %v10520, 3
        %v10617 = vsel %vm1126, %v10615, %v10616
        %v10618 = vrot.slane %v10521, 3
        %v10619 = vsel %vm1126, %v10616, %v10618
        %v10620 = vrot.slane %v10522, 3
        %v10621 = vrot.slane %v10523, 3
        %v10622 = vsel %vm1126, %v10620, %v10621
        %v10623 = vrot.slane %v10524, 3
        %v10624 = vsel %vm1126, %v10621, %v10623
        %v10625 = vrot.slane %v10525, 3
        %v10626 = vrot.slane %v10526, 3
        %v10627 = vsel %vm1126, %v10625, %v10626
        %v10628 = vrot.slane %v10527, 3
        %v10629 = vsel %vm1126, %v10626, %v10628
        %v10630 = vrot.slane %v10528, 3
        %v10631 = vrot.slane %v10529, 3
        %v10632 = vsel %vm1126, %v10630, %v10631
        %v10633 = vrot.slane %v10530, 3
        %v10634 = vsel %vm1126, %v10631, %v10633
        %v10635 = vrot.slane %v10531, 3
        %v10636 = vrot.slane %v10532, 3
        %v10637 = vsel %vm1126, %v10635, %v10636
        %v10638 = vrot.slane %v10533, 3
        %v10639 = vsel %vm1126, %v10636, %v10638
        %v10640 = vrot.slane %v10534, 3
        %v10641 = vrot.slane %v10535, 3
        %v10642 = vsel %vm1126, %v10640, %v10641
        %v10643 = vrot.slane %v10536, 3
        %v10644 = vsel %vm1126, %v10641, %v10643
        %v10645 = vrot.slane %v10537, 3
        %v10646 = vrot.slane %v10538, 3
        %v10647 = vsel %vm1126, %v10645, %v10646
        %v10648 = vrot.slane %v10539, 3
        %v10649 = vsel %vm1126, %v10646, %v10648
        %v10650 = vrot.slane %v10540, 3
        %v10651 = vrot.slane %v10541, 3
        %v10652 = vsel %vm1126, %v10650, %v10651
        %v10653 = vrot.slane %v10542, 3
        %v10654 = vsel %vm1126, %v10651, %v10653
        %v10655 = vrot.slane %v10543, 3
        %v10656 = vrot.slane %v10544, 3
        %v10657 = vsel %vm1126, %v10655, %v10656
        %v10658 = vrot.slane %v10545, 3
        %v10659 = vsel %vm1126, %v10656, %v10658
        %v10660 = vrot.slane %v10546, 3
        %v10661 = vrot.slane %v10547, 3
        %v10662 = vsel %vm1126, %v10660, %v10661
        %v10663 = vrot.slane %v10548, 3
        %v10664 = vsel %vm1126, %v10661, %v10663
        %v10665 = vrot.slane %v10549, 3
        %v10666 = vrot.slane %v10550, 3
        %v10667 = vsel %vm1126, %v10665, %v10666
        %v10668 = vrot.slane %v10551, 3
        %v10669 = vsel %vm1126, %v10666, %v10668
        %v10670 = vrot.slane %v10552, 3
        %v10671 = vrot.slane %v10553, 3
        %v10672 = vsel %vm1126, %v10670, %v10671
        %v10673 = vrot.slane %v10554, 3
        %v10674 = vsel %vm1126, %v10671, %v10673
        %v10675 = vrot.slane %v10555, 3
        %v10676 = vrot.slane %v10556, 3
        %v10677 = vsel %vm1126, %v10675, %v10676
        %v10678 = vrot.slane %v10557, 3
        %v10679 = vsel %vm1126, %v10676, %v10678
        %v10680 = vrot.slane %v10558, 3
        %v10681 = vrot.slane %v10559, 3
        %v10682 = vsel %vm1126, %v10680, %v10681
        %v10683 = vrot.slane %v10560, 3
        %v10684 = vsel %vm1126, %v10681, %v10683
        %v10685 = vrot.slane %v10561, 3
        %v10686 = vrot.slane %v10562, 3
        %v10687 = vsel %vm1126, %v10685, %v10686
        %v10688 = vrot.slane %v10563, 3
        %v10689 = vsel %vm1126, %v10686, %v10688
        %v10690 = vrot.slane %v10564, 3
        %v10691 = vrot.slane %v10565, 3
        %v10692 = vsel %vm1126, %v10690, %v10691
        %v10693 = vrot.slane %v10566, 3
        %v10694 = vsel %vm1126, %v10691, %v10693
        %v10727 = vadd.f32 %v10483, %v10617
        %v10728 = vadd.f32 %v10484, %v10619
        %v10729 = vadd.f32 %v10485, %v10622
        %v10730 = vadd.f32 %v10486, %v10624
        %v10731 = vadd.f32 %v10487, %v10627
        %v10732 = vadd.f32 %v10488, %v10629
        %v10733 = vadd.f32 %v10489, %v10632
        %v10734 = vadd.f32 %v10490, %v10634
        %v10735 = vadd.f32 %v10491, %v10637
        %v10736 = vadd.f32 %v10492, %v10639
        %v10737 = vadd.f32 %v10493, %v10642
        %v10738 = vadd.f32 %v10494, %v10644
        %v10739 = vadd.f32 %v10495, %v10647
        %v10740 = vadd.f32 %v10496, %v10649
        %v10741 = vadd.f32 %v10497, %v10652
        %v10742 = vadd.f32 %v10498, %v10654
        %v10743 = vadd.f32 %v10499, %v10657
        %v10744 = vadd.f32 %v10500, %v10659
        %v10745 = vadd.f32 %v10501, %v10662
        %v10746 = vadd.f32 %v10502, %v10664
        %v10747 = vadd.f32 %v10503, %v10667
        %v10748 = vadd.f32 %v10504, %v10669
        %v10749 = vadd.f32 %v10505, %v10672
        %v10750 = vadd.f32 %v10506, %v10674
        %v10751 = vadd.f32 %v10507, %v10677
        %v10752 = vadd.f32 %v10508, %v10679
        %v10753 = vadd.f32 %v10509, %v10682
        %v10754 = vadd.f32 %v10510, %v10684
        %v10755 = vadd.f32 %v10511, %v10687
        %v10756 = vadd.f32 %v10512, %v10689
        %v10757 = vadd.f32 %v10513, %v10692
        %v10758 = vadd.f32 %v10514, %v10694
        %v10759 = vlaneseq
        %v10760 = vshrl.u32 %v10759, 7
        %v10761 = vsub.s32 4, %v10760
        %v10762 = vrot.slane %v412, %v10761
        %v10763 = vmul.f32 %v9911, %v10762
        %v10764 = vmul.f32 %v9912, %v10762
        %v10765 = vmul.f32 %v9913, %v10762
        %v10766 = vmul.f32 %v9914, %v10762
        %v10767 = vmul.f32 %v9915, %v10762
        %v10768 = vmul.f32 %v9916, %v10762
        %v10769 = vmul.f32 %v9917, %v10762
        %v10770 = vmul.f32 %v9918, %v10762
        %v10771 = vmul.f32 %v9919, %v10762
        %v10772 = vmul.f32 %v9920, %v10762
        %v10773 = vmul.f32 %v9921, %v10762
        %v10774 = vmul.f32 %v9922, %v10762
        %v10775 = vmul.f32 %v9923, %v10762
        %v10776 = vmul.f32 %v9924, %v10762
        %v10777 = vmul.f32 %v9925, %v10762
        %v10778 = vmul.f32 %v9926, %v10762
        %v10779 = vmul.f32 %v9927, %v10762
        %v10780 = vmul.f32 %v9928, %v10762
        %v10781 = vmul.f32 %v9929, %v10762
        %v10782 = vmul.f32 %v9930, %v10762
        %v10783 = vmul.f32 %v9931, %v10762
        %v10784 = vmul.f32 %v9932, %v10762
        %v10785 = vmul.f32 %v9933, %v10762
        %v10786 = vmul.f32 %v9934, %v10762
        %v10787 = vmul.f32 %v9935, %v10762
        %v10788 = vmul.f32 %v9936, %v10762
        %v10789 = vmul.f32 %v9937, %v10762
        %v10790 = vmul.f32 %v9938, %v10762
        %v10791 = vmul.f32 %v9939, %v10762
        %v10792 = vmul.f32 %v9940, %v10762
        %v10793 = vmul.f32 %v9941, %v10762
        %v10794 = vmul.f32 %v9942, %v10762
        %v10795 = vmul.f32 %v9943, %v10762
        %v10796 = vmul.f32 %v9944, %v10762
        %v10797 = vmul.f32 %v9945, %v10762
        %v10798 = vmul.f32 %v9946, %v10762
        %v10799 = vmul.f32 %v9947, %v10762
        %v10800 = vmul.f32 %v9948, %v10762
        %v10801 = vmul.f32 %v9949, %v10762
        %v10802 = vmul.f32 %v9950, %v10762
        %v10803 = vmul.f32 %v9951, %v10762
        %v10804 = vmul.f32 %v9952, %v10762
        %v10805 = vmul.f32 %v9953, %v10762
        %v10806 = vmul.f32 %v9954, %v10762
        %v10807 = vmul.f32 %v9955, %v10762
        %v10808 = vmul.f32 %v9956, %v10762
        %v10809 = vmul.f32 %v9957, %v10762
        %v10810 = vmul.f32 %v9958, %v10762
        %v10859 = vrot.slane %v10763, 4
        %v10860 = vrot.slane %v10764, 4
        %v10861 = vsel %vm1371, %v10859, %v10860
        %v10862 = vrot.slane %v10765, 4
        %v10863 = vsel %vm1371, %v10860, %v10862
        %v10864 = vrot.slane %v10766, 4
        %v10865 = vrot.slane %v10767, 4
        %v10866 = vsel %vm1371, %v10864, %v10865
        %v10867 = vrot.slane %v10768, 4
        %v10868 = vsel %vm1371, %v10865, %v10867
        %v10869 = vrot.slane %v10769, 4
        %v10870 = vrot.slane %v10770, 4
        %v10871 = vsel %vm1371, %v10869, %v10870
        %v10872 = vrot.slane %v10771, 4
        %v10873 = vsel %vm1371, %v10870, %v10872
        %v10874 = vrot.slane %v10772, 4
        %v10875 = vrot.slane %v10773, 4
        %v10876 = vsel %vm1371, %v10874, %v10875
        %v10877 = vrot.slane %v10774, 4
        %v10878 = vsel %vm1371, %v10875, %v10877
        %v10879 = vrot.slane %v10775, 4
        %v10880 = vrot.slane %v10776, 4
        %v10881 = vsel %vm1371, %v10879, %v10880
        %v10882 = vrot.slane %v10777, 4
        %v10883 = vsel %vm1371, %v10880, %v10882
        %v10884 = vrot.slane %v10778, 4
        %v10885 = vrot.slane %v10779, 4
        %v10886 = vsel %vm1371, %v10884, %v10885
        %v10887 = vrot.slane %v10780, 4
        %v10888 = vsel %vm1371, %v10885, %v10887
        %v10889 = vrot.slane %v10781, 4
        %v10890 = vrot.slane %v10782, 4
        %v10891 = vsel %vm1371, %v10889, %v10890
        %v10892 = vrot.slane %v10783, 4
        %v10893 = vsel %vm1371, %v10890, %v10892
        %v10894 = vrot.slane %v10784, 4
        %v10895 = vrot.slane %v10785, 4
        %v10896 = vsel %vm1371, %v10894, %v10895
        %v10897 = vrot.slane %v10786, 4
        %v10898 = vsel %vm1371, %v10895, %v10897
        %v10899 = vrot.slane %v10787, 4
        %v10900 = vrot.slane %v10788, 4
        %v10901 = vsel %vm1371, %v10899, %v10900
        %v10902 = vrot.slane %v10789, 4
        %v10903 = vsel %vm1371, %v10900, %v10902
        %v10904 = vrot.slane %v10790, 4
        %v10905 = vrot.slane %v10791, 4
        %v10906 = vsel %vm1371, %v10904, %v10905
        %v10907 = vrot.slane %v10792, 4
        %v10908 = vsel %vm1371, %v10905, %v10907
        %v10909 = vrot.slane %v10793, 4
        %v10910 = vrot.slane %v10794, 4
        %v10911 = vsel %vm1371, %v10909, %v10910
        %v10912 = vrot.slane %v10795, 4
        %v10913 = vsel %vm1371, %v10910, %v10912
        %v10914 = vrot.slane %v10796, 4
        %v10915 = vrot.slane %v10797, 4
        %v10916 = vsel %vm1371, %v10914, %v10915
        %v10917 = vrot.slane %v10798, 4
        %v10918 = vsel %vm1371, %v10915, %v10917
        %v10919 = vrot.slane %v10799, 4
        %v10920 = vrot.slane %v10800, 4
        %v10921 = vsel %vm1371, %v10919, %v10920
        %v10922 = vrot.slane %v10801, 4
        %v10923 = vsel %vm1371, %v10920, %v10922
        %v10924 = vrot.slane %v10802, 4
        %v10925 = vrot.slane %v10803, 4
        %v10926 = vsel %vm1371, %v10924, %v10925
        %v10927 = vrot.slane %v10804, 4
        %v10928 = vsel %vm1371, %v10925, %v10927
        %v10929 = vrot.slane %v10805, 4
        %v10930 = vrot.slane %v10806, 4
        %v10931 = vsel %vm1371, %v10929, %v10930
        %v10932 = vrot.slane %v10807, 4
        %v10933 = vsel %vm1371, %v10930, %v10932
        %v10934 = vrot.slane %v10808, 4
        %v10935 = vrot.slane %v10809, 4
        %v10936 = vsel %vm1371, %v10934, %v10935
        %v10937 = vrot.slane %v10810, 4
        %v10938 = vsel %vm1371, %v10935, %v10937
        %v10971 = vadd.f32 %v10727, %v10861
        %v10972 = vadd.f32 %v10728, %v10863
        %v10973 = vadd.f32 %v10729, %v10866
        %v10974 = vadd.f32 %v10730, %v10868
        %v10975 = vadd.f32 %v10731, %v10871
        %v10976 = vadd.f32 %v10732, %v10873
        %v10977 = vadd.f32 %v10733, %v10876
        %v10978 = vadd.f32 %v10734, %v10878
        %v10979 = vadd.f32 %v10735, %v10881
        %v10980 = vadd.f32 %v10736, %v10883
        %v10981 = vadd.f32 %v10737, %v10886
        %v10982 = vadd.f32 %v10738, %v10888
        %v10983 = vadd.f32 %v10739, %v10891
        %v10984 = vadd.f32 %v10740, %v10893
        %v10985 = vadd.f32 %v10741, %v10896
        %v10986 = vadd.f32 %v10742, %v10898
        %v10987 = vadd.f32 %v10743, %v10901
        %v10988 = vadd.f32 %v10744, %v10903
        %v10989 = vadd.f32 %v10745, %v10906
        %v10990 = vadd.f32 %v10746, %v10908
        %v10991 = vadd.f32 %v10747, %v10911
        %v10992 = vadd.f32 %v10748, %v10913
        %v10993 = vadd.f32 %v10749, %v10916
        %v10994 = vadd.f32 %v10750, %v10918
        %v10995 = vadd.f32 %v10751, %v10921
        %v10996 = vadd.f32 %v10752, %v10923
        %v10997 = vadd.f32 %v10753, %v10926
        %v10998 = vadd.f32 %v10754, %v10928
        %v10999 = vadd.f32 %v10755, %v10931
        %v11000 = vadd.f32 %v10756, %v10933
        %v11001 = vadd.f32 %v10757, %v10936
        %v11002 = vadd.f32 %v10758, %v10938
        %v11003 = vlaneseq
        %v11004 = vshrl.u32 %v11003, 7
        %v11005 = vsub.s32 5, %v11004
        %v11006 = vrot.slane %v412, %v11005
        %v11007 = vmul.f32 %v9911, %v11006
        %v11008 = vmul.f32 %v9912, %v11006
        %v11009 = vmul.f32 %v9913, %v11006
        %v11010 = vmul.f32 %v9914, %v11006
        %v11011 = vmul.f32 %v9915, %v11006
        %v11012 = vmul.f32 %v9916, %v11006
        %v11013 = vmul.f32 %v9917, %v11006
        %v11014 = vmul.f32 %v9918, %v11006
        %v11015 = vmul.f32 %v9919, %v11006
        %v11016 = vmul.f32 %v9920, %v11006
        %v11017 = vmul.f32 %v9921, %v11006
        %v11018 = vmul.f32 %v9922, %v11006
        %v11019 = vmul.f32 %v9923, %v11006
        %v11020 = vmul.f32 %v9924, %v11006
        %v11021 = vmul.f32 %v9925, %v11006
        %v11022 = vmul.f32 %v9926, %v11006
        %v11023 = vmul.f32 %v9927, %v11006
        %v11024 = vmul.f32 %v9928, %v11006
        %v11025 = vmul.f32 %v9929, %v11006
        %v11026 = vmul.f32 %v9930, %v11006
        %v11027 = vmul.f32 %v9931, %v11006
        %v11028 = vmul.f32 %v9932, %v11006
        %v11029 = vmul.f32 %v9933, %v11006
        %v11030 = vmul.f32 %v9934, %v11006
        %v11031 = vmul.f32 %v9935, %v11006
        %v11032 = vmul.f32 %v9936, %v11006
        %v11033 = vmul.f32 %v9937, %v11006
        %v11034 = vmul.f32 %v9938, %v11006
        %v11035 = vmul.f32 %v9939, %v11006
        %v11036 = vmul.f32 %v9940, %v11006
        %v11037 = vmul.f32 %v9941, %v11006
        %v11038 = vmul.f32 %v9942, %v11006
        %v11039 = vmul.f32 %v9943, %v11006
        %v11040 = vmul.f32 %v9944, %v11006
        %v11041 = vmul.f32 %v9945, %v11006
        %v11042 = vmul.f32 %v9946, %v11006
        %v11043 = vmul.f32 %v9947, %v11006
        %v11044 = vmul.f32 %v9948, %v11006
        %v11045 = vmul.f32 %v9949, %v11006
        %v11046 = vmul.f32 %v9950, %v11006
        %v11047 = vmul.f32 %v9951, %v11006
        %v11048 = vmul.f32 %v9952, %v11006
        %v11049 = vmul.f32 %v9953, %v11006
        %v11050 = vmul.f32 %v9954, %v11006
        %v11051 = vmul.f32 %v9955, %v11006
        %v11052 = vmul.f32 %v9956, %v11006
        %v11053 = vmul.f32 %v9957, %v11006
        %v11054 = vmul.f32 %v9958, %v11006
        %v11103 = vrot.slane %v11007, 5
        %v11104 = vrot.slane %v11008, 5
        %v11105 = vsel %vm1616, %v11103, %v11104
        %v11106 = vrot.slane %v11009, 5
        %v11107 = vsel %vm1616, %v11104, %v11106
        %v11108 = vrot.slane %v11010, 5
        %v11109 = vrot.slane %v11011, 5
        %v11110 = vsel %vm1616, %v11108, %v11109
        %v11111 = vrot.slane %v11012, 5
        %v11112 = vsel %vm1616, %v11109, %v11111
        %v11113 = vrot.slane %v11013, 5
        %v11114 = vrot.slane %v11014, 5
        %v11115 = vsel %vm1616, %v11113, %v11114
        %v11116 = vrot.slane %v11015, 5
        %v11117 = vsel %vm1616, %v11114, %v11116
        %v11118 = vrot.slane %v11016, 5
        %v11119 = vrot.slane %v11017, 5
        %v11120 = vsel %vm1616, %v11118, %v11119
        %v11121 = vrot.slane %v11018, 5
        %v11122 = vsel %vm1616, %v11119, %v11121
        %v11123 = vrot.slane %v11019, 5
        %v11124 = vrot.slane %v11020, 5
        %v11125 = vsel %vm1616, %v11123, %v11124
        %v11126 = vrot.slane %v11021, 5
        %v11127 = vsel %vm1616, %v11124, %v11126
        %v11128 = vrot.slane %v11022, 5
        %v11129 = vrot.slane %v11023, 5
        %v11130 = vsel %vm1616, %v11128, %v11129
        %v11131 = vrot.slane %v11024, 5
        %v11132 = vsel %vm1616, %v11129, %v11131
        %v11133 = vrot.slane %v11025, 5
        %v11134 = vrot.slane %v11026, 5
        %v11135 = vsel %vm1616, %v11133, %v11134
        %v11136 = vrot.slane %v11027, 5
        %v11137 = vsel %vm1616, %v11134, %v11136
        %v11138 = vrot.slane %v11028, 5
        %v11139 = vrot.slane %v11029, 5
        %v11140 = vsel %vm1616, %v11138, %v11139
        %v11141 = vrot.slane %v11030, 5
        %v11142 = vsel %vm1616, %v11139, %v11141
        %v11143 = vrot.slane %v11031, 5
        %v11144 = vrot.slane %v11032, 5
        %v11145 = vsel %vm1616, %v11143, %v11144
        %v11146 = vrot.slane %v11033, 5
        %v11147 = vsel %vm1616, %v11144, %v11146
        %v11148 = vrot.slane %v11034, 5
        %v11149 = vrot.slane %v11035, 5
        %v11150 = vsel %vm1616, %v11148, %v11149
        %v11151 = vrot.slane %v11036, 5
        %v11152 = vsel %vm1616, %v11149, %v11151
        %v11153 = vrot.slane %v11037, 5
        %v11154 = vrot.slane %v11038, 5
        %v11155 = vsel %vm1616, %v11153, %v11154
        %v11156 = vrot.slane %v11039, 5
        %v11157 = vsel %vm1616, %v11154, %v11156
        %v11158 = vrot.slane %v11040, 5
        %v11159 = vrot.slane %v11041, 5
        %v11160 = vsel %vm1616, %v11158, %v11159
        %v11161 = vrot.slane %v11042, 5
        %v11162 = vsel %vm1616, %v11159, %v11161
        %v11163 = vrot.slane %v11043, 5
        %v11164 = vrot.slane %v11044, 5
        %v11165 = vsel %vm1616, %v11163, %v11164
        %v11166 = vrot.slane %v11045, 5
        %v11167 = vsel %vm1616, %v11164, %v11166
        %v11168 = vrot.slane %v11046, 5
        %v11169 = vrot.slane %v11047, 5
        %v11170 = vsel %vm1616, %v11168, %v11169
        %v11171 = vrot.slane %v11048, 5
        %v11172 = vsel %vm1616, %v11169, %v11171
        %v11173 = vrot.slane %v11049, 5
        %v11174 = vrot.slane %v11050, 5
        %v11175 = vsel %vm1616, %v11173, %v11174
        %v11176 = vrot.slane %v11051, 5
        %v11177 = vsel %vm1616, %v11174, %v11176
        %v11178 = vrot.slane %v11052, 5
        %v11179 = vrot.slane %v11053, 5
        %v11180 = vsel %vm1616, %v11178, %v11179
        %v11181 = vrot.slane %v11054, 5
        %v11182 = vsel %vm1616, %v11179, %v11181
        %v11215 = vadd.f32 %v10971, %v11105
        %v11216 = vadd.f32 %v10972, %v11107
        %v11217 = vadd.f32 %v10973, %v11110
        %v11218 = vadd.f32 %v10974, %v11112
        %v11219 = vadd.f32 %v10975, %v11115
        %v11220 = vadd.f32 %v10976, %v11117
        %v11221 = vadd.f32 %v10977, %v11120
        %v11222 = vadd.f32 %v10978, %v11122
        %v11223 = vadd.f32 %v10979, %v11125
        %v11224 = vadd.f32 %v10980, %v11127
        %v11225 = vadd.f32 %v10981, %v11130
        %v11226 = vadd.f32 %v10982, %v11132
        %v11227 = vadd.f32 %v10983, %v11135
        %v11228 = vadd.f32 %v10984, %v11137
        %v11229 = vadd.f32 %v10985, %v11140
        %v11230 = vadd.f32 %v10986, %v11142
        %v11231 = vadd.f32 %v10987, %v11145
        %v11232 = vadd.f32 %v10988, %v11147
        %v11233 = vadd.f32 %v10989, %v11150
        %v11234 = vadd.f32 %v10990, %v11152
        %v11235 = vadd.f32 %v10991, %v11155
        %v11236 = vadd.f32 %v10992, %v11157
        %v11237 = vadd.f32 %v10993, %v11160
        %v11238 = vadd.f32 %v10994, %v11162
        %v11239 = vadd.f32 %v10995, %v11165
        %v11240 = vadd.f32 %v10996, %v11167
        %v11241 = vadd.f32 %v10997, %v11170
        %v11242 = vadd.f32 %v10998, %v11172
        %v11243 = vadd.f32 %v10999, %v11175
        %v11244 = vadd.f32 %v11000, %v11177
        %v11245 = vadd.f32 %v11001, %v11180
        %v11246 = vadd.f32 %v11002, %v11182
        %v11247 = vlaneseq
        %v11248 = vshrl.u32 %v11247, 7
        %v11249 = vsub.s32 6, %v11248
        %v11250 = vrot.slane %v412, %v11249
        %v11251 = vmul.f32 %v9911, %v11250
        %v11252 = vmul.f32 %v9912, %v11250
        %v11253 = vmul.f32 %v9913, %v11250
        %v11254 = vmul.f32 %v9914, %v11250
        %v11255 = vmul.f32 %v9915, %v11250
        %v11256 = vmul.f32 %v9916, %v11250
        %v11257 = vmul.f32 %v9917, %v11250
        %v11258 = vmul.f32 %v9918, %v11250
        %v11259 = vmul.f32 %v9919, %v11250
        %v11260 = vmul.f32 %v9920, %v11250
        %v11261 = vmul.f32 %v9921, %v11250
        %v11262 = vmul.f32 %v9922, %v11250
        %v11263 = vmul.f32 %v9923, %v11250
        %v11264 = vmul.f32 %v9924, %v11250
        %v11265 = vmul.f32 %v9925, %v11250
        %v11266 = vmul.f32 %v9926, %v11250
        %v11267 = vmul.f32 %v9927, %v11250
        %v11268 = vmul.f32 %v9928, %v11250
        %v11269 = vmul.f32 %v9929, %v11250
        %v11270 = vmul.f32 %v9930, %v11250
        %v11271 = vmul.f32 %v9931, %v11250
        %v11272 = vmul.f32 %v9932, %v11250
        %v11273 = vmul.f32 %v9933, %v11250
        %v11274 = vmul.f32 %v9934, %v11250
        %v11275 = vmul.f32 %v9935, %v11250
        %v11276 = vmul.f32 %v9936, %v11250
        %v11277 = vmul.f32 %v9937, %v11250
        %v11278 = vmul.f32 %v9938, %v11250
        %v11279 = vmul.f32 %v9939, %v11250
        %v11280 = vmul.f32 %v9940, %v11250
        %v11281 = vmul.f32 %v9941, %v11250
        %v11282 = vmul.f32 %v9942, %v11250
        %v11283 = vmul.f32 %v9943, %v11250
        %v11284 = vmul.f32 %v9944, %v11250
        %v11285 = vmul.f32 %v9945, %v11250
        %v11286 = vmul.f32 %v9946, %v11250
        %v11287 = vmul.f32 %v9947, %v11250
        %v11288 = vmul.f32 %v9948, %v11250
        %v11289 = vmul.f32 %v9949, %v11250
        %v11290 = vmul.f32 %v9950, %v11250
        %v11291 = vmul.f32 %v9951, %v11250
        %v11292 = vmul.f32 %v9952, %v11250
        %v11293 = vmul.f32 %v9953, %v11250
        %v11294 = vmul.f32 %v9954, %v11250
        %v11295 = vmul.f32 %v9955, %v11250
        %v11296 = vmul.f32 %v9956, %v11250
        %v11297 = vmul.f32 %v9957, %v11250
        %v11298 = vmul.f32 %v9958, %v11250
        %v11347 = vrot.slane %v11251, 6
        %v11348 = vrot.slane %v11252, 6
        %v11349 = vsel %vm1861, %v11347, %v11348
        %v11350 = vrot.slane %v11253, 6
        %v11351 = vsel %vm1861, %v11348, %v11350
        %v11352 = vrot.slane %v11254, 6
        %v11353 = vrot.slane %v11255, 6
        %v11354 = vsel %vm1861, %v11352, %v11353
        %v11355 = vrot.slane %v11256, 6
        %v11356 = vsel %vm1861, %v11353, %v11355
        %v11357 = vrot.slane %v11257, 6
        %v11358 = vrot.slane %v11258, 6
        %v11359 = vsel %vm1861, %v11357, %v11358
        %v11360 = vrot.slane %v11259, 6
        %v11361 = vsel %vm1861, %v11358, %v11360
        %v11362 = vrot.slane %v11260, 6
        %v11363 = vrot.slane %v11261, 6
        %v11364 = vsel %vm1861, %v11362, %v11363
        %v11365 = vrot.slane %v11262, 6
        %v11366 = vsel %vm1861, %v11363, %v11365
        %v11367 = vrot.slane %v11263, 6
        %v11368 = vrot.slane %v11264, 6
        %v11369 = vsel %vm1861, %v11367, %v11368
        %v11370 = vrot.slane %v11265, 6
        %v11371 = vsel %vm1861, %v11368, %v11370
        %v11372 = vrot.slane %v11266, 6
        %v11373 = vrot.slane %v11267, 6
        %v11374 = vsel %vm1861, %v11372, %v11373
        %v11375 = vrot.slane %v11268, 6
        %v11376 = vsel %vm1861, %v11373, %v11375
        %v11377 = vrot.slane %v11269, 6
        %v11378 = vrot.slane %v11270, 6
        %v11379 = vsel %vm1861, %v11377, %v11378
        %v11380 = vrot.slane %v11271, 6
        %v11381 = vsel %vm1861, %v11378, %v11380
        %v11382 = vrot.slane %v11272, 6
        %v11383 = vrot.slane %v11273, 6
        %v11384 = vsel %vm1861, %v11382, %v11383
        %v11385 = vrot.slane %v11274, 6
        %v11386 = vsel %vm1861, %v11383, %v11385
        %v11387 = vrot.slane %v11275, 6
        %v11388 = vrot.slane %v11276, 6
        %v11389 = vsel %vm1861, %v11387, %v11388
        %v11390 = vrot.slane %v11277, 6
        %v11391 = vsel %vm1861, %v11388, %v11390
        %v11392 = vrot.slane %v11278, 6
        %v11393 = vrot.slane %v11279, 6
        %v11394 = vsel %vm1861, %v11392, %v11393
        %v11395 = vrot.slane %v11280, 6
        %v11396 = vsel %vm1861, %v11393, %v11395
        %v11397 = vrot.slane %v11281, 6
        %v11398 = vrot.slane %v11282, 6
        %v11399 = vsel %vm1861, %v11397, %v11398
        %v11400 = vrot.slane %v11283, 6
        %v11401 = vsel %vm1861, %v11398, %v11400
        %v11402 = vrot.slane %v11284, 6
        %v11403 = vrot.slane %v11285, 6
        %v11404 = vsel %vm1861, %v11402, %v11403
        %v11405 = vrot.slane %v11286, 6
        %v11406 = vsel %vm1861, %v11403, %v11405
        %v11407 = vrot.slane %v11287, 6
        %v11408 = vrot.slane %v11288, 6
        %v11409 = vsel %vm1861, %v11407, %v11408
        %v11410 = vrot.slane %v11289, 6
        %v11411 = vsel %vm1861, %v11408, %v11410
        %v11412 = vrot.slane %v11290, 6
        %v11413 = vrot.slane %v11291, 6
        %v11414 = vsel %vm1861, %v11412, %v11413
        %v11415 = vrot.slane %v11292, 6
        %v11416 = vsel %vm1861, %v11413, %v11415
        %v11417 = vrot.slane %v11293, 6
        %v11418 = vrot.slane %v11294, 6
        %v11419 = vsel %vm1861, %v11417, %v11418
        %v11420 = vrot.slane %v11295, 6
        %v11421 = vsel %vm1861, %v11418, %v11420
        %v11422 = vrot.slane %v11296, 6
        %v11423 = vrot.slane %v11297, 6
        %v11424 = vsel %vm1861, %v11422, %v11423
        %v11425 = vrot.slane %v11298, 6
        %v11426 = vsel %vm1861, %v11423, %v11425
        %v11459 = vadd.f32 %v11215, %v11349
        %v11460 = vadd.f32 %v11216, %v11351
        %v11461 = vadd.f32 %v11217, %v11354
        %v11462 = vadd.f32 %v11218, %v11356
        %v11463 = vadd.f32 %v11219, %v11359
        %v11464 = vadd.f32 %v11220, %v11361
        %v11465 = vadd.f32 %v11221, %v11364
        %v11466 = vadd.f32 %v11222, %v11366
        %v11467 = vadd.f32 %v11223, %v11369
        %v11468 = vadd.f32 %v11224, %v11371
        %v11469 = vadd.f32 %v11225, %v11374
        %v11470 = vadd.f32 %v11226, %v11376
        %v11471 = vadd.f32 %v11227, %v11379
        %v11472 = vadd.f32 %v11228, %v11381
        %v11473 = vadd.f32 %v11229, %v11384
        %v11474 = vadd.f32 %v11230, %v11386
        %v11475 = vadd.f32 %v11231, %v11389
        %v11476 = vadd.f32 %v11232, %v11391
        %v11477 = vadd.f32 %v11233, %v11394
        %v11478 = vadd.f32 %v11234, %v11396
        %v11479 = vadd.f32 %v11235, %v11399
        %v11480 = vadd.f32 %v11236, %v11401
        %v11481 = vadd.f32 %v11237, %v11404
        %v11482 = vadd.f32 %v11238, %v11406
        %v11483 = vadd.f32 %v11239, %v11409
        %v11484 = vadd.f32 %v11240, %v11411
        %v11485 = vadd.f32 %v11241, %v11414
        %v11486 = vadd.f32 %v11242, %v11416
        %v11487 = vadd.f32 %v11243, %v11419
        %v11488 = vadd.f32 %v11244, %v11421
        %v11489 = vadd.f32 %v11245, %v11424
        %v11490 = vadd.f32 %v11246, %v11426
        %v11491 = vld [vmem:[%s237] sm:$0xff]
        %v11492 = vld [vmem:[%s237 + $0x8] sm:$0xff]
        %v11493 = vld [vmem:[%s237 + $0x10] sm:$0xff]
        %v11494 = vld [vmem:[%s237 + $0x18] sm:$0xff]
        %v11495 = vld [vmem:[%s237 + $0x20] sm:$0xff]
        %v11496 = vld [vmem:[%s237 + $0x28] sm:$0xff]
        %v11497 = vld [vmem:[%s237 + $0x30] sm:$0xff]
        %v11498 = vld [vmem:[%s237 + $0x38] sm:$0xff]
        %v11499 = vld [vmem:[%s237 + $0x40] sm:$0xff]
        %v11500 = vld [vmem:[%s237 + $0x48] sm:$0xff]
        %v11501 = vld [vmem:[%s237 + $0x50] sm:$0xff]
        %v11502 = vld [vmem:[%s237 + $0x58] sm:$0xff]
        %v11503 = vld [vmem:[%s237 + $0x60] sm:$0xff]
        %v11504 = vld [vmem:[%s237 + $0x68] sm:$0xff]
        %v11505 = vld [vmem:[%s237 + $0x70] sm:$0xff]
        %v11506 = vld [vmem:[%s237 + $0x78] sm:$0xff]
        %v11507 = vld [vmem:[%s237 + $0x80] sm:$0xff]
        %v11508 = vld [vmem:[%s237 + $0x88] sm:$0xff]
        %v11509 = vld [vmem:[%s237 + $0x90] sm:$0xff]
        %v11510 = vld [vmem:[%s237 + $0x98] sm:$0xff]
        %v11511 = vld [vmem:[%s237 + $0xa0] sm:$0xff]
        %v11512 = vld [vmem:[%s237 + $0xa8] sm:$0xff]
        %v11513 = vld [vmem:[%s237 + $0xb0] sm:$0xff]
        %v11514 = vld [vmem:[%s237 + $0xb8] sm:$0xff]
        %v11515 = vld [vmem:[%s237 + $0xc0] sm:$0xff]
        %v11516 = vld [vmem:[%s237 + $0xc8] sm:$0xff]
        %v11517 = vld [vmem:[%s237 + $0xd0] sm:$0xff]
        %v11518 = vld [vmem:[%s237 + $0xd8] sm:$0xff]
        %v11519 = vld [vmem:[%s237 + $0xe0] sm:$0xff]
        %v11520 = vld [vmem:[%s237 + $0xe8] sm:$0xff]
        %v11521 = vld [vmem:[%s237 + $0xf0] sm:$0xff]
        %v11522 = vld [vmem:[%s237 + $0xf8] sm:$0xff]
        %v11523 = vadd.f32 %v11459, %v11491
        %v11524 = vadd.f32 %v11460, %v11492
        %v11525 = vadd.f32 %v11461, %v11493
        %v11526 = vadd.f32 %v11462, %v11494
        %v11527 = vadd.f32 %v11463, %v11495
        %v11528 = vadd.f32 %v11464, %v11496
        %v11529 = vadd.f32 %v11465, %v11497
        %v11530 = vadd.f32 %v11466, %v11498
        %v11531 = vadd.f32 %v11467, %v11499
        %v11532 = vadd.f32 %v11468, %v11500
        %v11533 = vadd.f32 %v11469, %v11501
        %v11534 = vadd.f32 %v11470, %v11502
        %v11535 = vadd.f32 %v11471, %v11503
        %v11536 = vadd.f32 %v11472, %v11504
        %v11537 = vadd.f32 %v11473, %v11505
        %v11538 = vadd.f32 %v11474, %v11506
        %v11539 = vadd.f32 %v11475, %v11507
        %v11540 = vadd.f32 %v11476, %v11508
        %v11541 = vadd.f32 %v11477, %v11509
        %v11542 = vadd.f32 %v11478, %v11510
        %v11543 = vadd.f32 %v11479, %v11511
        %v11544 = vadd.f32 %v11480, %v11512
        %v11545 = vadd.f32 %v11481, %v11513
        %v11546 = vadd.f32 %v11482, %v11514
        %v11547 = vadd.f32 %v11483, %v11515
        %v11548 = vadd.f32 %v11484, %v11516
        %v11549 = vadd.f32 %v11485, %v11517
        %v11550 = vadd.f32 %v11486, %v11518
        %v11551 = vadd.f32 %v11487, %v11519
        %v11552 = vadd.f32 %v11488, %v11520
        %v11553 = vadd.f32 %v11489, %v11521
        %v11554 = vadd.f32 %v11490, %v11522
        %v11555 = vpack.c.bf16 %v11524, %v11523
        %v11556 = vpack.c.bf16 %v11526, %v11525
        %v11557 = vpack.c.bf16 %v11528, %v11527
        %v11558 = vpack.c.bf16 %v11530, %v11529
        %v11559 = vpack.c.bf16 %v11532, %v11531
        %v11560 = vpack.c.bf16 %v11534, %v11533
        %v11561 = vpack.c.bf16 %v11536, %v11535
        %v11562 = vpack.c.bf16 %v11538, %v11537
        %v11563 = vpack.c.bf16 %v11540, %v11539
        %v11564 = vpack.c.bf16 %v11542, %v11541
        %v11565 = vpack.c.bf16 %v11544, %v11543
        %v11566 = vpack.c.bf16 %v11546, %v11545
        %v11567 = vpack.c.bf16 %v11548, %v11547
        %v11568 = vpack.c.bf16 %v11550, %v11549
        %v11569 = vpack.c.bf16 %v11552, %v11551
        %v11570 = vpack.c.bf16 %v11554, %v11553
        %v11571 = vld [vmem:[#allocation8] sm:$0xf]
        %v11572 = vld [vmem:[#allocation8 + $0x4] sm:$0xf]
        %v11573 = vld [vmem:[#allocation8 + $0x8] sm:$0xf]
        %v11574 = vld [vmem:[#allocation8 + $0xc] sm:$0xf]
        %v11575 = vld [vmem:[%s4] sm:$0x1]
        %v11577 = vlaneseq
        %v11578 = vshrl.u32 %v11577, 7
        %v11579 = vsub.s32 0, %v11578
        %v11580 = vrot.slane %v11575, %v11579
        %v11586 = vunpack.c.l.b16 %v11571
        %v11587 = vunpack.c.l.b16 %v11572
        %v11588 = vunpack.c.l.b16 %v11573
        %v11589 = vunpack.c.l.b16 %v11574
        %v11590 = vpack.c.b16 %v11587, %v11586
        %v11591 = vpack.c.b16 %v11589, %v11588
        %v11595 = vsel %vm273, %v11555, 0
        %v11598 = vsel %vm273, %v11556, 0
        %v11601 = vsel %vm273, %v11557, 0
        %v11604 = vsel %vm273, %v11558, 0
        %v11607 = vsel %vm273, %v11559, 0
        %v11610 = vsel %vm273, %v11560, 0
        %v11613 = vsel %vm273, %v11561, 0
        %v11616 = vsel %vm273, %v11562, 0
        %v11619 = vsel %vm273, %v11563, 0
        %v11622 = vsel %vm273, %v11564, 0
        %v11625 = vsel %vm273, %v11565, 0
        %v11628 = vsel %vm273, %v11566, 0
        %v11631 = vsel %vm273, %v11567, 0
        %v11634 = vsel %vm273, %v11568, 0
        %v11637 = vsel %vm273, %v11569, 0
        %v11640 = vsel %vm273, %v11570, 0
        %11642 = vmatprep.subr.bf16.mxu0 0
        %11643 = vmatpush1.bf16.msra.mxu0 %v11590
        %11644 = vmatprep.subr.bf16.mxu0 0
        %11645 = vmatpush1.bf16.msra.mxu0 %v11591
        %11646 = vmatprep.subr.bf16.mxu0 0
        %11647 = vmatpush1.bf16.msra.mxu0 0
        %11648 = vmatprep.subr.bf16.mxu0 0
        %11649 = vmatpush1.bf16.msra.mxu0 0
        %11650 = vmatprep.subr.bf16.mxu0 0
        %11651 = vmatpush1.bf16.msra.mxu0 0
        %11652 = vmatprep.subr.bf16.mxu0 0
        %11653 = vmatpush1.bf16.msra.mxu0 0
        %11654 = vmatprep.subr.bf16.mxu0 0
        %11655 = vmatpush1.bf16.msra.mxu0 0
        %11656 = vmatprep.subr.bf16.mxu0 0
        %11657 = vmatpush1.bf16.msra.mxu0 0
        %11658 = vmatprep.subr.bf16.mxu0 0
        %11659 = vmatpush1.bf16.msra.mxu0 0
        %11660 = vmatprep.subr.bf16.mxu0 0
        %11661 = vmatpush1.bf16.msra.mxu0 0
        %11662 = vmatprep.subr.bf16.mxu0 0
        %11663 = vmatpush1.bf16.msra.mxu0 0
        %11664 = vmatprep.subr.bf16.mxu0 0
        %11665 = vmatpush1.bf16.msra.mxu0 0
        %11666 = vmatprep.subr.bf16.mxu0 0
        %11667 = vmatpush1.bf16.msra.mxu0 0
        %11668 = vmatprep.subr.bf16.mxu0 0
        %11669 = vmatpush1.bf16.msra.mxu0 0
        %11670 = vmatprep.subr.bf16.mxu0 0
        %11671 = vmatpush1.bf16.msra.mxu0 0
        %11672 = vmatprep.subr.bf16.mxu0 0
        %11673 = vmatpush1.bf16.msra.mxu0 0
        %11674 = vmatprep.mubr.bf16.mxu0 0
        %11675 = vmatmul.mubr.bf16.gmra.mrb[0].mxu0 %v11595
        %v11676 = vpop.f32.mrb[0].mxu0
        %v11677 = vadd.f32 %v11580, %v11676
        %v11678 = vpop.f32.mrb[0].mxu0
        %v11679 = vpop.f32.mrb[0].mxu0
        %v11680 = vadd.f32 %v11580, %v11679
        %v11681 = vpop.f32.mrb[0].mxu0
        %11682 = vmatprep.mubr.bf16.mxu0 0
        %11683 = vmatmul.mubr.bf16.gmra.mrb[0].mxu0 %v11598
        %v11684 = vpop.f32.mrb[0].mxu0
        %v11685 = vadd.f32 %v11580, %v11684
        %v11686 = vpop.f32.mrb[0].mxu0
        %v11687 = vpop.f32.mrb[0].mxu0
        %v11688 = vadd.f32 %v11580, %v11687
        %v11689 = vpop.f32.mrb[0].mxu0
        %11690 = vmatprep.mubr.bf16.mxu0 0
        %11691 = vmatmul.mubr.bf16.gmra.mrb[0].mxu0 %v11601
        %v11692 = vpop.f32.mrb[0].mxu0
        %v11693 = vadd.f32 %v11580, %v11692
        %v11694 = vpop.f32.mrb[0].mxu0
        %v11695 = vpop.f32.mrb[0].mxu0
        %v11696 = vadd.f32 %v11580, %v11695
        %v11697 = vpop.f32.mrb[0].mxu0
        %11698 = vmatprep.mubr.bf16.mxu0 0
        %11699 = vmatmul.mubr.bf16.gmra.mrb[0].mxu0 %v11604
        %v11700 = vpop.f32.mrb[0].mxu0
        %v11701 = vadd.f32 %v11580, %v11700
        %v11702 = vpop.f32.mrb[0].mxu0
        %v11703 = vpop.f32.mrb[0].mxu0
        %v11704 = vadd.f32 %v11580, %v11703
        %v11705 = vpop.f32.mrb[0].mxu0
        %11706 = vmatprep.mubr.bf16.mxu0 0
        %11707 = vmatmul.mubr.bf16.gmra.mrb[0].mxu0 %v11607
        %v11708 = vpop.f32.mrb[0].mxu0
        %v11709 = vadd.f32 %v11580, %v11708
        %v11710 = vpop.f32.mrb[0].mxu0
        %v11711 = vpop.f32.mrb[0].mxu0
        %v11712 = vadd.f32 %v11580, %v11711
        %v11713 = vpop.f32.mrb[0].mxu0
        %11714 = vmatprep.mubr.bf16.mxu0 0
        %11715 = vmatmul.mubr.bf16.gmra.mrb[0].mxu0 %v11610
        %v11716 = vpop.f32.mrb[0].mxu0
        %v11717 = vadd.f32 %v11580, %v11716
        %v11718 = vpop.f32.mrb[0].mxu0
        %v11719 = vpop.f32.mrb[0].mxu0
        %v11720 = vadd.f32 %v11580, %v11719
        %v11721 = vpop.f32.mrb[0].mxu0
        %11722 = vmatprep.mubr.bf16.mxu0 0
        %11723 = vmatmul.mubr.bf16.gmra.mrb[0].mxu0 %v11613
        %v11724 = vpop.f32.mrb[0].mxu0
        %v11725 = vadd.f32 %v11580, %v11724
        %v11726 = vpop.f32.mrb[0].mxu0
        %v11727 = vpop.f32.mrb[0].mxu0
        %v11728 = vadd.f32 %v11580, %v11727
        %v11729 = vpop.f32.mrb[0].mxu0
        %11730 = vmatprep.mubr.bf16.mxu0 0
        %11731 = vmatmul.mubr.bf16.gmra.mrb[0].mxu0 %v11616
        %v11732 = vpop.f32.mrb[0].mxu0
        %v11733 = vadd.f32 %v11580, %v11732
        %v11734 = vpop.f32.mrb[0].mxu0
        %v11735 = vpop.f32.mrb[0].mxu0
        %v11736 = vadd.f32 %v11580, %v11735
        %v11737 = vpop.f32.mrb[0].mxu0
        %11738 = vmatprep.mubr.bf16.mxu0 0
        %11739 = vmatmul.mubr.bf16.gmra.mrb[0].mxu0 %v11619
        %v11740 = vpop.f32.mrb[0].mxu0
        %v11741 = vadd.f32 %v11580, %v11740
        %v11742 = vpop.f32.mrb[0].mxu0
        %v11743 = vpop.f32.mrb[0].mxu0
        %v11744 = vadd.f32 %v11580, %v11743
        %v11745 = vpop.f32.mrb[0].mxu0
        %11746 = vmatprep.mubr.bf16.mxu0 0
        %11747 = vmatmul.mubr.bf16.gmra.mrb[0].mxu0 %v11622
        %v11748 = vpop.f32.mrb[0].mxu0
        %v11749 = vadd.f32 %v11580, %v11748
        %v11750 = vpop.f32.mrb[0].mxu0
        %v11751 = vpop.f32.mrb[0].mxu0
        %v11752 = vadd.f32 %v11580, %v11751
        %v11753 = vpop.f32.mrb[0].mxu0
        %11754 = vmatprep.mubr.bf16.mxu0 0
        %11755 = vmatmul.mubr.bf16.gmra.mrb[0].mxu0 %v11625
        %v11756 = vpop.f32.mrb[0].mxu0
        %v11757 = vadd.f32 %v11580, %v11756
        %v11758 = vpop.f32.mrb[0].mxu0
        %v11759 = vpop.f32.mrb[0].mxu0
        %v11760 = vadd.f32 %v11580, %v11759
        %v11761 = vpop.f32.mrb[0].mxu0
        %11762 = vmatprep.mubr.bf16.mxu0 0
        %11763 = vmatmul.mubr.bf16.gmra.mrb[0].mxu0 %v11628
        %v11764 = vpop.f32.mrb[0].mxu0
        %v11765 = vadd.f32 %v11580, %v11764
        %v11766 = vpop.f32.mrb[0].mxu0
        %v11767 = vpop.f32.mrb[0].mxu0
        %v11768 = vadd.f32 %v11580, %v11767
        %v11769 = vpop.f32.mrb[0].mxu0
        %11770 = vmatprep.mubr.bf16.mxu0 0
        %11771 = vmatmul.mubr.bf16.gmra.mrb[0].mxu0 %v11631
        %v11772 = vpop.f32.mrb[0].mxu0
        %v11773 = vadd.f32 %v11580, %v11772
        %v11774 = vpop.f32.mrb[0].mxu0
        %v11775 = vpop.f32.mrb[0].mxu0
        %v11776 = vadd.f32 %v11580, %v11775
        %v11777 = vpop.f32.mrb[0].mxu0
        %11778 = vmatprep.mubr.bf16.mxu0 0
        %11779 = vmatmul.mubr.bf16.gmra.mrb[0].mxu0 %v11634
        %v11780 = vpop.f32.mrb[0].mxu0
        %v11781 = vadd.f32 %v11580, %v11780
        %v11782 = vpop.f32.mrb[0].mxu0
        %v11783 = vpop.f32.mrb[0].mxu0
        %v11784 = vadd.f32 %v11580, %v11783
        %v11785 = vpop.f32.mrb[0].mxu0
        %11786 = vmatprep.mubr.bf16.mxu0 0
        %11787 = vmatmul.mubr.bf16.gmra.mrb[0].mxu0 %v11637
        %v11788 = vpop.f32.mrb[0].mxu0
        %v11789 = vadd.f32 %v11580, %v11788
        %v11790 = vpop.f32.mrb[0].mxu0
        %v11791 = vpop.f32.mrb[0].mxu0
        %v11792 = vadd.f32 %v11580, %v11791
        %v11793 = vpop.f32.mrb[0].mxu0
        %11794 = vmatprep.mubr.bf16.mxu0 0
        %11795 = vmatmul.mubr.bf16.gmra.mrb[0].mxu0 %v11640
        %v11796 = vpop.f32.mrb[0].mxu0
        %v11797 = vadd.f32 %v11580, %v11796
        %v11798 = vpop.f32.mrb[0].mxu0
        %v11799 = vpop.f32.mrb[0].mxu0
        %v11800 = vadd.f32 %v11580, %v11799
        %v11801 = vpop.f32.mrb[0].mxu0
        %11802 = vdwg.mxu0
        %v11803 = vadd.f32 %v11523, %v11677
        %v11804 = vadd.f32 %v11524, %v11680
        %v11805 = vadd.f32 %v11525, %v11685
        %v11806 = vadd.f32 %v11526, %v11688
        %v11807 = vadd.f32 %v11527, %v11693
        %v11808 = vadd.f32 %v11528, %v11696
        %v11809 = vadd.f32 %v11529, %v11701
        %v11810 = vadd.f32 %v11530, %v11704
        %v11811 = vadd.f32 %v11531, %v11709
        %v11812 = vadd.f32 %v11532, %v11712
        %v11813 = vadd.f32 %v11533, %v11717
        %v11814 = vadd.f32 %v11534, %v11720
        %v11815 = vadd.f32 %v11535, %v11725
        %v11816 = vadd.f32 %v11536, %v11728
        %v11817 = vadd.f32 %v11537, %v11733
        %v11818 = vadd.f32 %v11538, %v11736
        %v11819 = vadd.f32 %v11539, %v11741
        %v11820 = vadd.f32 %v11540, %v11744
        %v11821 = vadd.f32 %v11541, %v11749
        %v11822 = vadd.f32 %v11542, %v11752
        %v11823 = vadd.f32 %v11543, %v11757
        %v11824 = vadd.f32 %v11544, %v11760
        %v11825 = vadd.f32 %v11545, %v11765
        %v11826 = vadd.f32 %v11546, %v11768
        %v11827 = vadd.f32 %v11547, %v11773
        %v11828 = vadd.f32 %v11548, %v11776
        %v11829 = vadd.f32 %v11549, %v11781
        %v11830 = vadd.f32 %v11550, %v11784
        %v11831 = vadd.f32 %v11551, %v11789
        %v11832 = vadd.f32 %v11552, %v11792
        %v11833 = vadd.f32 %v11553, %v11797
        %v11834 = vadd.f32 %v11554, %v11800
        %11835 = vst.msk [vmem:[%s271] sm:$0xff] %vm273, %v11803
        %11836 = vst.msk [vmem:[%s271 + $0x8] sm:$0xff] %vm273, %v11804
        %11837 = vst.msk [vmem:[%s271 + $0x10] sm:$0xff] %vm273, %v11805
        %11838 = vst.msk [vmem:[%s271 + $0x18] sm:$0xff] %vm273, %v11806
        %11839 = vst.msk [vmem:[%s271 + $0x20] sm:$0xff] %vm273, %v11807
        %11840 = vst.msk [vmem:[%s271 + $0x28] sm:$0xff] %vm273, %v11808
        %11841 = vst.msk [vmem:[%s271 + $0x30] sm:$0xff] %vm273, %v11809
        %11842 = vst.msk [vmem:[%s271 + $0x38] sm:$0xff] %vm273, %v11810
        %11843 = vst.msk [vmem:[%s271 + $0x40] sm:$0xff] %vm273, %v11811
        %11844 = vst.msk [vmem:[%s271 + $0x48] sm:$0xff] %vm273, %v11812
        %11845 = vst.msk [vmem:[%s271 + $0x50] sm:$0xff] %vm273, %v11813
        %11846 = vst.msk [vmem:[%s271 + $0x58] sm:$0xff] %vm273, %v11814
        %11847 = vst.msk [vmem:[%s271 + $0x60] sm:$0xff] %vm273, %v11815
        %11848 = vst.msk [vmem:[%s271 + $0x68] sm:$0xff] %vm273, %v11816
        %11849 = vst.msk [vmem:[%s271 + $0x70] sm:$0xff] %vm273, %v11817
        %11850 = vst.msk [vmem:[%s271 + $0x78] sm:$0xff] %vm273, %v11818
        %11851 = vst.msk [vmem:[%s271 + $0x80] sm:$0xff] %vm273, %v11819
        %11852 = vst.msk [vmem:[%s271 + $0x88] sm:$0xff] %vm273, %v11820
        %11853 = vst.msk [vmem:[%s271 + $0x90] sm:$0xff] %vm273, %v11821
        %11854 = vst.msk [vmem:[%s271 + $0x98] sm:$0xff] %vm273, %v11822
        %11855 = vst.msk [vmem:[%s271 + $0xa0] sm:$0xff] %vm273, %v11823
        %11856 = vst.msk [vmem:[%s271 + $0xa8] sm:$0xff] %vm273, %v11824
        %11857 = vst.msk [vmem:[%s271 + $0xb0] sm:$0xff] %vm273, %v11825
        %11858 = vst.msk [vmem:[%s271 + $0xb8] sm:$0xff] %vm273, %v11826
        %11859 = vst.msk [vmem:[%s271 + $0xc0] sm:$0xff] %vm273, %v11827
        %11860 = vst.msk [vmem:[%s271 + $0xc8] sm:$0xff] %vm273, %v11828
        %11861 = vst.msk [vmem:[%s271 + $0xd0] sm:$0xff] %vm273, %v11829
        %11862 = vst.msk [vmem:[%s271 + $0xd8] sm:$0xff] %vm273, %v11830
        %11863 = vst.msk [vmem:[%s271 + $0xe0] sm:$0xff] %vm273, %v11831
        %11864 = vst.msk [vmem:[%s271 + $0xe8] sm:$0xff] %vm273, %v11832
        %11865 = vst.msk [vmem:[%s271 + $0xf0] sm:$0xff] %vm273, %v11833
        %11866 = vst.msk [vmem:[%s271 + $0xf8] sm:$0xff] %vm273, %v11834
        %s11867 = sand.u32 %s141, 1
        %s11868 = scalar_lea.sflag [#allocation5], %s11867
        %s11869 = sand.u32 %s141, 1
        %s11870 = smul.addr %s11869, 256
        %s11871 = scalar_lea.vmem [#allocation9], %s11870
        // Predicated region
        $region53: #{tpu_custom_call.1} parent=39 // pred_check
          %p11872 = pneg %p151
        $region54: #{tpu_custom_call.1} parent=39 // pred_check_branch
          %11874 = sbr.rel (%p11872) target = $region56
        $region55: #{tpu_custom_call.1} parent=39 // pred_region
          %s11876 = ssub.s32 4096, 4096
          %11877 = vsyncadd %s11868, %s11876
          %s11878 = smul.addr %s23, 32
          %s11879 = smul.addr %s11878, 128
          %s11880 = scalar_lea.hbm %s5, %s11879
          %s11881 = sshll.u32 %s11871, 4
          %s11882 = int_to_ptr.vmem [resolvable:$true] %s11881
          %11887 = dma.vmem_to_hbm [thread:$0]  %s11882, 4096, %s11880, %s11868, 128, 128, 8
        $region56: #{tpu_custom_call.1} parent=39 // pred_fallthru
          _
      $region40: #{tpu_custom_call.1} parent=5 // pred_fallthru
        _
      %p11888 = scmp.le.s32.totalorder 2, %s18
      // Predicated region
      $region57: #{tpu_custom_call.1} parent=5 // pred_check
        %p11889 = pneg %p11888
      $region58: #{tpu_custom_call.1} parent=5 // pred_check_branch
        %11891 = sbr.rel (%p11889) target = $region60
      $region59: #{tpu_custom_call.1} parent=5 // pred_region
        %s11892 = ssub.s32 %s18, 2
        // Predicated region
        $region61: #{tpu_custom_call.1} parent=59 // pred_check
          %p11893 = pneg %p157
        $region62: #{tpu_custom_call.1} parent=59 // pred_check_branch
          %11895 = sbr.rel (%p11893) target = $region64
        $region63: #{tpu_custom_call.1} parent=59 // pred_region
          %s11896 = sand.u32 %s142, 1
          %s11897 = scalar_lea.sflag [#allocation5], %s11896
          %s11898 = sand.u32 %s142, 1
          %s11899 = smul.addr %s11898, 256
          %s11900 = scalar_lea.vmem [#allocation9], %s11899
          %11901 = dma.done %s11897, 4096
        $region64: #{tpu_custom_call.1} parent=59 // pred_fallthru
          _
      $region60: #{tpu_custom_call.1} parent=5 // pred_fallthru
        _
    $region6: #{tpu_custom_call.1} parent=1 // loop_footer
      %s22 = sadd.s32 1, %s18
    $region7: #{tpu_custom_call.1} parent=1 // loop_footer_branch
      %17 = sbr.rel target = $region3
    $region8: #{tpu_custom_call.1} parent=1 // loop_exit
      _
    %11902 = vsyncpa [#allocation4], 1
    %s11903 = scalar_lea.sflag [#allocation4], 1
    %11904 = vsyncpa %s11903, 1
    %11905 = vsyncpa [#allocation7], 1
    %11906 = vsyncpa [#allocation5], 1
    %s11907 = scalar_lea.sflag [#allocation5], 1
    %11908 = vsyncpa %s11907, 1

</llo_original>
